<compile_context>
chip_gen: v7x
topology: tpu7x:2x2x1
jax: 0.10.0
libtpu: 0.0.40
codegen_flags: <defaults>
</compile_context>

<pallas_src>
import functools

import jax
import jax.numpy as jnp
from jax.experimental import pallas as pl
from jax.experimental.pallas import tpu as pltpu


# ---------------------------------------------------------------------------
# Pallas kernels
# ---------------------------------------------------------------------------
def _conv_pool_kernel(a_ref, w_ref, b_ref, o_ref, *, n_phase, relu):
    """Fused conv-as-matmul + bias + ReLU + 2x2 maxpool.

    a_ref: [P, K, tile_m] bf16   P pooling phases of the im2col matrix
    w_ref: [Cout, K]      bf16
    b_ref: [Cout, 1]      f32
    o_ref: [Cout, tile_m] f32    lane-dense output (M on lanes)
    """
    w = w_ref[...]
    acc = jnp.dot(w, a_ref[0], preferred_element_type=jnp.float32)
    for p in range(1, n_phase):
        acc = jnp.maximum(
            acc, jnp.dot(w, a_ref[p], preferred_element_type=jnp.float32))
    acc = acc + b_ref[...]                 # [Cout, 1] broadcasts over lanes
    if relu:
        acc = jnp.maximum(acc, 0.0)
    o_ref[...] = acc.astype(o_ref.dtype)


def _head_kernel(a_ref, w5_ref, b5_ref, wl_ref, bl_ref, o_ref):
    """conv5 (single matmul, no ReLU) fused with the final Linear."""
    h = jnp.dot(w5_ref[...], a_ref[...], preferred_element_type=jnp.float32)
    h = h + b5_ref[...]                                        # [64, B]
    o = jnp.dot(wl_ref[...], h, preferred_element_type=jnp.float32)
    o_ref[...] = o + bl_ref[...]                               # [2, B]


# ---------------------------------------------------------------------------
# Kernel wrappers
# ---------------------------------------------------------------------------
def conv_pool_matmul(a, w2d, b, *, relu, tile_m=1024):
    """a: [P, K, M] bf16, w2d: [Cout, K] bf16, b: [Cout, 1] f32 -> [Cout, M] f32."""
    P, K, M = a.shape
    Cout = w2d.shape[0]
    tm = M if M <= tile_m else tile_m          # full dim or 128-aligned tile
    grid = (pl.cdiv(M, tm),)
    return pl.pallas_call(
        functools.partial(_conv_pool_kernel, n_phase=P, relu=relu),
        out_shape=jax.ShapeDtypeStruct((Cout, M), jnp.float32),
        grid=grid,
        in_specs=[
            pl.BlockSpec((P, K, tm), lambda m: (0, 0, m)),
            pl.BlockSpec((Cout, K), lambda m: (0, 0)),
            pl.BlockSpec((Cout, 1), lambda m: (0, 0)),
        ],
        out_specs=pl.BlockSpec((Cout, tm), lambda m: (0, m)),
        compiler_params=pltpu.CompilerParams(
            dimension_semantics=("parallel",)),
    )(a, w2d, b)


def _im2col_phases(x_cf, kh, kw, stride, pool):
    """x_cf: [C, B, H, W] -> A: [pool*pool, kh*kw*C, B*Hp*Wp] bf16.

    Row order of A is (i, j, ci); column order is (b, hp, wp).  Built purely
    from strided slices + concat + reshape (no transposes).
    """
    C, B, H, W = x_cf.shape
    Ho = (H - kh) // stride + 1
    Wo = (W - kw) // stride + 1
    Hp, Wp = Ho // pool, Wo // pool
    step = stride * pool
    phases = []
    for dy in range(pool):
        for dx in range(pool):
            taps = []
            for i in range(kh):
                for j in range(kw):
                    h0 = dy * stride + i
                    w0 = dx * stride + j
                    sl = x_cf[:, :, h0:h0 + step * Hp:step,
                              w0:w0 + step * Wp:step]        # [C, B, Hp, Wp]
                    taps.append(sl.reshape(C, B * Hp * Wp))
            phases.append(jnp.concatenate(taps, axis=0))     # [K, Mp]
    a = jnp.stack(phases, axis=0)                            # [P, K, Mp]
    return a.astype(jnp.bfloat16), Hp, Wp


def conv_relu_pool(x_cf, w, b, *, stride):
    """Conv2d(stride) + ReLU + MaxPool2d(2), channels-first [C,B,H,W] layout."""
    Cout, Cin, kh, kw = w.shape
    B = x_cf.shape[1]
    a, Hp, Wp = _im2col_phases(x_cf, kh, kw, stride, pool=2)
    # weight as [Cout, K] with K ordered (i, j, ci) to match A's rows
    w2d = w.transpose(0, 2, 3, 1).reshape(Cout, kh * kw * Cin).astype(jnp.bfloat16)
    y = conv_pool_matmul(a, w2d, b.reshape(Cout, 1), relu=True)   # [Cout, B*Hp*Wp]
    return y.reshape(Cout, B, Hp, Wp)


def conv5_linear(x_cf, w5, b5, wl, bl):
    """conv5 (5x5 kernel on a 5x5 map == full flatten) + Linear, one kernel."""
    C, B, H, W = x_cf.shape                                   # [64, B, 5, 5]
    Cout = w5.shape[0]
    a5 = x_cf.transpose(2, 3, 0, 1).reshape(H * W * C, B).astype(jnp.bfloat16)
    w5m = w5.transpose(0, 2, 3, 1).reshape(Cout, H * W * C).astype(jnp.bfloat16)
    out = pl.pallas_call(
        _head_kernel,
        out_shape=jax.ShapeDtypeStruct((wl.shape[0], B), jnp.float32),
        in_specs=[pl.BlockSpec(memory_space=pltpu.MemorySpace.VMEM)] * 5,
        out_specs=pl.BlockSpec(memory_space=pltpu.MemorySpace.VMEM),
    )(a5, w5m, b5.reshape(Cout, 1), wl, bl.reshape(-1, 1))
    return out.T                                              # [B, 2]


# ---------------------------------------------------------------------------
# Parameters (deterministic, matching the PyTorch __init__)
# ---------------------------------------------------------------------------
def init_params(key):
    def conv_w(k, cout, cin, kh, kw):
        # kaiming_normal_(mode='fan_out'): std = sqrt(2 / (cout * kh * kw))
        std = (2.0 / (cout * kh * kw)) ** 0.5
        return jax.random.normal(k, (cout, cin, kh, kw), jnp.float32) * std

    ks = jax.random.split(key, 6)
    return {
        "w1": conv_w(ks[0], 8, 1, 5, 5),   "b1": jnp.zeros((8,), jnp.float32),
        "w2": conv_w(ks[1], 16, 8, 3, 3),  "b2": jnp.zeros((16,), jnp.float32),
        "w3": conv_w(ks[2], 32, 16, 3, 3), "b3": jnp.zeros((32,), jnp.float32),
        "w4": conv_w(ks[3], 64, 32, 3, 3), "b4": jnp.zeros((64,), jnp.float32),
        "w5": conv_w(ks[4], 64, 64, 5, 5), "b5": jnp.zeros((64,), jnp.float32),
        # nn.Linear(64, 2): weight ~ N(0, 0.01), bias zeros
        "wl": jax.random.normal(ks[5], (2, 64), jnp.float32) * 0.01,
        "bl": jnp.zeros((2,), jnp.float32),
    }


# ---------------------------------------------------------------------------
# Forward pass (mirrors CNN.forward)
# ---------------------------------------------------------------------------
@jax.jit
def cnn_forward(x, params):
    B, Cin, H, W = x.shape
    # Cin == 1, so NCHW -> [Cin, B, H, W] is a free reshape (no data movement).
    x_cf = x.reshape(Cin, B, H, W)
    x_cf = conv_relu_pool(x_cf, params["w1"], params["b1"], stride=2)  # [8,B,55,55]
    x_cf = conv_relu_pool(x_cf, params["w2"], params["b2"], stride=1)  # [16,B,26,26]
    x_cf = conv_relu_pool(x_cf, params["w3"], params["b3"], stride=1)  # [32,B,12,12]
    x_cf = conv_relu_pool(x_cf, params["w4"], params["b4"], stride=1)  # [64,B,5,5]
    return conv5_linear(x_cf, params["w5"], params["b5"],
                        params["wl"], params["bl"])                    # [B, 2]


if __name__ == "__main__":
    key = jax.random.PRNGKey(0)
    pkey, xkey = jax.random.split(key)
    params = init_params(pkey)
    # The architecture requires a 224x224 single-channel input so that conv5
    # sees exactly a 5x5 map (Linear expects 64*1*1 features).  Batch = 2.
    x = jax.random.normal(xkey, (2, 1, 224, 224), jnp.float32)

    out = cnn_forward(x, params)
    jax.block_until_ready(out)
    assert out.shape == (2, 2), out.shape
    print("KERNEL_OK")
</pallas_src>

<mosaic_0001>
module attributes {stable_mosaic.version = 11 : i64} {
  func.func @_conv_pool_kernel(%arg0: i32, %arg1: memref<4x25x1024xbf16, #tpu.memory_space<vmem>>, %arg2: memref<8x25xbf16, #tpu.memory_space<vmem>>, %arg3: memref<8x1xf32, #tpu.memory_space<vmem>>, %arg4: memref<8x1024xf32, #tpu.memory_space<vmem>>) attributes {dimension_semantics = [#tpu.dimension_semantics<parallel>], iteration_bounds = array<i64: 6>, scalar_prefetch = 0 : i64, scratch_operands = 0 : i64, tpu.core_type = #tpu.core_type<tc>, window_params = [{transform_indices = @transform_0, window_bounds = array<i64: 4, 25, 1024>}, {pipeline_mode = #tpu.pipeline_mode<synchronous>, transform_indices = @transform_1, window_bounds = array<i64: 8, 25>}, {pipeline_mode = #tpu.pipeline_mode<synchronous>, transform_indices = @transform_2, window_bounds = array<i64: 8, 1>}, {transform_indices = @transform_3, window_bounds = array<i64: 8, 1024>}]} {
    %c0 = arith.constant 0 : index
    %c0_0 = arith.constant 0 : index
    %0 = vector.load %arg2[%c0, %c0_0] : memref<8x25xbf16, #tpu.memory_space<vmem>>, vector<8x25xbf16>
    %c0_1 = arith.constant 0 : index
    %c0_2 = arith.constant 0 : index
    %c0_3 = arith.constant 0 : index
    %1 = vector.load %arg1[%c0_1, %c0_2, %c0_3] : memref<4x25x1024xbf16, #tpu.memory_space<vmem>>, vector<1x25x1024xbf16>
    %2 = vector.shape_cast %1 : vector<1x25x1024xbf16> to vector<25x1024xbf16>
    %cst = arith.constant dense<0.000000e+00> : vector<8x1024xf32>
    %3 = tpu.matmul %0, %2, %cst {dimension_numbers = #tpu.dot_dimension_numbers<[1], [0], [0], [1], [0, 0, 1, 1], [], []>} : vector<8x25xbf16>, vector<25x1024xbf16>, vector<8x1024xf32> -> vector<8x1024xf32>
    %c1 = arith.constant 1 : index
    %c0_4 = arith.constant 0 : index
    %c0_5 = arith.constant 0 : index
    %4 = vector.load %arg1[%c1, %c0_4, %c0_5] : memref<4x25x1024xbf16, #tpu.memory_space<vmem>>, vector<1x25x1024xbf16>
    %5 = vector.shape_cast %4 : vector<1x25x1024xbf16> to vector<25x1024xbf16>
    %cst_6 = arith.constant dense<0.000000e+00> : vector<8x1024xf32>
    %6 = tpu.matmul %0, %5, %cst_6 {dimension_numbers = #tpu.dot_dimension_numbers<[1], [0], [0], [1], [0, 0, 1, 1], [], []>} : vector<8x25xbf16>, vector<25x1024xbf16>, vector<8x1024xf32> -> vector<8x1024xf32>
    %7 = arith.maximumf %3, %6 : vector<8x1024xf32>
    %c2 = arith.constant 2 : index
    %c0_7 = arith.constant 0 : index
    %c0_8 = arith.constant 0 : index
    %8 = vector.load %arg1[%c2, %c0_7, %c0_8] : memref<4x25x1024xbf16, #tpu.memory_space<vmem>>, vector<1x25x1024xbf16>
    %9 = vector.shape_cast %8 : vector<1x25x1024xbf16> to vector<25x1024xbf16>
    %cst_9 = arith.constant dense<0.000000e+00> : vector<8x1024xf32>
    %10 = tpu.matmul %0, %9, %cst_9 {dimension_numbers = #tpu.dot_dimension_numbers<[1], [0], [0], [1], [0, 0, 1, 1], [], []>} : vector<8x25xbf16>, vector<25x1024xbf16>, vector<8x1024xf32> -> vector<8x1024xf32>
    %11 = arith.maximumf %7, %10 : vector<8x1024xf32>
    %c3 = arith.constant 3 : index
    %c0_10 = arith.constant 0 : index
    %c0_11 = arith.constant 0 : index
    %12 = vector.load %arg1[%c3, %c0_10, %c0_11] : memref<4x25x1024xbf16, #tpu.memory_space<vmem>>, vector<1x25x1024xbf16>
    %13 = vector.shape_cast %12 : vector<1x25x1024xbf16> to vector<25x1024xbf16>
    %cst_12 = arith.constant dense<0.000000e+00> : vector<8x1024xf32>
    %14 = tpu.matmul %0, %13, %cst_12 {dimension_numbers = #tpu.dot_dimension_numbers<[1], [0], [0], [1], [0, 0, 1, 1], [], []>} : vector<8x25xbf16>, vector<25x1024xbf16>, vector<8x1024xf32> -> vector<8x1024xf32>
    %15 = arith.maximumf %11, %14 : vector<8x1024xf32>
    %c0_13 = arith.constant 0 : index
    %c0_14 = arith.constant 0 : index
    %16 = vector.load %arg3[%c0_13, %c0_14] : memref<8x1xf32, #tpu.memory_space<vmem>>, vector<8x1xf32>
    %17 = vector.broadcast %16 : vector<8x1xf32> to vector<8x1024xf32>
    %18 = arith.addf %15, %17 : vector<8x1024xf32>
    %cst_15 = arith.constant 0.000000e+00 : f32
    %19 = vector.broadcast %cst_15 : f32 to vector<8x1024xf32>
    %20 = arith.maximumf %18, %19 : vector<8x1024xf32>
    %c0_16 = arith.constant 0 : index
    %c0_17 = arith.constant 0 : index
    %21 = vector.load %arg4[%c0_16, %c0_17] : memref<8x1024xf32, #tpu.memory_space<vmem>>, vector<8x1024xf32>
    tpu.vector_store %arg4[%c0_16, %c0_17], %20 {strides = array<i32>} : memref<8x1024xf32, #tpu.memory_space<vmem>>, vector<8x1024xf32>,
    return
  }
  func.func @transform_0(%arg0: i32) -> (i32, i32, i32) {
    %c0_i32 = arith.constant 0 : i32
    %c0_i32_0 = arith.constant 0 : i32
    %c0_i32_1 = arith.constant 0 : i32
    return %c0_i32, %c0_i32_0, %arg0 : i32, i32, i32
  }
  func.func @transform_1(%arg0: i32) -> (i32, i32) {
    %c0_i32 = arith.constant 0 : i32
    %c0_i32_0 = arith.constant 0 : i32
    %c0_i32_1 = arith.constant 0 : i32
    return %c0_i32, %c0_i32_0 : i32, i32
  }
  func.func @transform_2(%arg0: i32) -> (i32, i32) {
    %c0_i32 = arith.constant 0 : i32
    %c0_i32_0 = arith.constant 0 : i32
    %c0_i32_1 = arith.constant 0 : i32
    return %c0_i32, %c0_i32_0 : i32, i32
  }
  func.func @transform_3(%arg0: i32) -> (i32, i32) {
    %c0_i32 = arith.constant 0 : i32
    %c0_i32_0 = arith.constant 0 : i32
    return %c0_i32, %arg0 : i32, i32
  }
}

module attributes {stable_mosaic.version = 11 : i64} {
  func.func @_conv_pool_kernel(%arg0: i32, %arg1: memref<4x72x1024xbf16, #tpu.memory_space<vmem>>, %arg2: memref<16x72xbf16, #tpu.memory_space<vmem>>, %arg3: memref<16x1xf32, #tpu.memory_space<vmem>>, %arg4: memref<16x1024xf32, #tpu.memory_space<vmem>>) attributes {dimension_semantics = [#tpu.dimension_semantics<parallel>], iteration_bounds = array<i64: 2>, scalar_prefetch = 0 : i64, scratch_operands = 0 : i64, tpu.core_type = #tpu.core_type<tc>, window_params = [{transform_indices = @transform_0, window_bounds = array<i64: 4, 72, 1024>}, {pipeline_mode = #tpu.pipeline_mode<synchronous>, transform_indices = @transform_1, window_bounds = array<i64: 16, 72>}, {pipeline_mode = #tpu.pipeline_mode<synchronous>, transform_indices = @transform_2, window_bounds = array<i64: 16, 1>}, {transform_indices = @transform_3, window_bounds = array<i64: 16, 1024>}]} {
    %c0 = arith.constant 0 : index
    %c0_0 = arith.constant 0 : index
    %0 = vector.load %arg2[%c0, %c0_0] : memref<16x72xbf16, #tpu.memory_space<vmem>>, vector<16x72xbf16>
    %c0_1 = arith.constant 0 : index
    %c0_2 = arith.constant 0 : index
    %c0_3 = arith.constant 0 : index
    %1 = vector.load %arg1[%c0_1, %c0_2, %c0_3] : memref<4x72x1024xbf16, #tpu.memory_space<vmem>>, vector<1x72x1024xbf16>
    %2 = vector.shape_cast %1 : vector<1x72x1024xbf16> to vector<72x1024xbf16>
    %cst = arith.constant dense<0.000000e+00> : vector<16x1024xf32>
    %3 = tpu.matmul %0, %2, %cst {dimension_numbers = #tpu.dot_dimension_numbers<[1], [0], [0], [1], [0, 0, 1, 1], [], []>} : vector<16x72xbf16>, vector<72x1024xbf16>, vector<16x1024xf32> -> vector<16x1024xf32>
    %c1 = arith.constant 1 : index
    %c0_4 = arith.constant 0 : index
    %c0_5 = arith.constant 0 : index
    %4 = vector.load %arg1[%c1, %c0_4, %c0_5] : memref<4x72x1024xbf16, #tpu.memory_space<vmem>>, vector<1x72x1024xbf16>
    %5 = vector.shape_cast %4 : vector<1x72x1024xbf16> to vector<72x1024xbf16>
    %cst_6 = arith.constant dense<0.000000e+00> : vector<16x1024xf32>
    %6 = tpu.matmul %0, %5, %cst_6 {dimension_numbers = #tpu.dot_dimension_numbers<[1], [0], [0], [1], [0, 0, 1, 1], [], []>} : vector<16x72xbf16>, vector<72x1024xbf16>, vector<16x1024xf32> -> vector<16x1024xf32>
    %7 = arith.maximumf %3, %6 : vector<16x1024xf32>
    %c2 = arith.constant 2 : index
    %c0_7 = arith.constant 0 : index
    %c0_8 = arith.constant 0 : index
    %8 = vector.load %arg1[%c2, %c0_7, %c0_8] : memref<4x72x1024xbf16, #tpu.memory_space<vmem>>, vector<1x72x1024xbf16>
    %9 = vector.shape_cast %8 : vector<1x72x1024xbf16> to vector<72x1024xbf16>
    %cst_9 = arith.constant dense<0.000000e+00> : vector<16x1024xf32>
    %10 = tpu.matmul %0, %9, %cst_9 {dimension_numbers = #tpu.dot_dimension_numbers<[1], [0], [0], [1], [0, 0, 1, 1], [], []>} : vector<16x72xbf16>, vector<72x1024xbf16>, vector<16x1024xf32> -> vector<16x1024xf32>
    %11 = arith.maximumf %7, %10 : vector<16x1024xf32>
    %c3 = arith.constant 3 : index
    %c0_10 = arith.constant 0 : index
    %c0_11 = arith.constant 0 : index
    %12 = vector.load %arg1[%c3, %c0_10, %c0_11] : memref<4x72x1024xbf16, #tpu.memory_space<vmem>>, vector<1x72x1024xbf16>
    %13 = vector.shape_cast %12 : vector<1x72x1024xbf16> to vector<72x1024xbf16>
    %cst_12 = arith.constant dense<0.000000e+00> : vector<16x1024xf32>
    %14 = tpu.matmul %0, %13, %cst_12 {dimension_numbers = #tpu.dot_dimension_numbers<[1], [0], [0], [1], [0, 0, 1, 1], [], []>} : vector<16x72xbf16>, vector<72x1024xbf16>, vector<16x1024xf32> -> vector<16x1024xf32>
    %15 = arith.maximumf %11, %14 : vector<16x1024xf32>
    %c0_13 = arith.constant 0 : index
    %c0_14 = arith.constant 0 : index
    %16 = vector.load %arg3[%c0_13, %c0_14] : memref<16x1xf32, #tpu.memory_space<vmem>>, vector<16x1xf32>
    %17 = vector.broadcast %16 : vector<16x1xf32> to vector<16x1024xf32>
    %18 = arith.addf %15, %17 : vector<16x1024xf32>
    %cst_15 = arith.constant 0.000000e+00 : f32
    %19 = vector.broadcast %cst_15 : f32 to vector<16x1024xf32>
    %20 = arith.maximumf %18, %19 : vector<16x1024xf32>
    %c0_16 = arith.constant 0 : index
    %c0_17 = arith.constant 0 : index
    %21 = vector.load %arg4[%c0_16, %c0_17] : memref<16x1024xf32, #tpu.memory_space<vmem>>, vector<16x1024xf32>
    tpu.vector_store %arg4[%c0_16, %c0_17], %20 {strides = array<i32>} : memref<16x1024xf32, #tpu.memory_space<vmem>>, vector<16x1024xf32>,
    return
  }
  func.func @transform_0(%arg0: i32) -> (i32, i32, i32) {
    %c0_i32 = arith.constant 0 : i32
    %c0_i32_0 = arith.constant 0 : i32
    %c0_i32_1 = arith.constant 0 : i32
    return %c0_i32, %c0_i32_0, %arg0 : i32, i32, i32
  }
  func.func @transform_1(%arg0: i32) -> (i32, i32) {
    %c0_i32 = arith.constant 0 : i32
    %c0_i32_0 = arith.constant 0 : i32
    %c0_i32_1 = arith.constant 0 : i32
    return %c0_i32, %c0_i32_0 : i32, i32
  }
  func.func @transform_2(%arg0: i32) -> (i32, i32) {
    %c0_i32 = arith.constant 0 : i32
    %c0_i32_0 = arith.constant 0 : i32
    %c0_i32_1 = arith.constant 0 : i32
    return %c0_i32, %c0_i32_0 : i32, i32
  }
  func.func @transform_3(%arg0: i32) -> (i32, i32) {
    %c0_i32 = arith.constant 0 : i32
    %c0_i32_0 = arith.constant 0 : i32
    return %c0_i32, %arg0 : i32, i32
  }
}

module attributes {stable_mosaic.version = 11 : i64} {
  func.func @_conv_pool_kernel(%arg0: i32, %arg1: memref<4x144x288xbf16, #tpu.memory_space<vmem>>, %arg2: memref<32x144xbf16, #tpu.memory_space<vmem>>, %arg3: memref<32x1xf32, #tpu.memory_space<vmem>>, %arg4: memref<32x288xf32, #tpu.memory_space<vmem>>) attributes {dimension_semantics = [#tpu.dimension_semantics<parallel>], iteration_bounds = array<i64: 1>, scalar_prefetch = 0 : i64, scratch_operands = 0 : i64, tpu.core_type = #tpu.core_type<tc>, window_params = [{transform_indices = @transform_0, window_bounds = array<i64: 4, 144, 288>}, {pipeline_mode = #tpu.pipeline_mode<synchronous>, transform_indices = @transform_1, window_bounds = array<i64: 32, 144>}, {pipeline_mode = #tpu.pipeline_mode<synchronous>, transform_indices = @transform_2, window_bounds = array<i64: 32, 1>}, {transform_indices = @transform_3, window_bounds = array<i64: 32, 288>}]} {
    %c0 = arith.constant 0 : index
    %c0_0 = arith.constant 0 : index
    %0 = vector.load %arg2[%c0, %c0_0] : memref<32x144xbf16, #tpu.memory_space<vmem>>, vector<32x144xbf16>
    %c0_1 = arith.constant 0 : index
    %c0_2 = arith.constant 0 : index
    %c0_3 = arith.constant 0 : index
    %1 = vector.load %arg1[%c0_1, %c0_2, %c0_3] : memref<4x144x288xbf16, #tpu.memory_space<vmem>>, vector<1x144x288xbf16>
    %2 = vector.shape_cast %1 : vector<1x144x288xbf16> to vector<144x288xbf16>
    %cst = arith.constant dense<0.000000e+00> : vector<32x288xf32>
    %3 = tpu.matmul %0, %2, %cst {dimension_numbers = #tpu.dot_dimension_numbers<[1], [0], [0], [1], [0, 0, 1, 1], [], []>} : vector<32x144xbf16>, vector<144x288xbf16>, vector<32x288xf32> -> vector<32x288xf32>
    %c1 = arith.constant 1 : index
    %c0_4 = arith.constant 0 : index
    %c0_5 = arith.constant 0 : index
    %4 = vector.load %arg1[%c1, %c0_4, %c0_5] : memref<4x144x288xbf16, #tpu.memory_space<vmem>>, vector<1x144x288xbf16>
    %5 = vector.shape_cast %4 : vector<1x144x288xbf16> to vector<144x288xbf16>
    %cst_6 = arith.constant dense<0.000000e+00> : vector<32x288xf32>
    %6 = tpu.matmul %0, %5, %cst_6 {dimension_numbers = #tpu.dot_dimension_numbers<[1], [0], [0], [1], [0, 0, 1, 1], [], []>} : vector<32x144xbf16>, vector<144x288xbf16>, vector<32x288xf32> -> vector<32x288xf32>
    %7 = arith.maximumf %3, %6 : vector<32x288xf32>
    %c2 = arith.constant 2 : index
    %c0_7 = arith.constant 0 : index
    %c0_8 = arith.constant 0 : index
    %8 = vector.load %arg1[%c2, %c0_7, %c0_8] : memref<4x144x288xbf16, #tpu.memory_space<vmem>>, vector<1x144x288xbf16>
    %9 = vector.shape_cast %8 : vector<1x144x288xbf16> to vector<144x288xbf16>
    %cst_9 = arith.constant dense<0.000000e+00> : vector<32x288xf32>
    %10 = tpu.matmul %0, %9, %cst_9 {dimension_numbers = #tpu.dot_dimension_numbers<[1], [0], [0], [1], [0, 0, 1, 1], [], []>} : vector<32x144xbf16>, vector<144x288xbf16>, vector<32x288xf32> -> vector<32x288xf32>
    %11 = arith.maximumf %7, %10 : vector<32x288xf32>
    %c3 = arith.constant 3 : index
    %c0_10 = arith.constant 0 : index
    %c0_11 = arith.constant 0 : index
    %12 = vector.load %arg1[%c3, %c0_10, %c0_11] : memref<4x144x288xbf16, #tpu.memory_space<vmem>>, vector<1x144x288xbf16>
    %13 = vector.shape_cast %12 : vector<1x144x288xbf16> to vector<144x288xbf16>
    %cst_12 = arith.constant dense<0.000000e+00> : vector<32x288xf32>
    %14 = tpu.matmul %0, %13, %cst_12 {dimension_numbers = #tpu.dot_dimension_numbers<[1], [0], [0], [1], [0, 0, 1, 1], [], []>} : vector<32x144xbf16>, vector<144x288xbf16>, vector<32x288xf32> -> vector<32x288xf32>
    %15 = arith.maximumf %11, %14 : vector<32x288xf32>
    %c0_13 = arith.constant 0 : index
    %c0_14 = arith.constant 0 : index
    %16 = vector.load %arg3[%c0_13, %c0_14] : memref<32x1xf32, #tpu.memory_space<vmem>>, vector<32x1xf32>
    %17 = vector.broadcast %16 : vector<32x1xf32> to vector<32x288xf32>
    %18 = arith.addf %15, %17 : vector<32x288xf32>
    %cst_15 = arith.constant 0.000000e+00 : f32
    %19 = vector.broadcast %cst_15 : f32 to vector<32x288xf32>
    %20 = arith.maximumf %18, %19 : vector<32x288xf32>
    %c0_16 = arith.constant 0 : index
    %c0_17 = arith.constant 0 : index
    %21 = vector.load %arg4[%c0_16, %c0_17] : memref<32x288xf32, #tpu.memory_space<vmem>>, vector<32x288xf32>
    tpu.vector_store %arg4[%c0_16, %c0_17], %20 {strides = array<i32>} : memref<32x288xf32, #tpu.memory_space<vmem>>, vector<32x288xf32>,
    return
  }
  func.func @transform_0(%arg0: i32) -> (i32, i32, i32) {
    %c0_i32 = arith.constant 0 : i32
    %c0_i32_0 = arith.constant 0 : i32
    %c0_i32_1 = arith.constant 0 : i32
    return %c0_i32, %c0_i32_0, %arg0 : i32, i32, i32
  }
  func.func @transform_1(%arg0: i32) -> (i32, i32) {
    %c0_i32 = arith.constant 0 : i32
    %c0_i32_0 = arith.constant 0 : i32
    %c0_i32_1 = arith.constant 0 : i32
    return %c0_i32, %c0_i32_0 : i32, i32
  }
  func.func @transform_2(%arg0: i32) -> (i32, i32) {
    %c0_i32 = arith.constant 0 : i32
    %c0_i32_0 = arith.constant 0 : i32
    %c0_i32_1 = arith.constant 0 : i32
    return %c0_i32, %c0_i32_0 : i32, i32
  }
  func.func @transform_3(%arg0: i32) -> (i32, i32) {
    %c0_i32 = arith.constant 0 : i32
    %c0_i32_0 = arith.constant 0 : i32
    return %c0_i32, %arg0 : i32, i32
  }
}

module attributes {stable_mosaic.version = 11 : i64} {
  func.func @_conv_pool_kernel(%arg0: i32, %arg1: memref<4x288x50xbf16, #tpu.memory_space<vmem>>, %arg2: memref<64x288xbf16, #tpu.memory_space<vmem>>, %arg3: memref<64x1xf32, #tpu.memory_space<vmem>>, %arg4: memref<64x50xf32, #tpu.memory_space<vmem>>) attributes {dimension_semantics = [#tpu.dimension_semantics<parallel>], iteration_bounds = array<i64: 1>, scalar_prefetch = 0 : i64, scratch_operands = 0 : i64, tpu.core_type = #tpu.core_type<tc>, window_params = [{transform_indices = @transform_0, window_bounds = array<i64: 4, 288, 50>}, {pipeline_mode = #tpu.pipeline_mode<synchronous>, transform_indices = @transform_1, window_bounds = array<i64: 64, 288>}, {pipeline_mode = #tpu.pipeline_mode<synchronous>, transform_indices = @transform_2, window_bounds = array<i64: 64, 1>}, {transform_indices = @transform_3, window_bounds = array<i64: 64, 50>}]} {
    %c0 = arith.constant 0 : index
    %c0_0 = arith.constant 0 : index
    %0 = vector.load %arg2[%c0, %c0_0] : memref<64x288xbf16, #tpu.memory_space<vmem>>, vector<64x288xbf16>
    %c0_1 = arith.constant 0 : index
    %c0_2 = arith.constant 0 : index
    %c0_3 = arith.constant 0 : index
    %1 = vector.load %arg1[%c0_1, %c0_2, %c0_3] : memref<4x288x50xbf16, #tpu.memory_space<vmem>>, vector<1x288x50xbf16>
    %2 = vector.shape_cast %1 : vector<1x288x50xbf16> to vector<288x50xbf16>
    %cst = arith.constant dense<0.000000e+00> : vector<64x50xf32>
    %3 = tpu.matmul %0, %2, %cst {dimension_numbers = #tpu.dot_dimension_numbers<[1], [0], [0], [1], [0, 0, 1, 1], [], []>} : vector<64x288xbf16>, vector<288x50xbf16>, vector<64x50xf32> -> vector<64x50xf32>
    %c1 = arith.constant 1 : index
    %c0_4 = arith.constant 0 : index
    %c0_5 = arith.constant 0 : index
    %4 = vector.load %arg1[%c1, %c0_4, %c0_5] : memref<4x288x50xbf16, #tpu.memory_space<vmem>>, vector<1x288x50xbf16>
    %5 = vector.shape_cast %4 : vector<1x288x50xbf16> to vector<288x50xbf16>
    %cst_6 = arith.constant dense<0.000000e+00> : vector<64x50xf32>
    %6 = tpu.matmul %0, %5, %cst_6 {dimension_numbers = #tpu.dot_dimension_numbers<[1], [0], [0], [1], [0, 0, 1, 1], [], []>} : vector<64x288xbf16>, vector<288x50xbf16>, vector<64x50xf32> -> vector<64x50xf32>
    %7 = arith.maximumf %3, %6 : vector<64x50xf32>
    %c2 = arith.constant 2 : index
    %c0_7 = arith.constant 0 : index
    %c0_8 = arith.constant 0 : index
    %8 = vector.load %arg1[%c2, %c0_7, %c0_8] : memref<4x288x50xbf16, #tpu.memory_space<vmem>>, vector<1x288x50xbf16>
    %9 = vector.shape_cast %8 : vector<1x288x50xbf16> to vector<288x50xbf16>
    %cst_9 = arith.constant dense<0.000000e+00> : vector<64x50xf32>
    %10 = tpu.matmul %0, %9, %cst_9 {dimension_numbers = #tpu.dot_dimension_numbers<[1], [0], [0], [1], [0, 0, 1, 1], [], []>} : vector<64x288xbf16>, vector<288x50xbf16>, vector<64x50xf32> -> vector<64x50xf32>
    %11 = arith.maximumf %7, %10 : vector<64x50xf32>
    %c3 = arith.constant 3 : index
    %c0_10 = arith.constant 0 : index
    %c0_11 = arith.constant 0 : index
    %12 = vector.load %arg1[%c3, %c0_10, %c0_11] : memref<4x288x50xbf16, #tpu.memory_space<vmem>>, vector<1x288x50xbf16>
    %13 = vector.shape_cast %12 : vector<1x288x50xbf16> to vector<288x50xbf16>
    %cst_12 = arith.constant dense<0.000000e+00> : vector<64x50xf32>
    %14 = tpu.matmul %0, %13, %cst_12 {dimension_numbers = #tpu.dot_dimension_numbers<[1], [0], [0], [1], [0, 0, 1, 1], [], []>} : vector<64x288xbf16>, vector<288x50xbf16>, vector<64x50xf32> -> vector<64x50xf32>
    %15 = arith.maximumf %11, %14 : vector<64x50xf32>
    %c0_13 = arith.constant 0 : index
    %c0_14 = arith.constant 0 : index
    %16 = vector.load %arg3[%c0_13, %c0_14] : memref<64x1xf32, #tpu.memory_space<vmem>>, vector<64x1xf32>
    %17 = vector.broadcast %16 : vector<64x1xf32> to vector<64x50xf32>
    %18 = arith.addf %15, %17 : vector<64x50xf32>
    %cst_15 = arith.constant 0.000000e+00 : f32
    %19 = vector.broadcast %cst_15 : f32 to vector<64x50xf32>
    %20 = arith.maximumf %18, %19 : vector<64x50xf32>
    %c0_16 = arith.constant 0 : index
    %c0_17 = arith.constant 0 : index
    %21 = vector.load %arg4[%c0_16, %c0_17] : memref<64x50xf32, #tpu.memory_space<vmem>>, vector<64x50xf32>
    tpu.vector_store %arg4[%c0_16, %c0_17], %20 {strides = array<i32>} : memref<64x50xf32, #tpu.memory_space<vmem>>, vector<64x50xf32>,
    return
  }
  func.func @transform_0(%arg0: i32) -> (i32, i32, i32) {
    %c0_i32 = arith.constant 0 : i32
    %c0_i32_0 = arith.constant 0 : i32
    %c0_i32_1 = arith.constant 0 : i32
    return %c0_i32, %c0_i32_0, %arg0 : i32, i32, i32
  }
  func.func @transform_1(%arg0: i32) -> (i32, i32) {
    %c0_i32 = arith.constant 0 : i32
    %c0_i32_0 = arith.constant 0 : i32
    %c0_i32_1 = arith.constant 0 : i32
    return %c0_i32, %c0_i32_0 : i32, i32
  }
  func.func @transform_2(%arg0: i32) -> (i32, i32) {
    %c0_i32 = arith.constant 0 : i32
    %c0_i32_0 = arith.constant 0 : i32
    %c0_i32_1 = arith.constant 0 : i32
    return %c0_i32, %c0_i32_0 : i32, i32
  }
  func.func @transform_3(%arg0: i32) -> (i32, i32) {
    %c0_i32 = arith.constant 0 : i32
    %c0_i32_0 = arith.constant 0 : i32
    return %c0_i32, %arg0 : i32, i32
  }
}

module attributes {stable_mosaic.version = 11 : i64} {
  func.func @_head_kernel(%arg0: memref<1600x2xbf16, #tpu.memory_space<vmem>>, %arg1: memref<64x1600xbf16, #tpu.memory_space<vmem>>, %arg2: memref<64x1xf32, #tpu.memory_space<vmem>>, %arg3: memref<2x64xf32, #tpu.memory_space<vmem>>, %arg4: memref<2x1xf32, #tpu.memory_space<vmem>>, %arg5: memref<2x2xf32, #tpu.memory_space<vmem>>) attributes {dimension_semantics = [], scalar_prefetch = 0 : i64, scratch_operands = 0 : i64, tpu.core_type = #tpu.core_type<tc>} {
    %c0 = arith.constant 0 : index
    %c0_0 = arith.constant 0 : index
    %0 = vector.load %arg1[%c0, %c0_0] : memref<64x1600xbf16, #tpu.memory_space<vmem>>, vector<64x1600xbf16>
    %c0_1 = arith.constant 0 : index
    %c0_2 = arith.constant 0 : index
    %1 = vector.load %arg0[%c0_1, %c0_2] : memref<1600x2xbf16, #tpu.memory_space<vmem>>, vector<1600x2xbf16>
    %cst = arith.constant dense<0.000000e+00> : vector<64x2xf32>
    %2 = tpu.matmul %0, %1, %cst {dimension_numbers = #tpu.dot_dimension_numbers<[1], [0], [0], [1], [0, 0, 1, 1], [], []>} : vector<64x1600xbf16>, vector<1600x2xbf16>, vector<64x2xf32> -> vector<64x2xf32>
    %c0_3 = arith.constant 0 : index
    %c0_4 = arith.constant 0 : index
    %3 = vector.load %arg2[%c0_3, %c0_4] : memref<64x1xf32, #tpu.memory_space<vmem>>, vector<64x1xf32>
    %4 = vector.broadcast %3 : vector<64x1xf32> to vector<64x2xf32>
    %5 = arith.addf %2, %4 : vector<64x2xf32>
    %c0_5 = arith.constant 0 : index
    %c0_6 = arith.constant 0 : index
    %6 = vector.load %arg3[%c0_5, %c0_6] : memref<2x64xf32, #tpu.memory_space<vmem>>, vector<2x64xf32>
    %cst_7 = arith.constant dense<0.000000e+00> : vector<2x2xf32>
    %7 = tpu.matmul %6, %5, %cst_7 {dimension_numbers = #tpu.dot_dimension_numbers<[1], [0], [0], [1], [0, 0, 1, 1], [], []>} : vector<2x64xf32>, vector<64x2xf32>, vector<2x2xf32> -> vector<2x2xf32>
    %c0_8 = arith.constant 0 : index
    %c0_9 = arith.constant 0 : index
    %8 = vector.load %arg4[%c0_8, %c0_9] : memref<2x1xf32, #tpu.memory_space<vmem>>, vector<2x1xf32>
    %9 = vector.broadcast %8 : vector<2x1xf32> to vector<2x2xf32>
    %10 = arith.addf %7, %9 : vector<2x2xf32>
    %c0_10 = arith.constant 0 : index
    %c0_11 = arith.constant 0 : index
    %11 = vector.load %arg5[%c0_10, %c0_11] : memref<2x2xf32, #tpu.memory_space<vmem>>, vector<2x2xf32>
    tpu.vector_store %arg5[%c0_10, %c0_11], %10 {strides = array<i32>} : memref<2x2xf32, #tpu.memory_space<vmem>>, vector<2x2xf32>,
    return
  }
}

</mosaic_0001>

<llo_original>
// kernel: cnn_forward.5
$region0: #{cnn_forward.5}
  #allocation0 [shape = 'u32[]', space=smem, size = 0x4, offset = 0x4, fixed_abs, tag = 'smem constant byte address 0x4 - core index']
  #allocation1 [shape = 'u32[144,128]{1,0:T(1,128)}', space=vmem, size = 0x12000, scoped, tag = 'internal scratch']
  %s0 = inlined_call_operand.vmem [shape: bf16[4,25,6050], index: 0, kind: input, shape index: {}]
  %s1 = inlined_call_operand.vmem [shape: bf16[8,25], index: 1, kind: input, shape index: {}]
  %s2 = inlined_call_operand.vmem [shape: f32[8,1], index: 2, kind: input, shape index: {}]
  %s3 = inlined_call_operand.vmem [shape: f32[8,6050], index: 3, kind: output, shape index: {}]
  %s4 = sld [smem:[#allocation0]]
  $region68: #{cnn_forward.5} parent=0
    _
  %s6 = ssub.s32 1, %s4
  %s7 = scalar_select 0, %s6, %s4
  $region1: #{cnn_forward.5} parent=0
    #allocation2 [shape = 'u8[524288]{0}', space=vmem, size = 0x80000, scoped, tag = 'input window, operand 0']
    loop: start=0, step=1, limit=8
    $region2: #{cnn_forward.5} parent=1 // loop_pre_header
      _
    $region3: #{cnn_forward.5} parent=1 // loop_header
      %s9 = sphi 0, %s13
      %p10 = scmp.ge.s32.totalorder %s9, 8
      %s19 = sphi 0, %s21
      %s22 = sphi 0, %s19
      %s23 = sphi 0, %s22
      %s39 = sphi 0, %s23
      %s43 = sphi 0, %s43
      %s45 = sphi 0, %s43
      %s46 = sphi 0, %s45
      %s60 = sphi 0, %s46
      %s64 = sphi 0, %s64
      %s66 = sphi 0, %s64
      %s67 = sphi 0, %s66
      %s81 = sphi 0, %s67
      %s87 = sphi 0, %s89
      %s90 = sphi 0, %s87
      %s91 = sphi 0, %s90
      %s107 = sphi 0, %s91
    $region4: #{cnn_forward.5} parent=1 // loop_header_branch
      %12 = sbr.rel (%p10) target = $region8
    $region5: #{cnn_forward.5} parent=1 // loop_body
      %s14 = ssub.s32 %s9, 1
      %s15 = ssub.s32 %s9, 2
      %s16 = sadd.s32 %s9, 1
      %s17 = ssub.s32 %s9, %s16
      %p18 = scmp.eq.s32.totalorder %s17, 0
      %s20 = sadd.s32 %s19, 1
      %s21 = scalar_select %p18, %s19, %s20
      %p24 = pneg %p18
      %p25 = scmp.eq.s32.totalorder %s9, 5
      %p26 = por %p24, %p25
      %p27 = scmp.ne.s32.totalorder %s19, %s22
      %p28 = scmp.eq.s32.totalorder %s9, 0
      %p29 = por %p27, %p28
      %p30 = scmp.ne.s32.totalorder %s19, %s22
      %p31 = scmp.eq.s32.totalorder %s14, 5
      %p32 = por %p30, %p31
      %p33 = scmp.ne.s32.totalorder %s22, %s23
      %p34 = scmp.eq.s32.totalorder %s14, 0
      %p35 = por %p33, %p34
      %p36 = scmp.ne.s32.totalorder %s22, %s23
      %p37 = scmp.eq.s32.totalorder %s15, 5
      %p38 = por %p36, %p37
      %p40 = scmp.ne.s32.totalorder %s23, %s39
      %p41 = scmp.eq.s32.totalorder %s15, 0
      %p42 = por %p40, %p41
      %s44 = sadd.s32 %s43, 1
      %p47 = scmp.eq.s32.totalorder %s9, 5
      %p48 = scmp.ne.s32.totalorder %s43, %s45
      %p49 = scmp.eq.s32.totalorder %s9, 0
      %p50 = por %p48, %p49
      %p51 = scmp.ne.s32.totalorder %s43, %s45
      %p52 = scmp.eq.s32.totalorder %s14, 5
      %p53 = por %p51, %p52
      %p54 = scmp.ne.s32.totalorder %s45, %s46
      %p55 = scmp.eq.s32.totalorder %s14, 0
      %p56 = por %p54, %p55
      %p57 = scmp.ne.s32.totalorder %s45, %s46
      %p58 = scmp.eq.s32.totalorder %s15, 5
      %p59 = por %p57, %p58
      %p61 = scmp.ne.s32.totalorder %s46, %s60
      %p62 = scmp.eq.s32.totalorder %s15, 0
      %p63 = por %p61, %p62
      %s65 = sadd.s32 %s64, 1
      %p68 = scmp.eq.s32.totalorder %s9, 5
      %p69 = scmp.ne.s32.totalorder %s64, %s66
      %p70 = scmp.eq.s32.totalorder %s9, 0
      %p71 = por %p69, %p70
      %p72 = scmp.ne.s32.totalorder %s64, %s66
      %p73 = scmp.eq.s32.totalorder %s14, 5
      %p74 = por %p72, %p73
      %p75 = scmp.ne.s32.totalorder %s66, %s67
      %p76 = scmp.eq.s32.totalorder %s14, 0
      %p77 = por %p75, %p76
      %p78 = scmp.ne.s32.totalorder %s66, %s67
      %p79 = scmp.eq.s32.totalorder %s15, 5
      %p80 = por %p78, %p79
      %p82 = scmp.ne.s32.totalorder %s67, %s81
      %p83 = scmp.eq.s32.totalorder %s15, 0
      %p84 = por %p82, %p83
      %s85 = ssub.s32 %s9, %s16
      %p86 = scmp.eq.s32.totalorder %s85, 0
      %s88 = sadd.s32 %s87, 1
      %s89 = scalar_select %p86, %s87, %s88
      %p92 = pneg %p86
      %p93 = scmp.eq.s32.totalorder %s9, 5
      %p94 = por %p92, %p93
      %p95 = scmp.ne.s32.totalorder %s87, %s90
      %p96 = scmp.eq.s32.totalorder %s9, 0
      %p97 = por %p95, %p96
      %p98 = scmp.ne.s32.totalorder %s87, %s90
      %p99 = scmp.eq.s32.totalorder %s14, 5
      %p100 = por %p98, %p99
      %p101 = scmp.ne.s32.totalorder %s90, %s91
      %p102 = scmp.eq.s32.totalorder %s14, 0
      %p103 = por %p101, %p102
      %p104 = scmp.ne.s32.totalorder %s90, %s91
      %p105 = scmp.eq.s32.totalorder %s15, 5
      %p106 = por %p104, %p105
      %p108 = scmp.ne.s32.totalorder %s91, %s107
      %p109 = scmp.eq.s32.totalorder %s15, 0
      %p110 = por %p108, %p109
      %p111 = scmp.le.s32.totalorder 1, %s9
      %p112 = scmp.lt.s32.totalorder %s9, 7
      %p113 = pnand %p111, %p112
      %p114 = pneg %p113
      // Predicated region
      $region9: #{cnn_forward.5} parent=5 // pred_check
        _
      $region10: #{cnn_forward.5} parent=5 // pred_check_branch
        %116 = sbr.rel (%p113) target = $region12
      $region11: #{cnn_forward.5} parent=5 // pred_region
        %s117 = ssub.s32 %s9, 1
        // Predicated region
        $region13: #{cnn_forward.5} parent=11 // pred_check
          %p118 = pneg %p56
        $region14: #{cnn_forward.5} parent=11 // pred_check_branch
          %120 = sbr.rel (%p118) target = $region16
        $region15: #{cnn_forward.5} parent=11 // pred_region
          _
        $region16: #{cnn_forward.5} parent=11 // pred_fallthru
          _
        // Predicated region
        $region17: #{cnn_forward.5} parent=11 // pred_check
          %p121 = pneg %p77
        $region18: #{cnn_forward.5} parent=11 // pred_check_branch
          %123 = sbr.rel (%p121) target = $region20
        $region19: #{cnn_forward.5} parent=11 // pred_region
          _
        $region20: #{cnn_forward.5} parent=11 // pred_fallthru
          _
      $region12: #{cnn_forward.5} parent=5 // pred_fallthru
        _
      %p124 = scmp.lt.s32.totalorder %s9, 6
      // Predicated region
      $region21: #{cnn_forward.5} parent=5 // pred_check
        %p125 = pneg %p124
      $region22: #{cnn_forward.5} parent=5 // pred_check_branch
        %127 = sbr.rel (%p125) target = $region24
      $region23: #{cnn_forward.5} parent=5 // pred_region
        // Predicated region
        $region25: #{cnn_forward.5} parent=23 // pred_check
          %p128 = pneg %p29
        $region26: #{cnn_forward.5} parent=23 // pred_check_branch
          %130 = sbr.rel (%p128) target = $region28
        $region27: #{cnn_forward.5} parent=23 // pred_region
          %s131 = sand.u32 %s19, 1
          %s132 = sand.u32 %s19, 1
          %s133 = smul.addr %s132, 512
          %s134 = scalar_lea.vmem [#allocation2], %s133
          %s135 = smul.u32 8, %s9
          %s136 = smul.addr %s135, 4
          %s137 = scalar_lea.vmem %s0, %s136
          // Predicated region
          $region29: #{cnn_forward.5} parent=27 // pred_check
            _
          $region30: #{cnn_forward.5} parent=27 // pred_check_branch
            %139 = sbr.rel (0) target = $region32
          $region31: #{cnn_forward.5} parent=27 // pred_region
            // Predicated region
            $region33: #{cnn_forward.5} parent=31 // pred_check
              _
            $region34: #{cnn_forward.5} parent=31 // pred_check_branch
              %141 = sbr.rel (0) target = $region36
            $region35: #{cnn_forward.5} parent=31 // pred_region
              loop: start=0, step=1, limit=1
              $region37: #{cnn_forward.5} parent=35 // loop_pre_header
                _
              $region38: #{cnn_forward.5} parent=35 // loop_header
                %s143 = sphi 0, %s147
                %p144 = scmp.ge.s32.totalorder %s143, 1
                %s148 = sphi %s137, %s137
                %s149 = sphi %s134, %s134
              $region39: #{cnn_forward.5} parent=35 // loop_header_branch
                %146 = sbr.rel (%p144) target = $region43
              $region40: #{cnn_forward.5} parent=35 // loop_body
                %v150 = vld [vmem:[%s148] sm:$0xff]
                %151 = vst [vmem:[%s149] sm:$0xff] %v150
                %v152 = vld [vmem:[%s148 + $0x8] sm:$0xff]
                %153 = vst [vmem:[%s149 + $0x8] sm:$0xff] %v152
                %v154 = vld [vmem:[%s148 + $0x10] sm:$0xff]
                %155 = vst [vmem:[%s149 + $0x10] sm:$0xff] %v154
                %v156 = vld [vmem:[%s148 + $0x18] sm:$0xff]
                %157 = vst [vmem:[%s149 + $0x18] sm:$0xff] %v156
                %v158 = vld [vmem:[%s148 + $0xc0] sm:$0xff]
                %159 = vst [vmem:[%s149 + $0x20] sm:$0xff] %v158
                %v160 = vld [vmem:[%s148 + $0xc8] sm:$0xff]
                %161 = vst [vmem:[%s149 + $0x28] sm:$0xff] %v160
                %v162 = vld [vmem:[%s148 + $0xd0] sm:$0xff]
                %163 = vst [vmem:[%s149 + $0x30] sm:$0xff] %v162
                %v164 = vld [vmem:[%s148 + $0xd8] sm:$0xff]
                %165 = vst [vmem:[%s149 + $0x38] sm:$0xff] %v164
                %v166 = vld [vmem:[%s148 + $0x180] sm:$0xff]
                %167 = vst [vmem:[%s149 + $0x40] sm:$0xff] %v166
                %v168 = vld [vmem:[%s148 + $0x188] sm:$0xff]
                %169 = vst [vmem:[%s149 + $0x48] sm:$0xff] %v168
                %v170 = vld [vmem:[%s148 + $0x190] sm:$0xff]
                %171 = vst [vmem:[%s149 + $0x50] sm:$0xff] %v170
                %v172 = vld [vmem:[%s148 + $0x198] sm:$0xff]
                %173 = vst [vmem:[%s149 + $0x58] sm:$0xff] %v172
                %v174 = vld [vmem:[%s148 + $0x240] sm:$0xff]
                %175 = vst [vmem:[%s149 + $0x60] sm:$0xff] %v174
                %v176 = vld [vmem:[%s148 + $0x248] sm:$0xff]
                %177 = vst [vmem:[%s149 + $0x68] sm:$0xff] %v176
                %v178 = vld [vmem:[%s148 + $0x250] sm:$0xff]
                %179 = vst [vmem:[%s149 + $0x70] sm:$0xff] %v178
                %v180 = vld [vmem:[%s148 + $0x258] sm:$0xff]
                %181 = vst [vmem:[%s149 + $0x78] sm:$0xff] %v180
                %v182 = vld [vmem:[%s148 + $0x300] sm:$0xff]
                %183 = vst [vmem:[%s149 + $0x80] sm:$0xff] %v182
                %v184 = vld [vmem:[%s148 + $0x308] sm:$0xff]
                %185 = vst [vmem:[%s149 + $0x88] sm:$0xff] %v184
                %v186 = vld [vmem:[%s148 + $0x310] sm:$0xff]
                %187 = vst [vmem:[%s149 + $0x90] sm:$0xff] %v186
                %v188 = vld [vmem:[%s148 + $0x318] sm:$0xff]
                %189 = vst [vmem:[%s149 + $0x98] sm:$0xff] %v188
                %v190 = vld [vmem:[%s148 + $0x3c0] sm:$0xff]
                %191 = vst [vmem:[%s149 + $0xa0] sm:$0xff] %v190
                %v192 = vld [vmem:[%s148 + $0x3c8] sm:$0xff]
                %193 = vst [vmem:[%s149 + $0xa8] sm:$0xff] %v192
                %v194 = vld [vmem:[%s148 + $0x3d0] sm:$0xff]
                %195 = vst [vmem:[%s149 + $0xb0] sm:$0xff] %v194
                %v196 = vld [vmem:[%s148 + $0x3d8] sm:$0xff]
                %197 = vst [vmem:[%s149 + $0xb8] sm:$0xff] %v196
                %v198 = vld [vmem:[%s148 + $0x480] sm:$0xff]
                %199 = vst [vmem:[%s149 + $0xc0] sm:$0xff] %v198
                %v200 = vld [vmem:[%s148 + $0x488] sm:$0xff]
                %201 = vst [vmem:[%s149 + $0xc8] sm:$0xff] %v200
                %v202 = vld [vmem:[%s148 + $0x490] sm:$0xff]
                %203 = vst [vmem:[%s149 + $0xd0] sm:$0xff] %v202
                %v204 = vld [vmem:[%s148 + $0x498] sm:$0xff]
                %205 = vst [vmem:[%s149 + $0xd8] sm:$0xff] %v204
                %v206 = vld [vmem:[%s148 + $0x540] sm:$0xff]
                %207 = vst [vmem:[%s149 + $0xe0] sm:$0xff] %v206
                %v208 = vld [vmem:[%s148 + $0x548] sm:$0xff]
                %209 = vst [vmem:[%s149 + $0xe8] sm:$0xff] %v208
                %v210 = vld [vmem:[%s148 + $0x550] sm:$0xff]
                %211 = vst [vmem:[%s149 + $0xf0] sm:$0xff] %v210
                %v212 = vld [vmem:[%s148 + $0x558] sm:$0xff]
                %213 = vst [vmem:[%s149 + $0xf8] sm:$0xff] %v212
                %v214 = vld [vmem:[%s148 + $0x600] sm:$0xff]
                %215 = vst [vmem:[%s149 + $0x100] sm:$0xff] %v214
                %v216 = vld [vmem:[%s148 + $0x608] sm:$0xff]
                %217 = vst [vmem:[%s149 + $0x108] sm:$0xff] %v216
                %v218 = vld [vmem:[%s148 + $0x610] sm:$0xff]
                %219 = vst [vmem:[%s149 + $0x110] sm:$0xff] %v218
                %v220 = vld [vmem:[%s148 + $0x618] sm:$0xff]
                %221 = vst [vmem:[%s149 + $0x118] sm:$0xff] %v220
                %v222 = vld [vmem:[%s148 + $0x6c0] sm:$0xff]
                %223 = vst [vmem:[%s149 + $0x120] sm:$0xff] %v222
                %v224 = vld [vmem:[%s148 + $0x6c8] sm:$0xff]
                %225 = vst [vmem:[%s149 + $0x128] sm:$0xff] %v224
                %v226 = vld [vmem:[%s148 + $0x6d0] sm:$0xff]
                %227 = vst [vmem:[%s149 + $0x130] sm:$0xff] %v226
                %v228 = vld [vmem:[%s148 + $0x6d8] sm:$0xff]
                %229 = vst [vmem:[%s149 + $0x138] sm:$0xff] %v228
                %v230 = vld [vmem:[%s148 + $0x780] sm:$0xff]
                %231 = vst [vmem:[%s149 + $0x140] sm:$0xff] %v230
                %v232 = vld [vmem:[%s148 + $0x788] sm:$0xff]
                %233 = vst [vmem:[%s149 + $0x148] sm:$0xff] %v232
                %v234 = vld [vmem:[%s148 + $0x790] sm:$0xff]
                %235 = vst [vmem:[%s149 + $0x150] sm:$0xff] %v234
                %v236 = vld [vmem:[%s148 + $0x798] sm:$0xff]
                %237 = vst [vmem:[%s149 + $0x158] sm:$0xff] %v236
                %v238 = vld [vmem:[%s148 + $0x840] sm:$0xff]
                %239 = vst [vmem:[%s149 + $0x160] sm:$0xff] %v238
                %v240 = vld [vmem:[%s148 + $0x848] sm:$0xff]
                %241 = vst [vmem:[%s149 + $0x168] sm:$0xff] %v240
                %v242 = vld [vmem:[%s148 + $0x850] sm:$0xff]
                %243 = vst [vmem:[%s149 + $0x170] sm:$0xff] %v242
                %v244 = vld [vmem:[%s148 + $0x858] sm:$0xff]
                %245 = vst [vmem:[%s149 + $0x178] sm:$0xff] %v244
                %v246 = vld [vmem:[%s148 + $0x900] sm:$0xff]
                %247 = vst [vmem:[%s149 + $0x180] sm:$0xff] %v246
                %v248 = vld [vmem:[%s148 + $0x908] sm:$0xff]
                %249 = vst [vmem:[%s149 + $0x188] sm:$0xff] %v248
                %v250 = vld [vmem:[%s148 + $0x910] sm:$0xff]
                %251 = vst [vmem:[%s149 + $0x190] sm:$0xff] %v250
                %v252 = vld [vmem:[%s148 + $0x918] sm:$0xff]
                %253 = vst [vmem:[%s149 + $0x198] sm:$0xff] %v252
                %v254 = vld [vmem:[%s148 + $0x9c0] sm:$0xff]
                %255 = vst [vmem:[%s149 + $0x1a0] sm:$0xff] %v254
                %v256 = vld [vmem:[%s148 + $0x9c8] sm:$0xff]
                %257 = vst [vmem:[%s149 + $0x1a8] sm:$0xff] %v256
                %v258 = vld [vmem:[%s148 + $0x9d0] sm:$0xff]
                %259 = vst [vmem:[%s149 + $0x1b0] sm:$0xff] %v258
                %v260 = vld [vmem:[%s148 + $0x9d8] sm:$0xff]
                %261 = vst [vmem:[%s149 + $0x1b8] sm:$0xff] %v260
                %v262 = vld [vmem:[%s148 + $0xa80] sm:$0xff]
                %263 = vst [vmem:[%s149 + $0x1c0] sm:$0xff] %v262
                %v264 = vld [vmem:[%s148 + $0xa88] sm:$0xff]
                %265 = vst [vmem:[%s149 + $0x1c8] sm:$0xff] %v264
                %v266 = vld [vmem:[%s148 + $0xa90] sm:$0xff]
                %267 = vst [vmem:[%s149 + $0x1d0] sm:$0xff] %v266
                %v268 = vld [vmem:[%s148 + $0xa98] sm:$0xff]
                %269 = vst [vmem:[%s149 + $0x1d8] sm:$0xff] %v268
                %v270 = vld [vmem:[%s148 + $0xb40] sm:$0xff]
                %271 = vst [vmem:[%s149 + $0x1e0] sm:$0xff] %v270
                %v272 = vld [vmem:[%s148 + $0xb48] sm:$0xff]
                %273 = vst [vmem:[%s149 + $0x1e8] sm:$0xff] %v272
                %v274 = vld [vmem:[%s148 + $0xb50] sm:$0xff]
                %275 = vst [vmem:[%s149 + $0x1f0] sm:$0xff] %v274
                %v276 = vld [vmem:[%s148 + $0xb58] sm:$0xff]
                %277 = vst [vmem:[%s149 + $0x1f8] sm:$0xff] %v276
              $region41: #{cnn_forward.5} parent=35 // loop_footer
                %s147 = sadd.s32 1, %s143
              $region42: #{cnn_forward.5} parent=35 // loop_footer_branch
                %142 = sbr.rel target = $region38
              $region43: #{cnn_forward.5} parent=35 // loop_exit
                _
            $region36: #{cnn_forward.5} parent=31 // pred_fallthru
              _
            // Predicated region
            $region44: #{cnn_forward.5} parent=31 // pred_check
              _
            $region45: #{cnn_forward.5} parent=31 // pred_check_branch
              %279 = sbr.rel target = $region47
            $region46: #{cnn_forward.5} parent=31 // pred_region
              _
            $region47: #{cnn_forward.5} parent=31 // pred_fallthru
              _
          $region32: #{cnn_forward.5} parent=27 // pred_fallthru
            _
          %280 = vnop
        $region28: #{cnn_forward.5} parent=23 // pred_fallthru
          _
      $region24: #{cnn_forward.5} parent=5 // pred_fallthru
        _
      %p281 = scmp.le.s32.totalorder 1, %s9
      %p282 = scmp.lt.s32.totalorder %s9, 7
      %p283 = pnand %p281, %p282
      %p284 = pneg %p283
      // Predicated region
      $region48: #{cnn_forward.5} parent=5 // pred_check
        _
      $region49: #{cnn_forward.5} parent=5 // pred_check_branch
        %286 = sbr.rel (%p283) target = $region51
      $region50: #{cnn_forward.5} parent=5 // pred_region
        %s287 = ssub.s32 %s9, 1
        %s288 = sand.u32 %s22, 1
        %s289 = sand.u32 %s22, 1
        %s290 = smul.addr %s289, 512
        %s291 = scalar_lea.vmem [#allocation2], %s290
        // Predicated region
        $region52: #{cnn_forward.5} parent=50 // pred_check
          %p292 = pneg %p35
        $region53: #{cnn_forward.5} parent=50 // pred_check_branch
          %294 = sbr.rel (%p292) target = $region55
        $region54: #{cnn_forward.5} parent=50 // pred_region
          _
        $region55: #{cnn_forward.5} parent=50 // pred_fallthru
          _
        %s295 = sand.u32 %s22, 1
        %s296 = sand.u32 %s22, 1
        %s297 = smul.addr %s296, 512
        %s298 = scalar_lea.vmem [#allocation2], %s297
        %p299 = pneg %p35
        %p300 = pneg %p32
        %p301 = pneg %p56
        %p302 = pneg %p53
        %p303 = pneg %p77
        %p304 = pneg %p74
        %p305 = pneg %p103
        %p306 = pneg %p100
        %s307 = smul.u32 8, %s14
        %p308 = scmp.lt.s32.totalorder %s307, 47
        %s309 = scalar_select %p308, %s307, 47
        %s310 = smul.addr %s309, 8
        %s311 = scalar_lea.vmem %s3, %s310
        %s312 = smul.u32 8, %s14
        %s313 = smul.u32 8, %s14
        %p314 = scmp.lt.s32.totalorder %s313, 47
        %s315 = scalar_select %p314, %s313, 47
        %s316 = smul.addr %s315, 8
        %s317 = scalar_lea.vmem %s3, %s316
        %s318 = smul.u32 8, %s14
        %v320 = vld [vmem:[%s1] sm:$0xf]
        %v321 = vld [vmem:[%s291] sm:$0xff]
        %v322 = vld [vmem:[%s291 + $0x8] sm:$0xff]
        %v323 = vld [vmem:[%s291 + $0x10] sm:$0xff]
        %v324 = vld [vmem:[%s291 + $0x18] sm:$0xff]
        %v325 = vld [vmem:[%s291 + $0x20] sm:$0xff]
        %v326 = vld [vmem:[%s291 + $0x28] sm:$0xff]
        %v327 = vld [vmem:[%s291 + $0x30] sm:$0xff]
        %v328 = vld [vmem:[%s291 + $0x38] sm:$0xff]
        %v329 = vld [vmem:[%s291 + $0x40] sm:$0xff]
        %v330 = vld [vmem:[%s291 + $0x48] sm:$0xff]
        %v331 = vld [vmem:[%s291 + $0x50] sm:$0xff]
        %v332 = vld [vmem:[%s291 + $0x58] sm:$0xff]
        %v333 = vld [vmem:[%s291 + $0x60] sm:$0x11]
        %v334 = vld [vmem:[%s291 + $0x68] sm:$0x11]
        %v335 = vld [vmem:[%s291 + $0x70] sm:$0x11]
        %v336 = vld [vmem:[%s291 + $0x78] sm:$0x11]
        %v353 = vunpack.c.l.b16 %v321
        %v354 = vunpack.c.h.b16 %v321
        %v355 = vunpack.c.l.b16 %v322
        %v356 = vunpack.c.h.b16 %v322
        %v357 = vunpack.c.l.b16 %v323
        %v358 = vunpack.c.h.b16 %v323
        %v359 = vunpack.c.l.b16 %v324
        %v360 = vunpack.c.h.b16 %v324
        %v361 = vunpack.c.l.b16 %v325
        %v362 = vunpack.c.h.b16 %v325
        %v363 = vunpack.c.l.b16 %v326
        %v364 = vunpack.c.h.b16 %v326
        %v365 = vunpack.c.l.b16 %v327
        %v366 = vunpack.c.h.b16 %v327
        %v367 = vunpack.c.l.b16 %v328
        %v368 = vunpack.c.h.b16 %v328
        %v369 = vunpack.c.l.b16 %v329
        %v370 = vunpack.c.h.b16 %v329
        %v371 = vunpack.c.l.b16 %v330
        %v372 = vunpack.c.h.b16 %v330
        %v373 = vunpack.c.l.b16 %v331
        %v374 = vunpack.c.h.b16 %v331
        %v375 = vunpack.c.l.b16 %v332
        %v376 = vunpack.c.h.b16 %v332
        %v377 = vunpack.c.l.b16 %v333
        %v378 = vunpack.c.h.b16 %v333
        %v379 = vunpack.c.l.b16 %v334
        %v380 = vunpack.c.h.b16 %v334
        %v381 = vunpack.c.l.b16 %v335
        %v382 = vunpack.c.h.b16 %v335
        %v383 = vunpack.c.l.b16 %v336
        %v384 = vunpack.c.h.b16 %v336
        %v385 = vpack.c.b16 %v361, %v353
        %v386 = vpack.c.b16 %v362, %v354
        %v387 = vpack.c.b16 %v363, %v355
        %v388 = vpack.c.b16 %v364, %v356
        %v389 = vpack.c.b16 %v365, %v357
        %v390 = vpack.c.b16 %v366, %v358
        %v391 = vpack.c.b16 %v367, %v359
        %v392 = vpack.c.b16 %v368, %v360
        %v393 = vpack.c.b16 %v377, %v369
        %v394 = vpack.c.b16 %v378, %v370
        %v395 = vpack.c.b16 %v379, %v371
        %v396 = vpack.c.b16 %v380, %v372
        %v397 = vpack.c.b16 %v381, %v373
        %v398 = vpack.c.b16 %v382, %v374
        %v399 = vpack.c.b16 %v383, %v375
        %v400 = vpack.c.b16 %v384, %v376
        %vm409 = vcmask 203776
        %v411 = vsel %vm409, %v320, 0
        %vm413 = vcmask 1043456
        %vm414 = vcmask 1044480
        %v415 = vsel %vm413, 4294967295, 65535
        %v416 = vsel %vm414, %v415, 0
        %v418 = vand.u32 %v393, %v416
        %v421 = vand.u32 %v394, %v416
        %v424 = vand.u32 %v395, %v416
        %v427 = vand.u32 %v396, %v416
        %v430 = vand.u32 %v397, %v416
        %v433 = vand.u32 %v398, %v416
        %v436 = vand.u32 %v399, %v416
        %v439 = vand.u32 %v400, %v416
        %441 = vmatprep.subr.bf16.mxu0 %v386
        %442 = vmatpush1.bf16.msra.mxu0 %v385
        %443 = vmatprep.subr.bf16.mxu0 %v421
        %444 = vmatpush1.bf16.msra.mxu0 %v418
        %445 = vmatprep.subr.bf16.mxu0 0
        %446 = vmatpush1.bf16.msra.mxu0 0
        %447 = vmatprep.subr.bf16.mxu0 0
        %448 = vmatpush1.bf16.msra.mxu0 0
        %449 = vmatprep.subr.bf16.mxu0 0
        %450 = vmatpush1.bf16.msra.mxu0 0
        %451 = vmatprep.subr.bf16.mxu0 0
        %452 = vmatpush1.bf16.msra.mxu0 0
        %453 = vmatprep.subr.bf16.mxu0 0
        %454 = vmatpush1.bf16.msra.mxu0 0
        %455 = vmatprep.subr.bf16.mxu0 0
        %456 = vmatpush1.bf16.msra.mxu0 0
        %457 = vmatprep.subr.bf16.mxu0 0
        %458 = vmatpush1.bf16.msra.mxu0 0
        %459 = vmatprep.subr.bf16.mxu0 0
        %460 = vmatpush1.bf16.msra.mxu0 0
        %461 = vmatprep.subr.bf16.mxu0 0
        %462 = vmatpush1.bf16.msra.mxu0 0
        %463 = vmatprep.subr.bf16.mxu0 0
        %464 = vmatpush1.bf16.msra.mxu0 0
        %465 = vmatprep.subr.bf16.mxu0 0
        %466 = vmatpush1.bf16.msra.mxu0 0
        %467 = vmatprep.subr.bf16.mxu0 0
        %468 = vmatpush1.bf16.msra.mxu0 0
        %469 = vmatprep.subr.bf16.mxu0 0
        %470 = vmatpush1.bf16.msra.mxu0 0
        %471 = vmatprep.subr.bf16.mxu0 0
        %472 = vmatpush1.bf16.msra.mxu0 0
        %473 = vmatprep.mubr.bf16.mxu0 0
        %474 = vmatmul.mubr.bf16.gmra.mrb[0].mxu0 %v411
        %v475 = vpop.f32.mrb[0].mxu0
        %v476 = vadd.f32 0.0, %v475
        %v477 = vpop.f32.mrb[0].mxu0
        %v478 = vadd.f32 0.0, %v477
        %v479 = vpop.f32.mrb[0].mxu0
        %v480 = vpop.f32.mrb[0].mxu0
        %481 = vdwg.mxu0
        %482 = vmatprep.subr.bf16.mxu0 %v388
        %483 = vmatpush1.bf16.msra.mxu0 %v387
        %484 = vmatprep.subr.bf16.mxu0 %v427
        %485 = vmatpush1.bf16.msra.mxu0 %v424
        %486 = vmatprep.subr.bf16.mxu0 0
        %487 = vmatpush1.bf16.msra.mxu0 0
        %488 = vmatprep.subr.bf16.mxu0 0
        %489 = vmatpush1.bf16.msra.mxu0 0
        %490 = vmatprep.subr.bf16.mxu0 0
        %491 = vmatpush1.bf16.msra.mxu0 0
        %492 = vmatprep.subr.bf16.mxu0 0
        %493 = vmatpush1.bf16.msra.mxu0 0
        %494 = vmatprep.subr.bf16.mxu0 0
        %495 = vmatpush1.bf16.msra.mxu0 0
        %496 = vmatprep.subr.bf16.mxu0 0
        %497 = vmatpush1.bf16.msra.mxu0 0
        %498 = vmatprep.subr.bf16.mxu0 0
        %499 = vmatpush1.bf16.msra.mxu0 0
        %500 = vmatprep.subr.bf16.mxu0 0
        %501 = vmatpush1.bf16.msra.mxu0 0
        %502 = vmatprep.subr.bf16.mxu0 0
        %503 = vmatpush1.bf16.msra.mxu0 0
        %504 = vmatprep.subr.bf16.mxu0 0
        %505 = vmatpush1.bf16.msra.mxu0 0
        %506 = vmatprep.subr.bf16.mxu0 0
        %507 = vmatpush1.bf16.msra.mxu0 0
        %508 = vmatprep.subr.bf16.mxu0 0
        %509 = vmatpush1.bf16.msra.mxu0 0
        %510 = vmatprep.subr.bf16.mxu0 0
        %511 = vmatpush1.bf16.msra.mxu0 0
        %512 = vmatprep.subr.bf16.mxu0 0
        %513 = vmatpush1.bf16.msra.mxu0 0
        %514 = vmatprep.mubr.bf16.mxu0 0
        %515 = vmatmul.mubr.bf16.gmra.mrb[0].mxu0 %v411
        %v516 = vpop.f32.mrb[0].mxu0
        %v517 = vadd.f32 0.0, %v516
        %v518 = vpop.f32.mrb[0].mxu0
        %v519 = vadd.f32 0.0, %v518
        %v520 = vpop.f32.mrb[0].mxu0
        %v521 = vpop.f32.mrb[0].mxu0
        %522 = vdwg.mxu0
        %523 = vmatprep.subr.bf16.mxu0 %v390
        %524 = vmatpush1.bf16.msra.mxu0 %v389
        %525 = vmatprep.subr.bf16.mxu0 %v433
        %526 = vmatpush1.bf16.msra.mxu0 %v430
        %527 = vmatprep.subr.bf16.mxu0 0
        %528 = vmatpush1.bf16.msra.mxu0 0
        %529 = vmatprep.subr.bf16.mxu0 0
        %530 = vmatpush1.bf16.msra.mxu0 0
        %531 = vmatprep.subr.bf16.mxu0 0
        %532 = vmatpush1.bf16.msra.mxu0 0
        %533 = vmatprep.subr.bf16.mxu0 0
        %534 = vmatpush1.bf16.msra.mxu0 0
        %535 = vmatprep.subr.bf16.mxu0 0
        %536 = vmatpush1.bf16.msra.mxu0 0
        %537 = vmatprep.subr.bf16.mxu0 0
        %538 = vmatpush1.bf16.msra.mxu0 0
        %539 = vmatprep.subr.bf16.mxu0 0
        %540 = vmatpush1.bf16.msra.mxu0 0
        %541 = vmatprep.subr.bf16.mxu0 0
        %542 = vmatpush1.bf16.msra.mxu0 0
        %543 = vmatprep.subr.bf16.mxu0 0
        %544 = vmatpush1.bf16.msra.mxu0 0
        %545 = vmatprep.subr.bf16.mxu0 0
        %546 = vmatpush1.bf16.msra.mxu0 0
        %547 = vmatprep.subr.bf16.mxu0 0
        %548 = vmatpush1.bf16.msra.mxu0 0
        %549 = vmatprep.subr.bf16.mxu0 0
        %550 = vmatpush1.bf16.msra.mxu0 0
        %551 = vmatprep.subr.bf16.mxu0 0
        %552 = vmatpush1.bf16.msra.mxu0 0
        %553 = vmatprep.subr.bf16.mxu0 0
        %554 = vmatpush1.bf16.msra.mxu0 0
        %555 = vmatprep.mubr.bf16.mxu0 0
        %556 = vmatmul.mubr.bf16.gmra.mrb[0].mxu0 %v411
        %v557 = vpop.f32.mrb[0].mxu0
        %v558 = vadd.f32 0.0, %v557
        %v559 = vpop.f32.mrb[0].mxu0
        %v560 = vadd.f32 0.0, %v559
        %v561 = vpop.f32.mrb[0].mxu0
        %v562 = vpop.f32.mrb[0].mxu0
        %563 = vdwg.mxu0
        %564 = vmatprep.subr.bf16.mxu0 %v392
        %565 = vmatpush1.bf16.msra.mxu0 %v391
        %566 = vmatprep.subr.bf16.mxu0 %v439
        %567 = vmatpush1.bf16.msra.mxu0 %v436
        %568 = vmatprep.subr.bf16.mxu0 0
        %569 = vmatpush1.bf16.msra.mxu0 0
        %570 = vmatprep.subr.bf16.mxu0 0
        %571 = vmatpush1.bf16.msra.mxu0 0
        %572 = vmatprep.subr.bf16.mxu0 0
        %573 = vmatpush1.bf16.msra.mxu0 0
        %574 = vmatprep.subr.bf16.mxu0 0
        %575 = vmatpush1.bf16.msra.mxu0 0
        %576 = vmatprep.subr.bf16.mxu0 0
        %577 = vmatpush1.bf16.msra.mxu0 0
        %578 = vmatprep.subr.bf16.mxu0 0
        %579 = vmatpush1.bf16.msra.mxu0 0
        %580 = vmatprep.subr.bf16.mxu0 0
        %581 = vmatpush1.bf16.msra.mxu0 0
        %582 = vmatprep.subr.bf16.mxu0 0
        %583 = vmatpush1.bf16.msra.mxu0 0
        %584 = vmatprep.subr.bf16.mxu0 0
        %585 = vmatpush1.bf16.msra.mxu0 0
        %586 = vmatprep.subr.bf16.mxu0 0
        %587 = vmatpush1.bf16.msra.mxu0 0
        %588 = vmatprep.subr.bf16.mxu0 0
        %589 = vmatpush1.bf16.msra.mxu0 0
        %590 = vmatprep.subr.bf16.mxu0 0
        %591 = vmatpush1.bf16.msra.mxu0 0
        %592 = vmatprep.subr.bf16.mxu0 0
        %593 = vmatpush1.bf16.msra.mxu0 0
        %594 = vmatprep.subr.bf16.mxu0 0
        %595 = vmatpush1.bf16.msra.mxu0 0
        %596 = vmatprep.mubr.bf16.mxu0 0
        %597 = vmatmul.mubr.bf16.gmra.mrb[0].mxu0 %v411
        %v598 = vpop.f32.mrb[0].mxu0
        %v599 = vadd.f32 0.0, %v598
        %v600 = vpop.f32.mrb[0].mxu0
        %v601 = vadd.f32 0.0, %v600
        %v602 = vpop.f32.mrb[0].mxu0
        %v603 = vpop.f32.mrb[0].mxu0
        %604 = vdwg.mxu0
        %s605 = scalar_lea.vmem %s291, 128 [#allocation2]
        %v606 = vld [vmem:[%s605] sm:$0xff]
        %v607 = vld [vmem:[%s605 + $0x8] sm:$0xff]
        %v608 = vld [vmem:[%s605 + $0x10] sm:$0xff]
        %v609 = vld [vmem:[%s605 + $0x18] sm:$0xff]
        %v610 = vld [vmem:[%s605 + $0x20] sm:$0xff]
        %v611 = vld [vmem:[%s605 + $0x28] sm:$0xff]
        %v612 = vld [vmem:[%s605 + $0x30] sm:$0xff]
        %v613 = vld [vmem:[%s605 + $0x38] sm:$0xff]
        %v614 = vld [vmem:[%s605 + $0x40] sm:$0xff]
        %v615 = vld [vmem:[%s605 + $0x48] sm:$0xff]
        %v616 = vld [vmem:[%s605 + $0x50] sm:$0xff]
        %v617 = vld [vmem:[%s605 + $0x58] sm:$0xff]
        %v618 = vld [vmem:[%s605 + $0x60] sm:$0x11]
        %v619 = vld [vmem:[%s605 + $0x68] sm:$0x11]
        %v620 = vld [vmem:[%s605 + $0x70] sm:$0x11]
        %v621 = vld [vmem:[%s605 + $0x78] sm:$0x11]
        %v638 = vunpack.c.l.b16 %v606
        %v639 = vunpack.c.h.b16 %v606
        %v640 = vunpack.c.l.b16 %v607
        %v641 = vunpack.c.h.b16 %v607
        %v642 = vunpack.c.l.b16 %v608
        %v643 = vunpack.c.h.b16 %v608
        %v644 = vunpack.c.l.b16 %v609
        %v645 = vunpack.c.h.b16 %v609
        %v646 = vunpack.c.l.b16 %v610
        %v647 = vunpack.c.h.b16 %v610
        %v648 = vunpack.c.l.b16 %v611
        %v649 = vunpack.c.h.b16 %v611
        %v650 = vunpack.c.l.b16 %v612
        %v651 = vunpack.c.h.b16 %v612
        %v652 = vunpack.c.l.b16 %v613
        %v653 = vunpack.c.h.b16 %v613
        %v654 = vunpack.c.l.b16 %v614
        %v655 = vunpack.c.h.b16 %v614
        %v656 = vunpack.c.l.b16 %v615
        %v657 = vunpack.c.h.b16 %v615
        %v658 = vunpack.c.l.b16 %v616
        %v659 = vunpack.c.h.b16 %v616
        %v660 = vunpack.c.l.b16 %v617
        %v661 = vunpack.c.h.b16 %v617
        %v662 = vunpack.c.l.b16 %v618
        %v663 = vunpack.c.h.b16 %v618
        %v664 = vunpack.c.l.b16 %v619
        %v665 = vunpack.c.h.b16 %v619
        %v666 = vunpack.c.l.b16 %v620
        %v667 = vunpack.c.h.b16 %v620
        %v668 = vunpack.c.l.b16 %v621
        %v669 = vunpack.c.h.b16 %v621
        %v670 = vpack.c.b16 %v646, %v638
        %v671 = vpack.c.b16 %v647, %v639
        %v672 = vpack.c.b16 %v648, %v640
        %v673 = vpack.c.b16 %v649, %v641
        %v674 = vpack.c.b16 %v650, %v642
        %v675 = vpack.c.b16 %v651, %v643
        %v676 = vpack.c.b16 %v652, %v644
        %v677 = vpack.c.b16 %v653, %v645
        %v678 = vpack.c.b16 %v662, %v654
        %v679 = vpack.c.b16 %v663, %v655
        %v680 = vpack.c.b16 %v664, %v656
        %v681 = vpack.c.b16 %v665, %v657
        %v682 = vpack.c.b16 %v666, %v658
        %v683 = vpack.c.b16 %v667, %v659
        %v684 = vpack.c.b16 %v668, %v660
        %v685 = vpack.c.b16 %v669, %v661
        %v695 = vand.u32 %v678, %v416
        %v698 = vand.u32 %v679, %v416
        %v701 = vand.u32 %v680, %v416
        %v704 = vand.u32 %v681, %v416
        %v707 = vand.u32 %v682, %v416
        %v710 = vand.u32 %v683, %v416
        %v713 = vand.u32 %v684, %v416
        %v716 = vand.u32 %v685, %v416
        %718 = vmatprep.subr.bf16.mxu0 %v671
        %719 = vmatpush1.bf16.msra.mxu0 %v670
        %720 = vmatprep.subr.bf16.mxu0 %v698
        %721 = vmatpush1.bf16.msra.mxu0 %v695
        %722 = vmatprep.subr.bf16.mxu0 0
        %723 = vmatpush1.bf16.msra.mxu0 0
        %724 = vmatprep.subr.bf16.mxu0 0
        %725 = vmatpush1.bf16.msra.mxu0 0
        %726 = vmatprep.subr.bf16.mxu0 0
        %727 = vmatpush1.bf16.msra.mxu0 0
        %728 = vmatprep.subr.bf16.mxu0 0
        %729 = vmatpush1.bf16.msra.mxu0 0
        %730 = vmatprep.subr.bf16.mxu0 0
        %731 = vmatpush1.bf16.msra.mxu0 0
        %732 = vmatprep.subr.bf16.mxu0 0
        %733 = vmatpush1.bf16.msra.mxu0 0
        %734 = vmatprep.subr.bf16.mxu0 0
        %735 = vmatpush1.bf16.msra.mxu0 0
        %736 = vmatprep.subr.bf16.mxu0 0
        %737 = vmatpush1.bf16.msra.mxu0 0
        %738 = vmatprep.subr.bf16.mxu0 0
        %739 = vmatpush1.bf16.msra.mxu0 0
        %740 = vmatprep.subr.bf16.mxu0 0
        %741 = vmatpush1.bf16.msra.mxu0 0
        %742 = vmatprep.subr.bf16.mxu0 0
        %743 = vmatpush1.bf16.msra.mxu0 0
        %744 = vmatprep.subr.bf16.mxu0 0
        %745 = vmatpush1.bf16.msra.mxu0 0
        %746 = vmatprep.subr.bf16.mxu0 0
        %747 = vmatpush1.bf16.msra.mxu0 0
        %748 = vmatprep.subr.bf16.mxu0 0
        %749 = vmatpush1.bf16.msra.mxu0 0
        %750 = vmatprep.mubr.bf16.mxu0 0
        %751 = vmatmul.mubr.bf16.gmra.mrb[0].mxu0 %v411
        %v752 = vpop.f32.mrb[0].mxu0
        %v753 = vadd.f32 0.0, %v752
        %v754 = vpop.f32.mrb[0].mxu0
        %v755 = vadd.f32 0.0, %v754
        %v756 = vpop.f32.mrb[0].mxu0
        %v757 = vpop.f32.mrb[0].mxu0
        %758 = vdwg.mxu0
        %759 = vmatprep.subr.bf16.mxu0 %v673
        %760 = vmatpush1.bf16.msra.mxu0 %v672
        %761 = vmatprep.subr.bf16.mxu0 %v704
        %762 = vmatpush1.bf16.msra.mxu0 %v701
        %763 = vmatprep.subr.bf16.mxu0 0
        %764 = vmatpush1.bf16.msra.mxu0 0
        %765 = vmatprep.subr.bf16.mxu0 0
        %766 = vmatpush1.bf16.msra.mxu0 0
        %767 = vmatprep.subr.bf16.mxu0 0
        %768 = vmatpush1.bf16.msra.mxu0 0
        %769 = vmatprep.subr.bf16.mxu0 0
        %770 = vmatpush1.bf16.msra.mxu0 0
        %771 = vmatprep.subr.bf16.mxu0 0
        %772 = vmatpush1.bf16.msra.mxu0 0
        %773 = vmatprep.subr.bf16.mxu0 0
        %774 = vmatpush1.bf16.msra.mxu0 0
        %775 = vmatprep.subr.bf16.mxu0 0
        %776 = vmatpush1.bf16.msra.mxu0 0
        %777 = vmatprep.subr.bf16.mxu0 0
        %778 = vmatpush1.bf16.msra.mxu0 0
        %779 = vmatprep.subr.bf16.mxu0 0
        %780 = vmatpush1.bf16.msra.mxu0 0
        %781 = vmatprep.subr.bf16.mxu0 0
        %782 = vmatpush1.bf16.msra.mxu0 0
        %783 = vmatprep.subr.bf16.mxu0 0
        %784 = vmatpush1.bf16.msra.mxu0 0
        %785 = vmatprep.subr.bf16.mxu0 0
        %786 = vmatpush1.bf16.msra.mxu0 0
        %787 = vmatprep.subr.bf16.mxu0 0
        %788 = vmatpush1.bf16.msra.mxu0 0
        %789 = vmatprep.subr.bf16.mxu0 0
        %790 = vmatpush1.bf16.msra.mxu0 0
        %791 = vmatprep.mubr.bf16.mxu0 0
        %792 = vmatmul.mubr.bf16.gmra.mrb[0].mxu0 %v411
        %v793 = vpop.f32.mrb[0].mxu0
        %v794 = vadd.f32 0.0, %v793
        %v795 = vpop.f32.mrb[0].mxu0
        %v796 = vadd.f32 0.0, %v795
        %v797 = vpop.f32.mrb[0].mxu0
        %v798 = vpop.f32.mrb[0].mxu0
        %799 = vdwg.mxu0
        %800 = vmatprep.subr.bf16.mxu0 %v675
        %801 = vmatpush1.bf16.msra.mxu0 %v674
        %802 = vmatprep.subr.bf16.mxu0 %v710
        %803 = vmatpush1.bf16.msra.mxu0 %v707
        %804 = vmatprep.subr.bf16.mxu0 0
        %805 = vmatpush1.bf16.msra.mxu0 0
        %806 = vmatprep.subr.bf16.mxu0 0
        %807 = vmatpush1.bf16.msra.mxu0 0
        %808 = vmatprep.subr.bf16.mxu0 0
        %809 = vmatpush1.bf16.msra.mxu0 0
        %810 = vmatprep.subr.bf16.mxu0 0
        %811 = vmatpush1.bf16.msra.mxu0 0
        %812 = vmatprep.subr.bf16.mxu0 0
        %813 = vmatpush1.bf16.msra.mxu0 0
        %814 = vmatprep.subr.bf16.mxu0 0
        %815 = vmatpush1.bf16.msra.mxu0 0
        %816 = vmatprep.subr.bf16.mxu0 0
        %817 = vmatpush1.bf16.msra.mxu0 0
        %818 = vmatprep.subr.bf16.mxu0 0
        %819 = vmatpush1.bf16.msra.mxu0 0
        %820 = vmatprep.subr.bf16.mxu0 0
        %821 = vmatpush1.bf16.msra.mxu0 0
        %822 = vmatprep.subr.bf16.mxu0 0
        %823 = vmatpush1.bf16.msra.mxu0 0
        %824 = vmatprep.subr.bf16.mxu0 0
        %825 = vmatpush1.bf16.msra.mxu0 0
        %826 = vmatprep.subr.bf16.mxu0 0
        %827 = vmatpush1.bf16.msra.mxu0 0
        %828 = vmatprep.subr.bf16.mxu0 0
        %829 = vmatpush1.bf16.msra.mxu0 0
        %830 = vmatprep.subr.bf16.mxu0 0
        %831 = vmatpush1.bf16.msra.mxu0 0
        %832 = vmatprep.mubr.bf16.mxu0 0
        %833 = vmatmul.mubr.bf16.gmra.mrb[0].mxu0 %v411
        %v834 = vpop.f32.mrb[0].mxu0
        %v835 = vadd.f32 0.0, %v834
        %v836 = vpop.f32.mrb[0].mxu0
        %v837 = vadd.f32 0.0, %v836
        %v838 = vpop.f32.mrb[0].mxu0
        %v839 = vpop.f32.mrb[0].mxu0
        %840 = vdwg.mxu0
        %841 = vmatprep.subr.bf16.mxu0 %v677
        %842 = vmatpush1.bf16.msra.mxu0 %v676
        %843 = vmatprep.subr.bf16.mxu0 %v716
        %844 = vmatpush1.bf16.msra.mxu0 %v713
        %845 = vmatprep.subr.bf16.mxu0 0
        %846 = vmatpush1.bf16.msra.mxu0 0
        %847 = vmatprep.subr.bf16.mxu0 0
        %848 = vmatpush1.bf16.msra.mxu0 0
        %849 = vmatprep.subr.bf16.mxu0 0
        %850 = vmatpush1.bf16.msra.mxu0 0
        %851 = vmatprep.subr.bf16.mxu0 0
        %852 = vmatpush1.bf16.msra.mxu0 0
        %853 = vmatprep.subr.bf16.mxu0 0
        %854 = vmatpush1.bf16.msra.mxu0 0
        %855 = vmatprep.subr.bf16.mxu0 0
        %856 = vmatpush1.bf16.msra.mxu0 0
        %857 = vmatprep.subr.bf16.mxu0 0
        %858 = vmatpush1.bf16.msra.mxu0 0
        %859 = vmatprep.subr.bf16.mxu0 0
        %860 = vmatpush1.bf16.msra.mxu0 0
        %861 = vmatprep.subr.bf16.mxu0 0
        %862 = vmatpush1.bf16.msra.mxu0 0
        %863 = vmatprep.subr.bf16.mxu0 0
        %864 = vmatpush1.bf16.msra.mxu0 0
        %865 = vmatprep.subr.bf16.mxu0 0
        %866 = vmatpush1.bf16.msra.mxu0 0
        %867 = vmatprep.subr.bf16.mxu0 0
        %868 = vmatpush1.bf16.msra.mxu0 0
        %869 = vmatprep.subr.bf16.mxu0 0
        %870 = vmatpush1.bf16.msra.mxu0 0
        %871 = vmatprep.subr.bf16.mxu0 0
        %872 = vmatpush1.bf16.msra.mxu0 0
        %873 = vmatprep.mubr.bf16.mxu0 0
        %874 = vmatmul.mubr.bf16.gmra.mrb[0].mxu0 %v411
        %v875 = vpop.f32.mrb[0].mxu0
        %v876 = vadd.f32 0.0, %v875
        %v877 = vpop.f32.mrb[0].mxu0
        %v878 = vadd.f32 0.0, %v877
        %v879 = vpop.f32.mrb[0].mxu0
        %v880 = vpop.f32.mrb[0].mxu0
        %881 = vdwg.mxu0
        %v882 = vmax.f32 %v476, %v753
        %v883 = vmax.f32 %v478, %v755
        %v884 = vmax.f32 %v517, %v794
        %v885 = vmax.f32 %v519, %v796
        %v886 = vmax.f32 %v558, %v835
        %v887 = vmax.f32 %v560, %v837
        %v888 = vmax.f32 %v599, %v876
        %v889 = vmax.f32 %v601, %v878
        %s890 = scalar_lea.vmem %s291, 256 [#allocation2]
        %v891 = vld [vmem:[%s890] sm:$0xff]
        %v892 = vld [vmem:[%s890 + $0x8] sm:$0xff]
        %v893 = vld [vmem:[%s890 + $0x10] sm:$0xff]
        %v894 = vld [vmem:[%s890 + $0x18] sm:$0xff]
        %v895 = vld [vmem:[%s890 + $0x20] sm:$0xff]
        %v896 = vld [vmem:[%s890 + $0x28] sm:$0xff]
        %v897 = vld [vmem:[%s890 + $0x30] sm:$0xff]
        %v898 = vld [vmem:[%s890 + $0x38] sm:$0xff]
        %v899 = vld [vmem:[%s890 + $0x40] sm:$0xff]
        %v900 = vld [vmem:[%s890 + $0x48] sm:$0xff]
        %v901 = vld [vmem:[%s890 + $0x50] sm:$0xff]
        %v902 = vld [vmem:[%s890 + $0x58] sm:$0xff]
        %v903 = vld [vmem:[%s890 + $0x60] sm:$0x11]
        %v904 = vld [vmem:[%s890 + $0x68] sm:$0x11]
        %v905 = vld [vmem:[%s890 + $0x70] sm:$0x11]
        %v906 = vld [vmem:[%s890 + $0x78] sm:$0x11]
        %v923 = vunpack.c.l.b16 %v891
        %v924 = vunpack.c.h.b16 %v891
        %v925 = vunpack.c.l.b16 %v892
        %v926 = vunpack.c.h.b16 %v892
        %v927 = vunpack.c.l.b16 %v893
        %v928 = vunpack.c.h.b16 %v893
        %v929 = vunpack.c.l.b16 %v894
        %v930 = vunpack.c.h.b16 %v894
        %v931 = vunpack.c.l.b16 %v895
        %v932 = vunpack.c.h.b16 %v895
        %v933 = vunpack.c.l.b16 %v896
        %v934 = vunpack.c.h.b16 %v896
        %v935 = vunpack.c.l.b16 %v897
        %v936 = vunpack.c.h.b16 %v897
        %v937 = vunpack.c.l.b16 %v898
        %v938 = vunpack.c.h.b16 %v898
        %v939 = vunpack.c.l.b16 %v899
        %v940 = vunpack.c.h.b16 %v899
        %v941 = vunpack.c.l.b16 %v900
        %v942 = vunpack.c.h.b16 %v900
        %v943 = vunpack.c.l.b16 %v901
        %v944 = vunpack.c.h.b16 %v901
        %v945 = vunpack.c.l.b16 %v902
        %v946 = vunpack.c.h.b16 %v902
        %v947 = vunpack.c.l.b16 %v903
        %v948 = vunpack.c.h.b16 %v903
        %v949 = vunpack.c.l.b16 %v904
        %v950 = vunpack.c.h.b16 %v904
        %v951 = vunpack.c.l.b16 %v905
        %v952 = vunpack.c.h.b16 %v905
        %v953 = vunpack.c.l.b16 %v906
        %v954 = vunpack.c.h.b16 %v906
        %v955 = vpack.c.b16 %v931, %v923
        %v956 = vpack.c.b16 %v932, %v924
        %v957 = vpack.c.b16 %v933, %v925
        %v958 = vpack.c.b16 %v934, %v926
        %v959 = vpack.c.b16 %v935, %v927
        %v960 = vpack.c.b16 %v936, %v928
        %v961 = vpack.c.b16 %v937, %v929
        %v962 = vpack.c.b16 %v938, %v930
        %v963 = vpack.c.b16 %v947, %v939
        %v964 = vpack.c.b16 %v948, %v940
        %v965 = vpack.c.b16 %v949, %v941
        %v966 = vpack.c.b16 %v950, %v942
        %v967 = vpack.c.b16 %v951, %v943
        %v968 = vpack.c.b16 %v952, %v944
        %v969 = vpack.c.b16 %v953, %v945
        %v970 = vpack.c.b16 %v954, %v946
        %v980 = vand.u32 %v963, %v416
        %v983 = vand.u32 %v964, %v416
        %v986 = vand.u32 %v965, %v416
        %v989 = vand.u32 %v966, %v416
        %v992 = vand.u32 %v967, %v416
        %v995 = vand.u32 %v968, %v416
        %v998 = vand.u32 %v969, %v416
        %v1001 = vand.u32 %v970, %v416
        %1003 = vmatprep.subr.bf16.mxu0 %v956
        %1004 = vmatpush1.bf16.msra.mxu0 %v955
        %1005 = vmatprep.subr.bf16.mxu0 %v983
        %1006 = vmatpush1.bf16.msra.mxu0 %v980
        %1007 = vmatprep.subr.bf16.mxu0 0
        %1008 = vmatpush1.bf16.msra.mxu0 0
        %1009 = vmatprep.subr.bf16.mxu0 0
        %1010 = vmatpush1.bf16.msra.mxu0 0
        %1011 = vmatprep.subr.bf16.mxu0 0
        %1012 = vmatpush1.bf16.msra.mxu0 0
        %1013 = vmatprep.subr.bf16.mxu0 0
        %1014 = vmatpush1.bf16.msra.mxu0 0
        %1015 = vmatprep.subr.bf16.mxu0 0
        %1016 = vmatpush1.bf16.msra.mxu0 0
        %1017 = vmatprep.subr.bf16.mxu0 0
        %1018 = vmatpush1.bf16.msra.mxu0 0
        %1019 = vmatprep.subr.bf16.mxu0 0
        %1020 = vmatpush1.bf16.msra.mxu0 0
        %1021 = vmatprep.subr.bf16.mxu0 0
        %1022 = vmatpush1.bf16.msra.mxu0 0
        %1023 = vmatprep.subr.bf16.mxu0 0
        %1024 = vmatpush1.bf16.msra.mxu0 0
        %1025 = vmatprep.subr.bf16.mxu0 0
        %1026 = vmatpush1.bf16.msra.mxu0 0
        %1027 = vmatprep.subr.bf16.mxu0 0
        %1028 = vmatpush1.bf16.msra.mxu0 0
        %1029 = vmatprep.subr.bf16.mxu0 0
        %1030 = vmatpush1.bf16.msra.mxu0 0
        %1031 = vmatprep.subr.bf16.mxu0 0
        %1032 = vmatpush1.bf16.msra.mxu0 0
        %1033 = vmatprep.subr.bf16.mxu0 0
        %1034 = vmatpush1.bf16.msra.mxu0 0
        %1035 = vmatprep.mubr.bf16.mxu0 0
        %1036 = vmatmul.mubr.bf16.gmra.mrb[0].mxu0 %v411
        %v1037 = vpop.f32.mrb[0].mxu0
        %v1038 = vadd.f32 0.0, %v1037
        %v1039 = vpop.f32.mrb[0].mxu0
        %v1040 = vadd.f32 0.0, %v1039
        %v1041 = vpop.f32.mrb[0].mxu0
        %v1042 = vpop.f32.mrb[0].mxu0
        %1043 = vdwg.mxu0
        %1044 = vmatprep.subr.bf16.mxu0 %v958
        %1045 = vmatpush1.bf16.msra.mxu0 %v957
        %1046 = vmatprep.subr.bf16.mxu0 %v989
        %1047 = vmatpush1.bf16.msra.mxu0 %v986
        %1048 = vmatprep.subr.bf16.mxu0 0
        %1049 = vmatpush1.bf16.msra.mxu0 0
        %1050 = vmatprep.subr.bf16.mxu0 0
        %1051 = vmatpush1.bf16.msra.mxu0 0
        %1052 = vmatprep.subr.bf16.mxu0 0
        %1053 = vmatpush1.bf16.msra.mxu0 0
        %1054 = vmatprep.subr.bf16.mxu0 0
        %1055 = vmatpush1.bf16.msra.mxu0 0
        %1056 = vmatprep.subr.bf16.mxu0 0
        %1057 = vmatpush1.bf16.msra.mxu0 0
        %1058 = vmatprep.subr.bf16.mxu0 0
        %1059 = vmatpush1.bf16.msra.mxu0 0
        %1060 = vmatprep.subr.bf16.mxu0 0
        %1061 = vmatpush1.bf16.msra.mxu0 0
        %1062 = vmatprep.subr.bf16.mxu0 0
        %1063 = vmatpush1.bf16.msra.mxu0 0
        %1064 = vmatprep.subr.bf16.mxu0 0
        %1065 = vmatpush1.bf16.msra.mxu0 0
        %1066 = vmatprep.subr.bf16.mxu0 0
        %1067 = vmatpush1.bf16.msra.mxu0 0
        %1068 = vmatprep.subr.bf16.mxu0 0
        %1069 = vmatpush1.bf16.msra.mxu0 0
        %1070 = vmatprep.subr.bf16.mxu0 0
        %1071 = vmatpush1.bf16.msra.mxu0 0
        %1072 = vmatprep.subr.bf16.mxu0 0
        %1073 = vmatpush1.bf16.msra.mxu0 0
        %1074 = vmatprep.subr.bf16.mxu0 0
        %1075 = vmatpush1.bf16.msra.mxu0 0
        %1076 = vmatprep.mubr.bf16.mxu0 0
        %1077 = vmatmul.mubr.bf16.gmra.mrb[0].mxu0 %v411
        %v1078 = vpop.f32.mrb[0].mxu0
        %v1079 = vadd.f32 0.0, %v1078
        %v1080 = vpop.f32.mrb[0].mxu0
        %v1081 = vadd.f32 0.0, %v1080
        %v1082 = vpop.f32.mrb[0].mxu0
        %v1083 = vpop.f32.mrb[0].mxu0
        %1084 = vdwg.mxu0
        %1085 = vmatprep.subr.bf16.mxu0 %v960
        %1086 = vmatpush1.bf16.msra.mxu0 %v959
        %1087 = vmatprep.subr.bf16.mxu0 %v995
        %1088 = vmatpush1.bf16.msra.mxu0 %v992
        %1089 = vmatprep.subr.bf16.mxu0 0
        %1090 = vmatpush1.bf16.msra.mxu0 0
        %1091 = vmatprep.subr.bf16.mxu0 0
        %1092 = vmatpush1.bf16.msra.mxu0 0
        %1093 = vmatprep.subr.bf16.mxu0 0
        %1094 = vmatpush1.bf16.msra.mxu0 0
        %1095 = vmatprep.subr.bf16.mxu0 0
        %1096 = vmatpush1.bf16.msra.mxu0 0
        %1097 = vmatprep.subr.bf16.mxu0 0
        %1098 = vmatpush1.bf16.msra.mxu0 0
        %1099 = vmatprep.subr.bf16.mxu0 0
        %1100 = vmatpush1.bf16.msra.mxu0 0
        %1101 = vmatprep.subr.bf16.mxu0 0
        %1102 = vmatpush1.bf16.msra.mxu0 0
        %1103 = vmatprep.subr.bf16.mxu0 0
        %1104 = vmatpush1.bf16.msra.mxu0 0
        %1105 = vmatprep.subr.bf16.mxu0 0
        %1106 = vmatpush1.bf16.msra.mxu0 0
        %1107 = vmatprep.subr.bf16.mxu0 0
        %1108 = vmatpush1.bf16.msra.mxu0 0
        %1109 = vmatprep.subr.bf16.mxu0 0
        %1110 = vmatpush1.bf16.msra.mxu0 0
        %1111 = vmatprep.subr.bf16.mxu0 0
        %1112 = vmatpush1.bf16.msra.mxu0 0
        %1113 = vmatprep.subr.bf16.mxu0 0
        %1114 = vmatpush1.bf16.msra.mxu0 0
        %1115 = vmatprep.subr.bf16.mxu0 0
        %1116 = vmatpush1.bf16.msra.mxu0 0
        %1117 = vmatprep.mubr.bf16.mxu0 0
        %1118 = vmatmul.mubr.bf16.gmra.mrb[0].mxu0 %v411
        %v1119 = vpop.f32.mrb[0].mxu0
        %v1120 = vadd.f32 0.0, %v1119
        %v1121 = vpop.f32.mrb[0].mxu0
        %v1122 = vadd.f32 0.0, %v1121
        %v1123 = vpop.f32.mrb[0].mxu0
        %v1124 = vpop.f32.mrb[0].mxu0
        %1125 = vdwg.mxu0
        %1126 = vmatprep.subr.bf16.mxu0 %v962
        %1127 = vmatpush1.bf16.msra.mxu0 %v961
        %1128 = vmatprep.subr.bf16.mxu0 %v1001
        %1129 = vmatpush1.bf16.msra.mxu0 %v998
        %1130 = vmatprep.subr.bf16.mxu0 0
        %1131 = vmatpush1.bf16.msra.mxu0 0
        %1132 = vmatprep.subr.bf16.mxu0 0
        %1133 = vmatpush1.bf16.msra.mxu0 0
        %1134 = vmatprep.subr.bf16.mxu0 0
        %1135 = vmatpush1.bf16.msra.mxu0 0
        %1136 = vmatprep.subr.bf16.mxu0 0
        %1137 = vmatpush1.bf16.msra.mxu0 0
        %1138 = vmatprep.subr.bf16.mxu0 0
        %1139 = vmatpush1.bf16.msra.mxu0 0
        %1140 = vmatprep.subr.bf16.mxu0 0
        %1141 = vmatpush1.bf16.msra.mxu0 0
        %1142 = vmatprep.subr.bf16.mxu0 0
        %1143 = vmatpush1.bf16.msra.mxu0 0
        %1144 = vmatprep.subr.bf16.mxu0 0
        %1145 = vmatpush1.bf16.msra.mxu0 0
        %1146 = vmatprep.subr.bf16.mxu0 0
        %1147 = vmatpush1.bf16.msra.mxu0 0
        %1148 = vmatprep.subr.bf16.mxu0 0
        %1149 = vmatpush1.bf16.msra.mxu0 0
        %1150 = vmatprep.subr.bf16.mxu0 0
        %1151 = vmatpush1.bf16.msra.mxu0 0
        %1152 = vmatprep.subr.bf16.mxu0 0
        %1153 = vmatpush1.bf16.msra.mxu0 0
        %1154 = vmatprep.subr.bf16.mxu0 0
        %1155 = vmatpush1.bf16.msra.mxu0 0
        %1156 = vmatprep.subr.bf16.mxu0 0
        %1157 = vmatpush1.bf16.msra.mxu0 0
        %1158 = vmatprep.mubr.bf16.mxu0 0
        %1159 = vmatmul.mubr.bf16.gmra.mrb[0].mxu0 %v411
        %v1160 = vpop.f32.mrb[0].mxu0
        %v1161 = vadd.f32 0.0, %v1160
        %v1162 = vpop.f32.mrb[0].mxu0
        %v1163 = vadd.f32 0.0, %v1162
        %v1164 = vpop.f32.mrb[0].mxu0
        %v1165 = vpop.f32.mrb[0].mxu0
        %1166 = vdwg.mxu0
        %v1167 = vmax.f32 %v882, %v1038
        %v1168 = vmax.f32 %v883, %v1040
        %v1169 = vmax.f32 %v884, %v1079
        %v1170 = vmax.f32 %v885, %v1081
        %v1171 = vmax.f32 %v886, %v1120
        %v1172 = vmax.f32 %v887, %v1122
        %v1173 = vmax.f32 %v888, %v1161
        %v1174 = vmax.f32 %v889, %v1163
        %s1175 = scalar_lea.vmem %s291, 384 [#allocation2]
        %v1176 = vld [vmem:[%s1175] sm:$0xff]
        %v1177 = vld [vmem:[%s1175 + $0x8] sm:$0xff]
        %v1178 = vld [vmem:[%s1175 + $0x10] sm:$0xff]
        %v1179 = vld [vmem:[%s1175 + $0x18] sm:$0xff]
        %v1180 = vld [vmem:[%s1175 + $0x20] sm:$0xff]
        %v1181 = vld [vmem:[%s1175 + $0x28] sm:$0xff]
        %v1182 = vld [vmem:[%s1175 + $0x30] sm:$0xff]
        %v1183 = vld [vmem:[%s1175 + $0x38] sm:$0xff]
        %v1184 = vld [vmem:[%s1175 + $0x40] sm:$0xff]
        %v1185 = vld [vmem:[%s1175 + $0x48] sm:$0xff]
        %v1186 = vld [vmem:[%s1175 + $0x50] sm:$0xff]
        %v1187 = vld [vmem:[%s1175 + $0x58] sm:$0xff]
        %v1188 = vld [vmem:[%s1175 + $0x60] sm:$0x11]
        %v1189 = vld [vmem:[%s1175 + $0x68] sm:$0x11]
        %v1190 = vld [vmem:[%s1175 + $0x70] sm:$0x11]
        %v1191 = vld [vmem:[%s1175 + $0x78] sm:$0x11]
        %v1208 = vunpack.c.l.b16 %v1176
        %v1209 = vunpack.c.h.b16 %v1176
        %v1210 = vunpack.c.l.b16 %v1177
        %v1211 = vunpack.c.h.b16 %v1177
        %v1212 = vunpack.c.l.b16 %v1178
        %v1213 = vunpack.c.h.b16 %v1178
        %v1214 = vunpack.c.l.b16 %v1179
        %v1215 = vunpack.c.h.b16 %v1179
        %v1216 = vunpack.c.l.b16 %v1180
        %v1217 = vunpack.c.h.b16 %v1180
        %v1218 = vunpack.c.l.b16 %v1181
        %v1219 = vunpack.c.h.b16 %v1181
        %v1220 = vunpack.c.l.b16 %v1182
        %v1221 = vunpack.c.h.b16 %v1182
        %v1222 = vunpack.c.l.b16 %v1183
        %v1223 = vunpack.c.h.b16 %v1183
        %v1224 = vunpack.c.l.b16 %v1184
        %v1225 = vunpack.c.h.b16 %v1184
        %v1226 = vunpack.c.l.b16 %v1185
        %v1227 = vunpack.c.h.b16 %v1185
        %v1228 = vunpack.c.l.b16 %v1186
        %v1229 = vunpack.c.h.b16 %v1186
        %v1230 = vunpack.c.l.b16 %v1187
        %v1231 = vunpack.c.h.b16 %v1187
        %v1232 = vunpack.c.l.b16 %v1188
        %v1233 = vunpack.c.h.b16 %v1188
        %v1234 = vunpack.c.l.b16 %v1189
        %v1235 = vunpack.c.h.b16 %v1189
        %v1236 = vunpack.c.l.b16 %v1190
        %v1237 = vunpack.c.h.b16 %v1190
        %v1238 = vunpack.c.l.b16 %v1191
        %v1239 = vunpack.c.h.b16 %v1191
        %v1240 = vpack.c.b16 %v1216, %v1208
        %v1241 = vpack.c.b16 %v1217, %v1209
        %v1242 = vpack.c.b16 %v1218, %v1210
        %v1243 = vpack.c.b16 %v1219, %v1211
        %v1244 = vpack.c.b16 %v1220, %v1212
        %v1245 = vpack.c.b16 %v1221, %v1213
        %v1246 = vpack.c.b16 %v1222, %v1214
        %v1247 = vpack.c.b16 %v1223, %v1215
        %v1248 = vpack.c.b16 %v1232, %v1224
        %v1249 = vpack.c.b16 %v1233, %v1225
        %v1250 = vpack.c.b16 %v1234, %v1226
        %v1251 = vpack.c.b16 %v1235, %v1227
        %v1252 = vpack.c.b16 %v1236, %v1228
        %v1253 = vpack.c.b16 %v1237, %v1229
        %v1254 = vpack.c.b16 %v1238, %v1230
        %v1255 = vpack.c.b16 %v1239, %v1231
        %v1265 = vand.u32 %v1248, %v416
        %v1268 = vand.u32 %v1249, %v416
        %v1271 = vand.u32 %v1250, %v416
        %v1274 = vand.u32 %v1251, %v416
        %v1277 = vand.u32 %v1252, %v416
        %v1280 = vand.u32 %v1253, %v416
        %v1283 = vand.u32 %v1254, %v416
        %v1286 = vand.u32 %v1255, %v416
        %1288 = vmatprep.subr.bf16.mxu0 %v1241
        %1289 = vmatpush1.bf16.msra.mxu0 %v1240
        %1290 = vmatprep.subr.bf16.mxu0 %v1268
        %1291 = vmatpush1.bf16.msra.mxu0 %v1265
        %1292 = vmatprep.subr.bf16.mxu0 0
        %1293 = vmatpush1.bf16.msra.mxu0 0
        %1294 = vmatprep.subr.bf16.mxu0 0
        %1295 = vmatpush1.bf16.msra.mxu0 0
        %1296 = vmatprep.subr.bf16.mxu0 0
        %1297 = vmatpush1.bf16.msra.mxu0 0
        %1298 = vmatprep.subr.bf16.mxu0 0
        %1299 = vmatpush1.bf16.msra.mxu0 0
        %1300 = vmatprep.subr.bf16.mxu0 0
        %1301 = vmatpush1.bf16.msra.mxu0 0
        %1302 = vmatprep.subr.bf16.mxu0 0
        %1303 = vmatpush1.bf16.msra.mxu0 0
        %1304 = vmatprep.subr.bf16.mxu0 0
        %1305 = vmatpush1.bf16.msra.mxu0 0
        %1306 = vmatprep.subr.bf16.mxu0 0
        %1307 = vmatpush1.bf16.msra.mxu0 0
        %1308 = vmatprep.subr.bf16.mxu0 0
        %1309 = vmatpush1.bf16.msra.mxu0 0
        %1310 = vmatprep.subr.bf16.mxu0 0
        %1311 = vmatpush1.bf16.msra.mxu0 0
        %1312 = vmatprep.subr.bf16.mxu0 0
        %1313 = vmatpush1.bf16.msra.mxu0 0
        %1314 = vmatprep.subr.bf16.mxu0 0
        %1315 = vmatpush1.bf16.msra.mxu0 0
        %1316 = vmatprep.subr.bf16.mxu0 0
        %1317 = vmatpush1.bf16.msra.mxu0 0
        %1318 = vmatprep.subr.bf16.mxu0 0
        %1319 = vmatpush1.bf16.msra.mxu0 0
        %1320 = vmatprep.mubr.bf16.mxu0 0
        %1321 = vmatmul.mubr.bf16.gmra.mrb[0].mxu0 %v411
        %v1322 = vpop.f32.mrb[0].mxu0
        %v1323 = vadd.f32 0.0, %v1322
        %v1324 = vpop.f32.mrb[0].mxu0
        %v1325 = vadd.f32 0.0, %v1324
        %v1326 = vpop.f32.mrb[0].mxu0
        %v1327 = vpop.f32.mrb[0].mxu0
        %1328 = vdwg.mxu0
        %1329 = vmatprep.subr.bf16.mxu0 %v1243
        %1330 = vmatpush1.bf16.msra.mxu0 %v1242
        %1331 = vmatprep.subr.bf16.mxu0 %v1274
        %1332 = vmatpush1.bf16.msra.mxu0 %v1271
        %1333 = vmatprep.subr.bf16.mxu0 0
        %1334 = vmatpush1.bf16.msra.mxu0 0
        %1335 = vmatprep.subr.bf16.mxu0 0
        %1336 = vmatpush1.bf16.msra.mxu0 0
        %1337 = vmatprep.subr.bf16.mxu0 0
        %1338 = vmatpush1.bf16.msra.mxu0 0
        %1339 = vmatprep.subr.bf16.mxu0 0
        %1340 = vmatpush1.bf16.msra.mxu0 0
        %1341 = vmatprep.subr.bf16.mxu0 0
        %1342 = vmatpush1.bf16.msra.mxu0 0
        %1343 = vmatprep.subr.bf16.mxu0 0
        %1344 = vmatpush1.bf16.msra.mxu0 0
        %1345 = vmatprep.subr.bf16.mxu0 0
        %1346 = vmatpush1.bf16.msra.mxu0 0
        %1347 = vmatprep.subr.bf16.mxu0 0
        %1348 = vmatpush1.bf16.msra.mxu0 0
        %1349 = vmatprep.subr.bf16.mxu0 0
        %1350 = vmatpush1.bf16.msra.mxu0 0
        %1351 = vmatprep.subr.bf16.mxu0 0
        %1352 = vmatpush1.bf16.msra.mxu0 0
        %1353 = vmatprep.subr.bf16.mxu0 0
        %1354 = vmatpush1.bf16.msra.mxu0 0
        %1355 = vmatprep.subr.bf16.mxu0 0
        %1356 = vmatpush1.bf16.msra.mxu0 0
        %1357 = vmatprep.subr.bf16.mxu0 0
        %1358 = vmatpush1.bf16.msra.mxu0 0
        %1359 = vmatprep.subr.bf16.mxu0 0
        %1360 = vmatpush1.bf16.msra.mxu0 0
        %1361 = vmatprep.mubr.bf16.mxu0 0
        %1362 = vmatmul.mubr.bf16.gmra.mrb[0].mxu0 %v411
        %v1363 = vpop.f32.mrb[0].mxu0
        %v1364 = vadd.f32 0.0, %v1363
        %v1365 = vpop.f32.mrb[0].mxu0
        %v1366 = vadd.f32 0.0, %v1365
        %v1367 = vpop.f32.mrb[0].mxu0
        %v1368 = vpop.f32.mrb[0].mxu0
        %1369 = vdwg.mxu0
        %1370 = vmatprep.subr.bf16.mxu0 %v1245
        %1371 = vmatpush1.bf16.msra.mxu0 %v1244
        %1372 = vmatprep.subr.bf16.mxu0 %v1280
        %1373 = vmatpush1.bf16.msra.mxu0 %v1277
        %1374 = vmatprep.subr.bf16.mxu0 0
        %1375 = vmatpush1.bf16.msra.mxu0 0
        %1376 = vmatprep.subr.bf16.mxu0 0
        %1377 = vmatpush1.bf16.msra.mxu0 0
        %1378 = vmatprep.subr.bf16.mxu0 0
        %1379 = vmatpush1.bf16.msra.mxu0 0
        %1380 = vmatprep.subr.bf16.mxu0 0
        %1381 = vmatpush1.bf16.msra.mxu0 0
        %1382 = vmatprep.subr.bf16.mxu0 0
        %1383 = vmatpush1.bf16.msra.mxu0 0
        %1384 = vmatprep.subr.bf16.mxu0 0
        %1385 = vmatpush1.bf16.msra.mxu0 0
        %1386 = vmatprep.subr.bf16.mxu0 0
        %1387 = vmatpush1.bf16.msra.mxu0 0
        %1388 = vmatprep.subr.bf16.mxu0 0
        %1389 = vmatpush1.bf16.msra.mxu0 0
        %1390 = vmatprep.subr.bf16.mxu0 0
        %1391 = vmatpush1.bf16.msra.mxu0 0
        %1392 = vmatprep.subr.bf16.mxu0 0
        %1393 = vmatpush1.bf16.msra.mxu0 0
        %1394 = vmatprep.subr.bf16.mxu0 0
        %1395 = vmatpush1.bf16.msra.mxu0 0
        %1396 = vmatprep.subr.bf16.mxu0 0
        %1397 = vmatpush1.bf16.msra.mxu0 0
        %1398 = vmatprep.subr.bf16.mxu0 0
        %1399 = vmatpush1.bf16.msra.mxu0 0
        %1400 = vmatprep.subr.bf16.mxu0 0
        %1401 = vmatpush1.bf16.msra.mxu0 0
        %1402 = vmatprep.mubr.bf16.mxu0 0
        %1403 = vmatmul.mubr.bf16.gmra.mrb[0].mxu0 %v411
        %v1404 = vpop.f32.mrb[0].mxu0
        %v1405 = vadd.f32 0.0, %v1404
        %v1406 = vpop.f32.mrb[0].mxu0
        %v1407 = vadd.f32 0.0, %v1406
        %v1408 = vpop.f32.mrb[0].mxu0
        %v1409 = vpop.f32.mrb[0].mxu0
        %1410 = vdwg.mxu0
        %1411 = vmatprep.subr.bf16.mxu0 %v1247
        %1412 = vmatpush1.bf16.msra.mxu0 %v1246
        %1413 = vmatprep.subr.bf16.mxu0 %v1286
        %1414 = vmatpush1.bf16.msra.mxu0 %v1283
        %1415 = vmatprep.subr.bf16.mxu0 0
        %1416 = vmatpush1.bf16.msra.mxu0 0
        %1417 = vmatprep.subr.bf16.mxu0 0
        %1418 = vmatpush1.bf16.msra.mxu0 0
        %1419 = vmatprep.subr.bf16.mxu0 0
        %1420 = vmatpush1.bf16.msra.mxu0 0
        %1421 = vmatprep.subr.bf16.mxu0 0
        %1422 = vmatpush1.bf16.msra.mxu0 0
        %1423 = vmatprep.subr.bf16.mxu0 0
        %1424 = vmatpush1.bf16.msra.mxu0 0
        %1425 = vmatprep.subr.bf16.mxu0 0
        %1426 = vmatpush1.bf16.msra.mxu0 0
        %1427 = vmatprep.subr.bf16.mxu0 0
        %1428 = vmatpush1.bf16.msra.mxu0 0
        %1429 = vmatprep.subr.bf16.mxu0 0
        %1430 = vmatpush1.bf16.msra.mxu0 0
        %1431 = vmatprep.subr.bf16.mxu0 0
        %1432 = vmatpush1.bf16.msra.mxu0 0
        %1433 = vmatprep.subr.bf16.mxu0 0
        %1434 = vmatpush1.bf16.msra.mxu0 0
        %1435 = vmatprep.subr.bf16.mxu0 0
        %1436 = vmatpush1.bf16.msra.mxu0 0
        %1437 = vmatprep.subr.bf16.mxu0 0
        %1438 = vmatpush1.bf16.msra.mxu0 0
        %1439 = vmatprep.subr.bf16.mxu0 0
        %1440 = vmatpush1.bf16.msra.mxu0 0
        %1441 = vmatprep.subr.bf16.mxu0 0
        %1442 = vmatpush1.bf16.msra.mxu0 0
        %1443 = vmatprep.mubr.bf16.mxu0 0
        %1444 = vmatmul.mubr.bf16.gmra.mrb[0].mxu0 %v411
        %v1445 = vpop.f32.mrb[0].mxu0
        %v1446 = vadd.f32 0.0, %v1445
        %v1447 = vpop.f32.mrb[0].mxu0
        %v1448 = vadd.f32 0.0, %v1447
        %v1449 = vpop.f32.mrb[0].mxu0
        %v1450 = vpop.f32.mrb[0].mxu0
        %1451 = vdwg.mxu0
        %v1452 = vmax.f32 %v1167, %v1323
        %v1453 = vmax.f32 %v1168, %v1325
        %v1454 = vmax.f32 %v1169, %v1364
        %v1455 = vmax.f32 %v1170, %v1366
        %v1456 = vmax.f32 %v1171, %v1405
        %v1457 = vmax.f32 %v1172, %v1407
        %v1458 = vmax.f32 %v1173, %v1446
        %v1459 = vmax.f32 %v1174, %v1448
        %v1460 = vld [vmem:[%s2] sm:$0xff]
        %1462 = vset.pattern.permute.xlu0 0
        %1463 = vperm.xlu0 %1462, %v1460
        %v1464 = vpop.permute.xlu0 %1463
        %v1466 = vadd.f32 %v1452, %v1464
        %v1467 = vadd.f32 %v1453, %v1464
        %v1468 = vadd.f32 %v1454, %v1464
        %v1469 = vadd.f32 %v1455, %v1464
        %v1470 = vadd.f32 %v1456, %v1464
        %v1471 = vadd.f32 %v1457, %v1464
        %v1472 = vadd.f32 %v1458, %v1464
        %v1473 = vadd.f32 %v1459, %v1464
        %v1474 = vmax.f32 %v1466, 0.0
        %v1475 = vmax.f32 %v1467, 0.0
        %v1476 = vmax.f32 %v1468, 0.0
        %v1477 = vmax.f32 %v1469, 0.0
        %v1478 = vmax.f32 %v1470, 0.0
        %v1479 = vmax.f32 %v1471, 0.0
        %v1480 = vmax.f32 %v1472, 0.0
        %v1481 = vmax.f32 %v1473, 0.0
        %1482 = vst [vmem:[%s317] sm:$0xff] %v1474
        %1483 = vst [vmem:[%s317 + $0x8] sm:$0xff] %v1475
        %1484 = vst [vmem:[%s317 + $0x10] sm:$0xff] %v1476
        %1485 = vst [vmem:[%s317 + $0x18] sm:$0xff] %v1477
        %1486 = vst [vmem:[%s317 + $0x20] sm:$0xff] %v1478
        %1487 = vst [vmem:[%s317 + $0x28] sm:$0xff] %v1479
        %1488 = vst [vmem:[%s317 + $0x30] sm:$0xff] %v1480
        %1489 = vst [vmem:[%s317 + $0x38] sm:$0xff] %v1481
        %s1490 = smul.u32 8, %s14
        %p1491 = scmp.lt.s32.totalorder %s1490, 47
        %s1492 = scalar_select %p1491, %s1490, 47
        %s1493 = smul.addr %s1492, 8
        %s1494 = scalar_lea.vmem %s3, %s1493
        // Predicated region
        $region56: #{cnn_forward.5} parent=50 // pred_check
          %p1495 = pneg %p100
        $region57: #{cnn_forward.5} parent=50 // pred_check_branch
          %1497 = sbr.rel (%p1495) target = $region59
        $region58: #{cnn_forward.5} parent=50 // pred_region
          %s1498 = smul.u32 8, %s14
        $region59: #{cnn_forward.5} parent=50 // pred_fallthru
          _
      $region51: #{cnn_forward.5} parent=5 // pred_fallthru
        _
      %p1499 = scmp.le.s32.totalorder 2, %s9
      // Predicated region
      $region60: #{cnn_forward.5} parent=5 // pred_check
        %p1500 = pneg %p1499
      $region61: #{cnn_forward.5} parent=5 // pred_check_branch
        %1502 = sbr.rel (%p1500) target = $region63
      $region62: #{cnn_forward.5} parent=5 // pred_region
        %s1503 = ssub.s32 %s9, 2
        // Predicated region
        $region64: #{cnn_forward.5} parent=62 // pred_check
          %p1504 = pneg %p106
        $region65: #{cnn_forward.5} parent=62 // pred_check_branch
          %1506 = sbr.rel (%p1504) target = $region67
        $region66: #{cnn_forward.5} parent=62 // pred_region
          %s1507 = smul.u32 8, %s15
          %p1508 = scmp.lt.s32.totalorder %s1507, 47
          %s1509 = scalar_select %p1508, %s1507, 47
          %s1510 = smul.addr %s1509, 8
          %s1511 = scalar_lea.vmem %s3, %s1510
        $region67: #{cnn_forward.5} parent=62 // pred_fallthru
          _
      $region63: #{cnn_forward.5} parent=5 // pred_fallthru
        _
    $region6: #{cnn_forward.5} parent=1 // loop_footer
      %s13 = sadd.s32 1, %s9
    $region7: #{cnn_forward.5} parent=1 // loop_footer_branch
      %8 = sbr.rel target = $region3
    $region8: #{cnn_forward.5} parent=1 // loop_exit
      _

// kernel: cnn_forward.6
$region0: #{cnn_forward.6}
  #allocation0 [shape = 'u32[]', space=smem, size = 0x4, offset = 0x4, fixed_abs, tag = 'smem constant byte address 0x4 - core index']
  #allocation1 [shape = 'u32[144,128]{1,0:T(1,128)}', space=vmem, size = 0x12000, scoped, tag = 'internal scratch']
  %s0 = inlined_call_operand.vmem [shape: bf16[4,72,1352], index: 0, kind: input, shape index: {}]
  %s1 = inlined_call_operand.vmem [shape: bf16[16,72], index: 1, kind: input, shape index: {}]
  %s2 = inlined_call_operand.vmem [shape: f32[16,1], index: 2, kind: input, shape index: {}]
  %s3 = inlined_call_operand.vmem [shape: f32[16,1352], index: 3, kind: output, shape index: {}]
  %s4 = sld [smem:[#allocation0]]
  $region173: #{cnn_forward.6} parent=0
    _
  %s6 = ssub.s32 1, %s4
  %s7 = scalar_select 0, %s6, %s4
  $region1: #{cnn_forward.6} parent=0
    #allocation2 [shape = 'u8[1179648]{0}', space=vmem, size = 0x120000, scoped, tag = 'input window, operand 0']
    #allocation3 [shape = 'u8[131072]{0}', space=vmem, size = 0x20000, scoped, tag = 'output window, operand 0']
    loop: start=0, step=1, limit=4
    $region2: #{cnn_forward.6} parent=1 // loop_pre_header
      _
    $region3: #{cnn_forward.6} parent=1 // loop_header
      %s9 = sphi 0, %s13
      %p10 = scmp.ge.s32.totalorder %s9, 4
      %s19 = sphi 0, %s21
      %s22 = sphi 0, %s19
      %s23 = sphi 0, %s22
      %s39 = sphi 0, %s23
      %s43 = sphi 0, %s43
      %s45 = sphi 0, %s43
      %s46 = sphi 0, %s45
      %s60 = sphi 0, %s46
      %s64 = sphi 0, %s64
      %s66 = sphi 0, %s64
      %s67 = sphi 0, %s66
      %s81 = sphi 0, %s67
      %s87 = sphi 0, %s89
      %s90 = sphi 0, %s87
      %s91 = sphi 0, %s90
      %s107 = sphi 0, %s91
    $region4: #{cnn_forward.6} parent=1 // loop_header_branch
      %12 = sbr.rel (%p10) target = $region8
    $region5: #{cnn_forward.6} parent=1 // loop_body
      %s14 = ssub.s32 %s9, 1
      %s15 = ssub.s32 %s9, 2
      %s16 = sadd.s32 %s9, 1
      %s17 = ssub.s32 %s9, %s16
      %p18 = scmp.eq.s32.totalorder %s17, 0
      %s20 = sadd.s32 %s19, 1
      %s21 = scalar_select %p18, %s19, %s20
      %p24 = pneg %p18
      %p25 = scmp.eq.s32.totalorder %s9, 1
      %p26 = por %p24, %p25
      %p27 = scmp.ne.s32.totalorder %s19, %s22
      %p28 = scmp.eq.s32.totalorder %s9, 0
      %p29 = por %p27, %p28
      %p30 = scmp.ne.s32.totalorder %s19, %s22
      %p31 = scmp.eq.s32.totalorder %s14, 1
      %p32 = por %p30, %p31
      %p33 = scmp.ne.s32.totalorder %s22, %s23
      %p34 = scmp.eq.s32.totalorder %s14, 0
      %p35 = por %p33, %p34
      %p36 = scmp.ne.s32.totalorder %s22, %s23
      %p37 = scmp.eq.s32.totalorder %s15, 1
      %p38 = por %p36, %p37
      %p40 = scmp.ne.s32.totalorder %s23, %s39
      %p41 = scmp.eq.s32.totalorder %s15, 0
      %p42 = por %p40, %p41
      %s44 = sadd.s32 %s43, 1
      %p47 = scmp.eq.s32.totalorder %s9, 1
      %p48 = scmp.ne.s32.totalorder %s43, %s45
      %p49 = scmp.eq.s32.totalorder %s9, 0
      %p50 = por %p48, %p49
      %p51 = scmp.ne.s32.totalorder %s43, %s45
      %p52 = scmp.eq.s32.totalorder %s14, 1
      %p53 = por %p51, %p52
      %p54 = scmp.ne.s32.totalorder %s45, %s46
      %p55 = scmp.eq.s32.totalorder %s14, 0
      %p56 = por %p54, %p55
      %p57 = scmp.ne.s32.totalorder %s45, %s46
      %p58 = scmp.eq.s32.totalorder %s15, 1
      %p59 = por %p57, %p58
      %p61 = scmp.ne.s32.totalorder %s46, %s60
      %p62 = scmp.eq.s32.totalorder %s15, 0
      %p63 = por %p61, %p62
      %s65 = sadd.s32 %s64, 1
      %p68 = scmp.eq.s32.totalorder %s9, 1
      %p69 = scmp.ne.s32.totalorder %s64, %s66
      %p70 = scmp.eq.s32.totalorder %s9, 0
      %p71 = por %p69, %p70
      %p72 = scmp.ne.s32.totalorder %s64, %s66
      %p73 = scmp.eq.s32.totalorder %s14, 1
      %p74 = por %p72, %p73
      %p75 = scmp.ne.s32.totalorder %s66, %s67
      %p76 = scmp.eq.s32.totalorder %s14, 0
      %p77 = por %p75, %p76
      %p78 = scmp.ne.s32.totalorder %s66, %s67
      %p79 = scmp.eq.s32.totalorder %s15, 1
      %p80 = por %p78, %p79
      %p82 = scmp.ne.s32.totalorder %s67, %s81
      %p83 = scmp.eq.s32.totalorder %s15, 0
      %p84 = por %p82, %p83
      %s85 = ssub.s32 %s9, %s16
      %p86 = scmp.eq.s32.totalorder %s85, 0
      %s88 = sadd.s32 %s87, 1
      %s89 = scalar_select %p86, %s87, %s88
      %p92 = pneg %p86
      %p93 = scmp.eq.s32.totalorder %s9, 1
      %p94 = por %p92, %p93
      %p95 = scmp.ne.s32.totalorder %s87, %s90
      %p96 = scmp.eq.s32.totalorder %s9, 0
      %p97 = por %p95, %p96
      %p98 = scmp.ne.s32.totalorder %s87, %s90
      %p99 = scmp.eq.s32.totalorder %s14, 1
      %p100 = por %p98, %p99
      %p101 = scmp.ne.s32.totalorder %s90, %s91
      %p102 = scmp.eq.s32.totalorder %s14, 0
      %p103 = por %p101, %p102
      %p104 = scmp.ne.s32.totalorder %s90, %s91
      %p105 = scmp.eq.s32.totalorder %s15, 1
      %p106 = por %p104, %p105
      %p108 = scmp.ne.s32.totalorder %s91, %s107
      %p109 = scmp.eq.s32.totalorder %s15, 0
      %p110 = por %p108, %p109
      %p111 = scmp.le.s32.totalorder 1, %s9
      %p112 = scmp.lt.s32.totalorder %s9, 3
      %p113 = pnand %p111, %p112
      %p114 = pneg %p113
      // Predicated region
      $region9: #{cnn_forward.6} parent=5 // pred_check
        _
      $region10: #{cnn_forward.6} parent=5 // pred_check_branch
        %116 = sbr.rel (%p113) target = $region12
      $region11: #{cnn_forward.6} parent=5 // pred_region
        %s117 = ssub.s32 %s9, 1
        // Predicated region
        $region13: #{cnn_forward.6} parent=11 // pred_check
          %p118 = pneg %p56
        $region14: #{cnn_forward.6} parent=11 // pred_check_branch
          %120 = sbr.rel (%p118) target = $region16
        $region15: #{cnn_forward.6} parent=11 // pred_region
          _
        $region16: #{cnn_forward.6} parent=11 // pred_fallthru
          _
        // Predicated region
        $region17: #{cnn_forward.6} parent=11 // pred_check
          %p121 = pneg %p77
        $region18: #{cnn_forward.6} parent=11 // pred_check_branch
          %123 = sbr.rel (%p121) target = $region20
        $region19: #{cnn_forward.6} parent=11 // pred_region
          _
        $region20: #{cnn_forward.6} parent=11 // pred_fallthru
          _
      $region12: #{cnn_forward.6} parent=5 // pred_fallthru
        _
      %p124 = scmp.lt.s32.totalorder %s9, 2
      // Predicated region
      $region21: #{cnn_forward.6} parent=5 // pred_check
        %p125 = pneg %p124
      $region22: #{cnn_forward.6} parent=5 // pred_check_branch
        %127 = sbr.rel (%p125) target = $region24
      $region23: #{cnn_forward.6} parent=5 // pred_region
        // Predicated region
        $region25: #{cnn_forward.6} parent=23 // pred_check
          %p128 = pneg %p29
        $region26: #{cnn_forward.6} parent=23 // pred_check_branch
          %130 = sbr.rel (%p128) target = $region28
        $region27: #{cnn_forward.6} parent=23 // pred_region
          %s131 = sand.u32 %s19, 1
          %s132 = sand.u32 %s19, 1
          %s133 = smul.addr %s132, 1152
          %s134 = scalar_lea.vmem [#allocation2], %s133
          %s135 = smul.u32 8, %s9
          %s136 = ssub.s32 11, %s135
          %p137 = scmp.lt.s32.totalorder %s136, 8
          %s138 = scalar_select %p137, %s136, 8
          %s139 = smul.u32 2304, %s138
          %p140 = scmp.ne.s32.totalorder 0, %s139
          %s141 = smul.addr %s135, 4
          %s142 = scalar_lea.vmem %s0, %s141
          %s143 = smul.u32 %s138, 4
          // Predicated region
          $region29: #{cnn_forward.6} parent=27 // pred_check
            %p144 = pneg %p140
          $region30: #{cnn_forward.6} parent=27 // pred_check_branch
            %146 = sbr.rel (%p144) target = $region32
          $region31: #{cnn_forward.6} parent=27 // pred_region
            %p147 = scmp.lt.u32.totalorder %s143, 8
            %p148 = pneg %p147
            // Predicated region
            $region33: #{cnn_forward.6} parent=31 // pred_check
              _
            $region34: #{cnn_forward.6} parent=31 // pred_check_branch
              %150 = sbr.rel (%p147) target = $region36
            $region35: #{cnn_forward.6} parent=31 // pred_region
              %s235 = sand.u32 %s143, 7
              %p236 = scmp.eq.s32.totalorder %s235, 0
              // Predicated region
              $region48: #{cnn_forward.6} parent=35 // pred_check
                %p237 = pneg %p236
              $region49: #{cnn_forward.6} parent=35 // pred_check_branch
                %239 = sbr.rel (%p237) target = $region51
              $region50: #{cnn_forward.6} parent=35 // pred_region
                %s240 = sshrl.u32 %s143, 3
                %s241 = sshrl.u32 %s240, 1
                // While loop
                $region52: #{cnn_forward.6} parent=50 // loop_pre_header
                  _
                $region53: #{cnn_forward.6} parent=50 // loop_header
                  %s245 = sphi 0, %s247
                  %p246 = scmp.ge.s32.totalorder %s245, %s241
                  %s250 = sphi 0, %s399
                  %s251 = sphi %s142, %s402
                  %s252 = sphi %s134, %s403
                $region54: #{cnn_forward.6} parent=50 // loop_header_branch
                  %249 = sbr.rel (%p246) target = $region58
                $region55: #{cnn_forward.6} parent=50 // loop_body
                  %v253 = vld [vmem:[%s251] sm:$0xff]
                  %254 = vst [vmem:[%s252] sm:$0xff] %v253
                  %v255 = vld [vmem:[%s251 + $0x8] sm:$0xff]
                  %256 = vst [vmem:[%s252 + $0x8] sm:$0xff] %v255
                  %v257 = vld [vmem:[%s251 + $0x2c] sm:$0xff]
                  %258 = vst [vmem:[%s252 + $0x20] sm:$0xff] %v257
                  %v259 = vld [vmem:[%s251 + $0x34] sm:$0xff]
                  %260 = vst [vmem:[%s252 + $0x28] sm:$0xff] %v259
                  %v261 = vld [vmem:[%s251 + $0x58] sm:$0xff]
                  %262 = vst [vmem:[%s252 + $0x40] sm:$0xff] %v261
                  %v263 = vld [vmem:[%s251 + $0x60] sm:$0xff]
                  %264 = vst [vmem:[%s252 + $0x48] sm:$0xff] %v263
                  %v265 = vld [vmem:[%s251 + $0x84] sm:$0xff]
                  %266 = vst [vmem:[%s252 + $0x60] sm:$0xff] %v265
                  %v267 = vld [vmem:[%s251 + $0x8c] sm:$0xff]
                  %268 = vst [vmem:[%s252 + $0x68] sm:$0xff] %v267
                  %v269 = vld [vmem:[%s251 + $0xb0] sm:$0xff]
                  %270 = vst [vmem:[%s252 + $0x80] sm:$0xff] %v269
                  %v271 = vld [vmem:[%s251 + $0xb8] sm:$0xff]
                  %272 = vst [vmem:[%s252 + $0x88] sm:$0xff] %v271
                  %v273 = vld [vmem:[%s251 + $0xdc] sm:$0xff]
                  %274 = vst [vmem:[%s252 + $0xa0] sm:$0xff] %v273
                  %v275 = vld [vmem:[%s251 + $0xe4] sm:$0xff]
                  %276 = vst [vmem:[%s252 + $0xa8] sm:$0xff] %v275
                  %v277 = vld [vmem:[%s251 + $0x108] sm:$0xff]
                  %278 = vst [vmem:[%s252 + $0xc0] sm:$0xff] %v277
                  %v279 = vld [vmem:[%s251 + $0x110] sm:$0xff]
                  %280 = vst [vmem:[%s252 + $0xc8] sm:$0xff] %v279
                  %v281 = vld [vmem:[%s251 + $0x134] sm:$0xff]
                  %282 = vst [vmem:[%s252 + $0xe0] sm:$0xff] %v281
                  %v283 = vld [vmem:[%s251 + $0x13c] sm:$0xff]
                  %284 = vst [vmem:[%s252 + $0xe8] sm:$0xff] %v283
                  %v285 = vld [vmem:[%s251 + $0x160] sm:$0xff]
                  %286 = vst [vmem:[%s252 + $0x100] sm:$0xff] %v285
                  %v287 = vld [vmem:[%s251 + $0x168] sm:$0xff]
                  %288 = vst [vmem:[%s252 + $0x108] sm:$0xff] %v287
                  %v289 = vld [vmem:[%s251 + $0x18c] sm:$0xff]
                  %290 = vst [vmem:[%s252 + $0x120] sm:$0xff] %v289
                  %v291 = vld [vmem:[%s251 + $0x194] sm:$0xff]
                  %292 = vst [vmem:[%s252 + $0x128] sm:$0xff] %v291
                  %v293 = vld [vmem:[%s251 + $0x1b8] sm:$0xff]
                  %294 = vst [vmem:[%s252 + $0x140] sm:$0xff] %v293
                  %v295 = vld [vmem:[%s251 + $0x1c0] sm:$0xff]
                  %296 = vst [vmem:[%s252 + $0x148] sm:$0xff] %v295
                  %v297 = vld [vmem:[%s251 + $0x1e4] sm:$0xff]
                  %298 = vst [vmem:[%s252 + $0x160] sm:$0xff] %v297
                  %v299 = vld [vmem:[%s251 + $0x1ec] sm:$0xff]
                  %300 = vst [vmem:[%s252 + $0x168] sm:$0xff] %v299
                  %v301 = vld [vmem:[%s251 + $0x210] sm:$0xff]
                  %302 = vst [vmem:[%s252 + $0x180] sm:$0xff] %v301
                  %v303 = vld [vmem:[%s251 + $0x218] sm:$0xff]
                  %304 = vst [vmem:[%s252 + $0x188] sm:$0xff] %v303
                  %v305 = vld [vmem:[%s251 + $0x23c] sm:$0xff]
                  %306 = vst [vmem:[%s252 + $0x1a0] sm:$0xff] %v305
                  %v307 = vld [vmem:[%s251 + $0x244] sm:$0xff]
                  %308 = vst [vmem:[%s252 + $0x1a8] sm:$0xff] %v307
                  %v309 = vld [vmem:[%s251 + $0x268] sm:$0xff]
                  %310 = vst [vmem:[%s252 + $0x1c0] sm:$0xff] %v309
                  %v311 = vld [vmem:[%s251 + $0x270] sm:$0xff]
                  %312 = vst [vmem:[%s252 + $0x1c8] sm:$0xff] %v311
                  %v313 = vld [vmem:[%s251 + $0x294] sm:$0xff]
                  %314 = vst [vmem:[%s252 + $0x1e0] sm:$0xff] %v313
                  %v315 = vld [vmem:[%s251 + $0x29c] sm:$0xff]
                  %316 = vst [vmem:[%s252 + $0x1e8] sm:$0xff] %v315
                  %v317 = vld [vmem:[%s251 + $0x2c0] sm:$0xff]
                  %318 = vst [vmem:[%s252 + $0x200] sm:$0xff] %v317
                  %v319 = vld [vmem:[%s251 + $0x2c8] sm:$0xff]
                  %320 = vst [vmem:[%s252 + $0x208] sm:$0xff] %v319
                  %v321 = vld [vmem:[%s251 + $0x2ec] sm:$0xff]
                  %322 = vst [vmem:[%s252 + $0x220] sm:$0xff] %v321
                  %v323 = vld [vmem:[%s251 + $0x2f4] sm:$0xff]
                  %324 = vst [vmem:[%s252 + $0x228] sm:$0xff] %v323
                  %v325 = vld [vmem:[%s251 + $0x318] sm:$0xff]
                  %326 = vst [vmem:[%s252 + $0x240] sm:$0xff] %v325
                  %v327 = vld [vmem:[%s251 + $0x320] sm:$0xff]
                  %328 = vst [vmem:[%s252 + $0x248] sm:$0xff] %v327
                  %v329 = vld [vmem:[%s251 + $0x344] sm:$0xff]
                  %330 = vst [vmem:[%s252 + $0x260] sm:$0xff] %v329
                  %v331 = vld [vmem:[%s251 + $0x34c] sm:$0xff]
                  %332 = vst [vmem:[%s252 + $0x268] sm:$0xff] %v331
                  %v333 = vld [vmem:[%s251 + $0x370] sm:$0xff]
                  %334 = vst [vmem:[%s252 + $0x280] sm:$0xff] %v333
                  %v335 = vld [vmem:[%s251 + $0x378] sm:$0xff]
                  %336 = vst [vmem:[%s252 + $0x288] sm:$0xff] %v335
                  %v337 = vld [vmem:[%s251 + $0x39c] sm:$0xff]
                  %338 = vst [vmem:[%s252 + $0x2a0] sm:$0xff] %v337
                  %v339 = vld [vmem:[%s251 + $0x3a4] sm:$0xff]
                  %340 = vst [vmem:[%s252 + $0x2a8] sm:$0xff] %v339
                  %v341 = vld [vmem:[%s251 + $0x3c8] sm:$0xff]
                  %342 = vst [vmem:[%s252 + $0x2c0] sm:$0xff] %v341
                  %v343 = vld [vmem:[%s251 + $0x3d0] sm:$0xff]
                  %344 = vst [vmem:[%s252 + $0x2c8] sm:$0xff] %v343
                  %v345 = vld [vmem:[%s251 + $0x3f4] sm:$0xff]
                  %346 = vst [vmem:[%s252 + $0x2e0] sm:$0xff] %v345
                  %v347 = vld [vmem:[%s251 + $0x3fc] sm:$0xff]
                  %348 = vst [vmem:[%s252 + $0x2e8] sm:$0xff] %v347
                  %v349 = vld [vmem:[%s251 + $0x420] sm:$0xff]
                  %350 = vst [vmem:[%s252 + $0x300] sm:$0xff] %v349
                  %v351 = vld [vmem:[%s251 + $0x428] sm:$0xff]
                  %352 = vst [vmem:[%s252 + $0x308] sm:$0xff] %v351
                  %v353 = vld [vmem:[%s251 + $0x44c] sm:$0xff]
                  %354 = vst [vmem:[%s252 + $0x320] sm:$0xff] %v353
                  %v355 = vld [vmem:[%s251 + $0x454] sm:$0xff]
                  %356 = vst [vmem:[%s252 + $0x328] sm:$0xff] %v355
                  %v357 = vld [vmem:[%s251 + $0x478] sm:$0xff]
                  %358 = vst [vmem:[%s252 + $0x340] sm:$0xff] %v357
                  %v359 = vld [vmem:[%s251 + $0x480] sm:$0xff]
                  %360 = vst [vmem:[%s252 + $0x348] sm:$0xff] %v359
                  %v361 = vld [vmem:[%s251 + $0x4a4] sm:$0xff]
                  %362 = vst [vmem:[%s252 + $0x360] sm:$0xff] %v361
                  %v363 = vld [vmem:[%s251 + $0x4ac] sm:$0xff]
                  %364 = vst [vmem:[%s252 + $0x368] sm:$0xff] %v363
                  %v365 = vld [vmem:[%s251 + $0x4d0] sm:$0xff]
                  %366 = vst [vmem:[%s252 + $0x380] sm:$0xff] %v365
                  %v367 = vld [vmem:[%s251 + $0x4d8] sm:$0xff]
                  %368 = vst [vmem:[%s252 + $0x388] sm:$0xff] %v367
                  %v369 = vld [vmem:[%s251 + $0x4fc] sm:$0xff]
                  %370 = vst [vmem:[%s252 + $0x3a0] sm:$0xff] %v369
                  %v371 = vld [vmem:[%s251 + $0x504] sm:$0xff]
                  %372 = vst [vmem:[%s252 + $0x3a8] sm:$0xff] %v371
                  %v373 = vld [vmem:[%s251 + $0x528] sm:$0xff]
                  %374 = vst [vmem:[%s252 + $0x3c0] sm:$0xff] %v373
                  %v375 = vld [vmem:[%s251 + $0x530] sm:$0xff]
                  %376 = vst [vmem:[%s252 + $0x3c8] sm:$0xff] %v375
                  %v377 = vld [vmem:[%s251 + $0x554] sm:$0xff]
                  %378 = vst [vmem:[%s252 + $0x3e0] sm:$0xff] %v377
                  %v379 = vld [vmem:[%s251 + $0x55c] sm:$0xff]
                  %380 = vst [vmem:[%s252 + $0x3e8] sm:$0xff] %v379
                  %v381 = vld [vmem:[%s251 + $0x580] sm:$0xff]
                  %382 = vst [vmem:[%s252 + $0x400] sm:$0xff] %v381
                  %v383 = vld [vmem:[%s251 + $0x588] sm:$0xff]
                  %384 = vst [vmem:[%s252 + $0x408] sm:$0xff] %v383
                  %v385 = vld [vmem:[%s251 + $0x5ac] sm:$0xff]
                  %386 = vst [vmem:[%s252 + $0x420] sm:$0xff] %v385
                  %v387 = vld [vmem:[%s251 + $0x5b4] sm:$0xff]
                  %388 = vst [vmem:[%s252 + $0x428] sm:$0xff] %v387
                  %v389 = vld [vmem:[%s251 + $0x5d8] sm:$0xff]
                  %390 = vst [vmem:[%s252 + $0x440] sm:$0xff] %v389
                  %v391 = vld [vmem:[%s251 + $0x5e0] sm:$0xff]
                  %392 = vst [vmem:[%s252 + $0x448] sm:$0xff] %v391
                  %v393 = vld [vmem:[%s251 + $0x604] sm:$0xff]
                  %394 = vst [vmem:[%s252 + $0x460] sm:$0xff] %v393
                  %v395 = vld [vmem:[%s251 + $0x60c] sm:$0xff]
                  %396 = vst [vmem:[%s252 + $0x468] sm:$0xff] %v395
                  %s397 = sadd.s32 1, %s250
                  %p398 = scmp.ge.s32.totalorder %s397, %s241
                  %s399 = scalar_select %p398, 0, %s397
                  %s400 = smul.u32 %s399, 16
                  %s401 = smul.u32 %s399, 16
                  %s402 = scalar_lea.vmem %s142, %s400
                  %s403 = scalar_lea.vmem %s134, %s401 [#allocation2]
                $region56: #{cnn_forward.6} parent=50 // loop_footer
                  %s247 = sadd.s32 %s245, 1
                $region57: #{cnn_forward.6} parent=50 // loop_footer_branch
                  %244 = sbr.rel target = $region53
                $region58: #{cnn_forward.6} parent=50 // loop_exit
                  _
                %s404 = sshrl.u32 %s240, 1
                %s405 = sand.u32 %s240, 1
                %s406 = smul.u32 %s404, 2
                %s407 = smul.u32 128, %s406
                %s408 = sshra.s32 %s407, 4
                %s409 = scalar_lea.vmem %s142, %s408
                %s410 = smul.u32 128, %s406
                %s411 = sshra.s32 %s410, 4
                %s412 = scalar_lea.vmem %s134, %s411 [#allocation2]
                // While loop
                $region59: #{cnn_forward.6} parent=50 // loop_pre_header
                  _
                $region60: #{cnn_forward.6} parent=50 // loop_header
                  %s416 = sphi 0, %s418
                  %p417 = scmp.ge.s32.totalorder %s416, %s405
                  %s421 = sphi 0, %s498
                  %s422 = sphi %s409, %s501
                  %s423 = sphi %s412, %s502
                $region61: #{cnn_forward.6} parent=50 // loop_header_branch
                  %420 = sbr.rel (%p417) target = $region65
                $region62: #{cnn_forward.6} parent=50 // loop_body
                  %v424 = vld [vmem:[%s422] sm:$0xff]
                  %425 = vst [vmem:[%s423] sm:$0xff] %v424
                  %v426 = vld [vmem:[%s422 + $0x2c] sm:$0xff]
                  %427 = vst [vmem:[%s423 + $0x20] sm:$0xff] %v426
                  %v428 = vld [vmem:[%s422 + $0x58] sm:$0xff]
                  %429 = vst [vmem:[%s423 + $0x40] sm:$0xff] %v428
                  %v430 = vld [vmem:[%s422 + $0x84] sm:$0xff]
                  %431 = vst [vmem:[%s423 + $0x60] sm:$0xff] %v430
                  %v432 = vld [vmem:[%s422 + $0xb0] sm:$0xff]
                  %433 = vst [vmem:[%s423 + $0x80] sm:$0xff] %v432
                  %v434 = vld [vmem:[%s422 + $0xdc] sm:$0xff]
                  %435 = vst [vmem:[%s423 + $0xa0] sm:$0xff] %v434
                  %v436 = vld [vmem:[%s422 + $0x108] sm:$0xff]
                  %437 = vst [vmem:[%s423 + $0xc0] sm:$0xff] %v436
                  %v438 = vld [vmem:[%s422 + $0x134] sm:$0xff]
                  %439 = vst [vmem:[%s423 + $0xe0] sm:$0xff] %v438
                  %v440 = vld [vmem:[%s422 + $0x160] sm:$0xff]
                  %441 = vst [vmem:[%s423 + $0x100] sm:$0xff] %v440
                  %v442 = vld [vmem:[%s422 + $0x18c] sm:$0xff]
                  %443 = vst [vmem:[%s423 + $0x120] sm:$0xff] %v442
                  %v444 = vld [vmem:[%s422 + $0x1b8] sm:$0xff]
                  %445 = vst [vmem:[%s423 + $0x140] sm:$0xff] %v444
                  %v446 = vld [vmem:[%s422 + $0x1e4] sm:$0xff]
                  %447 = vst [vmem:[%s423 + $0x160] sm:$0xff] %v446
                  %v448 = vld [vmem:[%s422 + $0x210] sm:$0xff]
                  %449 = vst [vmem:[%s423 + $0x180] sm:$0xff] %v448
                  %v450 = vld [vmem:[%s422 + $0x23c] sm:$0xff]
                  %451 = vst [vmem:[%s423 + $0x1a0] sm:$0xff] %v450
                  %v452 = vld [vmem:[%s422 + $0x268] sm:$0xff]
                  %453 = vst [vmem:[%s423 + $0x1c0] sm:$0xff] %v452
                  %v454 = vld [vmem:[%s422 + $0x294] sm:$0xff]
                  %455 = vst [vmem:[%s423 + $0x1e0] sm:$0xff] %v454
                  %v456 = vld [vmem:[%s422 + $0x2c0] sm:$0xff]
                  %457 = vst [vmem:[%s423 + $0x200] sm:$0xff] %v456
                  %v458 = vld [vmem:[%s422 + $0x2ec] sm:$0xff]
                  %459 = vst [vmem:[%s423 + $0x220] sm:$0xff] %v458
                  %v460 = vld [vmem:[%s422 + $0x318] sm:$0xff]
                  %461 = vst [vmem:[%s423 + $0x240] sm:$0xff] %v460
                  %v462 = vld [vmem:[%s422 + $0x344] sm:$0xff]
                  %463 = vst [vmem:[%s423 + $0x260] sm:$0xff] %v462
                  %v464 = vld [vmem:[%s422 + $0x370] sm:$0xff]
                  %465 = vst [vmem:[%s423 + $0x280] sm:$0xff] %v464
                  %v466 = vld [vmem:[%s422 + $0x39c] sm:$0xff]
                  %467 = vst [vmem:[%s423 + $0x2a0] sm:$0xff] %v466
                  %v468 = vld [vmem:[%s422 + $0x3c8] sm:$0xff]
                  %469 = vst [vmem:[%s423 + $0x2c0] sm:$0xff] %v468
                  %v470 = vld [vmem:[%s422 + $0x3f4] sm:$0xff]
                  %471 = vst [vmem:[%s423 + $0x2e0] sm:$0xff] %v470
                  %v472 = vld [vmem:[%s422 + $0x420] sm:$0xff]
                  %473 = vst [vmem:[%s423 + $0x300] sm:$0xff] %v472
                  %v474 = vld [vmem:[%s422 + $0x44c] sm:$0xff]
                  %475 = vst [vmem:[%s423 + $0x320] sm:$0xff] %v474
                  %v476 = vld [vmem:[%s422 + $0x478] sm:$0xff]
                  %477 = vst [vmem:[%s423 + $0x340] sm:$0xff] %v476
                  %v478 = vld [vmem:[%s422 + $0x4a4] sm:$0xff]
                  %479 = vst [vmem:[%s423 + $0x360] sm:$0xff] %v478
                  %v480 = vld [vmem:[%s422 + $0x4d0] sm:$0xff]
                  %481 = vst [vmem:[%s423 + $0x380] sm:$0xff] %v480
                  %v482 = vld [vmem:[%s422 + $0x4fc] sm:$0xff]
                  %483 = vst [vmem:[%s423 + $0x3a0] sm:$0xff] %v482
                  %v484 = vld [vmem:[%s422 + $0x528] sm:$0xff]
                  %485 = vst [vmem:[%s423 + $0x3c0] sm:$0xff] %v484
                  %v486 = vld [vmem:[%s422 + $0x554] sm:$0xff]
                  %487 = vst [vmem:[%s423 + $0x3e0] sm:$0xff] %v486
                  %v488 = vld [vmem:[%s422 + $0x580] sm:$0xff]
                  %489 = vst [vmem:[%s423 + $0x400] sm:$0xff] %v488
                  %v490 = vld [vmem:[%s422 + $0x5ac] sm:$0xff]
                  %491 = vst [vmem:[%s423 + $0x420] sm:$0xff] %v490
                  %v492 = vld [vmem:[%s422 + $0x5d8] sm:$0xff]
                  %493 = vst [vmem:[%s423 + $0x440] sm:$0xff] %v492
                  %v494 = vld [vmem:[%s422 + $0x604] sm:$0xff]
                  %495 = vst [vmem:[%s423 + $0x460] sm:$0xff] %v494
                  %s496 = sadd.s32 1, %s421
                  %p497 = scmp.ge.s32.totalorder %s496, %s405
                  %s498 = scalar_select %p497, 0, %s496
                  %s499 = smul.u32 %s498, 8
                  %s500 = smul.u32 %s498, 8
                  %s501 = scalar_lea.vmem %s409, %s499
                  %s502 = scalar_lea.vmem %s412, %s500 [#allocation2]
                $region63: #{cnn_forward.6} parent=50 // loop_footer
                  %s418 = sadd.s32 %s416, 1
                $region64: #{cnn_forward.6} parent=50 // loop_footer_branch
                  %415 = sbr.rel target = $region60
                $region65: #{cnn_forward.6} parent=50 // loop_exit
                  _
              $region51: #{cnn_forward.6} parent=35 // pred_fallthru
                _
              %p503 = pneg %p236
              // Predicated region
              $region66: #{cnn_forward.6} parent=35 // pred_check
                _
              $region67: #{cnn_forward.6} parent=35 // pred_check_branch
                %505 = sbr.rel (%p236) target = $region69
              $region68: #{cnn_forward.6} parent=35 // pred_region
                %s506 = sand.u32 %s143, 7
                %s507 = ssub.s32 %s143, %s506
                %s508 = scalar_lea.vmem %s142, %s507
                %s509 = ssub.s32 %s143, %s506
                %s510 = scalar_lea.vmem %s134, %s509 [#allocation2]
                %s511 = sshrl.u32 %s143, 3
                %s512 = sshrl.u32 %s511, 1
                // While loop
                $region70: #{cnn_forward.6} parent=68 // loop_pre_header
                  _
                $region71: #{cnn_forward.6} parent=68 // loop_header
                  %s516 = sphi 0, %s518
                  %p517 = scmp.ge.s32.totalorder %s516, %s512
                  %s521 = sphi 0, %s670
                  %s522 = sphi %s142, %s673
                  %s523 = sphi %s134, %s674
                $region72: #{cnn_forward.6} parent=68 // loop_header_branch
                  %520 = sbr.rel (%p517) target = $region76
                $region73: #{cnn_forward.6} parent=68 // loop_body
                  %v524 = vld [vmem:[%s522] sm:$0xff]
                  %525 = vst [vmem:[%s523] sm:$0xff] %v524
                  %v526 = vld [vmem:[%s522 + $0x8] sm:$0xff]
                  %527 = vst [vmem:[%s523 + $0x8] sm:$0xff] %v526
                  %v528 = vld [vmem:[%s522 + $0x2c] sm:$0xff]
                  %529 = vst [vmem:[%s523 + $0x20] sm:$0xff] %v528
                  %v530 = vld [vmem:[%s522 + $0x34] sm:$0xff]
                  %531 = vst [vmem:[%s523 + $0x28] sm:$0xff] %v530
                  %v532 = vld [vmem:[%s522 + $0x58] sm:$0xff]
                  %533 = vst [vmem:[%s523 + $0x40] sm:$0xff] %v532
                  %v534 = vld [vmem:[%s522 + $0x60] sm:$0xff]
                  %535 = vst [vmem:[%s523 + $0x48] sm:$0xff] %v534
                  %v536 = vld [vmem:[%s522 + $0x84] sm:$0xff]
                  %537 = vst [vmem:[%s523 + $0x60] sm:$0xff] %v536
                  %v538 = vld [vmem:[%s522 + $0x8c] sm:$0xff]
                  %539 = vst [vmem:[%s523 + $0x68] sm:$0xff] %v538
                  %v540 = vld [vmem:[%s522 + $0xb0] sm:$0xff]
                  %541 = vst [vmem:[%s523 + $0x80] sm:$0xff] %v540
                  %v542 = vld [vmem:[%s522 + $0xb8] sm:$0xff]
                  %543 = vst [vmem:[%s523 + $0x88] sm:$0xff] %v542
                  %v544 = vld [vmem:[%s522 + $0xdc] sm:$0xff]
                  %545 = vst [vmem:[%s523 + $0xa0] sm:$0xff] %v544
                  %v546 = vld [vmem:[%s522 + $0xe4] sm:$0xff]
                  %547 = vst [vmem:[%s523 + $0xa8] sm:$0xff] %v546
                  %v548 = vld [vmem:[%s522 + $0x108] sm:$0xff]
                  %549 = vst [vmem:[%s523 + $0xc0] sm:$0xff] %v548
                  %v550 = vld [vmem:[%s522 + $0x110] sm:$0xff]
                  %551 = vst [vmem:[%s523 + $0xc8] sm:$0xff] %v550
                  %v552 = vld [vmem:[%s522 + $0x134] sm:$0xff]
                  %553 = vst [vmem:[%s523 + $0xe0] sm:$0xff] %v552
                  %v554 = vld [vmem:[%s522 + $0x13c] sm:$0xff]
                  %555 = vst [vmem:[%s523 + $0xe8] sm:$0xff] %v554
                  %v556 = vld [vmem:[%s522 + $0x160] sm:$0xff]
                  %557 = vst [vmem:[%s523 + $0x100] sm:$0xff] %v556
                  %v558 = vld [vmem:[%s522 + $0x168] sm:$0xff]
                  %559 = vst [vmem:[%s523 + $0x108] sm:$0xff] %v558
                  %v560 = vld [vmem:[%s522 + $0x18c] sm:$0xff]
                  %561 = vst [vmem:[%s523 + $0x120] sm:$0xff] %v560
                  %v562 = vld [vmem:[%s522 + $0x194] sm:$0xff]
                  %563 = vst [vmem:[%s523 + $0x128] sm:$0xff] %v562
                  %v564 = vld [vmem:[%s522 + $0x1b8] sm:$0xff]
                  %565 = vst [vmem:[%s523 + $0x140] sm:$0xff] %v564
                  %v566 = vld [vmem:[%s522 + $0x1c0] sm:$0xff]
                  %567 = vst [vmem:[%s523 + $0x148] sm:$0xff] %v566
                  %v568 = vld [vmem:[%s522 + $0x1e4] sm:$0xff]
                  %569 = vst [vmem:[%s523 + $0x160] sm:$0xff] %v568
                  %v570 = vld [vmem:[%s522 + $0x1ec] sm:$0xff]
                  %571 = vst [vmem:[%s523 + $0x168] sm:$0xff] %v570
                  %v572 = vld [vmem:[%s522 + $0x210] sm:$0xff]
                  %573 = vst [vmem:[%s523 + $0x180] sm:$0xff] %v572
                  %v574 = vld [vmem:[%s522 + $0x218] sm:$0xff]
                  %575 = vst [vmem:[%s523 + $0x188] sm:$0xff] %v574
                  %v576 = vld [vmem:[%s522 + $0x23c] sm:$0xff]
                  %577 = vst [vmem:[%s523 + $0x1a0] sm:$0xff] %v576
                  %v578 = vld [vmem:[%s522 + $0x244] sm:$0xff]
                  %579 = vst [vmem:[%s523 + $0x1a8] sm:$0xff] %v578
                  %v580 = vld [vmem:[%s522 + $0x268] sm:$0xff]
                  %581 = vst [vmem:[%s523 + $0x1c0] sm:$0xff] %v580
                  %v582 = vld [vmem:[%s522 + $0x270] sm:$0xff]
                  %583 = vst [vmem:[%s523 + $0x1c8] sm:$0xff] %v582
                  %v584 = vld [vmem:[%s522 + $0x294] sm:$0xff]
                  %585 = vst [vmem:[%s523 + $0x1e0] sm:$0xff] %v584
                  %v586 = vld [vmem:[%s522 + $0x29c] sm:$0xff]
                  %587 = vst [vmem:[%s523 + $0x1e8] sm:$0xff] %v586
                  %v588 = vld [vmem:[%s522 + $0x2c0] sm:$0xff]
                  %589 = vst [vmem:[%s523 + $0x200] sm:$0xff] %v588
                  %v590 = vld [vmem:[%s522 + $0x2c8] sm:$0xff]
                  %591 = vst [vmem:[%s523 + $0x208] sm:$0xff] %v590
                  %v592 = vld [vmem:[%s522 + $0x2ec] sm:$0xff]
                  %593 = vst [vmem:[%s523 + $0x220] sm:$0xff] %v592
                  %v594 = vld [vmem:[%s522 + $0x2f4] sm:$0xff]
                  %595 = vst [vmem:[%s523 + $0x228] sm:$0xff] %v594
                  %v596 = vld [vmem:[%s522 + $0x318] sm:$0xff]
                  %597 = vst [vmem:[%s523 + $0x240] sm:$0xff] %v596
                  %v598 = vld [vmem:[%s522 + $0x320] sm:$0xff]
                  %599 = vst [vmem:[%s523 + $0x248] sm:$0xff] %v598
                  %v600 = vld [vmem:[%s522 + $0x344] sm:$0xff]
                  %601 = vst [vmem:[%s523 + $0x260] sm:$0xff] %v600
                  %v602 = vld [vmem:[%s522 + $0x34c] sm:$0xff]
                  %603 = vst [vmem:[%s523 + $0x268] sm:$0xff] %v602
                  %v604 = vld [vmem:[%s522 + $0x370] sm:$0xff]
                  %605 = vst [vmem:[%s523 + $0x280] sm:$0xff] %v604
                  %v606 = vld [vmem:[%s522 + $0x378] sm:$0xff]
                  %607 = vst [vmem:[%s523 + $0x288] sm:$0xff] %v606
                  %v608 = vld [vmem:[%s522 + $0x39c] sm:$0xff]
                  %609 = vst [vmem:[%s523 + $0x2a0] sm:$0xff] %v608
                  %v610 = vld [vmem:[%s522 + $0x3a4] sm:$0xff]
                  %611 = vst [vmem:[%s523 + $0x2a8] sm:$0xff] %v610
                  %v612 = vld [vmem:[%s522 + $0x3c8] sm:$0xff]
                  %613 = vst [vmem:[%s523 + $0x2c0] sm:$0xff] %v612
                  %v614 = vld [vmem:[%s522 + $0x3d0] sm:$0xff]
                  %615 = vst [vmem:[%s523 + $0x2c8] sm:$0xff] %v614
                  %v616 = vld [vmem:[%s522 + $0x3f4] sm:$0xff]
                  %617 = vst [vmem:[%s523 + $0x2e0] sm:$0xff] %v616
                  %v618 = vld [vmem:[%s522 + $0x3fc] sm:$0xff]
                  %619 = vst [vmem:[%s523 + $0x2e8] sm:$0xff] %v618
                  %v620 = vld [vmem:[%s522 + $0x420] sm:$0xff]
                  %621 = vst [vmem:[%s523 + $0x300] sm:$0xff] %v620
                  %v622 = vld [vmem:[%s522 + $0x428] sm:$0xff]
                  %623 = vst [vmem:[%s523 + $0x308] sm:$0xff] %v622
                  %v624 = vld [vmem:[%s522 + $0x44c] sm:$0xff]
                  %625 = vst [vmem:[%s523 + $0x320] sm:$0xff] %v624
                  %v626 = vld [vmem:[%s522 + $0x454] sm:$0xff]
                  %627 = vst [vmem:[%s523 + $0x328] sm:$0xff] %v626
                  %v628 = vld [vmem:[%s522 + $0x478] sm:$0xff]
                  %629 = vst [vmem:[%s523 + $0x340] sm:$0xff] %v628
                  %v630 = vld [vmem:[%s522 + $0x480] sm:$0xff]
                  %631 = vst [vmem:[%s523 + $0x348] sm:$0xff] %v630
                  %v632 = vld [vmem:[%s522 + $0x4a4] sm:$0xff]
                  %633 = vst [vmem:[%s523 + $0x360] sm:$0xff] %v632
                  %v634 = vld [vmem:[%s522 + $0x4ac] sm:$0xff]
                  %635 = vst [vmem:[%s523 + $0x368] sm:$0xff] %v634
                  %v636 = vld [vmem:[%s522 + $0x4d0] sm:$0xff]
                  %637 = vst [vmem:[%s523 + $0x380] sm:$0xff] %v636
                  %v638 = vld [vmem:[%s522 + $0x4d8] sm:$0xff]
                  %639 = vst [vmem:[%s523 + $0x388] sm:$0xff] %v638
                  %v640 = vld [vmem:[%s522 + $0x4fc] sm:$0xff]
                  %641 = vst [vmem:[%s523 + $0x3a0] sm:$0xff] %v640
                  %v642 = vld [vmem:[%s522 + $0x504] sm:$0xff]
                  %643 = vst [vmem:[%s523 + $0x3a8] sm:$0xff] %v642
                  %v644 = vld [vmem:[%s522 + $0x528] sm:$0xff]
                  %645 = vst [vmem:[%s523 + $0x3c0] sm:$0xff] %v644
                  %v646 = vld [vmem:[%s522 + $0x530] sm:$0xff]
                  %647 = vst [vmem:[%s523 + $0x3c8] sm:$0xff] %v646
                  %v648 = vld [vmem:[%s522 + $0x554] sm:$0xff]
                  %649 = vst [vmem:[%s523 + $0x3e0] sm:$0xff] %v648
                  %v650 = vld [vmem:[%s522 + $0x55c] sm:$0xff]
                  %651 = vst [vmem:[%s523 + $0x3e8] sm:$0xff] %v650
                  %v652 = vld [vmem:[%s522 + $0x580] sm:$0xff]
                  %653 = vst [vmem:[%s523 + $0x400] sm:$0xff] %v652
                  %v654 = vld [vmem:[%s522 + $0x588] sm:$0xff]
                  %655 = vst [vmem:[%s523 + $0x408] sm:$0xff] %v654
                  %v656 = vld [vmem:[%s522 + $0x5ac] sm:$0xff]
                  %657 = vst [vmem:[%s523 + $0x420] sm:$0xff] %v656
                  %v658 = vld [vmem:[%s522 + $0x5b4] sm:$0xff]
                  %659 = vst [vmem:[%s523 + $0x428] sm:$0xff] %v658
                  %v660 = vld [vmem:[%s522 + $0x5d8] sm:$0xff]
                  %661 = vst [vmem:[%s523 + $0x440] sm:$0xff] %v660
                  %v662 = vld [vmem:[%s522 + $0x5e0] sm:$0xff]
                  %663 = vst [vmem:[%s523 + $0x448] sm:$0xff] %v662
                  %v664 = vld [vmem:[%s522 + $0x604] sm:$0xff]
                  %665 = vst [vmem:[%s523 + $0x460] sm:$0xff] %v664
                  %v666 = vld [vmem:[%s522 + $0x60c] sm:$0xff]
                  %667 = vst [vmem:[%s523 + $0x468] sm:$0xff] %v666
                  %s668 = sadd.s32 1, %s521
                  %p669 = scmp.ge.s32.totalorder %s668, %s512
                  %s670 = scalar_select %p669, 0, %s668
                  %s671 = smul.u32 %s670, 16
                  %s672 = smul.u32 %s670, 16
                  %s673 = scalar_lea.vmem %s142, %s671
                  %s674 = scalar_lea.vmem %s134, %s672 [#allocation2]
                $region74: #{cnn_forward.6} parent=68 // loop_footer
                  %s518 = sadd.s32 %s516, 1
                $region75: #{cnn_forward.6} parent=68 // loop_footer_branch
                  %515 = sbr.rel target = $region71
                $region76: #{cnn_forward.6} parent=68 // loop_exit
                  _
                %s675 = sshrl.u32 %s511, 1
                %s676 = sand.u32 %s511, 1
                %s677 = smul.u32 %s675, 2
                %s678 = smul.u32 128, %s677
                %s679 = sshra.s32 %s678, 4
                %s680 = scalar_lea.vmem %s142, %s679
                %s681 = smul.u32 128, %s677
                %s682 = sshra.s32 %s681, 4
                %s683 = scalar_lea.vmem %s134, %s682 [#allocation2]
                // While loop
                $region77: #{cnn_forward.6} parent=68 // loop_pre_header
                  _
                $region78: #{cnn_forward.6} parent=68 // loop_header
                  %s687 = sphi 0, %s689
                  %p688 = scmp.ge.s32.totalorder %s687, %s676
                  %s692 = sphi 0, %s769
                  %s693 = sphi %s680, %s772
                  %s694 = sphi %s683, %s773
                $region79: #{cnn_forward.6} parent=68 // loop_header_branch
                  %691 = sbr.rel (%p688) target = $region83
                $region80: #{cnn_forward.6} parent=68 // loop_body
                  %v695 = vld [vmem:[%s693] sm:$0xff]
                  %696 = vst [vmem:[%s694] sm:$0xff] %v695
                  %v697 = vld [vmem:[%s693 + $0x2c] sm:$0xff]
                  %698 = vst [vmem:[%s694 + $0x20] sm:$0xff] %v697
                  %v699 = vld [vmem:[%s693 + $0x58] sm:$0xff]
                  %700 = vst [vmem:[%s694 + $0x40] sm:$0xff] %v699
                  %v701 = vld [vmem:[%s693 + $0x84] sm:$0xff]
                  %702 = vst [vmem:[%s694 + $0x60] sm:$0xff] %v701
                  %v703 = vld [vmem:[%s693 + $0xb0] sm:$0xff]
                  %704 = vst [vmem:[%s694 + $0x80] sm:$0xff] %v703
                  %v705 = vld [vmem:[%s693 + $0xdc] sm:$0xff]
                  %706 = vst [vmem:[%s694 + $0xa0] sm:$0xff] %v705
                  %v707 = vld [vmem:[%s693 + $0x108] sm:$0xff]
                  %708 = vst [vmem:[%s694 + $0xc0] sm:$0xff] %v707
                  %v709 = vld [vmem:[%s693 + $0x134] sm:$0xff]
                  %710 = vst [vmem:[%s694 + $0xe0] sm:$0xff] %v709
                  %v711 = vld [vmem:[%s693 + $0x160] sm:$0xff]
                  %712 = vst [vmem:[%s694 + $0x100] sm:$0xff] %v711
                  %v713 = vld [vmem:[%s693 + $0x18c] sm:$0xff]
                  %714 = vst [vmem:[%s694 + $0x120] sm:$0xff] %v713
                  %v715 = vld [vmem:[%s693 + $0x1b8] sm:$0xff]
                  %716 = vst [vmem:[%s694 + $0x140] sm:$0xff] %v715
                  %v717 = vld [vmem:[%s693 + $0x1e4] sm:$0xff]
                  %718 = vst [vmem:[%s694 + $0x160] sm:$0xff] %v717
                  %v719 = vld [vmem:[%s693 + $0x210] sm:$0xff]
                  %720 = vst [vmem:[%s694 + $0x180] sm:$0xff] %v719
                  %v721 = vld [vmem:[%s693 + $0x23c] sm:$0xff]
                  %722 = vst [vmem:[%s694 + $0x1a0] sm:$0xff] %v721
                  %v723 = vld [vmem:[%s693 + $0x268] sm:$0xff]
                  %724 = vst [vmem:[%s694 + $0x1c0] sm:$0xff] %v723
                  %v725 = vld [vmem:[%s693 + $0x294] sm:$0xff]
                  %726 = vst [vmem:[%s694 + $0x1e0] sm:$0xff] %v725
                  %v727 = vld [vmem:[%s693 + $0x2c0] sm:$0xff]
                  %728 = vst [vmem:[%s694 + $0x200] sm:$0xff] %v727
                  %v729 = vld [vmem:[%s693 + $0x2ec] sm:$0xff]
                  %730 = vst [vmem:[%s694 + $0x220] sm:$0xff] %v729
                  %v731 = vld [vmem:[%s693 + $0x318] sm:$0xff]
                  %732 = vst [vmem:[%s694 + $0x240] sm:$0xff] %v731
                  %v733 = vld [vmem:[%s693 + $0x344] sm:$0xff]
                  %734 = vst [vmem:[%s694 + $0x260] sm:$0xff] %v733
                  %v735 = vld [vmem:[%s693 + $0x370] sm:$0xff]
                  %736 = vst [vmem:[%s694 + $0x280] sm:$0xff] %v735
                  %v737 = vld [vmem:[%s693 + $0x39c] sm:$0xff]
                  %738 = vst [vmem:[%s694 + $0x2a0] sm:$0xff] %v737
                  %v739 = vld [vmem:[%s693 + $0x3c8] sm:$0xff]
                  %740 = vst [vmem:[%s694 + $0x2c0] sm:$0xff] %v739
                  %v741 = vld [vmem:[%s693 + $0x3f4] sm:$0xff]
                  %742 = vst [vmem:[%s694 + $0x2e0] sm:$0xff] %v741
                  %v743 = vld [vmem:[%s693 + $0x420] sm:$0xff]
                  %744 = vst [vmem:[%s694 + $0x300] sm:$0xff] %v743
                  %v745 = vld [vmem:[%s693 + $0x44c] sm:$0xff]
                  %746 = vst [vmem:[%s694 + $0x320] sm:$0xff] %v745
                  %v747 = vld [vmem:[%s693 + $0x478] sm:$0xff]
                  %748 = vst [vmem:[%s694 + $0x340] sm:$0xff] %v747
                  %v749 = vld [vmem:[%s693 + $0x4a4] sm:$0xff]
                  %750 = vst [vmem:[%s694 + $0x360] sm:$0xff] %v749
                  %v751 = vld [vmem:[%s693 + $0x4d0] sm:$0xff]
                  %752 = vst [vmem:[%s694 + $0x380] sm:$0xff] %v751
                  %v753 = vld [vmem:[%s693 + $0x4fc] sm:$0xff]
                  %754 = vst [vmem:[%s694 + $0x3a0] sm:$0xff] %v753
                  %v755 = vld [vmem:[%s693 + $0x528] sm:$0xff]
                  %756 = vst [vmem:[%s694 + $0x3c0] sm:$0xff] %v755
                  %v757 = vld [vmem:[%s693 + $0x554] sm:$0xff]
                  %758 = vst [vmem:[%s694 + $0x3e0] sm:$0xff] %v757
                  %v759 = vld [vmem:[%s693 + $0x580] sm:$0xff]
                  %760 = vst [vmem:[%s694 + $0x400] sm:$0xff] %v759
                  %v761 = vld [vmem:[%s693 + $0x5ac] sm:$0xff]
                  %762 = vst [vmem:[%s694 + $0x420] sm:$0xff] %v761
                  %v763 = vld [vmem:[%s693 + $0x5d8] sm:$0xff]
                  %764 = vst [vmem:[%s694 + $0x440] sm:$0xff] %v763
                  %v765 = vld [vmem:[%s693 + $0x604] sm:$0xff]
                  %766 = vst [vmem:[%s694 + $0x460] sm:$0xff] %v765
                  %s767 = sadd.s32 1, %s692
                  %p768 = scmp.ge.s32.totalorder %s767, %s676
                  %s769 = scalar_select %p768, 0, %s767
                  %s770 = smul.u32 %s769, 8
                  %s771 = smul.u32 %s769, 8
                  %s772 = scalar_lea.vmem %s680, %s770
                  %s773 = scalar_lea.vmem %s683, %s771 [#allocation2]
                $region81: #{cnn_forward.6} parent=68 // loop_footer
                  %s689 = sadd.s32 %s687, 1
                $region82: #{cnn_forward.6} parent=68 // loop_footer_branch
                  %686 = sbr.rel target = $region78
                $region83: #{cnn_forward.6} parent=68 // loop_exit
                  _
                %s774 = sshllo.u32 0, %s506
                loop: start=0, step=1, limit=1
                $region84: #{cnn_forward.6} parent=68 // loop_pre_header
                  _
                $region85: #{cnn_forward.6} parent=68 // loop_header
                  %s776 = sphi 0, %s780
                  %p777 = scmp.ge.s32.totalorder %s776, 1
                  %s781 = sphi %s508, %s508
                  %s782 = sphi %s510, %s510
                $region86: #{cnn_forward.6} parent=68 // loop_header_branch
                  %779 = sbr.rel (%p777) target = $region90
                $region87: #{cnn_forward.6} parent=68 // loop_body
                  %v783 = vld [vmem:[%s781] sm:%s774]
                  %784 = vst [vmem:[%s782] sm:%s774] %v783
                  %v785 = vld [vmem:[%s781 + $0x2c] sm:%s774]
                  %786 = vst [vmem:[%s782 + $0x20] sm:%s774] %v785
                  %v787 = vld [vmem:[%s781 + $0x58] sm:%s774]
                  %788 = vst [vmem:[%s782 + $0x40] sm:%s774] %v787
                  %v789 = vld [vmem:[%s781 + $0x84] sm:%s774]
                  %790 = vst [vmem:[%s782 + $0x60] sm:%s774] %v789
                  %v791 = vld [vmem:[%s781 + $0xb0] sm:%s774]
                  %792 = vst [vmem:[%s782 + $0x80] sm:%s774] %v791
                  %v793 = vld [vmem:[%s781 + $0xdc] sm:%s774]
                  %794 = vst [vmem:[%s782 + $0xa0] sm:%s774] %v793
                  %v795 = vld [vmem:[%s781 + $0x108] sm:%s774]
                  %796 = vst [vmem:[%s782 + $0xc0] sm:%s774] %v795
                  %v797 = vld [vmem:[%s781 + $0x134] sm:%s774]
                  %798 = vst [vmem:[%s782 + $0xe0] sm:%s774] %v797
                  %v799 = vld [vmem:[%s781 + $0x160] sm:%s774]
                  %800 = vst [vmem:[%s782 + $0x100] sm:%s774] %v799
                  %v801 = vld [vmem:[%s781 + $0x18c] sm:%s774]
                  %802 = vst [vmem:[%s782 + $0x120] sm:%s774] %v801
                  %v803 = vld [vmem:[%s781 + $0x1b8] sm:%s774]
                  %804 = vst [vmem:[%s782 + $0x140] sm:%s774] %v803
                  %v805 = vld [vmem:[%s781 + $0x1e4] sm:%s774]
                  %806 = vst [vmem:[%s782 + $0x160] sm:%s774] %v805
                  %v807 = vld [vmem:[%s781 + $0x210] sm:%s774]
                  %808 = vst [vmem:[%s782 + $0x180] sm:%s774] %v807
                  %v809 = vld [vmem:[%s781 + $0x23c] sm:%s774]
                  %810 = vst [vmem:[%s782 + $0x1a0] sm:%s774] %v809
                  %v811 = vld [vmem:[%s781 + $0x268] sm:%s774]
                  %812 = vst [vmem:[%s782 + $0x1c0] sm:%s774] %v811
                  %v813 = vld [vmem:[%s781 + $0x294] sm:%s774]
                  %814 = vst [vmem:[%s782 + $0x1e0] sm:%s774] %v813
                  %v815 = vld [vmem:[%s781 + $0x2c0] sm:%s774]
                  %816 = vst [vmem:[%s782 + $0x200] sm:%s774] %v815
                  %v817 = vld [vmem:[%s781 + $0x2ec] sm:%s774]
                  %818 = vst [vmem:[%s782 + $0x220] sm:%s774] %v817
                  %v819 = vld [vmem:[%s781 + $0x318] sm:%s774]
                  %820 = vst [vmem:[%s782 + $0x240] sm:%s774] %v819
                  %v821 = vld [vmem:[%s781 + $0x344] sm:%s774]
                  %822 = vst [vmem:[%s782 + $0x260] sm:%s774] %v821
                  %v823 = vld [vmem:[%s781 + $0x370] sm:%s774]
                  %824 = vst [vmem:[%s782 + $0x280] sm:%s774] %v823
                  %v825 = vld [vmem:[%s781 + $0x39c] sm:%s774]
                  %826 = vst [vmem:[%s782 + $0x2a0] sm:%s774] %v825
                  %v827 = vld [vmem:[%s781 + $0x3c8] sm:%s774]
                  %828 = vst [vmem:[%s782 + $0x2c0] sm:%s774] %v827
                  %v829 = vld [vmem:[%s781 + $0x3f4] sm:%s774]
                  %830 = vst [vmem:[%s782 + $0x2e0] sm:%s774] %v829
                  %v831 = vld [vmem:[%s781 + $0x420] sm:%s774]
                  %832 = vst [vmem:[%s782 + $0x300] sm:%s774] %v831
                  %v833 = vld [vmem:[%s781 + $0x44c] sm:%s774]
                  %834 = vst [vmem:[%s782 + $0x320] sm:%s774] %v833
                  %v835 = vld [vmem:[%s781 + $0x478] sm:%s774]
                  %836 = vst [vmem:[%s782 + $0x340] sm:%s774] %v835
                  %v837 = vld [vmem:[%s781 + $0x4a4] sm:%s774]
                  %838 = vst [vmem:[%s782 + $0x360] sm:%s774] %v837
                  %v839 = vld [vmem:[%s781 + $0x4d0] sm:%s774]
                  %840 = vst [vmem:[%s782 + $0x380] sm:%s774] %v839
                  %v841 = vld [vmem:[%s781 + $0x4fc] sm:%s774]
                  %842 = vst [vmem:[%s782 + $0x3a0] sm:%s774] %v841
                  %v843 = vld [vmem:[%s781 + $0x528] sm:%s774]
                  %844 = vst [vmem:[%s782 + $0x3c0] sm:%s774] %v843
                  %v845 = vld [vmem:[%s781 + $0x554] sm:%s774]
                  %846 = vst [vmem:[%s782 + $0x3e0] sm:%s774] %v845
                  %v847 = vld [vmem:[%s781 + $0x580] sm:%s774]
                  %848 = vst [vmem:[%s782 + $0x400] sm:%s774] %v847
                  %v849 = vld [vmem:[%s781 + $0x5ac] sm:%s774]
                  %850 = vst [vmem:[%s782 + $0x420] sm:%s774] %v849
                  %v851 = vld [vmem:[%s781 + $0x5d8] sm:%s774]
                  %852 = vst [vmem:[%s782 + $0x440] sm:%s774] %v851
                  %v853 = vld [vmem:[%s781 + $0x604] sm:%s774]
                  %854 = vst [vmem:[%s782 + $0x460] sm:%s774] %v853
                $region88: #{cnn_forward.6} parent=68 // loop_footer
                  %s780 = sadd.s32 1, %s776
                $region89: #{cnn_forward.6} parent=68 // loop_footer_branch
                  %775 = sbr.rel target = $region85
                $region90: #{cnn_forward.6} parent=68 // loop_exit
                  _
              $region69: #{cnn_forward.6} parent=35 // pred_fallthru
                _
            $region36: #{cnn_forward.6} parent=31 // pred_fallthru
              _
            // Predicated region
            $region37: #{cnn_forward.6} parent=31 // pred_check
              %p151 = pneg %p147
            $region38: #{cnn_forward.6} parent=31 // pred_check_branch
              %153 = sbr.rel (%p151) target = $region40
            $region39: #{cnn_forward.6} parent=31 // pred_region
              %s154 = sshllo.u32 0, %s143
              loop: start=0, step=1, limit=1
              $region41: #{cnn_forward.6} parent=39 // loop_pre_header
                _
              $region42: #{cnn_forward.6} parent=39 // loop_header
                %s156 = sphi 0, %s160
                %p157 = scmp.ge.s32.totalorder %s156, 1
                %s161 = sphi %s142, %s142
                %s162 = sphi %s134, %s134
              $region43: #{cnn_forward.6} parent=39 // loop_header_branch
                %159 = sbr.rel (%p157) target = $region47
              $region44: #{cnn_forward.6} parent=39 // loop_body
                %v163 = vld [vmem:[%s161] sm:%s154]
                %164 = vst [vmem:[%s162] sm:%s154] %v163
                %v165 = vld [vmem:[%s161 + $0x2c] sm:%s154]
                %166 = vst [vmem:[%s162 + $0x20] sm:%s154] %v165
                %v167 = vld [vmem:[%s161 + $0x58] sm:%s154]
                %168 = vst [vmem:[%s162 + $0x40] sm:%s154] %v167
                %v169 = vld [vmem:[%s161 + $0x84] sm:%s154]
                %170 = vst [vmem:[%s162 + $0x60] sm:%s154] %v169
                %v171 = vld [vmem:[%s161 + $0xb0] sm:%s154]
                %172 = vst [vmem:[%s162 + $0x80] sm:%s154] %v171
                %v173 = vld [vmem:[%s161 + $0xdc] sm:%s154]
                %174 = vst [vmem:[%s162 + $0xa0] sm:%s154] %v173
                %v175 = vld [vmem:[%s161 + $0x108] sm:%s154]
                %176 = vst [vmem:[%s162 + $0xc0] sm:%s154] %v175
                %v177 = vld [vmem:[%s161 + $0x134] sm:%s154]
                %178 = vst [vmem:[%s162 + $0xe0] sm:%s154] %v177
                %v179 = vld [vmem:[%s161 + $0x160] sm:%s154]
                %180 = vst [vmem:[%s162 + $0x100] sm:%s154] %v179
                %v181 = vld [vmem:[%s161 + $0x18c] sm:%s154]
                %182 = vst [vmem:[%s162 + $0x120] sm:%s154] %v181
                %v183 = vld [vmem:[%s161 + $0x1b8] sm:%s154]
                %184 = vst [vmem:[%s162 + $0x140] sm:%s154] %v183
                %v185 = vld [vmem:[%s161 + $0x1e4] sm:%s154]
                %186 = vst [vmem:[%s162 + $0x160] sm:%s154] %v185
                %v187 = vld [vmem:[%s161 + $0x210] sm:%s154]
                %188 = vst [vmem:[%s162 + $0x180] sm:%s154] %v187
                %v189 = vld [vmem:[%s161 + $0x23c] sm:%s154]
                %190 = vst [vmem:[%s162 + $0x1a0] sm:%s154] %v189
                %v191 = vld [vmem:[%s161 + $0x268] sm:%s154]
                %192 = vst [vmem:[%s162 + $0x1c0] sm:%s154] %v191
                %v193 = vld [vmem:[%s161 + $0x294] sm:%s154]
                %194 = vst [vmem:[%s162 + $0x1e0] sm:%s154] %v193
                %v195 = vld [vmem:[%s161 + $0x2c0] sm:%s154]
                %196 = vst [vmem:[%s162 + $0x200] sm:%s154] %v195
                %v197 = vld [vmem:[%s161 + $0x2ec] sm:%s154]
                %198 = vst [vmem:[%s162 + $0x220] sm:%s154] %v197
                %v199 = vld [vmem:[%s161 + $0x318] sm:%s154]
                %200 = vst [vmem:[%s162 + $0x240] sm:%s154] %v199
                %v201 = vld [vmem:[%s161 + $0x344] sm:%s154]
                %202 = vst [vmem:[%s162 + $0x260] sm:%s154] %v201
                %v203 = vld [vmem:[%s161 + $0x370] sm:%s154]
                %204 = vst [vmem:[%s162 + $0x280] sm:%s154] %v203
                %v205 = vld [vmem:[%s161 + $0x39c] sm:%s154]
                %206 = vst [vmem:[%s162 + $0x2a0] sm:%s154] %v205
                %v207 = vld [vmem:[%s161 + $0x3c8] sm:%s154]
                %208 = vst [vmem:[%s162 + $0x2c0] sm:%s154] %v207
                %v209 = vld [vmem:[%s161 + $0x3f4] sm:%s154]
                %210 = vst [vmem:[%s162 + $0x2e0] sm:%s154] %v209
                %v211 = vld [vmem:[%s161 + $0x420] sm:%s154]
                %212 = vst [vmem:[%s162 + $0x300] sm:%s154] %v211
                %v213 = vld [vmem:[%s161 + $0x44c] sm:%s154]
                %214 = vst [vmem:[%s162 + $0x320] sm:%s154] %v213
                %v215 = vld [vmem:[%s161 + $0x478] sm:%s154]
                %216 = vst [vmem:[%s162 + $0x340] sm:%s154] %v215
                %v217 = vld [vmem:[%s161 + $0x4a4] sm:%s154]
                %218 = vst [vmem:[%s162 + $0x360] sm:%s154] %v217
                %v219 = vld [vmem:[%s161 + $0x4d0] sm:%s154]
                %220 = vst [vmem:[%s162 + $0x380] sm:%s154] %v219
                %v221 = vld [vmem:[%s161 + $0x4fc] sm:%s154]
                %222 = vst [vmem:[%s162 + $0x3a0] sm:%s154] %v221
                %v223 = vld [vmem:[%s161 + $0x528] sm:%s154]
                %224 = vst [vmem:[%s162 + $0x3c0] sm:%s154] %v223
                %v225 = vld [vmem:[%s161 + $0x554] sm:%s154]
                %226 = vst [vmem:[%s162 + $0x3e0] sm:%s154] %v225
                %v227 = vld [vmem:[%s161 + $0x580] sm:%s154]
                %228 = vst [vmem:[%s162 + $0x400] sm:%s154] %v227
                %v229 = vld [vmem:[%s161 + $0x5ac] sm:%s154]
                %230 = vst [vmem:[%s162 + $0x420] sm:%s154] %v229
                %v231 = vld [vmem:[%s161 + $0x5d8] sm:%s154]
                %232 = vst [vmem:[%s162 + $0x440] sm:%s154] %v231
                %v233 = vld [vmem:[%s161 + $0x604] sm:%s154]
                %234 = vst [vmem:[%s162 + $0x460] sm:%s154] %v233
              $region45: #{cnn_forward.6} parent=39 // loop_footer
                %s160 = sadd.s32 1, %s156
              $region46: #{cnn_forward.6} parent=39 // loop_footer_branch
                %155 = sbr.rel target = $region42
              $region47: #{cnn_forward.6} parent=39 // loop_exit
                _
            $region40: #{cnn_forward.6} parent=31 // pred_fallthru
              _
          $region32: #{cnn_forward.6} parent=27 // pred_fallthru
            _
          %855 = vnop
        $region28: #{cnn_forward.6} parent=23 // pred_fallthru
          _
      $region24: #{cnn_forward.6} parent=5 // pred_fallthru
        _
      %p856 = scmp.le.s32.totalorder 1, %s9
      %p857 = scmp.lt.s32.totalorder %s9, 3
      %p858 = pnand %p856, %p857
      %p859 = pneg %p858
      // Predicated region
      $region91: #{cnn_forward.6} parent=5 // pred_check
        _
      $region92: #{cnn_forward.6} parent=5 // pred_check_branch
        %861 = sbr.rel (%p858) target = $region94
      $region93: #{cnn_forward.6} parent=5 // pred_region
        %s862 = ssub.s32 %s9, 1
        %s863 = sand.u32 %s22, 1
        %s864 = sand.u32 %s22, 1
        %s865 = smul.addr %s864, 1152
        %s866 = scalar_lea.vmem [#allocation2], %s865
        // Predicated region
        $region95: #{cnn_forward.6} parent=93 // pred_check
          %p867 = pneg %p35
        $region96: #{cnn_forward.6} parent=93 // pred_check_branch
          %869 = sbr.rel (%p867) target = $region98
        $region97: #{cnn_forward.6} parent=93 // pred_region
          _
        $region98: #{cnn_forward.6} parent=93 // pred_fallthru
          _
        %s870 = sand.u32 %s22, 1
        %s871 = sand.u32 %s22, 1
        %s872 = smul.addr %s871, 1152
        %s873 = scalar_lea.vmem [#allocation2], %s872
        %p874 = pneg %p35
        %p875 = pneg %p32
        %p876 = pneg %p56
        %p877 = pneg %p53
        %p878 = pneg %p77
        %p879 = pneg %p74
        %p880 = pneg %p103
        %p881 = pneg %p100
        %s882 = sand.u32 %s90, 1
        %s883 = sand.u32 %s90, 1
        %s884 = smul.addr %s883, 128
        %s885 = scalar_lea.vmem [#allocation3], %s884
        %s886 = smul.u32 8, %s14
        %s887 = ssub.s32 11, %s886
        %p888 = scmp.lt.s32.totalorder %s887, 8
        %s889 = scalar_select %p888, %s887, 8
        %s890 = smul.u32 2304, %s889
        %s891 = smul.u32 8, %s14
        %s892 = ssub.s32 11, %s891
        %p893 = scmp.lt.s32.totalorder %s892, 8
        %s894 = scalar_select %p893, %s892, 8
        %s895 = smul.u32 256, %s894
        %v897 = vld [vmem:[%s1] sm:$0xf]
        %v898 = vld [vmem:[%s1 + $0x4] sm:$0xf]
        %v899 = vld [vmem:[%s866] sm:$0xff]
        %v900 = vld [vmem:[%s866 + $0x8] sm:$0xff]
        %v901 = vld [vmem:[%s866 + $0x10] sm:$0xff]
        %v902 = vld [vmem:[%s866 + $0x18] sm:$0xff]
        %v903 = vld [vmem:[%s866 + $0x20] sm:$0xff]
        %v904 = vld [vmem:[%s866 + $0x28] sm:$0xff]
        %v905 = vld [vmem:[%s866 + $0x30] sm:$0xff]
        %v906 = vld [vmem:[%s866 + $0x38] sm:$0xff]
        %v907 = vld [vmem:[%s866 + $0x40] sm:$0xff]
        %v908 = vld [vmem:[%s866 + $0x48] sm:$0xff]
        %v909 = vld [vmem:[%s866 + $0x50] sm:$0xff]
        %v910 = vld [vmem:[%s866 + $0x58] sm:$0xff]
        %v911 = vld [vmem:[%s866 + $0x60] sm:$0xff]
        %v912 = vld [vmem:[%s866 + $0x68] sm:$0xff]
        %v913 = vld [vmem:[%s866 + $0x70] sm:$0xff]
        %v914 = vld [vmem:[%s866 + $0x78] sm:$0xff]
        %v915 = vld [vmem:[%s866 + $0x80] sm:$0xff]
        %v916 = vld [vmem:[%s866 + $0x88] sm:$0xff]
        %v917 = vld [vmem:[%s866 + $0x90] sm:$0xff]
        %v918 = vld [vmem:[%s866 + $0x98] sm:$0xff]
        %v919 = vld [vmem:[%s866 + $0xa0] sm:$0xff]
        %v920 = vld [vmem:[%s866 + $0xa8] sm:$0xff]
        %v921 = vld [vmem:[%s866 + $0xb0] sm:$0xff]
        %v922 = vld [vmem:[%s866 + $0xb8] sm:$0xff]
        %v923 = vld [vmem:[%s866 + $0xc0] sm:$0xff]
        %v924 = vld [vmem:[%s866 + $0xc8] sm:$0xff]
        %v925 = vld [vmem:[%s866 + $0xd0] sm:$0xff]
        %v926 = vld [vmem:[%s866 + $0xd8] sm:$0xff]
        %v927 = vld [vmem:[%s866 + $0xe0] sm:$0xff]
        %v928 = vld [vmem:[%s866 + $0xe8] sm:$0xff]
        %v929 = vld [vmem:[%s866 + $0xf0] sm:$0xff]
        %v930 = vld [vmem:[%s866 + $0xf8] sm:$0xff]
        %v931 = vld [vmem:[%s866 + $0x100] sm:$0xff]
        %v932 = vld [vmem:[%s866 + $0x108] sm:$0xff]
        %v933 = vld [vmem:[%s866 + $0x110] sm:$0xff]
        %v934 = vld [vmem:[%s866 + $0x118] sm:$0xff]
        %v937 = vunpack.c.l.b16 %v897
        %v938 = vunpack.c.l.b16 %v898
        %v939 = vpack.c.b16 %v938, %v937
        %v976 = vunpack.c.l.b16 %v899
        %v977 = vunpack.c.h.b16 %v899
        %v978 = vunpack.c.l.b16 %v900
        %v979 = vunpack.c.h.b16 %v900
        %v980 = vunpack.c.l.b16 %v901
        %v981 = vunpack.c.h.b16 %v901
        %v982 = vunpack.c.l.b16 %v902
        %v983 = vunpack.c.h.b16 %v902
        %v984 = vunpack.c.l.b16 %v903
        %v985 = vunpack.c.h.b16 %v903
        %v986 = vunpack.c.l.b16 %v904
        %v987 = vunpack.c.h.b16 %v904
        %v988 = vunpack.c.l.b16 %v905
        %v989 = vunpack.c.h.b16 %v905
        %v990 = vunpack.c.l.b16 %v906
        %v991 = vunpack.c.h.b16 %v906
        %v992 = vunpack.c.l.b16 %v907
        %v993 = vunpack.c.h.b16 %v907
        %v994 = vunpack.c.l.b16 %v908
        %v995 = vunpack.c.h.b16 %v908
        %v996 = vunpack.c.l.b16 %v909
        %v997 = vunpack.c.h.b16 %v909
        %v998 = vunpack.c.l.b16 %v910
        %v999 = vunpack.c.h.b16 %v910
        %v1000 = vunpack.c.l.b16 %v911
        %v1001 = vunpack.c.h.b16 %v911
        %v1002 = vunpack.c.l.b16 %v912
        %v1003 = vunpack.c.h.b16 %v912
        %v1004 = vunpack.c.l.b16 %v913
        %v1005 = vunpack.c.h.b16 %v913
        %v1006 = vunpack.c.l.b16 %v914
        %v1007 = vunpack.c.h.b16 %v914
        %v1008 = vunpack.c.l.b16 %v915
        %v1009 = vunpack.c.h.b16 %v915
        %v1010 = vunpack.c.l.b16 %v916
        %v1011 = vunpack.c.h.b16 %v916
        %v1012 = vunpack.c.l.b16 %v917
        %v1013 = vunpack.c.h.b16 %v917
        %v1014 = vunpack.c.l.b16 %v918
        %v1015 = vunpack.c.h.b16 %v918
        %v1016 = vunpack.c.l.b16 %v919
        %v1017 = vunpack.c.h.b16 %v919
        %v1018 = vunpack.c.l.b16 %v920
        %v1019 = vunpack.c.h.b16 %v920
        %v1020 = vunpack.c.l.b16 %v921
        %v1021 = vunpack.c.h.b16 %v921
        %v1022 = vunpack.c.l.b16 %v922
        %v1023 = vunpack.c.h.b16 %v922
        %v1024 = vunpack.c.l.b16 %v923
        %v1025 = vunpack.c.h.b16 %v923
        %v1026 = vunpack.c.l.b16 %v924
        %v1027 = vunpack.c.h.b16 %v924
        %v1028 = vunpack.c.l.b16 %v925
        %v1029 = vunpack.c.h.b16 %v925
        %v1030 = vunpack.c.l.b16 %v926
        %v1031 = vunpack.c.h.b16 %v926
        %v1032 = vunpack.c.l.b16 %v927
        %v1033 = vunpack.c.h.b16 %v927
        %v1034 = vunpack.c.l.b16 %v928
        %v1035 = vunpack.c.h.b16 %v928
        %v1036 = vunpack.c.l.b16 %v929
        %v1037 = vunpack.c.h.b16 %v929
        %v1038 = vunpack.c.l.b16 %v930
        %v1039 = vunpack.c.h.b16 %v930
        %v1040 = vunpack.c.l.b16 %v931
        %v1041 = vunpack.c.h.b16 %v931
        %v1042 = vunpack.c.l.b16 %v932
        %v1043 = vunpack.c.h.b16 %v932
        %v1044 = vunpack.c.l.b16 %v933
        %v1045 = vunpack.c.h.b16 %v933
        %v1046 = vunpack.c.l.b16 %v934
        %v1047 = vunpack.c.h.b16 %v934
        %v1048 = vpack.c.b16 %v984, %v976
        %v1049 = vpack.c.b16 %v985, %v977
        %v1050 = vpack.c.b16 %v986, %v978
        %v1051 = vpack.c.b16 %v987, %v979
        %v1052 = vpack.c.b16 %v988, %v980
        %v1053 = vpack.c.b16 %v989, %v981
        %v1054 = vpack.c.b16 %v990, %v982
        %v1055 = vpack.c.b16 %v991, %v983
        %v1056 = vpack.c.b16 %v1000, %v992
        %v1057 = vpack.c.b16 %v1001, %v993
        %v1058 = vpack.c.b16 %v1002, %v994
        %v1059 = vpack.c.b16 %v1003, %v995
        %v1060 = vpack.c.b16 %v1004, %v996
        %v1061 = vpack.c.b16 %v1005, %v997
        %v1062 = vpack.c.b16 %v1006, %v998
        %v1063 = vpack.c.b16 %v1007, %v999
        %v1064 = vpack.c.b16 %v1016, %v1008
        %v1065 = vpack.c.b16 %v1017, %v1009
        %v1066 = vpack.c.b16 %v1018, %v1010
        %v1067 = vpack.c.b16 %v1019, %v1011
        %v1068 = vpack.c.b16 %v1020, %v1012
        %v1069 = vpack.c.b16 %v1021, %v1013
        %v1070 = vpack.c.b16 %v1022, %v1014
        %v1071 = vpack.c.b16 %v1023, %v1015
        %v1072 = vpack.c.b16 %v1032, %v1024
        %v1073 = vpack.c.b16 %v1033, %v1025
        %v1074 = vpack.c.b16 %v1034, %v1026
        %v1075 = vpack.c.b16 %v1035, %v1027
        %v1076 = vpack.c.b16 %v1036, %v1028
        %v1077 = vpack.c.b16 %v1037, %v1029
        %v1078 = vpack.c.b16 %v1038, %v1030
        %v1079 = vpack.c.b16 %v1039, %v1031
        %v1080 = vpack.c.b16 %v1040, %v1040
        %v1081 = vpack.c.b16 %v1041, %v1041
        %v1082 = vpack.c.b16 %v1042, %v1042
        %v1083 = vpack.c.b16 %v1043, %v1043
        %v1084 = vpack.c.b16 %v1044, %v1044
        %v1085 = vpack.c.b16 %v1045, %v1045
        %v1086 = vpack.c.b16 %v1046, %v1046
        %v1087 = vpack.c.b16 %v1047, %v1047
        %vm1120 = vcmask 588800
        %v1122 = vsel %vm1120, %v939, 0
        %vm1124 = vcmask 1043456
        %v1126 = vsel %vm1124, %v1080, 0
        %v1129 = vsel %vm1124, %v1081, 0
        %v1132 = vsel %vm1124, %v1082, 0
        %v1135 = vsel %vm1124, %v1083, 0
        %v1138 = vsel %vm1124, %v1084, 0
        %v1141 = vsel %vm1124, %v1085, 0
        %v1144 = vsel %vm1124, %v1086, 0
        %v1147 = vsel %vm1124, %v1087, 0
        %1149 = vmatprep.subr.bf16.mxu0 %v1049
        %1150 = vmatpush1.bf16.msra.mxu0 %v1048
        %1151 = vmatprep.subr.bf16.mxu0 %v1057
        %1152 = vmatpush1.bf16.msra.mxu0 %v1056
        %1153 = vmatprep.subr.bf16.mxu0 %v1065
        %1154 = vmatpush1.bf16.msra.mxu0 %v1064
        %1155 = vmatprep.subr.bf16.mxu0 %v1073
        %1156 = vmatpush1.bf16.msra.mxu0 %v1072
        %1157 = vmatprep.subr.bf16.mxu0 %v1129
        %1158 = vmatpush1.bf16.msra.mxu0 %v1126
        %1159 = vmatprep.subr.bf16.mxu0 0
        %1160 = vmatpush1.bf16.msra.mxu0 0
        %1161 = vmatprep.subr.bf16.mxu0 0
        %1162 = vmatpush1.bf16.msra.mxu0 0
        %1163 = vmatprep.subr.bf16.mxu0 0
        %1164 = vmatpush1.bf16.msra.mxu0 0
        %1165 = vmatprep.subr.bf16.mxu0 0
        %1166 = vmatpush1.bf16.msra.mxu0 0
        %1167 = vmatprep.subr.bf16.mxu0 0
        %1168 = vmatpush1.bf16.msra.mxu0 0
        %1169 = vmatprep.subr.bf16.mxu0 0
        %1170 = vmatpush1.bf16.msra.mxu0 0
        %1171 = vmatprep.subr.bf16.mxu0 0
        %1172 = vmatpush1.bf16.msra.mxu0 0
        %1173 = vmatprep.subr.bf16.mxu0 0
        %1174 = vmatpush1.bf16.msra.mxu0 0
        %1175 = vmatprep.subr.bf16.mxu0 0
        %1176 = vmatpush1.bf16.msra.mxu0 0
        %1177 = vmatprep.subr.bf16.mxu0 0
        %1178 = vmatpush1.bf16.msra.mxu0 0
        %1179 = vmatprep.subr.bf16.mxu0 0
        %1180 = vmatpush1.bf16.msra.mxu0 0
        %1181 = vmatprep.mubr.bf16.mxu0 0
        %1182 = vmatmul.mubr.bf16.gmra.mrb[0].mxu0 %v1122
        %v1183 = vpop.f32.mrb[0].mxu0
        %v1184 = vadd.f32 0.0, %v1183
        %v1185 = vpop.f32.mrb[0].mxu0
        %v1186 = vadd.f32 0.0, %v1185
        %v1187 = vpop.f32.mrb[0].mxu0
        %v1188 = vadd.f32 0.0, %v1187
        %v1189 = vpop.f32.mrb[0].mxu0
        %v1190 = vadd.f32 0.0, %v1189
        %1191 = vdwg.mxu0
        %1192 = vmatprep.subr.bf16.mxu0 %v1051
        %1193 = vmatpush1.bf16.msra.mxu0 %v1050
        %1194 = vmatprep.subr.bf16.mxu0 %v1059
        %1195 = vmatpush1.bf16.msra.mxu0 %v1058
        %1196 = vmatprep.subr.bf16.mxu0 %v1067
        %1197 = vmatpush1.bf16.msra.mxu0 %v1066
        %1198 = vmatprep.subr.bf16.mxu0 %v1075
        %1199 = vmatpush1.bf16.msra.mxu0 %v1074
        %1200 = vmatprep.subr.bf16.mxu0 %v1135
        %1201 = vmatpush1.bf16.msra.mxu0 %v1132
        %1202 = vmatprep.subr.bf16.mxu0 0
        %1203 = vmatpush1.bf16.msra.mxu0 0
        %1204 = vmatprep.subr.bf16.mxu0 0
        %1205 = vmatpush1.bf16.msra.mxu0 0
        %1206 = vmatprep.subr.bf16.mxu0 0
        %1207 = vmatpush1.bf16.msra.mxu0 0
        %1208 = vmatprep.subr.bf16.mxu0 0
        %1209 = vmatpush1.bf16.msra.mxu0 0
        %1210 = vmatprep.subr.bf16.mxu0 0
        %1211 = vmatpush1.bf16.msra.mxu0 0
        %1212 = vmatprep.subr.bf16.mxu0 0
        %1213 = vmatpush1.bf16.msra.mxu0 0
        %1214 = vmatprep.subr.bf16.mxu0 0
        %1215 = vmatpush1.bf16.msra.mxu0 0
        %1216 = vmatprep.subr.bf16.mxu0 0
        %1217 = vmatpush1.bf16.msra.mxu0 0
        %1218 = vmatprep.subr.bf16.mxu0 0
        %1219 = vmatpush1.bf16.msra.mxu0 0
        %1220 = vmatprep.subr.bf16.mxu0 0
        %1221 = vmatpush1.bf16.msra.mxu0 0
        %1222 = vmatprep.subr.bf16.mxu0 0
        %1223 = vmatpush1.bf16.msra.mxu0 0
        %1224 = vmatprep.mubr.bf16.mxu0 0
        %1225 = vmatmul.mubr.bf16.gmra.mrb[0].mxu0 %v1122
        %v1226 = vpop.f32.mrb[0].mxu0
        %v1227 = vadd.f32 0.0, %v1226
        %v1228 = vpop.f32.mrb[0].mxu0
        %v1229 = vadd.f32 0.0, %v1228
        %v1230 = vpop.f32.mrb[0].mxu0
        %v1231 = vadd.f32 0.0, %v1230
        %v1232 = vpop.f32.mrb[0].mxu0
        %v1233 = vadd.f32 0.0, %v1232
        %1234 = vdwg.mxu0
        %1235 = vmatprep.subr.bf16.mxu0 %v1053
        %1236 = vmatpush1.bf16.msra.mxu0 %v1052
        %1237 = vmatprep.subr.bf16.mxu0 %v1061
        %1238 = vmatpush1.bf16.msra.mxu0 %v1060
        %1239 = vmatprep.subr.bf16.mxu0 %v1069
        %1240 = vmatpush1.bf16.msra.mxu0 %v1068
        %1241 = vmatprep.subr.bf16.mxu0 %v1077
        %1242 = vmatpush1.bf16.msra.mxu0 %v1076
        %1243 = vmatprep.subr.bf16.mxu0 %v1141
        %1244 = vmatpush1.bf16.msra.mxu0 %v1138
        %1245 = vmatprep.subr.bf16.mxu0 0
        %1246 = vmatpush1.bf16.msra.mxu0 0
        %1247 = vmatprep.subr.bf16.mxu0 0
        %1248 = vmatpush1.bf16.msra.mxu0 0
        %1249 = vmatprep.subr.bf16.mxu0 0
        %1250 = vmatpush1.bf16.msra.mxu0 0
        %1251 = vmatprep.subr.bf16.mxu0 0
        %1252 = vmatpush1.bf16.msra.mxu0 0
        %1253 = vmatprep.subr.bf16.mxu0 0
        %1254 = vmatpush1.bf16.msra.mxu0 0
        %1255 = vmatprep.subr.bf16.mxu0 0
        %1256 = vmatpush1.bf16.msra.mxu0 0
        %1257 = vmatprep.subr.bf16.mxu0 0
        %1258 = vmatpush1.bf16.msra.mxu0 0
        %1259 = vmatprep.subr.bf16.mxu0 0
        %1260 = vmatpush1.bf16.msra.mxu0 0
        %1261 = vmatprep.subr.bf16.mxu0 0
        %1262 = vmatpush1.bf16.msra.mxu0 0
        %1263 = vmatprep.subr.bf16.mxu0 0
        %1264 = vmatpush1.bf16.msra.mxu0 0
        %1265 = vmatprep.subr.bf16.mxu0 0
        %1266 = vmatpush1.bf16.msra.mxu0 0
        %1267 = vmatprep.mubr.bf16.mxu0 0
        %1268 = vmatmul.mubr.bf16.gmra.mrb[0].mxu0 %v1122
        %v1269 = vpop.f32.mrb[0].mxu0
        %v1270 = vadd.f32 0.0, %v1269
        %v1271 = vpop.f32.mrb[0].mxu0
        %v1272 = vadd.f32 0.0, %v1271
        %v1273 = vpop.f32.mrb[0].mxu0
        %v1274 = vadd.f32 0.0, %v1273
        %v1275 = vpop.f32.mrb[0].mxu0
        %v1276 = vadd.f32 0.0, %v1275
        %1277 = vdwg.mxu0
        %1278 = vmatprep.subr.bf16.mxu0 %v1055
        %1279 = vmatpush1.bf16.msra.mxu0 %v1054
        %1280 = vmatprep.subr.bf16.mxu0 %v1063
        %1281 = vmatpush1.bf16.msra.mxu0 %v1062
        %1282 = vmatprep.subr.bf16.mxu0 %v1071
        %1283 = vmatpush1.bf16.msra.mxu0 %v1070
        %1284 = vmatprep.subr.bf16.mxu0 %v1079
        %1285 = vmatpush1.bf16.msra.mxu0 %v1078
        %1286 = vmatprep.subr.bf16.mxu0 %v1147
        %1287 = vmatpush1.bf16.msra.mxu0 %v1144
        %1288 = vmatprep.subr.bf16.mxu0 0
        %1289 = vmatpush1.bf16.msra.mxu0 0
        %1290 = vmatprep.subr.bf16.mxu0 0
        %1291 = vmatpush1.bf16.msra.mxu0 0
        %1292 = vmatprep.subr.bf16.mxu0 0
        %1293 = vmatpush1.bf16.msra.mxu0 0
        %1294 = vmatprep.subr.bf16.mxu0 0
        %1295 = vmatpush1.bf16.msra.mxu0 0
        %1296 = vmatprep.subr.bf16.mxu0 0
        %1297 = vmatpush1.bf16.msra.mxu0 0
        %1298 = vmatprep.subr.bf16.mxu0 0
        %1299 = vmatpush1.bf16.msra.mxu0 0
        %1300 = vmatprep.subr.bf16.mxu0 0
        %1301 = vmatpush1.bf16.msra.mxu0 0
        %1302 = vmatprep.subr.bf16.mxu0 0
        %1303 = vmatpush1.bf16.msra.mxu0 0
        %1304 = vmatprep.subr.bf16.mxu0 0
        %1305 = vmatpush1.bf16.msra.mxu0 0
        %1306 = vmatprep.subr.bf16.mxu0 0
        %1307 = vmatpush1.bf16.msra.mxu0 0
        %1308 = vmatprep.subr.bf16.mxu0 0
        %1309 = vmatpush1.bf16.msra.mxu0 0
        %1310 = vmatprep.mubr.bf16.mxu0 0
        %1311 = vmatmul.mubr.bf16.gmra.mrb[0].mxu0 %v1122
        %v1312 = vpop.f32.mrb[0].mxu0
        %v1313 = vadd.f32 0.0, %v1312
        %v1314 = vpop.f32.mrb[0].mxu0
        %v1315 = vadd.f32 0.0, %v1314
        %v1316 = vpop.f32.mrb[0].mxu0
        %v1317 = vadd.f32 0.0, %v1316
        %v1318 = vpop.f32.mrb[0].mxu0
        %v1319 = vadd.f32 0.0, %v1318
        %1320 = vdwg.mxu0
        %s1321 = scalar_lea.vmem %s866, 288 [#allocation2]
        %v1322 = vld [vmem:[%s1321] sm:$0xff]
        %v1323 = vld [vmem:[%s1321 + $0x8] sm:$0xff]
        %v1324 = vld [vmem:[%s1321 + $0x10] sm:$0xff]
        %v1325 = vld [vmem:[%s1321 + $0x18] sm:$0xff]
        %v1326 = vld [vmem:[%s1321 + $0x20] sm:$0xff]
        %v1327 = vld [vmem:[%s1321 + $0x28] sm:$0xff]
        %v1328 = vld [vmem:[%s1321 + $0x30] sm:$0xff]
        %v1329 = vld [vmem:[%s1321 + $0x38] sm:$0xff]
        %v1330 = vld [vmem:[%s1321 + $0x40] sm:$0xff]
        %v1331 = vld [vmem:[%s1321 + $0x48] sm:$0xff]
        %v1332 = vld [vmem:[%s1321 + $0x50] sm:$0xff]
        %v1333 = vld [vmem:[%s1321 + $0x58] sm:$0xff]
        %v1334 = vld [vmem:[%s1321 + $0x60] sm:$0xff]
        %v1335 = vld [vmem:[%s1321 + $0x68] sm:$0xff]
        %v1336 = vld [vmem:[%s1321 + $0x70] sm:$0xff]
        %v1337 = vld [vmem:[%s1321 + $0x78] sm:$0xff]
        %v1338 = vld [vmem:[%s1321 + $0x80] sm:$0xff]
        %v1339 = vld [vmem:[%s1321 + $0x88] sm:$0xff]
        %v1340 = vld [vmem:[%s1321 + $0x90] sm:$0xff]
        %v1341 = vld [vmem:[%s1321 + $0x98] sm:$0xff]
        %v1342 = vld [vmem:[%s1321 + $0xa0] sm:$0xff]
        %v1343 = vld [vmem:[%s1321 + $0xa8] sm:$0xff]
        %v1344 = vld [vmem:[%s1321 + $0xb0] sm:$0xff]
        %v1345 = vld [vmem:[%s1321 + $0xb8] sm:$0xff]
        %v1346 = vld [vmem:[%s1321 + $0xc0] sm:$0xff]
        %v1347 = vld [vmem:[%s1321 + $0xc8] sm:$0xff]
        %v1348 = vld [vmem:[%s1321 + $0xd0] sm:$0xff]
        %v1349 = vld [vmem:[%s1321 + $0xd8] sm:$0xff]
        %v1350 = vld [vmem:[%s1321 + $0xe0] sm:$0xff]
        %v1351 = vld [vmem:[%s1321 + $0xe8] sm:$0xff]
        %v1352 = vld [vmem:[%s1321 + $0xf0] sm:$0xff]
        %v1353 = vld [vmem:[%s1321 + $0xf8] sm:$0xff]
        %v1354 = vld [vmem:[%s1321 + $0x100] sm:$0xff]
        %v1355 = vld [vmem:[%s1321 + $0x108] sm:$0xff]
        %v1356 = vld [vmem:[%s1321 + $0x110] sm:$0xff]
        %v1357 = vld [vmem:[%s1321 + $0x118] sm:$0xff]
        %v1394 = vunpack.c.l.b16 %v1322
        %v1395 = vunpack.c.h.b16 %v1322
        %v1396 = vunpack.c.l.b16 %v1323
        %v1397 = vunpack.c.h.b16 %v1323
        %v1398 = vunpack.c.l.b16 %v1324
        %v1399 = vunpack.c.h.b16 %v1324
        %v1400 = vunpack.c.l.b16 %v1325
        %v1401 = vunpack.c.h.b16 %v1325
        %v1402 = vunpack.c.l.b16 %v1326
        %v1403 = vunpack.c.h.b16 %v1326
        %v1404 = vunpack.c.l.b16 %v1327
        %v1405 = vunpack.c.h.b16 %v1327
        %v1406 = vunpack.c.l.b16 %v1328
        %v1407 = vunpack.c.h.b16 %v1328
        %v1408 = vunpack.c.l.b16 %v1329
        %v1409 = vunpack.c.h.b16 %v1329
        %v1410 = vunpack.c.l.b16 %v1330
        %v1411 = vunpack.c.h.b16 %v1330
        %v1412 = vunpack.c.l.b16 %v1331
        %v1413 = vunpack.c.h.b16 %v1331
        %v1414 = vunpack.c.l.b16 %v1332
        %v1415 = vunpack.c.h.b16 %v1332
        %v1416 = vunpack.c.l.b16 %v1333
        %v1417 = vunpack.c.h.b16 %v1333
        %v1418 = vunpack.c.l.b16 %v1334
        %v1419 = vunpack.c.h.b16 %v1334
        %v1420 = vunpack.c.l.b16 %v1335
        %v1421 = vunpack.c.h.b16 %v1335
        %v1422 = vunpack.c.l.b16 %v1336
        %v1423 = vunpack.c.h.b16 %v1336
        %v1424 = vunpack.c.l.b16 %v1337
        %v1425 = vunpack.c.h.b16 %v1337
        %v1426 = vunpack.c.l.b16 %v1338
        %v1427 = vunpack.c.h.b16 %v1338
        %v1428 = vunpack.c.l.b16 %v1339
        %v1429 = vunpack.c.h.b16 %v1339
        %v1430 = vunpack.c.l.b16 %v1340
        %v1431 = vunpack.c.h.b16 %v1340
        %v1432 = vunpack.c.l.b16 %v1341
        %v1433 = vunpack.c.h.b16 %v1341
        %v1434 = vunpack.c.l.b16 %v1342
        %v1435 = vunpack.c.h.b16 %v1342
        %v1436 = vunpack.c.l.b16 %v1343
        %v1437 = vunpack.c.h.b16 %v1343
        %v1438 = vunpack.c.l.b16 %v1344
        %v1439 = vunpack.c.h.b16 %v1344
        %v1440 = vunpack.c.l.b16 %v1345
        %v1441 = vunpack.c.h.b16 %v1345
        %v1442 = vunpack.c.l.b16 %v1346
        %v1443 = vunpack.c.h.b16 %v1346
        %v1444 = vunpack.c.l.b16 %v1347
        %v1445 = vunpack.c.h.b16 %v1347
        %v1446 = vunpack.c.l.b16 %v1348
        %v1447 = vunpack.c.h.b16 %v1348
        %v1448 = vunpack.c.l.b16 %v1349
        %v1449 = vunpack.c.h.b16 %v1349
        %v1450 = vunpack.c.l.b16 %v1350
        %v1451 = vunpack.c.h.b16 %v1350
        %v1452 = vunpack.c.l.b16 %v1351
        %v1453 = vunpack.c.h.b16 %v1351
        %v1454 = vunpack.c.l.b16 %v1352
        %v1455 = vunpack.c.h.b16 %v1352
        %v1456 = vunpack.c.l.b16 %v1353
        %v1457 = vunpack.c.h.b16 %v1353
        %v1458 = vunpack.c.l.b16 %v1354
        %v1459 = vunpack.c.h.b16 %v1354
        %v1460 = vunpack.c.l.b16 %v1355
        %v1461 = vunpack.c.h.b16 %v1355
        %v1462 = vunpack.c.l.b16 %v1356
        %v1463 = vunpack.c.h.b16 %v1356
        %v1464 = vunpack.c.l.b16 %v1357
        %v1465 = vunpack.c.h.b16 %v1357
        %v1466 = vpack.c.b16 %v1402, %v1394
        %v1467 = vpack.c.b16 %v1403, %v1395
        %v1468 = vpack.c.b16 %v1404, %v1396
        %v1469 = vpack.c.b16 %v1405, %v1397
        %v1470 = vpack.c.b16 %v1406, %v1398
        %v1471 = vpack.c.b16 %v1407, %v1399
        %v1472 = vpack.c.b16 %v1408, %v1400
        %v1473 = vpack.c.b16 %v1409, %v1401
        %v1474 = vpack.c.b16 %v1418, %v1410
        %v1475 = vpack.c.b16 %v1419, %v1411
        %v1476 = vpack.c.b16 %v1420, %v1412
        %v1477 = vpack.c.b16 %v1421, %v1413
        %v1478 = vpack.c.b16 %v1422, %v1414
        %v1479 = vpack.c.b16 %v1423, %v1415
        %v1480 = vpack.c.b16 %v1424, %v1416
        %v1481 = vpack.c.b16 %v1425, %v1417
        %v1482 = vpack.c.b16 %v1434, %v1426
        %v1483 = vpack.c.b16 %v1435, %v1427
        %v1484 = vpack.c.b16 %v1436, %v1428
        %v1485 = vpack.c.b16 %v1437, %v1429
        %v1486 = vpack.c.b16 %v1438, %v1430
        %v1487 = vpack.c.b16 %v1439, %v1431
        %v1488 = vpack.c.b16 %v1440, %v1432
        %v1489 = vpack.c.b16 %v1441, %v1433
        %v1490 = vpack.c.b16 %v1450, %v1442
        %v1491 = vpack.c.b16 %v1451, %v1443
        %v1492 = vpack.c.b16 %v1452, %v1444
        %v1493 = vpack.c.b16 %v1453, %v1445
        %v1494 = vpack.c.b16 %v1454, %v1446
        %v1495 = vpack.c.b16 %v1455, %v1447
        %v1496 = vpack.c.b16 %v1456, %v1448
        %v1497 = vpack.c.b16 %v1457, %v1449
        %v1498 = vpack.c.b16 %v1458, %v1458
        %v1499 = vpack.c.b16 %v1459, %v1459
        %v1500 = vpack.c.b16 %v1460, %v1460
        %v1501 = vpack.c.b16 %v1461, %v1461
        %v1502 = vpack.c.b16 %v1462, %v1462
        %v1503 = vpack.c.b16 %v1463, %v1463
        %v1504 = vpack.c.b16 %v1464, %v1464
        %v1505 = vpack.c.b16 %v1465, %v1465
        %v1539 = vsel %vm1124, %v1498, 0
        %v1542 = vsel %vm1124, %v1499, 0
        %v1545 = vsel %vm1124, %v1500, 0
        %v1548 = vsel %vm1124, %v1501, 0
        %v1551 = vsel %vm1124, %v1502, 0
        %v1554 = vsel %vm1124, %v1503, 0
        %v1557 = vsel %vm1124, %v1504, 0
        %v1560 = vsel %vm1124, %v1505, 0
        %1562 = vmatprep.subr.bf16.mxu0 %v1467
        %1563 = vmatpush1.bf16.msra.mxu0 %v1466
        %1564 = vmatprep.subr.bf16.mxu0 %v1475
        %1565 = vmatpush1.bf16.msra.mxu0 %v1474
        %1566 = vmatprep.subr.bf16.mxu0 %v1483
        %1567 = vmatpush1.bf16.msra.mxu0 %v1482
        %1568 = vmatprep.subr.bf16.mxu0 %v1491
        %1569 = vmatpush1.bf16.msra.mxu0 %v1490
        %1570 = vmatprep.subr.bf16.mxu0 %v1542
        %1571 = vmatpush1.bf16.msra.mxu0 %v1539
        %1572 = vmatprep.subr.bf16.mxu0 0
        %1573 = vmatpush1.bf16.msra.mxu0 0
        %1574 = vmatprep.subr.bf16.mxu0 0
        %1575 = vmatpush1.bf16.msra.mxu0 0
        %1576 = vmatprep.subr.bf16.mxu0 0
        %1577 = vmatpush1.bf16.msra.mxu0 0
        %1578 = vmatprep.subr.bf16.mxu0 0
        %1579 = vmatpush1.bf16.msra.mxu0 0
        %1580 = vmatprep.subr.bf16.mxu0 0
        %1581 = vmatpush1.bf16.msra.mxu0 0
        %1582 = vmatprep.subr.bf16.mxu0 0
        %1583 = vmatpush1.bf16.msra.mxu0 0
        %1584 = vmatprep.subr.bf16.mxu0 0
        %1585 = vmatpush1.bf16.msra.mxu0 0
        %1586 = vmatprep.subr.bf16.mxu0 0
        %1587 = vmatpush1.bf16.msra.mxu0 0
        %1588 = vmatprep.subr.bf16.mxu0 0
        %1589 = vmatpush1.bf16.msra.mxu0 0
        %1590 = vmatprep.subr.bf16.mxu0 0
        %1591 = vmatpush1.bf16.msra.mxu0 0
        %1592 = vmatprep.subr.bf16.mxu0 0
        %1593 = vmatpush1.bf16.msra.mxu0 0
        %1594 = vmatprep.mubr.bf16.mxu0 0
        %1595 = vmatmul.mubr.bf16.gmra.mrb[0].mxu0 %v1122
        %v1596 = vpop.f32.mrb[0].mxu0
        %v1597 = vadd.f32 0.0, %v1596
        %v1598 = vpop.f32.mrb[0].mxu0
        %v1599 = vadd.f32 0.0, %v1598
        %v1600 = vpop.f32.mrb[0].mxu0
        %v1601 = vadd.f32 0.0, %v1600
        %v1602 = vpop.f32.mrb[0].mxu0
        %v1603 = vadd.f32 0.0, %v1602
        %1604 = vdwg.mxu0
        %1605 = vmatprep.subr.bf16.mxu0 %v1469
        %1606 = vmatpush1.bf16.msra.mxu0 %v1468
        %1607 = vmatprep.subr.bf16.mxu0 %v1477
        %1608 = vmatpush1.bf16.msra.mxu0 %v1476
        %1609 = vmatprep.subr.bf16.mxu0 %v1485
        %1610 = vmatpush1.bf16.msra.mxu0 %v1484
        %1611 = vmatprep.subr.bf16.mxu0 %v1493
        %1612 = vmatpush1.bf16.msra.mxu0 %v1492
        %1613 = vmatprep.subr.bf16.mxu0 %v1548
        %1614 = vmatpush1.bf16.msra.mxu0 %v1545
        %1615 = vmatprep.subr.bf16.mxu0 0
        %1616 = vmatpush1.bf16.msra.mxu0 0
        %1617 = vmatprep.subr.bf16.mxu0 0
        %1618 = vmatpush1.bf16.msra.mxu0 0
        %1619 = vmatprep.subr.bf16.mxu0 0
        %1620 = vmatpush1.bf16.msra.mxu0 0
        %1621 = vmatprep.subr.bf16.mxu0 0
        %1622 = vmatpush1.bf16.msra.mxu0 0
        %1623 = vmatprep.subr.bf16.mxu0 0
        %1624 = vmatpush1.bf16.msra.mxu0 0
        %1625 = vmatprep.subr.bf16.mxu0 0
        %1626 = vmatpush1.bf16.msra.mxu0 0
        %1627 = vmatprep.subr.bf16.mxu0 0
        %1628 = vmatpush1.bf16.msra.mxu0 0
        %1629 = vmatprep.subr.bf16.mxu0 0
        %1630 = vmatpush1.bf16.msra.mxu0 0
        %1631 = vmatprep.subr.bf16.mxu0 0
        %1632 = vmatpush1.bf16.msra.mxu0 0
        %1633 = vmatprep.subr.bf16.mxu0 0
        %1634 = vmatpush1.bf16.msra.mxu0 0
        %1635 = vmatprep.subr.bf16.mxu0 0
        %1636 = vmatpush1.bf16.msra.mxu0 0
        %1637 = vmatprep.mubr.bf16.mxu0 0
        %1638 = vmatmul.mubr.bf16.gmra.mrb[0].mxu0 %v1122
        %v1639 = vpop.f32.mrb[0].mxu0
        %v1640 = vadd.f32 0.0, %v1639
        %v1641 = vpop.f32.mrb[0].mxu0
        %v1642 = vadd.f32 0.0, %v1641
        %v1643 = vpop.f32.mrb[0].mxu0
        %v1644 = vadd.f32 0.0, %v1643
        %v1645 = vpop.f32.mrb[0].mxu0
        %v1646 = vadd.f32 0.0, %v1645
        %1647 = vdwg.mxu0
        %1648 = vmatprep.subr.bf16.mxu0 %v1471
        %1649 = vmatpush1.bf16.msra.mxu0 %v1470
        %1650 = vmatprep.subr.bf16.mxu0 %v1479
        %1651 = vmatpush1.bf16.msra.mxu0 %v1478
        %1652 = vmatprep.subr.bf16.mxu0 %v1487
        %1653 = vmatpush1.bf16.msra.mxu0 %v1486
        %1654 = vmatprep.subr.bf16.mxu0 %v1495
        %1655 = vmatpush1.bf16.msra.mxu0 %v1494
        %1656 = vmatprep.subr.bf16.mxu0 %v1554
        %1657 = vmatpush1.bf16.msra.mxu0 %v1551
        %1658 = vmatprep.subr.bf16.mxu0 0
        %1659 = vmatpush1.bf16.msra.mxu0 0
        %1660 = vmatprep.subr.bf16.mxu0 0
        %1661 = vmatpush1.bf16.msra.mxu0 0
        %1662 = vmatprep.subr.bf16.mxu0 0
        %1663 = vmatpush1.bf16.msra.mxu0 0
        %1664 = vmatprep.subr.bf16.mxu0 0
        %1665 = vmatpush1.bf16.msra.mxu0 0
        %1666 = vmatprep.subr.bf16.mxu0 0
        %1667 = vmatpush1.bf16.msra.mxu0 0
        %1668 = vmatprep.subr.bf16.mxu0 0
        %1669 = vmatpush1.bf16.msra.mxu0 0
        %1670 = vmatprep.subr.bf16.mxu0 0
        %1671 = vmatpush1.bf16.msra.mxu0 0
        %1672 = vmatprep.subr.bf16.mxu0 0
        %1673 = vmatpush1.bf16.msra.mxu0 0
        %1674 = vmatprep.subr.bf16.mxu0 0
        %1675 = vmatpush1.bf16.msra.mxu0 0
        %1676 = vmatprep.subr.bf16.mxu0 0
        %1677 = vmatpush1.bf16.msra.mxu0 0
        %1678 = vmatprep.subr.bf16.mxu0 0
        %1679 = vmatpush1.bf16.msra.mxu0 0
        %1680 = vmatprep.mubr.bf16.mxu0 0
        %1681 = vmatmul.mubr.bf16.gmra.mrb[0].mxu0 %v1122
        %v1682 = vpop.f32.mrb[0].mxu0
        %v1683 = vadd.f32 0.0, %v1682
        %v1684 = vpop.f32.mrb[0].mxu0
        %v1685 = vadd.f32 0.0, %v1684
        %v1686 = vpop.f32.mrb[0].mxu0
        %v1687 = vadd.f32 0.0, %v1686
        %v1688 = vpop.f32.mrb[0].mxu0
        %v1689 = vadd.f32 0.0, %v1688
        %1690 = vdwg.mxu0
        %1691 = vmatprep.subr.bf16.mxu0 %v1473
        %1692 = vmatpush1.bf16.msra.mxu0 %v1472
        %1693 = vmatprep.subr.bf16.mxu0 %v1481
        %1694 = vmatpush1.bf16.msra.mxu0 %v1480
        %1695 = vmatprep.subr.bf16.mxu0 %v1489
        %1696 = vmatpush1.bf16.msra.mxu0 %v1488
        %1697 = vmatprep.subr.bf16.mxu0 %v1497
        %1698 = vmatpush1.bf16.msra.mxu0 %v1496
        %1699 = vmatprep.subr.bf16.mxu0 %v1560
        %1700 = vmatpush1.bf16.msra.mxu0 %v1557
        %1701 = vmatprep.subr.bf16.mxu0 0
        %1702 = vmatpush1.bf16.msra.mxu0 0
        %1703 = vmatprep.subr.bf16.mxu0 0
        %1704 = vmatpush1.bf16.msra.mxu0 0
        %1705 = vmatprep.subr.bf16.mxu0 0
        %1706 = vmatpush1.bf16.msra.mxu0 0
        %1707 = vmatprep.subr.bf16.mxu0 0
        %1708 = vmatpush1.bf16.msra.mxu0 0
        %1709 = vmatprep.subr.bf16.mxu0 0
        %1710 = vmatpush1.bf16.msra.mxu0 0
        %1711 = vmatprep.subr.bf16.mxu0 0
        %1712 = vmatpush1.bf16.msra.mxu0 0
        %1713 = vmatprep.subr.bf16.mxu0 0
        %1714 = vmatpush1.bf16.msra.mxu0 0
        %1715 = vmatprep.subr.bf16.mxu0 0
        %1716 = vmatpush1.bf16.msra.mxu0 0
        %1717 = vmatprep.subr.bf16.mxu0 0
        %1718 = vmatpush1.bf16.msra.mxu0 0
        %1719 = vmatprep.subr.bf16.mxu0 0
        %1720 = vmatpush1.bf16.msra.mxu0 0
        %1721 = vmatprep.subr.bf16.mxu0 0
        %1722 = vmatpush1.bf16.msra.mxu0 0
        %1723 = vmatprep.mubr.bf16.mxu0 0
        %1724 = vmatmul.mubr.bf16.gmra.mrb[0].mxu0 %v1122
        %v1725 = vpop.f32.mrb[0].mxu0
        %v1726 = vadd.f32 0.0, %v1725
        %v1727 = vpop.f32.mrb[0].mxu0
        %v1728 = vadd.f32 0.0, %v1727
        %v1729 = vpop.f32.mrb[0].mxu0
        %v1730 = vadd.f32 0.0, %v1729
        %v1731 = vpop.f32.mrb[0].mxu0
        %v1732 = vadd.f32 0.0, %v1731
        %1733 = vdwg.mxu0
        %v1734 = vmax.f32 %v1184, %v1597
        %v1735 = vmax.f32 %v1186, %v1599
        %v1736 = vmax.f32 %v1227, %v1640
        %v1737 = vmax.f32 %v1229, %v1642
        %v1738 = vmax.f32 %v1270, %v1683
        %v1739 = vmax.f32 %v1272, %v1685
        %v1740 = vmax.f32 %v1313, %v1726
        %v1741 = vmax.f32 %v1315, %v1728
        %v1742 = vmax.f32 %v1188, %v1601
        %v1743 = vmax.f32 %v1190, %v1603
        %v1744 = vmax.f32 %v1231, %v1644
        %v1745 = vmax.f32 %v1233, %v1646
        %v1746 = vmax.f32 %v1274, %v1687
        %v1747 = vmax.f32 %v1276, %v1689
        %v1748 = vmax.f32 %v1317, %v1730
        %v1749 = vmax.f32 %v1319, %v1732
        %s1750 = scalar_lea.vmem %s866, 576 [#allocation2]
        %v1751 = vld [vmem:[%s1750] sm:$0xff]
        %v1752 = vld [vmem:[%s1750 + $0x8] sm:$0xff]
        %v1753 = vld [vmem:[%s1750 + $0x10] sm:$0xff]
        %v1754 = vld [vmem:[%s1750 + $0x18] sm:$0xff]
        %v1755 = vld [vmem:[%s1750 + $0x20] sm:$0xff]
        %v1756 = vld [vmem:[%s1750 + $0x28] sm:$0xff]
        %v1757 = vld [vmem:[%s1750 + $0x30] sm:$0xff]
        %v1758 = vld [vmem:[%s1750 + $0x38] sm:$0xff]
        %v1759 = vld [vmem:[%s1750 + $0x40] sm:$0xff]
        %v1760 = vld [vmem:[%s1750 + $0x48] sm:$0xff]
        %v1761 = vld [vmem:[%s1750 + $0x50] sm:$0xff]
        %v1762 = vld [vmem:[%s1750 + $0x58] sm:$0xff]
        %v1763 = vld [vmem:[%s1750 + $0x60] sm:$0xff]
        %v1764 = vld [vmem:[%s1750 + $0x68] sm:$0xff]
        %v1765 = vld [vmem:[%s1750 + $0x70] sm:$0xff]
        %v1766 = vld [vmem:[%s1750 + $0x78] sm:$0xff]
        %v1767 = vld [vmem:[%s1750 + $0x80] sm:$0xff]
        %v1768 = vld [vmem:[%s1750 + $0x88] sm:$0xff]
        %v1769 = vld [vmem:[%s1750 + $0x90] sm:$0xff]
        %v1770 = vld [vmem:[%s1750 + $0x98] sm:$0xff]
        %v1771 = vld [vmem:[%s1750 + $0xa0] sm:$0xff]
        %v1772 = vld [vmem:[%s1750 + $0xa8] sm:$0xff]
        %v1773 = vld [vmem:[%s1750 + $0xb0] sm:$0xff]
        %v1774 = vld [vmem:[%s1750 + $0xb8] sm:$0xff]
        %v1775 = vld [vmem:[%s1750 + $0xc0] sm:$0xff]
        %v1776 = vld [vmem:[%s1750 + $0xc8] sm:$0xff]
        %v1777 = vld [vmem:[%s1750 + $0xd0] sm:$0xff]
        %v1778 = vld [vmem:[%s1750 + $0xd8] sm:$0xff]
        %v1779 = vld [vmem:[%s1750 + $0xe0] sm:$0xff]
        %v1780 = vld [vmem:[%s1750 + $0xe8] sm:$0xff]
        %v1781 = vld [vmem:[%s1750 + $0xf0] sm:$0xff]
        %v1782 = vld [vmem:[%s1750 + $0xf8] sm:$0xff]
        %v1783 = vld [vmem:[%s1750 + $0x100] sm:$0xff]
        %v1784 = vld [vmem:[%s1750 + $0x108] sm:$0xff]
        %v1785 = vld [vmem:[%s1750 + $0x110] sm:$0xff]
        %v1786 = vld [vmem:[%s1750 + $0x118] sm:$0xff]
        %v1823 = vunpack.c.l.b16 %v1751
        %v1824 = vunpack.c.h.b16 %v1751
        %v1825 = vunpack.c.l.b16 %v1752
        %v1826 = vunpack.c.h.b16 %v1752
        %v1827 = vunpack.c.l.b16 %v1753
        %v1828 = vunpack.c.h.b16 %v1753
        %v1829 = vunpack.c.l.b16 %v1754
        %v1830 = vunpack.c.h.b16 %v1754
        %v1831 = vunpack.c.l.b16 %v1755
        %v1832 = vunpack.c.h.b16 %v1755
        %v1833 = vunpack.c.l.b16 %v1756
        %v1834 = vunpack.c.h.b16 %v1756
        %v1835 = vunpack.c.l.b16 %v1757
        %v1836 = vunpack.c.h.b16 %v1757
        %v1837 = vunpack.c.l.b16 %v1758
        %v1838 = vunpack.c.h.b16 %v1758
        %v1839 = vunpack.c.l.b16 %v1759
        %v1840 = vunpack.c.h.b16 %v1759
        %v1841 = vunpack.c.l.b16 %v1760
        %v1842 = vunpack.c.h.b16 %v1760
        %v1843 = vunpack.c.l.b16 %v1761
        %v1844 = vunpack.c.h.b16 %v1761
        %v1845 = vunpack.c.l.b16 %v1762
        %v1846 = vunpack.c.h.b16 %v1762
        %v1847 = vunpack.c.l.b16 %v1763
        %v1848 = vunpack.c.h.b16 %v1763
        %v1849 = vunpack.c.l.b16 %v1764
        %v1850 = vunpack.c.h.b16 %v1764
        %v1851 = vunpack.c.l.b16 %v1765
        %v1852 = vunpack.c.h.b16 %v1765
        %v1853 = vunpack.c.l.b16 %v1766
        %v1854 = vunpack.c.h.b16 %v1766
        %v1855 = vunpack.c.l.b16 %v1767
        %v1856 = vunpack.c.h.b16 %v1767
        %v1857 = vunpack.c.l.b16 %v1768
        %v1858 = vunpack.c.h.b16 %v1768
        %v1859 = vunpack.c.l.b16 %v1769
        %v1860 = vunpack.c.h.b16 %v1769
        %v1861 = vunpack.c.l.b16 %v1770
        %v1862 = vunpack.c.h.b16 %v1770
        %v1863 = vunpack.c.l.b16 %v1771
        %v1864 = vunpack.c.h.b16 %v1771
        %v1865 = vunpack.c.l.b16 %v1772
        %v1866 = vunpack.c.h.b16 %v1772
        %v1867 = vunpack.c.l.b16 %v1773
        %v1868 = vunpack.c.h.b16 %v1773
        %v1869 = vunpack.c.l.b16 %v1774
        %v1870 = vunpack.c.h.b16 %v1774
        %v1871 = vunpack.c.l.b16 %v1775
        %v1872 = vunpack.c.h.b16 %v1775
        %v1873 = vunpack.c.l.b16 %v1776
        %v1874 = vunpack.c.h.b16 %v1776
        %v1875 = vunpack.c.l.b16 %v1777
        %v1876 = vunpack.c.h.b16 %v1777
        %v1877 = vunpack.c.l.b16 %v1778
        %v1878 = vunpack.c.h.b16 %v1778
        %v1879 = vunpack.c.l.b16 %v1779
        %v1880 = vunpack.c.h.b16 %v1779
        %v1881 = vunpack.c.l.b16 %v1780
        %v1882 = vunpack.c.h.b16 %v1780
        %v1883 = vunpack.c.l.b16 %v1781
        %v1884 = vunpack.c.h.b16 %v1781
        %v1885 = vunpack.c.l.b16 %v1782
        %v1886 = vunpack.c.h.b16 %v1782
        %v1887 = vunpack.c.l.b16 %v1783
        %v1888 = vunpack.c.h.b16 %v1783
        %v1889 = vunpack.c.l.b16 %v1784
        %v1890 = vunpack.c.h.b16 %v1784
        %v1891 = vunpack.c.l.b16 %v1785
        %v1892 = vunpack.c.h.b16 %v1785
        %v1893 = vunpack.c.l.b16 %v1786
        %v1894 = vunpack.c.h.b16 %v1786
        %v1895 = vpack.c.b16 %v1831, %v1823
        %v1896 = vpack.c.b16 %v1832, %v1824
        %v1897 = vpack.c.b16 %v1833, %v1825
        %v1898 = vpack.c.b16 %v1834, %v1826
        %v1899 = vpack.c.b16 %v1835, %v1827
        %v1900 = vpack.c.b16 %v1836, %v1828
        %v1901 = vpack.c.b16 %v1837, %v1829
        %v1902 = vpack.c.b16 %v1838, %v1830
        %v1903 = vpack.c.b16 %v1847, %v1839
        %v1904 = vpack.c.b16 %v1848, %v1840
        %v1905 = vpack.c.b16 %v1849, %v1841
        %v1906 = vpack.c.b16 %v1850, %v1842
        %v1907 = vpack.c.b16 %v1851, %v1843
        %v1908 = vpack.c.b16 %v1852, %v1844
        %v1909 = vpack.c.b16 %v1853, %v1845
        %v1910 = vpack.c.b16 %v1854, %v1846
        %v1911 = vpack.c.b16 %v1863, %v1855
        %v1912 = vpack.c.b16 %v1864, %v1856
        %v1913 = vpack.c.b16 %v1865, %v1857
        %v1914 = vpack.c.b16 %v1866, %v1858
        %v1915 = vpack.c.b16 %v1867, %v1859
        %v1916 = vpack.c.b16 %v1868, %v1860
        %v1917 = vpack.c.b16 %v1869, %v1861
        %v1918 = vpack.c.b16 %v1870, %v1862
        %v1919 = vpack.c.b16 %v1879, %v1871
        %v1920 = vpack.c.b16 %v1880, %v1872
        %v1921 = vpack.c.b16 %v1881, %v1873
        %v1922 = vpack.c.b16 %v1882, %v1874
        %v1923 = vpack.c.b16 %v1883, %v1875
        %v1924 = vpack.c.b16 %v1884, %v1876
        %v1925 = vpack.c.b16 %v1885, %v1877
        %v1926 = vpack.c.b16 %v1886, %v1878
        %v1927 = vpack.c.b16 %v1887, %v1887
        %v1928 = vpack.c.b16 %v1888, %v1888
        %v1929 = vpack.c.b16 %v1889, %v1889
        %v1930 = vpack.c.b16 %v1890, %v1890
        %v1931 = vpack.c.b16 %v1891, %v1891
        %v1932 = vpack.c.b16 %v1892, %v1892
        %v1933 = vpack.c.b16 %v1893, %v1893
        %v1934 = vpack.c.b16 %v1894, %v1894
        %v1968 = vsel %vm1124, %v1927, 0
        %v1971 = vsel %vm1124, %v1928, 0
        %v1974 = vsel %vm1124, %v1929, 0
        %v1977 = vsel %vm1124, %v1930, 0
        %v1980 = vsel %vm1124, %v1931, 0
        %v1983 = vsel %vm1124, %v1932, 0
        %v1986 = vsel %vm1124, %v1933, 0
        %v1989 = vsel %vm1124, %v1934, 0
        %1991 = vmatprep.subr.bf16.mxu0 %v1896
        %1992 = vmatpush1.bf16.msra.mxu0 %v1895
        %1993 = vmatprep.subr.bf16.mxu0 %v1904
        %1994 = vmatpush1.bf16.msra.mxu0 %v1903
        %1995 = vmatprep.subr.bf16.mxu0 %v1912
        %1996 = vmatpush1.bf16.msra.mxu0 %v1911
        %1997 = vmatprep.subr.bf16.mxu0 %v1920
        %1998 = vmatpush1.bf16.msra.mxu0 %v1919
        %1999 = vmatprep.subr.bf16.mxu0 %v1971
        %2000 = vmatpush1.bf16.msra.mxu0 %v1968
        %2001 = vmatprep.subr.bf16.mxu0 0
        %2002 = vmatpush1.bf16.msra.mxu0 0
        %2003 = vmatprep.subr.bf16.mxu0 0
        %2004 = vmatpush1.bf16.msra.mxu0 0
        %2005 = vmatprep.subr.bf16.mxu0 0
        %2006 = vmatpush1.bf16.msra.mxu0 0
        %2007 = vmatprep.subr.bf16.mxu0 0
        %2008 = vmatpush1.bf16.msra.mxu0 0
        %2009 = vmatprep.subr.bf16.mxu0 0
        %2010 = vmatpush1.bf16.msra.mxu0 0
        %2011 = vmatprep.subr.bf16.mxu0 0
        %2012 = vmatpush1.bf16.msra.mxu0 0
        %2013 = vmatprep.subr.bf16.mxu0 0
        %2014 = vmatpush1.bf16.msra.mxu0 0
        %2015 = vmatprep.subr.bf16.mxu0 0
        %2016 = vmatpush1.bf16.msra.mxu0 0
        %2017 = vmatprep.subr.bf16.mxu0 0
        %2018 = vmatpush1.bf16.msra.mxu0 0
        %2019 = vmatprep.subr.bf16.mxu0 0
        %2020 = vmatpush1.bf16.msra.mxu0 0
        %2021 = vmatprep.subr.bf16.mxu0 0
        %2022 = vmatpush1.bf16.msra.mxu0 0
        %2023 = vmatprep.mubr.bf16.mxu0 0
        %2024 = vmatmul.mubr.bf16.gmra.mrb[0].mxu0 %v1122
        %v2025 = vpop.f32.mrb[0].mxu0
        %v2026 = vadd.f32 0.0, %v2025
        %v2027 = vpop.f32.mrb[0].mxu0
        %v2028 = vadd.f32 0.0, %v2027
        %v2029 = vpop.f32.mrb[0].mxu0
        %v2030 = vadd.f32 0.0, %v2029
        %v2031 = vpop.f32.mrb[0].mxu0
        %v2032 = vadd.f32 0.0, %v2031
        %2033 = vdwg.mxu0
        %2034 = vmatprep.subr.bf16.mxu0 %v1898
        %2035 = vmatpush1.bf16.msra.mxu0 %v1897
        %2036 = vmatprep.subr.bf16.mxu0 %v1906
        %2037 = vmatpush1.bf16.msra.mxu0 %v1905
        %2038 = vmatprep.subr.bf16.mxu0 %v1914
        %2039 = vmatpush1.bf16.msra.mxu0 %v1913
        %2040 = vmatprep.subr.bf16.mxu0 %v1922
        %2041 = vmatpush1.bf16.msra.mxu0 %v1921
        %2042 = vmatprep.subr.bf16.mxu0 %v1977
        %2043 = vmatpush1.bf16.msra.mxu0 %v1974
        %2044 = vmatprep.subr.bf16.mxu0 0
        %2045 = vmatpush1.bf16.msra.mxu0 0
        %2046 = vmatprep.subr.bf16.mxu0 0
        %2047 = vmatpush1.bf16.msra.mxu0 0
        %2048 = vmatprep.subr.bf16.mxu0 0
        %2049 = vmatpush1.bf16.msra.mxu0 0
        %2050 = vmatprep.subr.bf16.mxu0 0
        %2051 = vmatpush1.bf16.msra.mxu0 0
        %2052 = vmatprep.subr.bf16.mxu0 0
        %2053 = vmatpush1.bf16.msra.mxu0 0
        %2054 = vmatprep.subr.bf16.mxu0 0
        %2055 = vmatpush1.bf16.msra.mxu0 0
        %2056 = vmatprep.subr.bf16.mxu0 0
        %2057 = vmatpush1.bf16.msra.mxu0 0
        %2058 = vmatprep.subr.bf16.mxu0 0
        %2059 = vmatpush1.bf16.msra.mxu0 0
        %2060 = vmatprep.subr.bf16.mxu0 0
        %2061 = vmatpush1.bf16.msra.mxu0 0
        %2062 = vmatprep.subr.bf16.mxu0 0
        %2063 = vmatpush1.bf16.msra.mxu0 0
        %2064 = vmatprep.subr.bf16.mxu0 0
        %2065 = vmatpush1.bf16.msra.mxu0 0
        %2066 = vmatprep.mubr.bf16.mxu0 0
        %2067 = vmatmul.mubr.bf16.gmra.mrb[0].mxu0 %v1122
        %v2068 = vpop.f32.mrb[0].mxu0
        %v2069 = vadd.f32 0.0, %v2068
        %v2070 = vpop.f32.mrb[0].mxu0
        %v2071 = vadd.f32 0.0, %v2070
        %v2072 = vpop.f32.mrb[0].mxu0
        %v2073 = vadd.f32 0.0, %v2072
        %v2074 = vpop.f32.mrb[0].mxu0
        %v2075 = vadd.f32 0.0, %v2074
        %2076 = vdwg.mxu0
        %2077 = vmatprep.subr.bf16.mxu0 %v1900
        %2078 = vmatpush1.bf16.msra.mxu0 %v1899
        %2079 = vmatprep.subr.bf16.mxu0 %v1908
        %2080 = vmatpush1.bf16.msra.mxu0 %v1907
        %2081 = vmatprep.subr.bf16.mxu0 %v1916
        %2082 = vmatpush1.bf16.msra.mxu0 %v1915
        %2083 = vmatprep.subr.bf16.mxu0 %v1924
        %2084 = vmatpush1.bf16.msra.mxu0 %v1923
        %2085 = vmatprep.subr.bf16.mxu0 %v1983
        %2086 = vmatpush1.bf16.msra.mxu0 %v1980
        %2087 = vmatprep.subr.bf16.mxu0 0
        %2088 = vmatpush1.bf16.msra.mxu0 0
        %2089 = vmatprep.subr.bf16.mxu0 0
        %2090 = vmatpush1.bf16.msra.mxu0 0
        %2091 = vmatprep.subr.bf16.mxu0 0
        %2092 = vmatpush1.bf16.msra.mxu0 0
        %2093 = vmatprep.subr.bf16.mxu0 0
        %2094 = vmatpush1.bf16.msra.mxu0 0
        %2095 = vmatprep.subr.bf16.mxu0 0
        %2096 = vmatpush1.bf16.msra.mxu0 0
        %2097 = vmatprep.subr.bf16.mxu0 0
        %2098 = vmatpush1.bf16.msra.mxu0 0
        %2099 = vmatprep.subr.bf16.mxu0 0
        %2100 = vmatpush1.bf16.msra.mxu0 0
        %2101 = vmatprep.subr.bf16.mxu0 0
        %2102 = vmatpush1.bf16.msra.mxu0 0
        %2103 = vmatprep.subr.bf16.mxu0 0
        %2104 = vmatpush1.bf16.msra.mxu0 0
        %2105 = vmatprep.subr.bf16.mxu0 0
        %2106 = vmatpush1.bf16.msra.mxu0 0
        %2107 = vmatprep.subr.bf16.mxu0 0
        %2108 = vmatpush1.bf16.msra.mxu0 0
        %2109 = vmatprep.mubr.bf16.mxu0 0
        %2110 = vmatmul.mubr.bf16.gmra.mrb[0].mxu0 %v1122
        %v2111 = vpop.f32.mrb[0].mxu0
        %v2112 = vadd.f32 0.0, %v2111
        %v2113 = vpop.f32.mrb[0].mxu0
        %v2114 = vadd.f32 0.0, %v2113
        %v2115 = vpop.f32.mrb[0].mxu0
        %v2116 = vadd.f32 0.0, %v2115
        %v2117 = vpop.f32.mrb[0].mxu0
        %v2118 = vadd.f32 0.0, %v2117
        %2119 = vdwg.mxu0
        %2120 = vmatprep.subr.bf16.mxu0 %v1902
        %2121 = vmatpush1.bf16.msra.mxu0 %v1901
        %2122 = vmatprep.subr.bf16.mxu0 %v1910
        %2123 = vmatpush1.bf16.msra.mxu0 %v1909
        %2124 = vmatprep.subr.bf16.mxu0 %v1918
        %2125 = vmatpush1.bf16.msra.mxu0 %v1917
        %2126 = vmatprep.subr.bf16.mxu0 %v1926
        %2127 = vmatpush1.bf16.msra.mxu0 %v1925
        %2128 = vmatprep.subr.bf16.mxu0 %v1989
        %2129 = vmatpush1.bf16.msra.mxu0 %v1986
        %2130 = vmatprep.subr.bf16.mxu0 0
        %2131 = vmatpush1.bf16.msra.mxu0 0
        %2132 = vmatprep.subr.bf16.mxu0 0
        %2133 = vmatpush1.bf16.msra.mxu0 0
        %2134 = vmatprep.subr.bf16.mxu0 0
        %2135 = vmatpush1.bf16.msra.mxu0 0
        %2136 = vmatprep.subr.bf16.mxu0 0
        %2137 = vmatpush1.bf16.msra.mxu0 0
        %2138 = vmatprep.subr.bf16.mxu0 0
        %2139 = vmatpush1.bf16.msra.mxu0 0
        %2140 = vmatprep.subr.bf16.mxu0 0
        %2141 = vmatpush1.bf16.msra.mxu0 0
        %2142 = vmatprep.subr.bf16.mxu0 0
        %2143 = vmatpush1.bf16.msra.mxu0 0
        %2144 = vmatprep.subr.bf16.mxu0 0
        %2145 = vmatpush1.bf16.msra.mxu0 0
        %2146 = vmatprep.subr.bf16.mxu0 0
        %2147 = vmatpush1.bf16.msra.mxu0 0
        %2148 = vmatprep.subr.bf16.mxu0 0
        %2149 = vmatpush1.bf16.msra.mxu0 0
        %2150 = vmatprep.subr.bf16.mxu0 0
        %2151 = vmatpush1.bf16.msra.mxu0 0
        %2152 = vmatprep.mubr.bf16.mxu0 0
        %2153 = vmatmul.mubr.bf16.gmra.mrb[0].mxu0 %v1122
        %v2154 = vpop.f32.mrb[0].mxu0
        %v2155 = vadd.f32 0.0, %v2154
        %v2156 = vpop.f32.mrb[0].mxu0
        %v2157 = vadd.f32 0.0, %v2156
        %v2158 = vpop.f32.mrb[0].mxu0
        %v2159 = vadd.f32 0.0, %v2158
        %v2160 = vpop.f32.mrb[0].mxu0
        %v2161 = vadd.f32 0.0, %v2160
        %2162 = vdwg.mxu0
        %v2163 = vmax.f32 %v1734, %v2026
        %v2164 = vmax.f32 %v1735, %v2028
        %v2165 = vmax.f32 %v1736, %v2069
        %v2166 = vmax.f32 %v1737, %v2071
        %v2167 = vmax.f32 %v1738, %v2112
        %v2168 = vmax.f32 %v1739, %v2114
        %v2169 = vmax.f32 %v1740, %v2155
        %v2170 = vmax.f32 %v1741, %v2157
        %v2171 = vmax.f32 %v1742, %v2030
        %v2172 = vmax.f32 %v1743, %v2032
        %v2173 = vmax.f32 %v1744, %v2073
        %v2174 = vmax.f32 %v1745, %v2075
        %v2175 = vmax.f32 %v1746, %v2116
        %v2176 = vmax.f32 %v1747, %v2118
        %v2177 = vmax.f32 %v1748, %v2159
        %v2178 = vmax.f32 %v1749, %v2161
        %s2179 = scalar_lea.vmem %s866, 864 [#allocation2]
        %v2180 = vld [vmem:[%s2179] sm:$0xff]
        %v2181 = vld [vmem:[%s2179 + $0x8] sm:$0xff]
        %v2182 = vld [vmem:[%s2179 + $0x10] sm:$0xff]
        %v2183 = vld [vmem:[%s2179 + $0x18] sm:$0xff]
        %v2184 = vld [vmem:[%s2179 + $0x20] sm:$0xff]
        %v2185 = vld [vmem:[%s2179 + $0x28] sm:$0xff]
        %v2186 = vld [vmem:[%s2179 + $0x30] sm:$0xff]
        %v2187 = vld [vmem:[%s2179 + $0x38] sm:$0xff]
        %v2188 = vld [vmem:[%s2179 + $0x40] sm:$0xff]
        %v2189 = vld [vmem:[%s2179 + $0x48] sm:$0xff]
        %v2190 = vld [vmem:[%s2179 + $0x50] sm:$0xff]
        %v2191 = vld [vmem:[%s2179 + $0x58] sm:$0xff]
        %v2192 = vld [vmem:[%s2179 + $0x60] sm:$0xff]
        %v2193 = vld [vmem:[%s2179 + $0x68] sm:$0xff]
        %v2194 = vld [vmem:[%s2179 + $0x70] sm:$0xff]
        %v2195 = vld [vmem:[%s2179 + $0x78] sm:$0xff]
        %v2196 = vld [vmem:[%s2179 + $0x80] sm:$0xff]
        %v2197 = vld [vmem:[%s2179 + $0x88] sm:$0xff]
        %v2198 = vld [vmem:[%s2179 + $0x90] sm:$0xff]
        %v2199 = vld [vmem:[%s2179 + $0x98] sm:$0xff]
        %v2200 = vld [vmem:[%s2179 + $0xa0] sm:$0xff]
        %v2201 = vld [vmem:[%s2179 + $0xa8] sm:$0xff]
        %v2202 = vld [vmem:[%s2179 + $0xb0] sm:$0xff]
        %v2203 = vld [vmem:[%s2179 + $0xb8] sm:$0xff]
        %v2204 = vld [vmem:[%s2179 + $0xc0] sm:$0xff]
        %v2205 = vld [vmem:[%s2179 + $0xc8] sm:$0xff]
        %v2206 = vld [vmem:[%s2179 + $0xd0] sm:$0xff]
        %v2207 = vld [vmem:[%s2179 + $0xd8] sm:$0xff]
        %v2208 = vld [vmem:[%s2179 + $0xe0] sm:$0xff]
        %v2209 = vld [vmem:[%s2179 + $0xe8] sm:$0xff]
        %v2210 = vld [vmem:[%s2179 + $0xf0] sm:$0xff]
        %v2211 = vld [vmem:[%s2179 + $0xf8] sm:$0xff]
        %v2212 = vld [vmem:[%s2179 + $0x100] sm:$0xff]
        %v2213 = vld [vmem:[%s2179 + $0x108] sm:$0xff]
        %v2214 = vld [vmem:[%s2179 + $0x110] sm:$0xff]
        %v2215 = vld [vmem:[%s2179 + $0x118] sm:$0xff]
        %v2252 = vunpack.c.l.b16 %v2180
        %v2253 = vunpack.c.h.b16 %v2180
        %v2254 = vunpack.c.l.b16 %v2181
        %v2255 = vunpack.c.h.b16 %v2181
        %v2256 = vunpack.c.l.b16 %v2182
        %v2257 = vunpack.c.h.b16 %v2182
        %v2258 = vunpack.c.l.b16 %v2183
        %v2259 = vunpack.c.h.b16 %v2183
        %v2260 = vunpack.c.l.b16 %v2184
        %v2261 = vunpack.c.h.b16 %v2184
        %v2262 = vunpack.c.l.b16 %v2185
        %v2263 = vunpack.c.h.b16 %v2185
        %v2264 = vunpack.c.l.b16 %v2186
        %v2265 = vunpack.c.h.b16 %v2186
        %v2266 = vunpack.c.l.b16 %v2187
        %v2267 = vunpack.c.h.b16 %v2187
        %v2268 = vunpack.c.l.b16 %v2188
        %v2269 = vunpack.c.h.b16 %v2188
        %v2270 = vunpack.c.l.b16 %v2189
        %v2271 = vunpack.c.h.b16 %v2189
        %v2272 = vunpack.c.l.b16 %v2190
        %v2273 = vunpack.c.h.b16 %v2190
        %v2274 = vunpack.c.l.b16 %v2191
        %v2275 = vunpack.c.h.b16 %v2191
        %v2276 = vunpack.c.l.b16 %v2192
        %v2277 = vunpack.c.h.b16 %v2192
        %v2278 = vunpack.c.l.b16 %v2193
        %v2279 = vunpack.c.h.b16 %v2193
        %v2280 = vunpack.c.l.b16 %v2194
        %v2281 = vunpack.c.h.b16 %v2194
        %v2282 = vunpack.c.l.b16 %v2195
        %v2283 = vunpack.c.h.b16 %v2195
        %v2284 = vunpack.c.l.b16 %v2196
        %v2285 = vunpack.c.h.b16 %v2196
        %v2286 = vunpack.c.l.b16 %v2197
        %v2287 = vunpack.c.h.b16 %v2197
        %v2288 = vunpack.c.l.b16 %v2198
        %v2289 = vunpack.c.h.b16 %v2198
        %v2290 = vunpack.c.l.b16 %v2199
        %v2291 = vunpack.c.h.b16 %v2199
        %v2292 = vunpack.c.l.b16 %v2200
        %v2293 = vunpack.c.h.b16 %v2200
        %v2294 = vunpack.c.l.b16 %v2201
        %v2295 = vunpack.c.h.b16 %v2201
        %v2296 = vunpack.c.l.b16 %v2202
        %v2297 = vunpack.c.h.b16 %v2202
        %v2298 = vunpack.c.l.b16 %v2203
        %v2299 = vunpack.c.h.b16 %v2203
        %v2300 = vunpack.c.l.b16 %v2204
        %v2301 = vunpack.c.h.b16 %v2204
        %v2302 = vunpack.c.l.b16 %v2205
        %v2303 = vunpack.c.h.b16 %v2205
        %v2304 = vunpack.c.l.b16 %v2206
        %v2305 = vunpack.c.h.b16 %v2206
        %v2306 = vunpack.c.l.b16 %v2207
        %v2307 = vunpack.c.h.b16 %v2207
        %v2308 = vunpack.c.l.b16 %v2208
        %v2309 = vunpack.c.h.b16 %v2208
        %v2310 = vunpack.c.l.b16 %v2209
        %v2311 = vunpack.c.h.b16 %v2209
        %v2312 = vunpack.c.l.b16 %v2210
        %v2313 = vunpack.c.h.b16 %v2210
        %v2314 = vunpack.c.l.b16 %v2211
        %v2315 = vunpack.c.h.b16 %v2211
        %v2316 = vunpack.c.l.b16 %v2212
        %v2317 = vunpack.c.h.b16 %v2212
        %v2318 = vunpack.c.l.b16 %v2213
        %v2319 = vunpack.c.h.b16 %v2213
        %v2320 = vunpack.c.l.b16 %v2214
        %v2321 = vunpack.c.h.b16 %v2214
        %v2322 = vunpack.c.l.b16 %v2215
        %v2323 = vunpack.c.h.b16 %v2215
        %v2324 = vpack.c.b16 %v2260, %v2252
        %v2325 = vpack.c.b16 %v2261, %v2253
        %v2326 = vpack.c.b16 %v2262, %v2254
        %v2327 = vpack.c.b16 %v2263, %v2255
        %v2328 = vpack.c.b16 %v2264, %v2256
        %v2329 = vpack.c.b16 %v2265, %v2257
        %v2330 = vpack.c.b16 %v2266, %v2258
        %v2331 = vpack.c.b16 %v2267, %v2259
        %v2332 = vpack.c.b16 %v2276, %v2268
        %v2333 = vpack.c.b16 %v2277, %v2269
        %v2334 = vpack.c.b16 %v2278, %v2270
        %v2335 = vpack.c.b16 %v2279, %v2271
        %v2336 = vpack.c.b16 %v2280, %v2272
        %v2337 = vpack.c.b16 %v2281, %v2273
        %v2338 = vpack.c.b16 %v2282, %v2274
        %v2339 = vpack.c.b16 %v2283, %v2275
        %v2340 = vpack.c.b16 %v2292, %v2284
        %v2341 = vpack.c.b16 %v2293, %v2285
        %v2342 = vpack.c.b16 %v2294, %v2286
        %v2343 = vpack.c.b16 %v2295, %v2287
        %v2344 = vpack.c.b16 %v2296, %v2288
        %v2345 = vpack.c.b16 %v2297, %v2289
        %v2346 = vpack.c.b16 %v2298, %v2290
        %v2347 = vpack.c.b16 %v2299, %v2291
        %v2348 = vpack.c.b16 %v2308, %v2300
        %v2349 = vpack.c.b16 %v2309, %v2301
        %v2350 = vpack.c.b16 %v2310, %v2302
        %v2351 = vpack.c.b16 %v2311, %v2303
        %v2352 = vpack.c.b16 %v2312, %v2304
        %v2353 = vpack.c.b16 %v2313, %v2305
        %v2354 = vpack.c.b16 %v2314, %v2306
        %v2355 = vpack.c.b16 %v2315, %v2307
        %v2356 = vpack.c.b16 %v2316, %v2316
        %v2357 = vpack.c.b16 %v2317, %v2317
        %v2358 = vpack.c.b16 %v2318, %v2318
        %v2359 = vpack.c.b16 %v2319, %v2319
        %v2360 = vpack.c.b16 %v2320, %v2320
        %v2361 = vpack.c.b16 %v2321, %v2321
        %v2362 = vpack.c.b16 %v2322, %v2322
        %v2363 = vpack.c.b16 %v2323, %v2323
        %v2397 = vsel %vm1124, %v2356, 0
        %v2400 = vsel %vm1124, %v2357, 0
        %v2403 = vsel %vm1124, %v2358, 0
        %v2406 = vsel %vm1124, %v2359, 0
        %v2409 = vsel %vm1124, %v2360, 0
        %v2412 = vsel %vm1124, %v2361, 0
        %v2415 = vsel %vm1124, %v2362, 0
        %v2418 = vsel %vm1124, %v2363, 0
        %2420 = vmatprep.subr.bf16.mxu0 %v2325
        %2421 = vmatpush1.bf16.msra.mxu0 %v2324
        %2422 = vmatprep.subr.bf16.mxu0 %v2333
        %2423 = vmatpush1.bf16.msra.mxu0 %v2332
        %2424 = vmatprep.subr.bf16.mxu0 %v2341
        %2425 = vmatpush1.bf16.msra.mxu0 %v2340
        %2426 = vmatprep.subr.bf16.mxu0 %v2349
        %2427 = vmatpush1.bf16.msra.mxu0 %v2348
        %2428 = vmatprep.subr.bf16.mxu0 %v2400
        %2429 = vmatpush1.bf16.msra.mxu0 %v2397
        %2430 = vmatprep.subr.bf16.mxu0 0
        %2431 = vmatpush1.bf16.msra.mxu0 0
        %2432 = vmatprep.subr.bf16.mxu0 0
        %2433 = vmatpush1.bf16.msra.mxu0 0
        %2434 = vmatprep.subr.bf16.mxu0 0
        %2435 = vmatpush1.bf16.msra.mxu0 0
        %2436 = vmatprep.subr.bf16.mxu0 0
        %2437 = vmatpush1.bf16.msra.mxu0 0
        %2438 = vmatprep.subr.bf16.mxu0 0
        %2439 = vmatpush1.bf16.msra.mxu0 0
        %2440 = vmatprep.subr.bf16.mxu0 0
        %2441 = vmatpush1.bf16.msra.mxu0 0
        %2442 = vmatprep.subr.bf16.mxu0 0
        %2443 = vmatpush1.bf16.msra.mxu0 0
        %2444 = vmatprep.subr.bf16.mxu0 0
        %2445 = vmatpush1.bf16.msra.mxu0 0
        %2446 = vmatprep.subr.bf16.mxu0 0
        %2447 = vmatpush1.bf16.msra.mxu0 0
        %2448 = vmatprep.subr.bf16.mxu0 0
        %2449 = vmatpush1.bf16.msra.mxu0 0
        %2450 = vmatprep.subr.bf16.mxu0 0
        %2451 = vmatpush1.bf16.msra.mxu0 0
        %2452 = vmatprep.mubr.bf16.mxu0 0
        %2453 = vmatmul.mubr.bf16.gmra.mrb[0].mxu0 %v1122
        %v2454 = vpop.f32.mrb[0].mxu0
        %v2455 = vadd.f32 0.0, %v2454
        %v2456 = vpop.f32.mrb[0].mxu0
        %v2457 = vadd.f32 0.0, %v2456
        %v2458 = vpop.f32.mrb[0].mxu0
        %v2459 = vadd.f32 0.0, %v2458
        %v2460 = vpop.f32.mrb[0].mxu0
        %v2461 = vadd.f32 0.0, %v2460
        %2462 = vdwg.mxu0
        %2463 = vmatprep.subr.bf16.mxu0 %v2327
        %2464 = vmatpush1.bf16.msra.mxu0 %v2326
        %2465 = vmatprep.subr.bf16.mxu0 %v2335
        %2466 = vmatpush1.bf16.msra.mxu0 %v2334
        %2467 = vmatprep.subr.bf16.mxu0 %v2343
        %2468 = vmatpush1.bf16.msra.mxu0 %v2342
        %2469 = vmatprep.subr.bf16.mxu0 %v2351
        %2470 = vmatpush1.bf16.msra.mxu0 %v2350
        %2471 = vmatprep.subr.bf16.mxu0 %v2406
        %2472 = vmatpush1.bf16.msra.mxu0 %v2403
        %2473 = vmatprep.subr.bf16.mxu0 0
        %2474 = vmatpush1.bf16.msra.mxu0 0
        %2475 = vmatprep.subr.bf16.mxu0 0
        %2476 = vmatpush1.bf16.msra.mxu0 0
        %2477 = vmatprep.subr.bf16.mxu0 0
        %2478 = vmatpush1.bf16.msra.mxu0 0
        %2479 = vmatprep.subr.bf16.mxu0 0
        %2480 = vmatpush1.bf16.msra.mxu0 0
        %2481 = vmatprep.subr.bf16.mxu0 0
        %2482 = vmatpush1.bf16.msra.mxu0 0
        %2483 = vmatprep.subr.bf16.mxu0 0
        %2484 = vmatpush1.bf16.msra.mxu0 0
        %2485 = vmatprep.subr.bf16.mxu0 0
        %2486 = vmatpush1.bf16.msra.mxu0 0
        %2487 = vmatprep.subr.bf16.mxu0 0
        %2488 = vmatpush1.bf16.msra.mxu0 0
        %2489 = vmatprep.subr.bf16.mxu0 0
        %2490 = vmatpush1.bf16.msra.mxu0 0
        %2491 = vmatprep.subr.bf16.mxu0 0
        %2492 = vmatpush1.bf16.msra.mxu0 0
        %2493 = vmatprep.subr.bf16.mxu0 0
        %2494 = vmatpush1.bf16.msra.mxu0 0
        %2495 = vmatprep.mubr.bf16.mxu0 0
        %2496 = vmatmul.mubr.bf16.gmra.mrb[0].mxu0 %v1122
        %v2497 = vpop.f32.mrb[0].mxu0
        %v2498 = vadd.f32 0.0, %v2497
        %v2499 = vpop.f32.mrb[0].mxu0
        %v2500 = vadd.f32 0.0, %v2499
        %v2501 = vpop.f32.mrb[0].mxu0
        %v2502 = vadd.f32 0.0, %v2501
        %v2503 = vpop.f32.mrb[0].mxu0
        %v2504 = vadd.f32 0.0, %v2503
        %2505 = vdwg.mxu0
        %2506 = vmatprep.subr.bf16.mxu0 %v2329
        %2507 = vmatpush1.bf16.msra.mxu0 %v2328
        %2508 = vmatprep.subr.bf16.mxu0 %v2337
        %2509 = vmatpush1.bf16.msra.mxu0 %v2336
        %2510 = vmatprep.subr.bf16.mxu0 %v2345
        %2511 = vmatpush1.bf16.msra.mxu0 %v2344
        %2512 = vmatprep.subr.bf16.mxu0 %v2353
        %2513 = vmatpush1.bf16.msra.mxu0 %v2352
        %2514 = vmatprep.subr.bf16.mxu0 %v2412
        %2515 = vmatpush1.bf16.msra.mxu0 %v2409
        %2516 = vmatprep.subr.bf16.mxu0 0
        %2517 = vmatpush1.bf16.msra.mxu0 0
        %2518 = vmatprep.subr.bf16.mxu0 0
        %2519 = vmatpush1.bf16.msra.mxu0 0
        %2520 = vmatprep.subr.bf16.mxu0 0
        %2521 = vmatpush1.bf16.msra.mxu0 0
        %2522 = vmatprep.subr.bf16.mxu0 0
        %2523 = vmatpush1.bf16.msra.mxu0 0
        %2524 = vmatprep.subr.bf16.mxu0 0
        %2525 = vmatpush1.bf16.msra.mxu0 0
        %2526 = vmatprep.subr.bf16.mxu0 0
        %2527 = vmatpush1.bf16.msra.mxu0 0
        %2528 = vmatprep.subr.bf16.mxu0 0
        %2529 = vmatpush1.bf16.msra.mxu0 0
        %2530 = vmatprep.subr.bf16.mxu0 0
        %2531 = vmatpush1.bf16.msra.mxu0 0
        %2532 = vmatprep.subr.bf16.mxu0 0
        %2533 = vmatpush1.bf16.msra.mxu0 0
        %2534 = vmatprep.subr.bf16.mxu0 0
        %2535 = vmatpush1.bf16.msra.mxu0 0
        %2536 = vmatprep.subr.bf16.mxu0 0
        %2537 = vmatpush1.bf16.msra.mxu0 0
        %2538 = vmatprep.mubr.bf16.mxu0 0
        %2539 = vmatmul.mubr.bf16.gmra.mrb[0].mxu0 %v1122
        %v2540 = vpop.f32.mrb[0].mxu0
        %v2541 = vadd.f32 0.0, %v2540
        %v2542 = vpop.f32.mrb[0].mxu0
        %v2543 = vadd.f32 0.0, %v2542
        %v2544 = vpop.f32.mrb[0].mxu0
        %v2545 = vadd.f32 0.0, %v2544
        %v2546 = vpop.f32.mrb[0].mxu0
        %v2547 = vadd.f32 0.0, %v2546
        %2548 = vdwg.mxu0
        %2549 = vmatprep.subr.bf16.mxu0 %v2331
        %2550 = vmatpush1.bf16.msra.mxu0 %v2330
        %2551 = vmatprep.subr.bf16.mxu0 %v2339
        %2552 = vmatpush1.bf16.msra.mxu0 %v2338
        %2553 = vmatprep.subr.bf16.mxu0 %v2347
        %2554 = vmatpush1.bf16.msra.mxu0 %v2346
        %2555 = vmatprep.subr.bf16.mxu0 %v2355
        %2556 = vmatpush1.bf16.msra.mxu0 %v2354
        %2557 = vmatprep.subr.bf16.mxu0 %v2418
        %2558 = vmatpush1.bf16.msra.mxu0 %v2415
        %2559 = vmatprep.subr.bf16.mxu0 0
        %2560 = vmatpush1.bf16.msra.mxu0 0
        %2561 = vmatprep.subr.bf16.mxu0 0
        %2562 = vmatpush1.bf16.msra.mxu0 0
        %2563 = vmatprep.subr.bf16.mxu0 0
        %2564 = vmatpush1.bf16.msra.mxu0 0
        %2565 = vmatprep.subr.bf16.mxu0 0
        %2566 = vmatpush1.bf16.msra.mxu0 0
        %2567 = vmatprep.subr.bf16.mxu0 0
        %2568 = vmatpush1.bf16.msra.mxu0 0
        %2569 = vmatprep.subr.bf16.mxu0 0
        %2570 = vmatpush1.bf16.msra.mxu0 0
        %2571 = vmatprep.subr.bf16.mxu0 0
        %2572 = vmatpush1.bf16.msra.mxu0 0
        %2573 = vmatprep.subr.bf16.mxu0 0
        %2574 = vmatpush1.bf16.msra.mxu0 0
        %2575 = vmatprep.subr.bf16.mxu0 0
        %2576 = vmatpush1.bf16.msra.mxu0 0
        %2577 = vmatprep.subr.bf16.mxu0 0
        %2578 = vmatpush1.bf16.msra.mxu0 0
        %2579 = vmatprep.subr.bf16.mxu0 0
        %2580 = vmatpush1.bf16.msra.mxu0 0
        %2581 = vmatprep.mubr.bf16.mxu0 0
        %2582 = vmatmul.mubr.bf16.gmra.mrb[0].mxu0 %v1122
        %v2583 = vpop.f32.mrb[0].mxu0
        %v2584 = vadd.f32 0.0, %v2583
        %v2585 = vpop.f32.mrb[0].mxu0
        %v2586 = vadd.f32 0.0, %v2585
        %v2587 = vpop.f32.mrb[0].mxu0
        %v2588 = vadd.f32 0.0, %v2587
        %v2589 = vpop.f32.mrb[0].mxu0
        %v2590 = vadd.f32 0.0, %v2589
        %2591 = vdwg.mxu0
        %v2592 = vmax.f32 %v2163, %v2455
        %v2593 = vmax.f32 %v2164, %v2457
        %v2594 = vmax.f32 %v2165, %v2498
        %v2595 = vmax.f32 %v2166, %v2500
        %v2596 = vmax.f32 %v2167, %v2541
        %v2597 = vmax.f32 %v2168, %v2543
        %v2598 = vmax.f32 %v2169, %v2584
        %v2599 = vmax.f32 %v2170, %v2586
        %v2600 = vmax.f32 %v2171, %v2459
        %v2601 = vmax.f32 %v2172, %v2461
        %v2602 = vmax.f32 %v2173, %v2502
        %v2603 = vmax.f32 %v2174, %v2504
        %v2604 = vmax.f32 %v2175, %v2545
        %v2605 = vmax.f32 %v2176, %v2547
        %v2606 = vmax.f32 %v2177, %v2588
        %v2607 = vmax.f32 %v2178, %v2590
        %v2608 = vld [vmem:[%s2] sm:$0xff]
        %v2609 = vld [vmem:[%s2 + $0x8] sm:$0xff]
        %2611 = vset.pattern.permute.xlu0 0
        %2612 = vperm.xlu0 %2611, %v2608
        %v2613 = vpop.permute.xlu0 %2612
        %2616 = vset.pattern.permute.xlu0 0
        %2617 = vperm.xlu0 %2616, %v2609
        %v2618 = vpop.permute.xlu0 %2617
        %v2620 = vadd.f32 %v2592, %v2613
        %v2621 = vadd.f32 %v2593, %v2613
        %v2622 = vadd.f32 %v2594, %v2613
        %v2623 = vadd.f32 %v2595, %v2613
        %v2624 = vadd.f32 %v2596, %v2613
        %v2625 = vadd.f32 %v2597, %v2613
        %v2626 = vadd.f32 %v2598, %v2613
        %v2627 = vadd.f32 %v2599, %v2613
        %v2628 = vadd.f32 %v2600, %v2618
        %v2629 = vadd.f32 %v2601, %v2618
        %v2630 = vadd.f32 %v2602, %v2618
        %v2631 = vadd.f32 %v2603, %v2618
        %v2632 = vadd.f32 %v2604, %v2618
        %v2633 = vadd.f32 %v2605, %v2618
        %v2634 = vadd.f32 %v2606, %v2618
        %v2635 = vadd.f32 %v2607, %v2618
        %v2636 = vmax.f32 %v2620, 0.0
        %v2637 = vmax.f32 %v2621, 0.0
        %v2638 = vmax.f32 %v2622, 0.0
        %v2639 = vmax.f32 %v2623, 0.0
        %v2640 = vmax.f32 %v2624, 0.0
        %v2641 = vmax.f32 %v2625, 0.0
        %v2642 = vmax.f32 %v2626, 0.0
        %v2643 = vmax.f32 %v2627, 0.0
        %v2644 = vmax.f32 %v2628, 0.0
        %v2645 = vmax.f32 %v2629, 0.0
        %v2646 = vmax.f32 %v2630, 0.0
        %v2647 = vmax.f32 %v2631, 0.0
        %v2648 = vmax.f32 %v2632, 0.0
        %v2649 = vmax.f32 %v2633, 0.0
        %v2650 = vmax.f32 %v2634, 0.0
        %v2651 = vmax.f32 %v2635, 0.0
        %2652 = vst [vmem:[%s885] sm:$0xff] %v2636
        %2653 = vst [vmem:[%s885 + $0x8] sm:$0xff] %v2637
        %2654 = vst [vmem:[%s885 + $0x10] sm:$0xff] %v2638
        %2655 = vst [vmem:[%s885 + $0x18] sm:$0xff] %v2639
        %2656 = vst [vmem:[%s885 + $0x20] sm:$0xff] %v2640
        %2657 = vst [vmem:[%s885 + $0x28] sm:$0xff] %v2641
        %2658 = vst [vmem:[%s885 + $0x30] sm:$0xff] %v2642
        %2659 = vst [vmem:[%s885 + $0x38] sm:$0xff] %v2643
        %2660 = vst [vmem:[%s885 + $0x40] sm:$0xff] %v2644
        %2661 = vst [vmem:[%s885 + $0x48] sm:$0xff] %v2645
        %2662 = vst [vmem:[%s885 + $0x50] sm:$0xff] %v2646
        %2663 = vst [vmem:[%s885 + $0x58] sm:$0xff] %v2647
        %2664 = vst [vmem:[%s885 + $0x60] sm:$0xff] %v2648
        %2665 = vst [vmem:[%s885 + $0x68] sm:$0xff] %v2649
        %2666 = vst [vmem:[%s885 + $0x70] sm:$0xff] %v2650
        %2667 = vst [vmem:[%s885 + $0x78] sm:$0xff] %v2651
        %s2668 = sand.u32 %s90, 1
        %s2669 = sand.u32 %s90, 1
        %s2670 = smul.addr %s2669, 128
        %s2671 = scalar_lea.vmem [#allocation3], %s2670
        // Predicated region
        $region99: #{cnn_forward.6} parent=93 // pred_check
          %p2672 = pneg %p100
        $region100: #{cnn_forward.6} parent=93 // pred_check_branch
          %2674 = sbr.rel (%p2672) target = $region102
        $region101: #{cnn_forward.6} parent=93 // pred_region
          %s2675 = smul.u32 8, %s14
          %s2676 = ssub.s32 11, %s2675
          %p2677 = scmp.lt.s32.totalorder %s2676, 8
          %s2678 = scalar_select %p2677, %s2676, 8
          %s2679 = smul.u32 256, %s2678
          %p2680 = scmp.ne.s32.totalorder 0, %s2679
          %s2681 = smul.addr %s2675, 8
          %s2682 = scalar_lea.vmem %s3, %s2681
          %s2683 = smul.u32 %s2678, 8
          // Predicated region
          $region103: #{cnn_forward.6} parent=101 // pred_check
            %p2684 = pneg %p2680
          $region104: #{cnn_forward.6} parent=101 // pred_check_branch
            %2686 = sbr.rel (%p2684) target = $region106
          $region105: #{cnn_forward.6} parent=101 // pred_region
            %p2687 = scmp.lt.u32.totalorder %s2683, 8
            %p2688 = pneg %p2687
            // Predicated region
            $region107: #{cnn_forward.6} parent=105 // pred_check
              _
            $region108: #{cnn_forward.6} parent=105 // pred_check_branch
              %2690 = sbr.rel (%p2687) target = $region110
            $region109: #{cnn_forward.6} parent=105 // pred_region
              %s2707 = sand.u32 %s2683, 7
              %p2708 = scmp.eq.s32.totalorder %s2707, 0
              // Predicated region
              $region122: #{cnn_forward.6} parent=109 // pred_check
                %p2709 = pneg %p2708
              $region123: #{cnn_forward.6} parent=109 // pred_check_branch
                %2711 = sbr.rel (%p2709) target = $region125
              $region124: #{cnn_forward.6} parent=109 // pred_region
                %s2712 = sshrl.u32 %s2683, 3
                %s2713 = sshrl.u32 %s2712, 5
                // While loop
                $region126: #{cnn_forward.6} parent=124 // loop_pre_header
                  _
                $region127: #{cnn_forward.6} parent=124 // loop_header
                  %s2717 = sphi 0, %s2719
                  %p2718 = scmp.ge.s32.totalorder %s2717, %s2713
                  %s2722 = sphi 0, %s2855
                  %s2723 = sphi %s2671, %s2858
                  %s2724 = sphi %s2682, %s2859
                $region128: #{cnn_forward.6} parent=124 // loop_header_branch
                  %2721 = sbr.rel (%p2718) target = $region132
                $region129: #{cnn_forward.6} parent=124 // loop_body
                  %v2725 = vld [vmem:[%s2723] sm:$0xff]
                  %2726 = vst [vmem:[%s2724] sm:$0xff] %v2725
                  %v2727 = vld [vmem:[%s2723 + $0x8] sm:$0xff]
                  %2728 = vst [vmem:[%s2724 + $0x8] sm:$0xff] %v2727
                  %v2729 = vld [vmem:[%s2723 + $0x10] sm:$0xff]
                  %2730 = vst [vmem:[%s2724 + $0x10] sm:$0xff] %v2729
                  %v2731 = vld [vmem:[%s2723 + $0x18] sm:$0xff]
                  %2732 = vst [vmem:[%s2724 + $0x18] sm:$0xff] %v2731
                  %v2733 = vld [vmem:[%s2723 + $0x20] sm:$0xff]
                  %2734 = vst [vmem:[%s2724 + $0x20] sm:$0xff] %v2733
                  %v2735 = vld [vmem:[%s2723 + $0x28] sm:$0xff]
                  %2736 = vst [vmem:[%s2724 + $0x28] sm:$0xff] %v2735
                  %v2737 = vld [vmem:[%s2723 + $0x30] sm:$0xff]
                  %2738 = vst [vmem:[%s2724 + $0x30] sm:$0xff] %v2737
                  %v2739 = vld [vmem:[%s2723 + $0x38] sm:$0xff]
                  %2740 = vst [vmem:[%s2724 + $0x38] sm:$0xff] %v2739
                  %v2741 = vld [vmem:[%s2723 + $0x40] sm:$0xff]
                  %2742 = vst [vmem:[%s2724 + $0x40] sm:$0xff] %v2741
                  %v2743 = vld [vmem:[%s2723 + $0x48] sm:$0xff]
                  %2744 = vst [vmem:[%s2724 + $0x48] sm:$0xff] %v2743
                  %v2745 = vld [vmem:[%s2723 + $0x50] sm:$0xff]
                  %2746 = vst [vmem:[%s2724 + $0x50] sm:$0xff] %v2745
                  %v2747 = vld [vmem:[%s2723 + $0x58] sm:$0xff]
                  %2748 = vst [vmem:[%s2724 + $0x58] sm:$0xff] %v2747
                  %v2749 = vld [vmem:[%s2723 + $0x60] sm:$0xff]
                  %2750 = vst [vmem:[%s2724 + $0x60] sm:$0xff] %v2749
                  %v2751 = vld [vmem:[%s2723 + $0x68] sm:$0xff]
                  %2752 = vst [vmem:[%s2724 + $0x68] sm:$0xff] %v2751
                  %v2753 = vld [vmem:[%s2723 + $0x70] sm:$0xff]
                  %2754 = vst [vmem:[%s2724 + $0x70] sm:$0xff] %v2753
                  %v2755 = vld [vmem:[%s2723 + $0x78] sm:$0xff]
                  %2756 = vst [vmem:[%s2724 + $0x78] sm:$0xff] %v2755
                  %v2757 = vld [vmem:[%s2723 + $0x80] sm:$0xff]
                  %2758 = vst [vmem:[%s2724 + $0x80] sm:$0xff] %v2757
                  %v2759 = vld [vmem:[%s2723 + $0x88] sm:$0xff]
                  %2760 = vst [vmem:[%s2724 + $0x88] sm:$0xff] %v2759
                  %v2761 = vld [vmem:[%s2723 + $0x90] sm:$0xff]
                  %2762 = vst [vmem:[%s2724 + $0x90] sm:$0xff] %v2761
                  %v2763 = vld [vmem:[%s2723 + $0x98] sm:$0xff]
                  %2764 = vst [vmem:[%s2724 + $0x98] sm:$0xff] %v2763
                  %v2765 = vld [vmem:[%s2723 + $0xa0] sm:$0xff]
                  %2766 = vst [vmem:[%s2724 + $0xa0] sm:$0xff] %v2765
                  %v2767 = vld [vmem:[%s2723 + $0xa8] sm:$0xff]
                  %2768 = vst [vmem:[%s2724 + $0xa8] sm:$0xff] %v2767
                  %v2769 = vld [vmem:[%s2723 + $0xb0] sm:$0xff]
                  %2770 = vst [vmem:[%s2724 + $0xb0] sm:$0xff] %v2769
                  %v2771 = vld [vmem:[%s2723 + $0xb8] sm:$0xff]
                  %2772 = vst [vmem:[%s2724 + $0xb8] sm:$0xff] %v2771
                  %v2773 = vld [vmem:[%s2723 + $0xc0] sm:$0xff]
                  %2774 = vst [vmem:[%s2724 + $0xc0] sm:$0xff] %v2773
                  %v2775 = vld [vmem:[%s2723 + $0xc8] sm:$0xff]
                  %2776 = vst [vmem:[%s2724 + $0xc8] sm:$0xff] %v2775
                  %v2777 = vld [vmem:[%s2723 + $0xd0] sm:$0xff]
                  %2778 = vst [vmem:[%s2724 + $0xd0] sm:$0xff] %v2777
                  %v2779 = vld [vmem:[%s2723 + $0xd8] sm:$0xff]
                  %2780 = vst [vmem:[%s2724 + $0xd8] sm:$0xff] %v2779
                  %v2781 = vld [vmem:[%s2723 + $0xe0] sm:$0xff]
                  %2782 = vst [vmem:[%s2724 + $0xe0] sm:$0xff] %v2781
                  %v2783 = vld [vmem:[%s2723 + $0xe8] sm:$0xff]
                  %2784 = vst [vmem:[%s2724 + $0xe8] sm:$0xff] %v2783
                  %v2785 = vld [vmem:[%s2723 + $0xf0] sm:$0xff]
                  %2786 = vst [vmem:[%s2724 + $0xf0] sm:$0xff] %v2785
                  %v2787 = vld [vmem:[%s2723 + $0xf8] sm:$0xff]
                  %2788 = vst [vmem:[%s2724 + $0xf8] sm:$0xff] %v2787
                  %v2789 = vld [vmem:[%s2723 + $0x40] sm:$0xff]
                  %2790 = vst [vmem:[%s2724 + $0x58] sm:$0xff] %v2789
                  %v2791 = vld [vmem:[%s2723 + $0x48] sm:$0xff]
                  %2792 = vst [vmem:[%s2724 + $0x60] sm:$0xff] %v2791
                  %v2793 = vld [vmem:[%s2723 + $0x50] sm:$0xff]
                  %2794 = vst [vmem:[%s2724 + $0x68] sm:$0xff] %v2793
                  %v2795 = vld [vmem:[%s2723 + $0x58] sm:$0xff]
                  %2796 = vst [vmem:[%s2724 + $0x70] sm:$0xff] %v2795
                  %v2797 = vld [vmem:[%s2723 + $0x60] sm:$0xff]
                  %2798 = vst [vmem:[%s2724 + $0x78] sm:$0xff] %v2797
                  %v2799 = vld [vmem:[%s2723 + $0x68] sm:$0xff]
                  %2800 = vst [vmem:[%s2724 + $0x80] sm:$0xff] %v2799
                  %v2801 = vld [vmem:[%s2723 + $0x70] sm:$0xff]
                  %2802 = vst [vmem:[%s2724 + $0x88] sm:$0xff] %v2801
                  %v2803 = vld [vmem:[%s2723 + $0x78] sm:$0xff]
                  %2804 = vst [vmem:[%s2724 + $0x90] sm:$0xff] %v2803
                  %v2805 = vld [vmem:[%s2723 + $0x80] sm:$0xff]
                  %2806 = vst [vmem:[%s2724 + $0x98] sm:$0xff] %v2805
                  %v2807 = vld [vmem:[%s2723 + $0x88] sm:$0xff]
                  %2808 = vst [vmem:[%s2724 + $0xa0] sm:$0xff] %v2807
                  %v2809 = vld [vmem:[%s2723 + $0x90] sm:$0xff]
                  %2810 = vst [vmem:[%s2724 + $0xa8] sm:$0xff] %v2809
                  %v2811 = vld [vmem:[%s2723 + $0x98] sm:$0xff]
                  %2812 = vst [vmem:[%s2724 + $0xb0] sm:$0xff] %v2811
                  %v2813 = vld [vmem:[%s2723 + $0xa0] sm:$0xff]
                  %2814 = vst [vmem:[%s2724 + $0xb8] sm:$0xff] %v2813
                  %v2815 = vld [vmem:[%s2723 + $0xa8] sm:$0xff]
                  %2816 = vst [vmem:[%s2724 + $0xc0] sm:$0xff] %v2815
                  %v2817 = vld [vmem:[%s2723 + $0xb0] sm:$0xff]
                  %2818 = vst [vmem:[%s2724 + $0xc8] sm:$0xff] %v2817
                  %v2819 = vld [vmem:[%s2723 + $0xb8] sm:$0xff]
                  %2820 = vst [vmem:[%s2724 + $0xd0] sm:$0xff] %v2819
                  %v2821 = vld [vmem:[%s2723 + $0xc0] sm:$0xff]
                  %2822 = vst [vmem:[%s2724 + $0xd8] sm:$0xff] %v2821
                  %v2823 = vld [vmem:[%s2723 + $0xc8] sm:$0xff]
                  %2824 = vst [vmem:[%s2724 + $0xe0] sm:$0xff] %v2823
                  %v2825 = vld [vmem:[%s2723 + $0xd0] sm:$0xff]
                  %2826 = vst [vmem:[%s2724 + $0xe8] sm:$0xff] %v2825
                  %v2827 = vld [vmem:[%s2723 + $0xd8] sm:$0xff]
                  %2828 = vst [vmem:[%s2724 + $0xf0] sm:$0xff] %v2827
                  %v2829 = vld [vmem:[%s2723 + $0xe0] sm:$0xff]
                  %2830 = vst [vmem:[%s2724 + $0xf8] sm:$0xff] %v2829
                  %v2831 = vld [vmem:[%s2723 + $0xe8] sm:$0xff]
                  %2832 = vst [vmem:[%s2724 + $0x100] sm:$0xff] %v2831
                  %v2833 = vld [vmem:[%s2723 + $0xf0] sm:$0xff]
                  %2834 = vst [vmem:[%s2724 + $0x108] sm:$0xff] %v2833
                  %v2835 = vld [vmem:[%s2723 + $0xf8] sm:$0xff]
                  %2836 = vst [vmem:[%s2724 + $0x110] sm:$0xff] %v2835
                  %v2837 = vld [vmem:[%s2723 + $0x100] sm:$0xff]
                  %2838 = vst [vmem:[%s2724 + $0x118] sm:$0xff] %v2837
                  %v2839 = vld [vmem:[%s2723 + $0x108] sm:$0xff]
                  %2840 = vst [vmem:[%s2724 + $0x120] sm:$0xff] %v2839
                  %v2841 = vld [vmem:[%s2723 + $0x110] sm:$0xff]
                  %2842 = vst [vmem:[%s2724 + $0x128] sm:$0xff] %v2841
                  %v2843 = vld [vmem:[%s2723 + $0x118] sm:$0xff]
                  %2844 = vst [vmem:[%s2724 + $0x130] sm:$0xff] %v2843
                  %v2845 = vld [vmem:[%s2723 + $0x120] sm:$0xff]
                  %2846 = vst [vmem:[%s2724 + $0x138] sm:$0xff] %v2845
                  %v2847 = vld [vmem:[%s2723 + $0x128] sm:$0xff]
                  %2848 = vst [vmem:[%s2724 + $0x140] sm:$0xff] %v2847
                  %v2849 = vld [vmem:[%s2723 + $0x130] sm:$0xff]
                  %2850 = vst [vmem:[%s2724 + $0x148] sm:$0xff] %v2849
                  %v2851 = vld [vmem:[%s2723 + $0x138] sm:$0xff]
                  %2852 = vst [vmem:[%s2724 + $0x150] sm:$0xff] %v2851
                  %s2853 = sadd.s32 1, %s2722
                  %p2854 = scmp.ge.s32.totalorder %s2853, %s2713
                  %s2855 = scalar_select %p2854, 0, %s2853
                  %s2856 = smul.u32 %s2855, 256
                  %s2857 = smul.u32 %s2855, 256
                  %s2858 = scalar_lea.vmem %s2671, %s2856 [#allocation3]
                  %s2859 = scalar_lea.vmem %s2682, %s2857
                $region130: #{cnn_forward.6} parent=124 // loop_footer
                  %s2719 = sadd.s32 %s2717, 1
                $region131: #{cnn_forward.6} parent=124 // loop_footer_branch
                  %2716 = sbr.rel target = $region127
                $region132: #{cnn_forward.6} parent=124 // loop_exit
                  _
                %s2860 = sshrl.u32 %s2712, 5
                %s2861 = sand.u32 %s2712, 31
                %s2862 = smul.u32 %s2860, 32
                %s2863 = smul.u32 128, %s2862
                %s2864 = sshra.s32 %s2863, 4
                %s2865 = scalar_lea.vmem %s2671, %s2864 [#allocation3]
                %s2866 = smul.u32 128, %s2862
                %s2867 = sshra.s32 %s2866, 4
                %s2868 = scalar_lea.vmem %s2682, %s2867
                // While loop
                $region133: #{cnn_forward.6} parent=124 // loop_pre_header
                  _
                $region134: #{cnn_forward.6} parent=124 // loop_header
                  %s2872 = sphi 0, %s2874
                  %p2873 = scmp.ge.s32.totalorder %s2872, %s2861
                  %s2877 = sphi 0, %s2886
                  %s2878 = sphi %s2865, %s2889
                  %s2879 = sphi %s2868, %s2890
                $region135: #{cnn_forward.6} parent=124 // loop_header_branch
                  %2876 = sbr.rel (%p2873) target = $region139
                $region136: #{cnn_forward.6} parent=124 // loop_body
                  %v2880 = vld [vmem:[%s2878] sm:$0xff]
                  %2881 = vst [vmem:[%s2879] sm:$0xff] %v2880
                  %v2882 = vld [vmem:[%s2878 + $0x40] sm:$0xff]
                  %2883 = vst [vmem:[%s2879 + $0x58] sm:$0xff] %v2882
                  %s2884 = sadd.s32 1, %s2877
                  %p2885 = scmp.ge.s32.totalorder %s2884, %s2861
                  %s2886 = scalar_select %p2885, 0, %s2884
                  %s2887 = smul.u32 %s2886, 8
                  %s2888 = smul.u32 %s2886, 8
                  %s2889 = scalar_lea.vmem %s2865, %s2887 [#allocation3]
                  %s2890 = scalar_lea.vmem %s2868, %s2888
                $region137: #{cnn_forward.6} parent=124 // loop_footer
                  %s2874 = sadd.s32 %s2872, 1
                $region138: #{cnn_forward.6} parent=124 // loop_footer_branch
                  %2871 = sbr.rel target = $region134
                $region139: #{cnn_forward.6} parent=124 // loop_exit
                  _
              $region125: #{cnn_forward.6} parent=109 // pred_fallthru
                _
              %p2891 = pneg %p2708
              // Predicated region
              $region140: #{cnn_forward.6} parent=109 // pred_check
                _
              $region141: #{cnn_forward.6} parent=109 // pred_check_branch
                %2893 = sbr.rel (%p2708) target = $region143
              $region142: #{cnn_forward.6} parent=109 // pred_region
                %s2894 = sand.u32 %s2683, 7
                %s2895 = ssub.s32 %s2683, %s2894
                %s2896 = scalar_lea.vmem %s2671, %s2895 [#allocation3]
                %s2897 = ssub.s32 %s2683, %s2894
                %s2898 = scalar_lea.vmem %s2682, %s2897
                %s2899 = sshrl.u32 %s2683, 3
                %s2900 = sshrl.u32 %s2899, 5
                // While loop
                $region144: #{cnn_forward.6} parent=142 // loop_pre_header
                  _
                $region145: #{cnn_forward.6} parent=142 // loop_header
                  %s2904 = sphi 0, %s2906
                  %p2905 = scmp.ge.s32.totalorder %s2904, %s2900
                  %s2909 = sphi 0, %s3042
                  %s2910 = sphi %s2671, %s3045
                  %s2911 = sphi %s2682, %s3046
                $region146: #{cnn_forward.6} parent=142 // loop_header_branch
                  %2908 = sbr.rel (%p2905) target = $region150
                $region147: #{cnn_forward.6} parent=142 // loop_body
                  %v2912 = vld [vmem:[%s2910] sm:$0xff]
                  %2913 = vst [vmem:[%s2911] sm:$0xff] %v2912
                  %v2914 = vld [vmem:[%s2910 + $0x8] sm:$0xff]
                  %2915 = vst [vmem:[%s2911 + $0x8] sm:$0xff] %v2914
                  %v2916 = vld [vmem:[%s2910 + $0x10] sm:$0xff]
                  %2917 = vst [vmem:[%s2911 + $0x10] sm:$0xff] %v2916
                  %v2918 = vld [vmem:[%s2910 + $0x18] sm:$0xff]
                  %2919 = vst [vmem:[%s2911 + $0x18] sm:$0xff] %v2918
                  %v2920 = vld [vmem:[%s2910 + $0x20] sm:$0xff]
                  %2921 = vst [vmem:[%s2911 + $0x20] sm:$0xff] %v2920
                  %v2922 = vld [vmem:[%s2910 + $0x28] sm:$0xff]
                  %2923 = vst [vmem:[%s2911 + $0x28] sm:$0xff] %v2922
                  %v2924 = vld [vmem:[%s2910 + $0x30] sm:$0xff]
                  %2925 = vst [vmem:[%s2911 + $0x30] sm:$0xff] %v2924
                  %v2926 = vld [vmem:[%s2910 + $0x38] sm:$0xff]
                  %2927 = vst [vmem:[%s2911 + $0x38] sm:$0xff] %v2926
                  %v2928 = vld [vmem:[%s2910 + $0x40] sm:$0xff]
                  %2929 = vst [vmem:[%s2911 + $0x40] sm:$0xff] %v2928
                  %v2930 = vld [vmem:[%s2910 + $0x48] sm:$0xff]
                  %2931 = vst [vmem:[%s2911 + $0x48] sm:$0xff] %v2930
                  %v2932 = vld [vmem:[%s2910 + $0x50] sm:$0xff]
                  %2933 = vst [vmem:[%s2911 + $0x50] sm:$0xff] %v2932
                  %v2934 = vld [vmem:[%s2910 + $0x58] sm:$0xff]
                  %2935 = vst [vmem:[%s2911 + $0x58] sm:$0xff] %v2934
                  %v2936 = vld [vmem:[%s2910 + $0x60] sm:$0xff]
                  %2937 = vst [vmem:[%s2911 + $0x60] sm:$0xff] %v2936
                  %v2938 = vld [vmem:[%s2910 + $0x68] sm:$0xff]
                  %2939 = vst [vmem:[%s2911 + $0x68] sm:$0xff] %v2938
                  %v2940 = vld [vmem:[%s2910 + $0x70] sm:$0xff]
                  %2941 = vst [vmem:[%s2911 + $0x70] sm:$0xff] %v2940
                  %v2942 = vld [vmem:[%s2910 + $0x78] sm:$0xff]
                  %2943 = vst [vmem:[%s2911 + $0x78] sm:$0xff] %v2942
                  %v2944 = vld [vmem:[%s2910 + $0x80] sm:$0xff]
                  %2945 = vst [vmem:[%s2911 + $0x80] sm:$0xff] %v2944
                  %v2946 = vld [vmem:[%s2910 + $0x88] sm:$0xff]
                  %2947 = vst [vmem:[%s2911 + $0x88] sm:$0xff] %v2946
                  %v2948 = vld [vmem:[%s2910 + $0x90] sm:$0xff]
                  %2949 = vst [vmem:[%s2911 + $0x90] sm:$0xff] %v2948
                  %v2950 = vld [vmem:[%s2910 + $0x98] sm:$0xff]
                  %2951 = vst [vmem:[%s2911 + $0x98] sm:$0xff] %v2950
                  %v2952 = vld [vmem:[%s2910 + $0xa0] sm:$0xff]
                  %2953 = vst [vmem:[%s2911 + $0xa0] sm:$0xff] %v2952
                  %v2954 = vld [vmem:[%s2910 + $0xa8] sm:$0xff]
                  %2955 = vst [vmem:[%s2911 + $0xa8] sm:$0xff] %v2954
                  %v2956 = vld [vmem:[%s2910 + $0xb0] sm:$0xff]
                  %2957 = vst [vmem:[%s2911 + $0xb0] sm:$0xff] %v2956
                  %v2958 = vld [vmem:[%s2910 + $0xb8] sm:$0xff]
                  %2959 = vst [vmem:[%s2911 + $0xb8] sm:$0xff] %v2958
                  %v2960 = vld [vmem:[%s2910 + $0xc0] sm:$0xff]
                  %2961 = vst [vmem:[%s2911 + $0xc0] sm:$0xff] %v2960
                  %v2962 = vld [vmem:[%s2910 + $0xc8] sm:$0xff]
                  %2963 = vst [vmem:[%s2911 + $0xc8] sm:$0xff] %v2962
                  %v2964 = vld [vmem:[%s2910 + $0xd0] sm:$0xff]
                  %2965 = vst [vmem:[%s2911 + $0xd0] sm:$0xff] %v2964
                  %v2966 = vld [vmem:[%s2910 + $0xd8] sm:$0xff]
                  %2967 = vst [vmem:[%s2911 + $0xd8] sm:$0xff] %v2966
                  %v2968 = vld [vmem:[%s2910 + $0xe0] sm:$0xff]
                  %2969 = vst [vmem:[%s2911 + $0xe0] sm:$0xff] %v2968
                  %v2970 = vld [vmem:[%s2910 + $0xe8] sm:$0xff]
                  %2971 = vst [vmem:[%s2911 + $0xe8] sm:$0xff] %v2970
                  %v2972 = vld [vmem:[%s2910 + $0xf0] sm:$0xff]
                  %2973 = vst [vmem:[%s2911 + $0xf0] sm:$0xff] %v2972
                  %v2974 = vld [vmem:[%s2910 + $0xf8] sm:$0xff]
                  %2975 = vst [vmem:[%s2911 + $0xf8] sm:$0xff] %v2974
                  %v2976 = vld [vmem:[%s2910 + $0x40] sm:$0xff]
                  %2977 = vst [vmem:[%s2911 + $0x58] sm:$0xff] %v2976
                  %v2978 = vld [vmem:[%s2910 + $0x48] sm:$0xff]
                  %2979 = vst [vmem:[%s2911 + $0x60] sm:$0xff] %v2978
                  %v2980 = vld [vmem:[%s2910 + $0x50] sm:$0xff]
                  %2981 = vst [vmem:[%s2911 + $0x68] sm:$0xff] %v2980
                  %v2982 = vld [vmem:[%s2910 + $0x58] sm:$0xff]
                  %2983 = vst [vmem:[%s2911 + $0x70] sm:$0xff] %v2982
                  %v2984 = vld [vmem:[%s2910 + $0x60] sm:$0xff]
                  %2985 = vst [vmem:[%s2911 + $0x78] sm:$0xff] %v2984
                  %v2986 = vld [vmem:[%s2910 + $0x68] sm:$0xff]
                  %2987 = vst [vmem:[%s2911 + $0x80] sm:$0xff] %v2986
                  %v2988 = vld [vmem:[%s2910 + $0x70] sm:$0xff]
                  %2989 = vst [vmem:[%s2911 + $0x88] sm:$0xff] %v2988
                  %v2990 = vld [vmem:[%s2910 + $0x78] sm:$0xff]
                  %2991 = vst [vmem:[%s2911 + $0x90] sm:$0xff] %v2990
                  %v2992 = vld [vmem:[%s2910 + $0x80] sm:$0xff]
                  %2993 = vst [vmem:[%s2911 + $0x98] sm:$0xff] %v2992
                  %v2994 = vld [vmem:[%s2910 + $0x88] sm:$0xff]
                  %2995 = vst [vmem:[%s2911 + $0xa0] sm:$0xff] %v2994
                  %v2996 = vld [vmem:[%s2910 + $0x90] sm:$0xff]
                  %2997 = vst [vmem:[%s2911 + $0xa8] sm:$0xff] %v2996
                  %v2998 = vld [vmem:[%s2910 + $0x98] sm:$0xff]
                  %2999 = vst [vmem:[%s2911 + $0xb0] sm:$0xff] %v2998
                  %v3000 = vld [vmem:[%s2910 + $0xa0] sm:$0xff]
                  %3001 = vst [vmem:[%s2911 + $0xb8] sm:$0xff] %v3000
                  %v3002 = vld [vmem:[%s2910 + $0xa8] sm:$0xff]
                  %3003 = vst [vmem:[%s2911 + $0xc0] sm:$0xff] %v3002
                  %v3004 = vld [vmem:[%s2910 + $0xb0] sm:$0xff]
                  %3005 = vst [vmem:[%s2911 + $0xc8] sm:$0xff] %v3004
                  %v3006 = vld [vmem:[%s2910 + $0xb8] sm:$0xff]
                  %3007 = vst [vmem:[%s2911 + $0xd0] sm:$0xff] %v3006
                  %v3008 = vld [vmem:[%s2910 + $0xc0] sm:$0xff]
                  %3009 = vst [vmem:[%s2911 + $0xd8] sm:$0xff] %v3008
                  %v3010 = vld [vmem:[%s2910 + $0xc8] sm:$0xff]
                  %3011 = vst [vmem:[%s2911 + $0xe0] sm:$0xff] %v3010
                  %v3012 = vld [vmem:[%s2910 + $0xd0] sm:$0xff]
                  %3013 = vst [vmem:[%s2911 + $0xe8] sm:$0xff] %v3012
                  %v3014 = vld [vmem:[%s2910 + $0xd8] sm:$0xff]
                  %3015 = vst [vmem:[%s2911 + $0xf0] sm:$0xff] %v3014
                  %v3016 = vld [vmem:[%s2910 + $0xe0] sm:$0xff]
                  %3017 = vst [vmem:[%s2911 + $0xf8] sm:$0xff] %v3016
                  %v3018 = vld [vmem:[%s2910 + $0xe8] sm:$0xff]
                  %3019 = vst [vmem:[%s2911 + $0x100] sm:$0xff] %v3018
                  %v3020 = vld [vmem:[%s2910 + $0xf0] sm:$0xff]
                  %3021 = vst [vmem:[%s2911 + $0x108] sm:$0xff] %v3020
                  %v3022 = vld [vmem:[%s2910 + $0xf8] sm:$0xff]
                  %3023 = vst [vmem:[%s2911 + $0x110] sm:$0xff] %v3022
                  %v3024 = vld [vmem:[%s2910 + $0x100] sm:$0xff]
                  %3025 = vst [vmem:[%s2911 + $0x118] sm:$0xff] %v3024
                  %v3026 = vld [vmem:[%s2910 + $0x108] sm:$0xff]
                  %3027 = vst [vmem:[%s2911 + $0x120] sm:$0xff] %v3026
                  %v3028 = vld [vmem:[%s2910 + $0x110] sm:$0xff]
                  %3029 = vst [vmem:[%s2911 + $0x128] sm:$0xff] %v3028
                  %v3030 = vld [vmem:[%s2910 + $0x118] sm:$0xff]
                  %3031 = vst [vmem:[%s2911 + $0x130] sm:$0xff] %v3030
                  %v3032 = vld [vmem:[%s2910 + $0x120] sm:$0xff]
                  %3033 = vst [vmem:[%s2911 + $0x138] sm:$0xff] %v3032
                  %v3034 = vld [vmem:[%s2910 + $0x128] sm:$0xff]
                  %3035 = vst [vmem:[%s2911 + $0x140] sm:$0xff] %v3034
                  %v3036 = vld [vmem:[%s2910 + $0x130] sm:$0xff]
                  %3037 = vst [vmem:[%s2911 + $0x148] sm:$0xff] %v3036
                  %v3038 = vld [vmem:[%s2910 + $0x138] sm:$0xff]
                  %3039 = vst [vmem:[%s2911 + $0x150] sm:$0xff] %v3038
                  %s3040 = sadd.s32 1, %s2909
                  %p3041 = scmp.ge.s32.totalorder %s3040, %s2900
                  %s3042 = scalar_select %p3041, 0, %s3040
                  %s3043 = smul.u32 %s3042, 256
                  %s3044 = smul.u32 %s3042, 256
                  %s3045 = scalar_lea.vmem %s2671, %s3043 [#allocation3]
                  %s3046 = scalar_lea.vmem %s2682, %s3044
                $region148: #{cnn_forward.6} parent=142 // loop_footer
                  %s2906 = sadd.s32 %s2904, 1
                $region149: #{cnn_forward.6} parent=142 // loop_footer_branch
                  %2903 = sbr.rel target = $region145
                $region150: #{cnn_forward.6} parent=142 // loop_exit
                  _
                %s3047 = sshrl.u32 %s2899, 5
                %s3048 = sand.u32 %s2899, 31
                %s3049 = smul.u32 %s3047, 32
                %s3050 = smul.u32 128, %s3049
                %s3051 = sshra.s32 %s3050, 4
                %s3052 = scalar_lea.vmem %s2671, %s3051 [#allocation3]
                %s3053 = smul.u32 128, %s3049
                %s3054 = sshra.s32 %s3053, 4
                %s3055 = scalar_lea.vmem %s2682, %s3054
                // While loop
                $region151: #{cnn_forward.6} parent=142 // loop_pre_header
                  _
                $region152: #{cnn_forward.6} parent=142 // loop_header
                  %s3059 = sphi 0, %s3061
                  %p3060 = scmp.ge.s32.totalorder %s3059, %s3048
                  %s3064 = sphi 0, %s3073
                  %s3065 = sphi %s3052, %s3076
                  %s3066 = sphi %s3055, %s3077
                $region153: #{cnn_forward.6} parent=142 // loop_header_branch
                  %3063 = sbr.rel (%p3060) target = $region157
                $region154: #{cnn_forward.6} parent=142 // loop_body
                  %v3067 = vld [vmem:[%s3065] sm:$0xff]
                  %3068 = vst [vmem:[%s3066] sm:$0xff] %v3067
                  %v3069 = vld [vmem:[%s3065 + $0x40] sm:$0xff]
                  %3070 = vst [vmem:[%s3066 + $0x58] sm:$0xff] %v3069
                  %s3071 = sadd.s32 1, %s3064
                  %p3072 = scmp.ge.s32.totalorder %s3071, %s3048
                  %s3073 = scalar_select %p3072, 0, %s3071
                  %s3074 = smul.u32 %s3073, 8
                  %s3075 = smul.u32 %s3073, 8
                  %s3076 = scalar_lea.vmem %s3052, %s3074 [#allocation3]
                  %s3077 = scalar_lea.vmem %s3055, %s3075
                $region155: #{cnn_forward.6} parent=142 // loop_footer
                  %s3061 = sadd.s32 %s3059, 1
                $region156: #{cnn_forward.6} parent=142 // loop_footer_branch
                  %3058 = sbr.rel target = $region152
                $region157: #{cnn_forward.6} parent=142 // loop_exit
                  _
                %s3078 = sshllo.u32 0, %s2894
                loop: start=0, step=1, limit=1
                $region158: #{cnn_forward.6} parent=142 // loop_pre_header
                  _
                $region159: #{cnn_forward.6} parent=142 // loop_header
                  %s3080 = sphi 0, %s3084
                  %p3081 = scmp.ge.s32.totalorder %s3080, 1
                  %s3085 = sphi %s2896, %s2896
                  %s3086 = sphi %s2898, %s2898
                $region160: #{cnn_forward.6} parent=142 // loop_header_branch
                  %3083 = sbr.rel (%p3081) target = $region164
                $region161: #{cnn_forward.6} parent=142 // loop_body
                  %v3087 = vld [vmem:[%s3085] sm:%s3078]
                  %3088 = vst [vmem:[%s3086] sm:%s3078] %v3087
                  %v3089 = vld [vmem:[%s3085 + $0x40] sm:%s3078]
                  %3090 = vst [vmem:[%s3086 + $0x58] sm:%s3078] %v3089
                $region162: #{cnn_forward.6} parent=142 // loop_footer
                  %s3084 = sadd.s32 1, %s3080
                $region163: #{cnn_forward.6} parent=142 // loop_footer_branch
                  %3079 = sbr.rel target = $region159
                $region164: #{cnn_forward.6} parent=142 // loop_exit
                  _
              $region143: #{cnn_forward.6} parent=109 // pred_fallthru
                _
            $region110: #{cnn_forward.6} parent=105 // pred_fallthru
              _
            // Predicated region
            $region111: #{cnn_forward.6} parent=105 // pred_check
              %p2691 = pneg %p2687
            $region112: #{cnn_forward.6} parent=105 // pred_check_branch
              %2693 = sbr.rel (%p2691) target = $region114
            $region113: #{cnn_forward.6} parent=105 // pred_region
              %s2694 = sshllo.u32 0, %s2683
              loop: start=0, step=1, limit=1
              $region115: #{cnn_forward.6} parent=113 // loop_pre_header
                _
              $region116: #{cnn_forward.6} parent=113 // loop_header
                %s2696 = sphi 0, %s2700
                %p2697 = scmp.ge.s32.totalorder %s2696, 1
                %s2701 = sphi %s2671, %s2671
                %s2702 = sphi %s2682, %s2682
              $region117: #{cnn_forward.6} parent=113 // loop_header_branch
                %2699 = sbr.rel (%p2697) target = $region121
              $region118: #{cnn_forward.6} parent=113 // loop_body
                %v2703 = vld [vmem:[%s2701] sm:%s2694]
                %2704 = vst [vmem:[%s2702] sm:%s2694] %v2703
                %v2705 = vld [vmem:[%s2701 + $0x40] sm:%s2694]
                %2706 = vst [vmem:[%s2702 + $0x58] sm:%s2694] %v2705
              $region119: #{cnn_forward.6} parent=113 // loop_footer
                %s2700 = sadd.s32 1, %s2696
              $region120: #{cnn_forward.6} parent=113 // loop_footer_branch
                %2695 = sbr.rel target = $region116
              $region121: #{cnn_forward.6} parent=113 // loop_exit
                _
            $region114: #{cnn_forward.6} parent=105 // pred_fallthru
              _
          $region106: #{cnn_forward.6} parent=101 // pred_fallthru
            _
          %3091 = vnop
        $region102: #{cnn_forward.6} parent=93 // pred_fallthru
          _
      $region94: #{cnn_forward.6} parent=5 // pred_fallthru
        _
      %p3092 = scmp.le.s32.totalorder 2, %s9
      // Predicated region
      $region165: #{cnn_forward.6} parent=5 // pred_check
        %p3093 = pneg %p3092
      $region166: #{cnn_forward.6} parent=5 // pred_check_branch
        %3095 = sbr.rel (%p3093) target = $region168
      $region167: #{cnn_forward.6} parent=5 // pred_region
        %s3096 = ssub.s32 %s9, 2
        // Predicated region
        $region169: #{cnn_forward.6} parent=167 // pred_check
          %p3097 = pneg %p106
        $region170: #{cnn_forward.6} parent=167 // pred_check_branch
          %3099 = sbr.rel (%p3097) target = $region172
        $region171: #{cnn_forward.6} parent=167 // pred_region
          %s3100 = sand.u32 %s91, 1
          %s3101 = sand.u32 %s91, 1
          %s3102 = smul.addr %s3101, 128
          %s3103 = scalar_lea.vmem [#allocation3], %s3102
        $region172: #{cnn_forward.6} parent=167 // pred_fallthru
          _
      $region168: #{cnn_forward.6} parent=5 // pred_fallthru
        _
    $region6: #{cnn_forward.6} parent=1 // loop_footer
      %s13 = sadd.s32 1, %s9
    $region7: #{cnn_forward.6} parent=1 // loop_footer_branch
      %8 = sbr.rel target = $region3
    $region8: #{cnn_forward.6} parent=1 // loop_exit
      _

// kernel: cnn_forward.7
$region0: #{cnn_forward.7}
  #allocation0 [shape = 'u32[]', space=smem, size = 0x4, offset = 0x4, fixed_abs, tag = 'smem constant byte address 0x4 - core index']
  #allocation1 [shape = 'u32[144,128]{1,0:T(1,128)}', space=vmem, size = 0x12000, scoped, tag = 'internal scratch']
  %s0 = inlined_call_operand.vmem [shape: bf16[4,144,288], index: 0, kind: input, shape index: {}]
  %s1 = inlined_call_operand.vmem [shape: bf16[32,144], index: 1, kind: input, shape index: {}]
  %s2 = inlined_call_operand.vmem [shape: f32[32,1], index: 2, kind: input, shape index: {}]
  %s3 = inlined_call_operand.vmem [shape: f32[32,288], index: 3, kind: output, shape index: {}]
  %s4 = sld [smem:[#allocation0]]
  $region22: #{cnn_forward.7} parent=0
    _
  %s6 = ssub.s32 1, %s4
  %s7 = scalar_select 0, %s6, %s4
  // Predicated region
  $region2: #{cnn_forward.7} parent=0 // pred_check
    _
  $region3: #{cnn_forward.7} parent=0 // pred_check_branch
    %9 = sbr.rel (0) target = $region5
  $region4: #{cnn_forward.7} parent=0 // pred_region
    _
  $region5: #{cnn_forward.7} parent=0 // pred_fallthru
    _
  // Predicated region
  $region6: #{cnn_forward.7} parent=0 // pred_check
    _
  $region7: #{cnn_forward.7} parent=0 // pred_check_branch
    %11 = sbr.rel (0) target = $region9
  $region8: #{cnn_forward.7} parent=0 // pred_region
    _
  $region9: #{cnn_forward.7} parent=0 // pred_fallthru
    _
  // Predicated region
  $region10: #{cnn_forward.7} parent=0 // pred_check
    _
  $region11: #{cnn_forward.7} parent=0 // pred_check_branch
    %13 = sbr.rel (0) target = $region13
  $region12: #{cnn_forward.7} parent=0 // pred_region
    _
  $region13: #{cnn_forward.7} parent=0 // pred_fallthru
    _
  %v15 = vld [vmem:[%s1] sm:$0xff]
  %v16 = vld [vmem:[%s1 + $0x8] sm:$0xff]
  %v17 = vld [vmem:[%s1 + $0x10] sm:$0xff]
  %v18 = vld [vmem:[%s1 + $0x18] sm:$0xff]
  %v19 = vld [vmem:[%s0] sm:$0xff]
  %v20 = vld [vmem:[%s0 + $0x8] sm:$0xf]
  %v21 = vld [vmem:[%s0 + $0xc] sm:$0xff]
  %v22 = vld [vmem:[%s0 + $0x14] sm:$0xf]
  %v23 = vld [vmem:[%s0 + $0x18] sm:$0xff]
  %v24 = vld [vmem:[%s0 + $0x20] sm:$0xf]
  %v25 = vld [vmem:[%s0 + $0x24] sm:$0xff]
  %v26 = vld [vmem:[%s0 + $0x2c] sm:$0xf]
  %v27 = vld [vmem:[%s0 + $0x30] sm:$0xff]
  %v28 = vld [vmem:[%s0 + $0x38] sm:$0xf]
  %v29 = vld [vmem:[%s0 + $0x3c] sm:$0xff]
  %v30 = vld [vmem:[%s0 + $0x44] sm:$0xf]
  %v31 = vld [vmem:[%s0 + $0x48] sm:$0xff]
  %v32 = vld [vmem:[%s0 + $0x50] sm:$0xf]
  %v33 = vld [vmem:[%s0 + $0x54] sm:$0xff]
  %v34 = vld [vmem:[%s0 + $0x5c] sm:$0xf]
  %v35 = vld [vmem:[%s0 + $0x60] sm:$0xff]
  %v36 = vld [vmem:[%s0 + $0x68] sm:$0xf]
  %v37 = vld [vmem:[%s0 + $0x6c] sm:$0xff]
  %v38 = vld [vmem:[%s0 + $0x74] sm:$0xf]
  %v39 = vld [vmem:[%s0 + $0x78] sm:$0xff]
  %v40 = vld [vmem:[%s0 + $0x80] sm:$0xf]
  %v41 = vld [vmem:[%s0 + $0x84] sm:$0xff]
  %v42 = vld [vmem:[%s0 + $0x8c] sm:$0xf]
  %v43 = vld [vmem:[%s0 + $0x90] sm:$0xff]
  %v44 = vld [vmem:[%s0 + $0x98] sm:$0xf]
  %v45 = vld [vmem:[%s0 + $0x9c] sm:$0xff]
  %v46 = vld [vmem:[%s0 + $0xa4] sm:$0xf]
  %v47 = vld [vmem:[%s0 + $0xa8] sm:$0xff]
  %v48 = vld [vmem:[%s0 + $0xb0] sm:$0xf]
  %v49 = vld [vmem:[%s0 + $0xb4] sm:$0xff]
  %v50 = vld [vmem:[%s0 + $0xbc] sm:$0xf]
  %v51 = vld [vmem:[%s0 + $0xc0] sm:$0xff]
  %v52 = vld [vmem:[%s0 + $0xc8] sm:$0xf]
  %v53 = vld [vmem:[%s0 + $0xcc] sm:$0xff]
  %v54 = vld [vmem:[%s0 + $0xd4] sm:$0xf]
  %v59 = vunpack.c.l.b16 %v15
  %v60 = vunpack.c.h.b16 %v15
  %v61 = vunpack.c.l.b16 %v16
  %v62 = vunpack.c.h.b16 %v16
  %v63 = vunpack.c.l.b16 %v17
  %v64 = vunpack.c.h.b16 %v17
  %v65 = vunpack.c.l.b16 %v18
  %v66 = vunpack.c.h.b16 %v18
  %v67 = vpack.c.b16 %v61, %v59
  %v68 = vpack.c.b16 %v62, %v60
  %v69 = vpack.c.b16 %v65, %v63
  %v70 = vpack.c.b16 %v66, %v64
  %v109 = vunpack.c.l.b16 %v19
  %v110 = vunpack.c.h.b16 %v19
  %v111 = vunpack.c.l.b16 %v20
  %v112 = vunpack.c.l.b16 %v21
  %v113 = vunpack.c.h.b16 %v21
  %v114 = vunpack.c.l.b16 %v22
  %v115 = vunpack.c.l.b16 %v23
  %v116 = vunpack.c.h.b16 %v23
  %v117 = vunpack.c.l.b16 %v24
  %v118 = vunpack.c.l.b16 %v25
  %v119 = vunpack.c.h.b16 %v25
  %v120 = vunpack.c.l.b16 %v26
  %v121 = vunpack.c.l.b16 %v27
  %v122 = vunpack.c.h.b16 %v27
  %v123 = vunpack.c.l.b16 %v28
  %v124 = vunpack.c.l.b16 %v29
  %v125 = vunpack.c.h.b16 %v29
  %v126 = vunpack.c.l.b16 %v30
  %v127 = vunpack.c.l.b16 %v31
  %v128 = vunpack.c.h.b16 %v31
  %v129 = vunpack.c.l.b16 %v32
  %v130 = vunpack.c.l.b16 %v33
  %v131 = vunpack.c.h.b16 %v33
  %v132 = vunpack.c.l.b16 %v34
  %v133 = vunpack.c.l.b16 %v35
  %v134 = vunpack.c.h.b16 %v35
  %v135 = vunpack.c.l.b16 %v36
  %v136 = vunpack.c.l.b16 %v37
  %v137 = vunpack.c.h.b16 %v37
  %v138 = vunpack.c.l.b16 %v38
  %v139 = vunpack.c.l.b16 %v39
  %v140 = vunpack.c.h.b16 %v39
  %v141 = vunpack.c.l.b16 %v40
  %v142 = vunpack.c.l.b16 %v41
  %v143 = vunpack.c.h.b16 %v41
  %v144 = vunpack.c.l.b16 %v42
  %v145 = vunpack.c.l.b16 %v43
  %v146 = vunpack.c.h.b16 %v43
  %v147 = vunpack.c.l.b16 %v44
  %v148 = vunpack.c.l.b16 %v45
  %v149 = vunpack.c.h.b16 %v45
  %v150 = vunpack.c.l.b16 %v46
  %v151 = vunpack.c.l.b16 %v47
  %v152 = vunpack.c.h.b16 %v47
  %v153 = vunpack.c.l.b16 %v48
  %v154 = vunpack.c.l.b16 %v49
  %v155 = vunpack.c.h.b16 %v49
  %v156 = vunpack.c.l.b16 %v50
  %v157 = vunpack.c.l.b16 %v51
  %v158 = vunpack.c.h.b16 %v51
  %v159 = vunpack.c.l.b16 %v52
  %v160 = vunpack.c.l.b16 %v53
  %v161 = vunpack.c.h.b16 %v53
  %v162 = vunpack.c.l.b16 %v54
  %v163 = vpack.c.b16 %v112, %v109
  %v164 = vpack.c.b16 %v113, %v110
  %v165 = vpack.c.b16 %v114, %v111
  %v166 = vpack.c.b16 %v118, %v115
  %v167 = vpack.c.b16 %v119, %v116
  %v168 = vpack.c.b16 %v120, %v117
  %v169 = vpack.c.b16 %v124, %v121
  %v170 = vpack.c.b16 %v125, %v122
  %v171 = vpack.c.b16 %v126, %v123
  %v172 = vpack.c.b16 %v130, %v127
  %v173 = vpack.c.b16 %v131, %v128
  %v174 = vpack.c.b16 %v132, %v129
  %v175 = vpack.c.b16 %v136, %v133
  %v176 = vpack.c.b16 %v137, %v134
  %v177 = vpack.c.b16 %v138, %v135
  %v178 = vpack.c.b16 %v142, %v139
  %v179 = vpack.c.b16 %v143, %v140
  %v180 = vpack.c.b16 %v144, %v141
  %v181 = vpack.c.b16 %v148, %v145
  %v182 = vpack.c.b16 %v149, %v146
  %v183 = vpack.c.b16 %v150, %v147
  %v184 = vpack.c.b16 %v154, %v151
  %v185 = vpack.c.b16 %v155, %v152
  %v186 = vpack.c.b16 %v156, %v153
  %v187 = vpack.c.b16 %v160, %v157
  %v188 = vpack.c.b16 %v161, %v158
  %v189 = vpack.c.b16 %v162, %v159
  %vm217 = vcmask 130048
  %v219 = vsel %vm217, %v68, 0
  %v222 = vsel %vm217, %v70, 0
  %224 = vmatprep.subr.bf16.mxu0 %v164
  %225 = vmatpush1.bf16.msra.mxu0 %v163
  %226 = vmatprep.subr.bf16.mxu0 %v167
  %227 = vmatpush1.bf16.msra.mxu0 %v166
  %228 = vmatprep.subr.bf16.mxu0 %v170
  %229 = vmatpush1.bf16.msra.mxu0 %v169
  %230 = vmatprep.subr.bf16.mxu0 %v173
  %231 = vmatpush1.bf16.msra.mxu0 %v172
  %232 = vmatprep.subr.bf16.mxu0 %v176
  %233 = vmatpush1.bf16.msra.mxu0 %v175
  %234 = vmatprep.subr.bf16.mxu0 %v179
  %235 = vmatpush1.bf16.msra.mxu0 %v178
  %236 = vmatprep.subr.bf16.mxu0 %v182
  %237 = vmatpush1.bf16.msra.mxu0 %v181
  %238 = vmatprep.subr.bf16.mxu0 %v185
  %239 = vmatpush1.bf16.msra.mxu0 %v184
  %240 = vmatprep.subr.bf16.mxu0 %v188
  %241 = vmatpush1.bf16.msra.mxu0 %v187
  %242 = vmatprep.subr.bf16.mxu0 0
  %243 = vmatpush1.bf16.msra.mxu0 0
  %244 = vmatprep.subr.bf16.mxu0 0
  %245 = vmatpush1.bf16.msra.mxu0 0
  %246 = vmatprep.subr.bf16.mxu0 0
  %247 = vmatpush1.bf16.msra.mxu0 0
  %248 = vmatprep.subr.bf16.mxu0 0
  %249 = vmatpush1.bf16.msra.mxu0 0
  %250 = vmatprep.subr.bf16.mxu0 0
  %251 = vmatpush1.bf16.msra.mxu0 0
  %252 = vmatprep.subr.bf16.mxu0 0
  %253 = vmatpush1.bf16.msra.mxu0 0
  %254 = vmatprep.subr.bf16.mxu0 0
  %255 = vmatpush1.bf16.msra.mxu0 0
  %256 = vmatprep.mubr.bf16.mxu0 %v219
  %257 = vmatmul.mubr.bf16.gmra.mrb[0].mxu0 %v67
  %v258 = vpop.f32.mrb[0].mxu0
  %v259 = vadd.f32 0.0, %v258
  %v260 = vpop.f32.mrb[0].mxu0
  %v261 = vadd.f32 0.0, %v260
  %v262 = vpop.f32.mrb[0].mxu0
  %v263 = vadd.f32 0.0, %v262
  %v264 = vpop.f32.mrb[0].mxu0
  %v265 = vadd.f32 0.0, %v264
  %266 = vmatprep.mubr.bf16.mxu0 %v222
  %267 = vmatmul.mubr.bf16.gmra.mrb[0].mxu0 %v69
  %v268 = vpop.f32.mrb[0].mxu0
  %v269 = vadd.f32 0.0, %v268
  %v270 = vpop.f32.mrb[0].mxu0
  %v271 = vadd.f32 0.0, %v270
  %v272 = vpop.f32.mrb[0].mxu0
  %v273 = vadd.f32 0.0, %v272
  %v274 = vpop.f32.mrb[0].mxu0
  %v275 = vadd.f32 0.0, %v274
  %276 = vdwg.mxu0
  %277 = vmatprep.subr.bf16.mxu0 0
  %278 = vmatpush1.bf16.msra.mxu0 %v165
  %279 = vmatprep.subr.bf16.mxu0 0
  %280 = vmatpush1.bf16.msra.mxu0 %v168
  %281 = vmatprep.subr.bf16.mxu0 0
  %282 = vmatpush1.bf16.msra.mxu0 %v171
  %283 = vmatprep.subr.bf16.mxu0 0
  %284 = vmatpush1.bf16.msra.mxu0 %v174
  %285 = vmatprep.subr.bf16.mxu0 0
  %286 = vmatpush1.bf16.msra.mxu0 %v177
  %287 = vmatprep.subr.bf16.mxu0 0
  %288 = vmatpush1.bf16.msra.mxu0 %v180
  %289 = vmatprep.subr.bf16.mxu0 0
  %290 = vmatpush1.bf16.msra.mxu0 %v183
  %291 = vmatprep.subr.bf16.mxu0 0
  %292 = vmatpush1.bf16.msra.mxu0 %v186
  %293 = vmatprep.subr.bf16.mxu0 0
  %294 = vmatpush1.bf16.msra.mxu0 %v189
  %295 = vmatprep.subr.bf16.mxu0 0
  %296 = vmatpush1.bf16.msra.mxu0 0
  %297 = vmatprep.subr.bf16.mxu0 0
  %298 = vmatpush1.bf16.msra.mxu0 0
  %299 = vmatprep.subr.bf16.mxu0 0
  %300 = vmatpush1.bf16.msra.mxu0 0
  %301 = vmatprep.subr.bf16.mxu0 0
  %302 = vmatpush1.bf16.msra.mxu0 0
  %303 = vmatprep.subr.bf16.mxu0 0
  %304 = vmatpush1.bf16.msra.mxu0 0
  %305 = vmatprep.subr.bf16.mxu0 0
  %306 = vmatpush1.bf16.msra.mxu0 0
  %307 = vmatprep.subr.bf16.mxu0 0
  %308 = vmatpush1.bf16.msra.mxu0 0
  %309 = vmatprep.mubr.bf16.mxu0 %v219
  %310 = vmatmul.mubr.bf16.gmra.mrb[0].mxu0 %v67
  %v311 = vpop.f32.mrb[0].mxu0
  %v312 = vadd.f32 0.0, %v311
  %v313 = vpop.f32.mrb[0].mxu0
  %v314 = vpop.f32.mrb[0].mxu0
  %v315 = vadd.f32 0.0, %v314
  %v316 = vpop.f32.mrb[0].mxu0
  %317 = vmatprep.mubr.bf16.mxu0 %v222
  %318 = vmatmul.mubr.bf16.gmra.mrb[0].mxu0 %v69
  %v319 = vpop.f32.mrb[0].mxu0
  %v320 = vadd.f32 0.0, %v319
  %v321 = vpop.f32.mrb[0].mxu0
  %v322 = vpop.f32.mrb[0].mxu0
  %v323 = vadd.f32 0.0, %v322
  %v324 = vpop.f32.mrb[0].mxu0
  %325 = vdwg.mxu0
  %s326 = scalar_lea.vmem %s0, 216
  %v327 = vld [vmem:[%s326] sm:$0xff]
  %v328 = vld [vmem:[%s326 + $0x8] sm:$0xf]
  %v329 = vld [vmem:[%s326 + $0xc] sm:$0xff]
  %v330 = vld [vmem:[%s326 + $0x14] sm:$0xf]
  %v331 = vld [vmem:[%s326 + $0x18] sm:$0xff]
  %v332 = vld [vmem:[%s326 + $0x20] sm:$0xf]
  %v333 = vld [vmem:[%s326 + $0x24] sm:$0xff]
  %v334 = vld [vmem:[%s326 + $0x2c] sm:$0xf]
  %v335 = vld [vmem:[%s326 + $0x30] sm:$0xff]
  %v336 = vld [vmem:[%s326 + $0x38] sm:$0xf]
  %v337 = vld [vmem:[%s326 + $0x3c] sm:$0xff]
  %v338 = vld [vmem:[%s326 + $0x44] sm:$0xf]
  %v339 = vld [vmem:[%s326 + $0x48] sm:$0xff]
  %v340 = vld [vmem:[%s326 + $0x50] sm:$0xf]
  %v341 = vld [vmem:[%s326 + $0x54] sm:$0xff]
  %v342 = vld [vmem:[%s326 + $0x5c] sm:$0xf]
  %v343 = vld [vmem:[%s326 + $0x60] sm:$0xff]
  %v344 = vld [vmem:[%s326 + $0x68] sm:$0xf]
  %v345 = vld [vmem:[%s326 + $0x6c] sm:$0xff]
  %v346 = vld [vmem:[%s326 + $0x74] sm:$0xf]
  %v347 = vld [vmem:[%s326 + $0x78] sm:$0xff]
  %v348 = vld [vmem:[%s326 + $0x80] sm:$0xf]
  %v349 = vld [vmem:[%s326 + $0x84] sm:$0xff]
  %v350 = vld [vmem:[%s326 + $0x8c] sm:$0xf]
  %v351 = vld [vmem:[%s326 + $0x90] sm:$0xff]
  %v352 = vld [vmem:[%s326 + $0x98] sm:$0xf]
  %v353 = vld [vmem:[%s326 + $0x9c] sm:$0xff]
  %v354 = vld [vmem:[%s326 + $0xa4] sm:$0xf]
  %v355 = vld [vmem:[%s326 + $0xa8] sm:$0xff]
  %v356 = vld [vmem:[%s326 + $0xb0] sm:$0xf]
  %v357 = vld [vmem:[%s326 + $0xb4] sm:$0xff]
  %v358 = vld [vmem:[%s326 + $0xbc] sm:$0xf]
  %v359 = vld [vmem:[%s326 + $0xc0] sm:$0xff]
  %v360 = vld [vmem:[%s326 + $0xc8] sm:$0xf]
  %v361 = vld [vmem:[%s326 + $0xcc] sm:$0xff]
  %v362 = vld [vmem:[%s326 + $0xd4] sm:$0xf]
  %v399 = vunpack.c.l.b16 %v327
  %v400 = vunpack.c.h.b16 %v327
  %v401 = vunpack.c.l.b16 %v328
  %v402 = vunpack.c.l.b16 %v329
  %v403 = vunpack.c.h.b16 %v329
  %v404 = vunpack.c.l.b16 %v330
  %v405 = vunpack.c.l.b16 %v331
  %v406 = vunpack.c.h.b16 %v331
  %v407 = vunpack.c.l.b16 %v332
  %v408 = vunpack.c.l.b16 %v333
  %v409 = vunpack.c.h.b16 %v333
  %v410 = vunpack.c.l.b16 %v334
  %v411 = vunpack.c.l.b16 %v335
  %v412 = vunpack.c.h.b16 %v335
  %v413 = vunpack.c.l.b16 %v336
  %v414 = vunpack.c.l.b16 %v337
  %v415 = vunpack.c.h.b16 %v337
  %v416 = vunpack.c.l.b16 %v338
  %v417 = vunpack.c.l.b16 %v339
  %v418 = vunpack.c.h.b16 %v339
  %v419 = vunpack.c.l.b16 %v340
  %v420 = vunpack.c.l.b16 %v341
  %v421 = vunpack.c.h.b16 %v341
  %v422 = vunpack.c.l.b16 %v342
  %v423 = vunpack.c.l.b16 %v343
  %v424 = vunpack.c.h.b16 %v343
  %v425 = vunpack.c.l.b16 %v344
  %v426 = vunpack.c.l.b16 %v345
  %v427 = vunpack.c.h.b16 %v345
  %v428 = vunpack.c.l.b16 %v346
  %v429 = vunpack.c.l.b16 %v347
  %v430 = vunpack.c.h.b16 %v347
  %v431 = vunpack.c.l.b16 %v348
  %v432 = vunpack.c.l.b16 %v349
  %v433 = vunpack.c.h.b16 %v349
  %v434 = vunpack.c.l.b16 %v350
  %v435 = vunpack.c.l.b16 %v351
  %v436 = vunpack.c.h.b16 %v351
  %v437 = vunpack.c.l.b16 %v352
  %v438 = vunpack.c.l.b16 %v353
  %v439 = vunpack.c.h.b16 %v353
  %v440 = vunpack.c.l.b16 %v354
  %v441 = vunpack.c.l.b16 %v355
  %v442 = vunpack.c.h.b16 %v355
  %v443 = vunpack.c.l.b16 %v356
  %v444 = vunpack.c.l.b16 %v357
  %v445 = vunpack.c.h.b16 %v357
  %v446 = vunpack.c.l.b16 %v358
  %v447 = vunpack.c.l.b16 %v359
  %v448 = vunpack.c.h.b16 %v359
  %v449 = vunpack.c.l.b16 %v360
  %v450 = vunpack.c.l.b16 %v361
  %v451 = vunpack.c.h.b16 %v361
  %v452 = vunpack.c.l.b16 %v362
  %v453 = vpack.c.b16 %v402, %v399
  %v454 = vpack.c.b16 %v403, %v400
  %v455 = vpack.c.b16 %v404, %v401
  %v456 = vpack.c.b16 %v408, %v405
  %v457 = vpack.c.b16 %v409, %v406
  %v458 = vpack.c.b16 %v410, %v407
  %v459 = vpack.c.b16 %v414, %v411
  %v460 = vpack.c.b16 %v415, %v412
  %v461 = vpack.c.b16 %v416, %v413
  %v462 = vpack.c.b16 %v420, %v417
  %v463 = vpack.c.b16 %v421, %v418
  %v464 = vpack.c.b16 %v422, %v419
  %v465 = vpack.c.b16 %v426, %v423
  %v466 = vpack.c.b16 %v427, %v424
  %v467 = vpack.c.b16 %v428, %v425
  %v468 = vpack.c.b16 %v432, %v429
  %v469 = vpack.c.b16 %v433, %v430
  %v470 = vpack.c.b16 %v434, %v431
  %v471 = vpack.c.b16 %v438, %v435
  %v472 = vpack.c.b16 %v439, %v436
  %v473 = vpack.c.b16 %v440, %v437
  %v474 = vpack.c.b16 %v444, %v441
  %v475 = vpack.c.b16 %v445, %v442
  %v476 = vpack.c.b16 %v446, %v443
  %v477 = vpack.c.b16 %v450, %v447
  %v478 = vpack.c.b16 %v451, %v448
  %v479 = vpack.c.b16 %v452, %v449
  %507 = vmatprep.subr.bf16.mxu0 %v454
  %508 = vmatpush1.bf16.msra.mxu0 %v453
  %509 = vmatprep.subr.bf16.mxu0 %v457
  %510 = vmatpush1.bf16.msra.mxu0 %v456
  %511 = vmatprep.subr.bf16.mxu0 %v460
  %512 = vmatpush1.bf16.msra.mxu0 %v459
  %513 = vmatprep.subr.bf16.mxu0 %v463
  %514 = vmatpush1.bf16.msra.mxu0 %v462
  %515 = vmatprep.subr.bf16.mxu0 %v466
  %516 = vmatpush1.bf16.msra.mxu0 %v465
  %517 = vmatprep.subr.bf16.mxu0 %v469
  %518 = vmatpush1.bf16.msra.mxu0 %v468
  %519 = vmatprep.subr.bf16.mxu0 %v472
  %520 = vmatpush1.bf16.msra.mxu0 %v471
  %521 = vmatprep.subr.bf16.mxu0 %v475
  %522 = vmatpush1.bf16.msra.mxu0 %v474
  %523 = vmatprep.subr.bf16.mxu0 %v478
  %524 = vmatpush1.bf16.msra.mxu0 %v477
  %525 = vmatprep.subr.bf16.mxu0 0
  %526 = vmatpush1.bf16.msra.mxu0 0
  %527 = vmatprep.subr.bf16.mxu0 0
  %528 = vmatpush1.bf16.msra.mxu0 0
  %529 = vmatprep.subr.bf16.mxu0 0
  %530 = vmatpush1.bf16.msra.mxu0 0
  %531 = vmatprep.subr.bf16.mxu0 0
  %532 = vmatpush1.bf16.msra.mxu0 0
  %533 = vmatprep.subr.bf16.mxu0 0
  %534 = vmatpush1.bf16.msra.mxu0 0
  %535 = vmatprep.subr.bf16.mxu0 0
  %536 = vmatpush1.bf16.msra.mxu0 0
  %537 = vmatprep.subr.bf16.mxu0 0
  %538 = vmatpush1.bf16.msra.mxu0 0
  %539 = vmatprep.mubr.bf16.mxu0 %v219
  %540 = vmatmul.mubr.bf16.gmra.mrb[0].mxu0 %v67
  %v541 = vpop.f32.mrb[0].mxu0
  %v542 = vadd.f32 0.0, %v541
  %v543 = vpop.f32.mrb[0].mxu0
  %v544 = vadd.f32 0.0, %v543
  %v545 = vpop.f32.mrb[0].mxu0
  %v546 = vadd.f32 0.0, %v545
  %v547 = vpop.f32.mrb[0].mxu0
  %v548 = vadd.f32 0.0, %v547
  %549 = vmatprep.mubr.bf16.mxu0 %v222
  %550 = vmatmul.mubr.bf16.gmra.mrb[0].mxu0 %v69
  %v551 = vpop.f32.mrb[0].mxu0
  %v552 = vadd.f32 0.0, %v551
  %v553 = vpop.f32.mrb[0].mxu0
  %v554 = vadd.f32 0.0, %v553
  %v555 = vpop.f32.mrb[0].mxu0
  %v556 = vadd.f32 0.0, %v555
  %v557 = vpop.f32.mrb[0].mxu0
  %v558 = vadd.f32 0.0, %v557
  %559 = vdwg.mxu0
  %560 = vmatprep.subr.bf16.mxu0 0
  %561 = vmatpush1.bf16.msra.mxu0 %v455
  %562 = vmatprep.subr.bf16.mxu0 0
  %563 = vmatpush1.bf16.msra.mxu0 %v458
  %564 = vmatprep.subr.bf16.mxu0 0
  %565 = vmatpush1.bf16.msra.mxu0 %v461
  %566 = vmatprep.subr.bf16.mxu0 0
  %567 = vmatpush1.bf16.msra.mxu0 %v464
  %568 = vmatprep.subr.bf16.mxu0 0
  %569 = vmatpush1.bf16.msra.mxu0 %v467
  %570 = vmatprep.subr.bf16.mxu0 0
  %571 = vmatpush1.bf16.msra.mxu0 %v470
  %572 = vmatprep.subr.bf16.mxu0 0
  %573 = vmatpush1.bf16.msra.mxu0 %v473
  %574 = vmatprep.subr.bf16.mxu0 0
  %575 = vmatpush1.bf16.msra.mxu0 %v476
  %576 = vmatprep.subr.bf16.mxu0 0
  %577 = vmatpush1.bf16.msra.mxu0 %v479
  %578 = vmatprep.subr.bf16.mxu0 0
  %579 = vmatpush1.bf16.msra.mxu0 0
  %580 = vmatprep.subr.bf16.mxu0 0
  %581 = vmatpush1.bf16.msra.mxu0 0
  %582 = vmatprep.subr.bf16.mxu0 0
  %583 = vmatpush1.bf16.msra.mxu0 0
  %584 = vmatprep.subr.bf16.mxu0 0
  %585 = vmatpush1.bf16.msra.mxu0 0
  %586 = vmatprep.subr.bf16.mxu0 0
  %587 = vmatpush1.bf16.msra.mxu0 0
  %588 = vmatprep.subr.bf16.mxu0 0
  %589 = vmatpush1.bf16.msra.mxu0 0
  %590 = vmatprep.subr.bf16.mxu0 0
  %591 = vmatpush1.bf16.msra.mxu0 0
  %592 = vmatprep.mubr.bf16.mxu0 %v219
  %593 = vmatmul.mubr.bf16.gmra.mrb[0].mxu0 %v67
  %v594 = vpop.f32.mrb[0].mxu0
  %v595 = vadd.f32 0.0, %v594
  %v596 = vpop.f32.mrb[0].mxu0
  %v597 = vpop.f32.mrb[0].mxu0
  %v598 = vadd.f32 0.0, %v597
  %v599 = vpop.f32.mrb[0].mxu0
  %600 = vmatprep.mubr.bf16.mxu0 %v222
  %601 = vmatmul.mubr.bf16.gmra.mrb[0].mxu0 %v69
  %v602 = vpop.f32.mrb[0].mxu0
  %v603 = vadd.f32 0.0, %v602
  %v604 = vpop.f32.mrb[0].mxu0
  %v605 = vpop.f32.mrb[0].mxu0
  %v606 = vadd.f32 0.0, %v605
  %v607 = vpop.f32.mrb[0].mxu0
  %608 = vdwg.mxu0
  %v609 = vmax.f32 %v259, %v542
  %v610 = vmax.f32 %v261, %v544
  %v611 = vmax.f32 %v312, %v595
  %v612 = vmax.f32 %v263, %v546
  %v613 = vmax.f32 %v265, %v548
  %v614 = vmax.f32 %v315, %v598
  %v615 = vmax.f32 %v269, %v552
  %v616 = vmax.f32 %v271, %v554
  %v617 = vmax.f32 %v320, %v603
  %v618 = vmax.f32 %v273, %v556
  %v619 = vmax.f32 %v275, %v558
  %v620 = vmax.f32 %v323, %v606
  %s621 = scalar_lea.vmem %s0, 432
  %v622 = vld [vmem:[%s621] sm:$0xff]
  %v623 = vld [vmem:[%s621 + $0x8] sm:$0xf]
  %v624 = vld [vmem:[%s621 + $0xc] sm:$0xff]
  %v625 = vld [vmem:[%s621 + $0x14] sm:$0xf]
  %v626 = vld [vmem:[%s621 + $0x18] sm:$0xff]
  %v627 = vld [vmem:[%s621 + $0x20] sm:$0xf]
  %v628 = vld [vmem:[%s621 + $0x24] sm:$0xff]
  %v629 = vld [vmem:[%s621 + $0x2c] sm:$0xf]
  %v630 = vld [vmem:[%s621 + $0x30] sm:$0xff]
  %v631 = vld [vmem:[%s621 + $0x38] sm:$0xf]
  %v632 = vld [vmem:[%s621 + $0x3c] sm:$0xff]
  %v633 = vld [vmem:[%s621 + $0x44] sm:$0xf]
  %v634 = vld [vmem:[%s621 + $0x48] sm:$0xff]
  %v635 = vld [vmem:[%s621 + $0x50] sm:$0xf]
  %v636 = vld [vmem:[%s621 + $0x54] sm:$0xff]
  %v637 = vld [vmem:[%s621 + $0x5c] sm:$0xf]
  %v638 = vld [vmem:[%s621 + $0x60] sm:$0xff]
  %v639 = vld [vmem:[%s621 + $0x68] sm:$0xf]
  %v640 = vld [vmem:[%s621 + $0x6c] sm:$0xff]
  %v641 = vld [vmem:[%s621 + $0x74] sm:$0xf]
  %v642 = vld [vmem:[%s621 + $0x78] sm:$0xff]
  %v643 = vld [vmem:[%s621 + $0x80] sm:$0xf]
  %v644 = vld [vmem:[%s621 + $0x84] sm:$0xff]
  %v645 = vld [vmem:[%s621 + $0x8c] sm:$0xf]
  %v646 = vld [vmem:[%s621 + $0x90] sm:$0xff]
  %v647 = vld [vmem:[%s621 + $0x98] sm:$0xf]
  %v648 = vld [vmem:[%s621 + $0x9c] sm:$0xff]
  %v649 = vld [vmem:[%s621 + $0xa4] sm:$0xf]
  %v650 = vld [vmem:[%s621 + $0xa8] sm:$0xff]
  %v651 = vld [vmem:[%s621 + $0xb0] sm:$0xf]
  %v652 = vld [vmem:[%s621 + $0xb4] sm:$0xff]
  %v653 = vld [vmem:[%s621 + $0xbc] sm:$0xf]
  %v654 = vld [vmem:[%s621 + $0xc0] sm:$0xff]
  %v655 = vld [vmem:[%s621 + $0xc8] sm:$0xf]
  %v656 = vld [vmem:[%s621 + $0xcc] sm:$0xff]
  %v657 = vld [vmem:[%s621 + $0xd4] sm:$0xf]
  %v694 = vunpack.c.l.b16 %v622
  %v695 = vunpack.c.h.b16 %v622
  %v696 = vunpack.c.l.b16 %v623
  %v697 = vunpack.c.l.b16 %v624
  %v698 = vunpack.c.h.b16 %v624
  %v699 = vunpack.c.l.b16 %v625
  %v700 = vunpack.c.l.b16 %v626
  %v701 = vunpack.c.h.b16 %v626
  %v702 = vunpack.c.l.b16 %v627
  %v703 = vunpack.c.l.b16 %v628
  %v704 = vunpack.c.h.b16 %v628
  %v705 = vunpack.c.l.b16 %v629
  %v706 = vunpack.c.l.b16 %v630
  %v707 = vunpack.c.h.b16 %v630
  %v708 = vunpack.c.l.b16 %v631
  %v709 = vunpack.c.l.b16 %v632
  %v710 = vunpack.c.h.b16 %v632
  %v711 = vunpack.c.l.b16 %v633
  %v712 = vunpack.c.l.b16 %v634
  %v713 = vunpack.c.h.b16 %v634
  %v714 = vunpack.c.l.b16 %v635
  %v715 = vunpack.c.l.b16 %v636
  %v716 = vunpack.c.h.b16 %v636
  %v717 = vunpack.c.l.b16 %v637
  %v718 = vunpack.c.l.b16 %v638
  %v719 = vunpack.c.h.b16 %v638
  %v720 = vunpack.c.l.b16 %v639
  %v721 = vunpack.c.l.b16 %v640
  %v722 = vunpack.c.h.b16 %v640
  %v723 = vunpack.c.l.b16 %v641
  %v724 = vunpack.c.l.b16 %v642
  %v725 = vunpack.c.h.b16 %v642
  %v726 = vunpack.c.l.b16 %v643
  %v727 = vunpack.c.l.b16 %v644
  %v728 = vunpack.c.h.b16 %v644
  %v729 = vunpack.c.l.b16 %v645
  %v730 = vunpack.c.l.b16 %v646
  %v731 = vunpack.c.h.b16 %v646
  %v732 = vunpack.c.l.b16 %v647
  %v733 = vunpack.c.l.b16 %v648
  %v734 = vunpack.c.h.b16 %v648
  %v735 = vunpack.c.l.b16 %v649
  %v736 = vunpack.c.l.b16 %v650
  %v737 = vunpack.c.h.b16 %v650
  %v738 = vunpack.c.l.b16 %v651
  %v739 = vunpack.c.l.b16 %v652
  %v740 = vunpack.c.h.b16 %v652
  %v741 = vunpack.c.l.b16 %v653
  %v742 = vunpack.c.l.b16 %v654
  %v743 = vunpack.c.h.b16 %v654
  %v744 = vunpack.c.l.b16 %v655
  %v745 = vunpack.c.l.b16 %v656
  %v746 = vunpack.c.h.b16 %v656
  %v747 = vunpack.c.l.b16 %v657
  %v748 = vpack.c.b16 %v697, %v694
  %v749 = vpack.c.b16 %v698, %v695
  %v750 = vpack.c.b16 %v699, %v696
  %v751 = vpack.c.b16 %v703, %v700
  %v752 = vpack.c.b16 %v704, %v701
  %v753 = vpack.c.b16 %v705, %v702
  %v754 = vpack.c.b16 %v709, %v706
  %v755 = vpack.c.b16 %v710, %v707
  %v756 = vpack.c.b16 %v711, %v708
  %v757 = vpack.c.b16 %v715, %v712
  %v758 = vpack.c.b16 %v716, %v713
  %v759 = vpack.c.b16 %v717, %v714
  %v760 = vpack.c.b16 %v721, %v718
  %v761 = vpack.c.b16 %v722, %v719
  %v762 = vpack.c.b16 %v723, %v720
  %v763 = vpack.c.b16 %v727, %v724
  %v764 = vpack.c.b16 %v728, %v725
  %v765 = vpack.c.b16 %v729, %v726
  %v766 = vpack.c.b16 %v733, %v730
  %v767 = vpack.c.b16 %v734, %v731
  %v768 = vpack.c.b16 %v735, %v732
  %v769 = vpack.c.b16 %v739, %v736
  %v770 = vpack.c.b16 %v740, %v737
  %v771 = vpack.c.b16 %v741, %v738
  %v772 = vpack.c.b16 %v745, %v742
  %v773 = vpack.c.b16 %v746, %v743
  %v774 = vpack.c.b16 %v747, %v744
  %802 = vmatprep.subr.bf16.mxu0 %v749
  %803 = vmatpush1.bf16.msra.mxu0 %v748
  %804 = vmatprep.subr.bf16.mxu0 %v752
  %805 = vmatpush1.bf16.msra.mxu0 %v751
  %806 = vmatprep.subr.bf16.mxu0 %v755
  %807 = vmatpush1.bf16.msra.mxu0 %v754
  %808 = vmatprep.subr.bf16.mxu0 %v758
  %809 = vmatpush1.bf16.msra.mxu0 %v757
  %810 = vmatprep.subr.bf16.mxu0 %v761
  %811 = vmatpush1.bf16.msra.mxu0 %v760
  %812 = vmatprep.subr.bf16.mxu0 %v764
  %813 = vmatpush1.bf16.msra.mxu0 %v763
  %814 = vmatprep.subr.bf16.mxu0 %v767
  %815 = vmatpush1.bf16.msra.mxu0 %v766
  %816 = vmatprep.subr.bf16.mxu0 %v770
  %817 = vmatpush1.bf16.msra.mxu0 %v769
  %818 = vmatprep.subr.bf16.mxu0 %v773
  %819 = vmatpush1.bf16.msra.mxu0 %v772
  %820 = vmatprep.subr.bf16.mxu0 0
  %821 = vmatpush1.bf16.msra.mxu0 0
  %822 = vmatprep.subr.bf16.mxu0 0
  %823 = vmatpush1.bf16.msra.mxu0 0
  %824 = vmatprep.subr.bf16.mxu0 0
  %825 = vmatpush1.bf16.msra.mxu0 0
  %826 = vmatprep.subr.bf16.mxu0 0
  %827 = vmatpush1.bf16.msra.mxu0 0
  %828 = vmatprep.subr.bf16.mxu0 0
  %829 = vmatpush1.bf16.msra.mxu0 0
  %830 = vmatprep.subr.bf16.mxu0 0
  %831 = vmatpush1.bf16.msra.mxu0 0
  %832 = vmatprep.subr.bf16.mxu0 0
  %833 = vmatpush1.bf16.msra.mxu0 0
  %834 = vmatprep.mubr.bf16.mxu0 %v219
  %835 = vmatmul.mubr.bf16.gmra.mrb[0].mxu0 %v67
  %v836 = vpop.f32.mrb[0].mxu0
  %v837 = vadd.f32 0.0, %v836
  %v838 = vpop.f32.mrb[0].mxu0
  %v839 = vadd.f32 0.0, %v838
  %v840 = vpop.f32.mrb[0].mxu0
  %v841 = vadd.f32 0.0, %v840
  %v842 = vpop.f32.mrb[0].mxu0
  %v843 = vadd.f32 0.0, %v842
  %844 = vmatprep.mubr.bf16.mxu0 %v222
  %845 = vmatmul.mubr.bf16.gmra.mrb[0].mxu0 %v69
  %v846 = vpop.f32.mrb[0].mxu0
  %v847 = vadd.f32 0.0, %v846
  %v848 = vpop.f32.mrb[0].mxu0
  %v849 = vadd.f32 0.0, %v848
  %v850 = vpop.f32.mrb[0].mxu0
  %v851 = vadd.f32 0.0, %v850
  %v852 = vpop.f32.mrb[0].mxu0
  %v853 = vadd.f32 0.0, %v852
  %854 = vdwg.mxu0
  %855 = vmatprep.subr.bf16.mxu0 0
  %856 = vmatpush1.bf16.msra.mxu0 %v750
  %857 = vmatprep.subr.bf16.mxu0 0
  %858 = vmatpush1.bf16.msra.mxu0 %v753
  %859 = vmatprep.subr.bf16.mxu0 0
  %860 = vmatpush1.bf16.msra.mxu0 %v756
  %861 = vmatprep.subr.bf16.mxu0 0
  %862 = vmatpush1.bf16.msra.mxu0 %v759
  %863 = vmatprep.subr.bf16.mxu0 0
  %864 = vmatpush1.bf16.msra.mxu0 %v762
  %865 = vmatprep.subr.bf16.mxu0 0
  %866 = vmatpush1.bf16.msra.mxu0 %v765
  %867 = vmatprep.subr.bf16.mxu0 0
  %868 = vmatpush1.bf16.msra.mxu0 %v768
  %869 = vmatprep.subr.bf16.mxu0 0
  %870 = vmatpush1.bf16.msra.mxu0 %v771
  %871 = vmatprep.subr.bf16.mxu0 0
  %872 = vmatpush1.bf16.msra.mxu0 %v774
  %873 = vmatprep.subr.bf16.mxu0 0
  %874 = vmatpush1.bf16.msra.mxu0 0
  %875 = vmatprep.subr.bf16.mxu0 0
  %876 = vmatpush1.bf16.msra.mxu0 0
  %877 = vmatprep.subr.bf16.mxu0 0
  %878 = vmatpush1.bf16.msra.mxu0 0
  %879 = vmatprep.subr.bf16.mxu0 0
  %880 = vmatpush1.bf16.msra.mxu0 0
  %881 = vmatprep.subr.bf16.mxu0 0
  %882 = vmatpush1.bf16.msra.mxu0 0
  %883 = vmatprep.subr.bf16.mxu0 0
  %884 = vmatpush1.bf16.msra.mxu0 0
  %885 = vmatprep.subr.bf16.mxu0 0
  %886 = vmatpush1.bf16.msra.mxu0 0
  %887 = vmatprep.mubr.bf16.mxu0 %v219
  %888 = vmatmul.mubr.bf16.gmra.mrb[0].mxu0 %v67
  %v889 = vpop.f32.mrb[0].mxu0
  %v890 = vadd.f32 0.0, %v889
  %v891 = vpop.f32.mrb[0].mxu0
  %v892 = vpop.f32.mrb[0].mxu0
  %v893 = vadd.f32 0.0, %v892
  %v894 = vpop.f32.mrb[0].mxu0
  %895 = vmatprep.mubr.bf16.mxu0 %v222
  %896 = vmatmul.mubr.bf16.gmra.mrb[0].mxu0 %v69
  %v897 = vpop.f32.mrb[0].mxu0
  %v898 = vadd.f32 0.0, %v897
  %v899 = vpop.f32.mrb[0].mxu0
  %v900 = vpop.f32.mrb[0].mxu0
  %v901 = vadd.f32 0.0, %v900
  %v902 = vpop.f32.mrb[0].mxu0
  %903 = vdwg.mxu0
  %v904 = vmax.f32 %v609, %v837
  %v905 = vmax.f32 %v610, %v839
  %v906 = vmax.f32 %v611, %v890
  %v907 = vmax.f32 %v612, %v841
  %v908 = vmax.f32 %v613, %v843
  %v909 = vmax.f32 %v614, %v893
  %v910 = vmax.f32 %v615, %v847
  %v911 = vmax.f32 %v616, %v849
  %v912 = vmax.f32 %v617, %v898
  %v913 = vmax.f32 %v618, %v851
  %v914 = vmax.f32 %v619, %v853
  %v915 = vmax.f32 %v620, %v901
  %s916 = scalar_lea.vmem %s0, 648
  %v917 = vld [vmem:[%s916] sm:$0xff]
  %v918 = vld [vmem:[%s916 + $0x8] sm:$0xf]
  %v919 = vld [vmem:[%s916 + $0xc] sm:$0xff]
  %v920 = vld [vmem:[%s916 + $0x14] sm:$0xf]
  %v921 = vld [vmem:[%s916 + $0x18] sm:$0xff]
  %v922 = vld [vmem:[%s916 + $0x20] sm:$0xf]
  %v923 = vld [vmem:[%s916 + $0x24] sm:$0xff]
  %v924 = vld [vmem:[%s916 + $0x2c] sm:$0xf]
  %v925 = vld [vmem:[%s916 + $0x30] sm:$0xff]
  %v926 = vld [vmem:[%s916 + $0x38] sm:$0xf]
  %v927 = vld [vmem:[%s916 + $0x3c] sm:$0xff]
  %v928 = vld [vmem:[%s916 + $0x44] sm:$0xf]
  %v929 = vld [vmem:[%s916 + $0x48] sm:$0xff]
  %v930 = vld [vmem:[%s916 + $0x50] sm:$0xf]
  %v931 = vld [vmem:[%s916 + $0x54] sm:$0xff]
  %v932 = vld [vmem:[%s916 + $0x5c] sm:$0xf]
  %v933 = vld [vmem:[%s916 + $0x60] sm:$0xff]
  %v934 = vld [vmem:[%s916 + $0x68] sm:$0xf]
  %v935 = vld [vmem:[%s916 + $0x6c] sm:$0xff]
  %v936 = vld [vmem:[%s916 + $0x74] sm:$0xf]
  %v937 = vld [vmem:[%s916 + $0x78] sm:$0xff]
  %v938 = vld [vmem:[%s916 + $0x80] sm:$0xf]
  %v939 = vld [vmem:[%s916 + $0x84] sm:$0xff]
  %v940 = vld [vmem:[%s916 + $0x8c] sm:$0xf]
  %v941 = vld [vmem:[%s916 + $0x90] sm:$0xff]
  %v942 = vld [vmem:[%s916 + $0x98] sm:$0xf]
  %v943 = vld [vmem:[%s916 + $0x9c] sm:$0xff]
  %v944 = vld [vmem:[%s916 + $0xa4] sm:$0xf]
  %v945 = vld [vmem:[%s916 + $0xa8] sm:$0xff]
  %v946 = vld [vmem:[%s916 + $0xb0] sm:$0xf]
  %v947 = vld [vmem:[%s916 + $0xb4] sm:$0xff]
  %v948 = vld [vmem:[%s916 + $0xbc] sm:$0xf]
  %v949 = vld [vmem:[%s916 + $0xc0] sm:$0xff]
  %v950 = vld [vmem:[%s916 + $0xc8] sm:$0xf]
  %v951 = vld [vmem:[%s916 + $0xcc] sm:$0xff]
  %v952 = vld [vmem:[%s916 + $0xd4] sm:$0xf]
  %v989 = vunpack.c.l.b16 %v917
  %v990 = vunpack.c.h.b16 %v917
  %v991 = vunpack.c.l.b16 %v918
  %v992 = vunpack.c.l.b16 %v919
  %v993 = vunpack.c.h.b16 %v919
  %v994 = vunpack.c.l.b16 %v920
  %v995 = vunpack.c.l.b16 %v921
  %v996 = vunpack.c.h.b16 %v921
  %v997 = vunpack.c.l.b16 %v922
  %v998 = vunpack.c.l.b16 %v923
  %v999 = vunpack.c.h.b16 %v923
  %v1000 = vunpack.c.l.b16 %v924
  %v1001 = vunpack.c.l.b16 %v925
  %v1002 = vunpack.c.h.b16 %v925
  %v1003 = vunpack.c.l.b16 %v926
  %v1004 = vunpack.c.l.b16 %v927
  %v1005 = vunpack.c.h.b16 %v927
  %v1006 = vunpack.c.l.b16 %v928
  %v1007 = vunpack.c.l.b16 %v929
  %v1008 = vunpack.c.h.b16 %v929
  %v1009 = vunpack.c.l.b16 %v930
  %v1010 = vunpack.c.l.b16 %v931
  %v1011 = vunpack.c.h.b16 %v931
  %v1012 = vunpack.c.l.b16 %v932
  %v1013 = vunpack.c.l.b16 %v933
  %v1014 = vunpack.c.h.b16 %v933
  %v1015 = vunpack.c.l.b16 %v934
  %v1016 = vunpack.c.l.b16 %v935
  %v1017 = vunpack.c.h.b16 %v935
  %v1018 = vunpack.c.l.b16 %v936
  %v1019 = vunpack.c.l.b16 %v937
  %v1020 = vunpack.c.h.b16 %v937
  %v1021 = vunpack.c.l.b16 %v938
  %v1022 = vunpack.c.l.b16 %v939
  %v1023 = vunpack.c.h.b16 %v939
  %v1024 = vunpack.c.l.b16 %v940
  %v1025 = vunpack.c.l.b16 %v941
  %v1026 = vunpack.c.h.b16 %v941
  %v1027 = vunpack.c.l.b16 %v942
  %v1028 = vunpack.c.l.b16 %v943
  %v1029 = vunpack.c.h.b16 %v943
  %v1030 = vunpack.c.l.b16 %v944
  %v1031 = vunpack.c.l.b16 %v945
  %v1032 = vunpack.c.h.b16 %v945
  %v1033 = vunpack.c.l.b16 %v946
  %v1034 = vunpack.c.l.b16 %v947
  %v1035 = vunpack.c.h.b16 %v947
  %v1036 = vunpack.c.l.b16 %v948
  %v1037 = vunpack.c.l.b16 %v949
  %v1038 = vunpack.c.h.b16 %v949
  %v1039 = vunpack.c.l.b16 %v950
  %v1040 = vunpack.c.l.b16 %v951
  %v1041 = vunpack.c.h.b16 %v951
  %v1042 = vunpack.c.l.b16 %v952
  %v1043 = vpack.c.b16 %v992, %v989
  %v1044 = vpack.c.b16 %v993, %v990
  %v1045 = vpack.c.b16 %v994, %v991
  %v1046 = vpack.c.b16 %v998, %v995
  %v1047 = vpack.c.b16 %v999, %v996
  %v1048 = vpack.c.b16 %v1000, %v997
  %v1049 = vpack.c.b16 %v1004, %v1001
  %v1050 = vpack.c.b16 %v1005, %v1002
  %v1051 = vpack.c.b16 %v1006, %v1003
  %v1052 = vpack.c.b16 %v1010, %v1007
  %v1053 = vpack.c.b16 %v1011, %v1008
  %v1054 = vpack.c.b16 %v1012, %v1009
  %v1055 = vpack.c.b16 %v1016, %v1013
  %v1056 = vpack.c.b16 %v1017, %v1014
  %v1057 = vpack.c.b16 %v1018, %v1015
  %v1058 = vpack.c.b16 %v1022, %v1019
  %v1059 = vpack.c.b16 %v1023, %v1020
  %v1060 = vpack.c.b16 %v1024, %v1021
  %v1061 = vpack.c.b16 %v1028, %v1025
  %v1062 = vpack.c.b16 %v1029, %v1026
  %v1063 = vpack.c.b16 %v1030, %v1027
  %v1064 = vpack.c.b16 %v1034, %v1031
  %v1065 = vpack.c.b16 %v1035, %v1032
  %v1066 = vpack.c.b16 %v1036, %v1033
  %v1067 = vpack.c.b16 %v1040, %v1037
  %v1068 = vpack.c.b16 %v1041, %v1038
  %v1069 = vpack.c.b16 %v1042, %v1039
  %1097 = vmatprep.subr.bf16.mxu0 %v1044
  %1098 = vmatpush1.bf16.msra.mxu0 %v1043
  %1099 = vmatprep.subr.bf16.mxu0 %v1047
  %1100 = vmatpush1.bf16.msra.mxu0 %v1046
  %1101 = vmatprep.subr.bf16.mxu0 %v1050
  %1102 = vmatpush1.bf16.msra.mxu0 %v1049
  %1103 = vmatprep.subr.bf16.mxu0 %v1053
  %1104 = vmatpush1.bf16.msra.mxu0 %v1052
  %1105 = vmatprep.subr.bf16.mxu0 %v1056
  %1106 = vmatpush1.bf16.msra.mxu0 %v1055
  %1107 = vmatprep.subr.bf16.mxu0 %v1059
  %1108 = vmatpush1.bf16.msra.mxu0 %v1058
  %1109 = vmatprep.subr.bf16.mxu0 %v1062
  %1110 = vmatpush1.bf16.msra.mxu0 %v1061
  %1111 = vmatprep.subr.bf16.mxu0 %v1065
  %1112 = vmatpush1.bf16.msra.mxu0 %v1064
  %1113 = vmatprep.subr.bf16.mxu0 %v1068
  %1114 = vmatpush1.bf16.msra.mxu0 %v1067
  %1115 = vmatprep.subr.bf16.mxu0 0
  %1116 = vmatpush1.bf16.msra.mxu0 0
  %1117 = vmatprep.subr.bf16.mxu0 0
  %1118 = vmatpush1.bf16.msra.mxu0 0
  %1119 = vmatprep.subr.bf16.mxu0 0
  %1120 = vmatpush1.bf16.msra.mxu0 0
  %1121 = vmatprep.subr.bf16.mxu0 0
  %1122 = vmatpush1.bf16.msra.mxu0 0
  %1123 = vmatprep.subr.bf16.mxu0 0
  %1124 = vmatpush1.bf16.msra.mxu0 0
  %1125 = vmatprep.subr.bf16.mxu0 0
  %1126 = vmatpush1.bf16.msra.mxu0 0
  %1127 = vmatprep.subr.bf16.mxu0 0
  %1128 = vmatpush1.bf16.msra.mxu0 0
  %1129 = vmatprep.mubr.bf16.mxu0 %v219
  %1130 = vmatmul.mubr.bf16.gmra.mrb[0].mxu0 %v67
  %v1131 = vpop.f32.mrb[0].mxu0
  %v1132 = vadd.f32 0.0, %v1131
  %v1133 = vpop.f32.mrb[0].mxu0
  %v1134 = vadd.f32 0.0, %v1133
  %v1135 = vpop.f32.mrb[0].mxu0
  %v1136 = vadd.f32 0.0, %v1135
  %v1137 = vpop.f32.mrb[0].mxu0
  %v1138 = vadd.f32 0.0, %v1137
  %1139 = vmatprep.mubr.bf16.mxu0 %v222
  %1140 = vmatmul.mubr.bf16.gmra.mrb[0].mxu0 %v69
  %v1141 = vpop.f32.mrb[0].mxu0
  %v1142 = vadd.f32 0.0, %v1141
  %v1143 = vpop.f32.mrb[0].mxu0
  %v1144 = vadd.f32 0.0, %v1143
  %v1145 = vpop.f32.mrb[0].mxu0
  %v1146 = vadd.f32 0.0, %v1145
  %v1147 = vpop.f32.mrb[0].mxu0
  %v1148 = vadd.f32 0.0, %v1147
  %1149 = vdwg.mxu0
  %1150 = vmatprep.subr.bf16.mxu0 0
  %1151 = vmatpush1.bf16.msra.mxu0 %v1045
  %1152 = vmatprep.subr.bf16.mxu0 0
  %1153 = vmatpush1.bf16.msra.mxu0 %v1048
  %1154 = vmatprep.subr.bf16.mxu0 0
  %1155 = vmatpush1.bf16.msra.mxu0 %v1051
  %1156 = vmatprep.subr.bf16.mxu0 0
  %1157 = vmatpush1.bf16.msra.mxu0 %v1054
  %1158 = vmatprep.subr.bf16.mxu0 0
  %1159 = vmatpush1.bf16.msra.mxu0 %v1057
  %1160 = vmatprep.subr.bf16.mxu0 0
  %1161 = vmatpush1.bf16.msra.mxu0 %v1060
  %1162 = vmatprep.subr.bf16.mxu0 0
  %1163 = vmatpush1.bf16.msra.mxu0 %v1063
  %1164 = vmatprep.subr.bf16.mxu0 0
  %1165 = vmatpush1.bf16.msra.mxu0 %v1066
  %1166 = vmatprep.subr.bf16.mxu0 0
  %1167 = vmatpush1.bf16.msra.mxu0 %v1069
  %1168 = vmatprep.subr.bf16.mxu0 0
  %1169 = vmatpush1.bf16.msra.mxu0 0
  %1170 = vmatprep.subr.bf16.mxu0 0
  %1171 = vmatpush1.bf16.msra.mxu0 0
  %1172 = vmatprep.subr.bf16.mxu0 0
  %1173 = vmatpush1.bf16.msra.mxu0 0
  %1174 = vmatprep.subr.bf16.mxu0 0
  %1175 = vmatpush1.bf16.msra.mxu0 0
  %1176 = vmatprep.subr.bf16.mxu0 0
  %1177 = vmatpush1.bf16.msra.mxu0 0
  %1178 = vmatprep.subr.bf16.mxu0 0
  %1179 = vmatpush1.bf16.msra.mxu0 0
  %1180 = vmatprep.subr.bf16.mxu0 0
  %1181 = vmatpush1.bf16.msra.mxu0 0
  %1182 = vmatprep.mubr.bf16.mxu0 %v219
  %1183 = vmatmul.mubr.bf16.gmra.mrb[0].mxu0 %v67
  %v1184 = vpop.f32.mrb[0].mxu0
  %v1185 = vadd.f32 0.0, %v1184
  %v1186 = vpop.f32.mrb[0].mxu0
  %v1187 = vpop.f32.mrb[0].mxu0
  %v1188 = vadd.f32 0.0, %v1187
  %v1189 = vpop.f32.mrb[0].mxu0
  %1190 = vmatprep.mubr.bf16.mxu0 %v222
  %1191 = vmatmul.mubr.bf16.gmra.mrb[0].mxu0 %v69
  %v1192 = vpop.f32.mrb[0].mxu0
  %v1193 = vadd.f32 0.0, %v1192
  %v1194 = vpop.f32.mrb[0].mxu0
  %v1195 = vpop.f32.mrb[0].mxu0
  %v1196 = vadd.f32 0.0, %v1195
  %v1197 = vpop.f32.mrb[0].mxu0
  %1198 = vdwg.mxu0
  %v1199 = vmax.f32 %v904, %v1132
  %v1200 = vmax.f32 %v905, %v1134
  %v1201 = vmax.f32 %v906, %v1185
  %v1202 = vmax.f32 %v907, %v1136
  %v1203 = vmax.f32 %v908, %v1138
  %v1204 = vmax.f32 %v909, %v1188
  %v1205 = vmax.f32 %v910, %v1142
  %v1206 = vmax.f32 %v911, %v1144
  %v1207 = vmax.f32 %v912, %v1193
  %v1208 = vmax.f32 %v913, %v1146
  %v1209 = vmax.f32 %v914, %v1148
  %v1210 = vmax.f32 %v915, %v1196
  %v1211 = vld [vmem:[%s2] sm:$0xff]
  %v1212 = vld [vmem:[%s2 + $0x8] sm:$0xff]
  %v1213 = vld [vmem:[%s2 + $0x10] sm:$0xff]
  %v1214 = vld [vmem:[%s2 + $0x18] sm:$0xff]
  %1216 = vset.pattern.permute.xlu0 0
  %1217 = vperm.xlu0 %1216, %v1211
  %v1218 = vpop.permute.xlu0 %1217
  %1221 = vset.pattern.permute.xlu0 0
  %1222 = vperm.xlu0 %1221, %v1212
  %v1223 = vpop.permute.xlu0 %1222
  %1226 = vset.pattern.permute.xlu0 0
  %1227 = vperm.xlu0 %1226, %v1213
  %v1228 = vpop.permute.xlu0 %1227
  %1231 = vset.pattern.permute.xlu0 0
  %1232 = vperm.xlu0 %1231, %v1214
  %v1233 = vpop.permute.xlu0 %1232
  %v1235 = vadd.f32 %v1199, %v1218
  %v1236 = vadd.f32 %v1200, %v1218
  %v1237 = vadd.f32 %v1201, %v1218
  %v1238 = vadd.f32 %v1202, %v1223
  %v1239 = vadd.f32 %v1203, %v1223
  %v1240 = vadd.f32 %v1204, %v1223
  %v1241 = vadd.f32 %v1205, %v1228
  %v1242 = vadd.f32 %v1206, %v1228
  %v1243 = vadd.f32 %v1207, %v1228
  %v1244 = vadd.f32 %v1208, %v1233
  %v1245 = vadd.f32 %v1209, %v1233
  %v1246 = vadd.f32 %v1210, %v1233
  %v1247 = vmax.f32 %v1235, 0.0
  %v1248 = vmax.f32 %v1236, 0.0
  %v1249 = vmax.f32 %v1237, 0.0
  %v1250 = vmax.f32 %v1238, 0.0
  %v1251 = vmax.f32 %v1239, 0.0
  %v1252 = vmax.f32 %v1240, 0.0
  %v1253 = vmax.f32 %v1241, 0.0
  %v1254 = vmax.f32 %v1242, 0.0
  %v1255 = vmax.f32 %v1243, 0.0
  %v1256 = vmax.f32 %v1244, 0.0
  %v1257 = vmax.f32 %v1245, 0.0
  %v1258 = vmax.f32 %v1246, 0.0
  %1259 = vst [vmem:[%s3] sm:$0xff] %v1247
  %1260 = vst [vmem:[%s3 + $0x8] sm:$0xff] %v1248
  %vm1261 = vcmask 261120
  %1262 = vst.msk [vmem:[%s3 + $0x10] sm:$0xff] %vm1261, %v1249
  %1263 = vst [vmem:[%s3 + $0x18] sm:$0xff] %v1250
  %1264 = vst [vmem:[%s3 + $0x20] sm:$0xff] %v1251
  %1265 = vst.msk [vmem:[%s3 + $0x28] sm:$0xff] %vm1261, %v1252
  %1266 = vst [vmem:[%s3 + $0x30] sm:$0xff] %v1253
  %1267 = vst [vmem:[%s3 + $0x38] sm:$0xff] %v1254
  %1268 = vst.msk [vmem:[%s3 + $0x40] sm:$0xff] %vm1261, %v1255
  %1269 = vst [vmem:[%s3 + $0x48] sm:$0xff] %v1256
  %1270 = vst [vmem:[%s3 + $0x50] sm:$0xff] %v1257
  %1271 = vst.msk [vmem:[%s3 + $0x58] sm:$0xff] %vm1261, %v1258
  // Predicated region
  $region14: #{cnn_forward.7} parent=0 // pred_check
    _
  $region15: #{cnn_forward.7} parent=0 // pred_check_branch
    %1273 = sbr.rel (0) target = $region17
  $region16: #{cnn_forward.7} parent=0 // pred_region
    _
  $region17: #{cnn_forward.7} parent=0 // pred_fallthru
    _
  // Predicated region
  $region18: #{cnn_forward.7} parent=0 // pred_check
    _
  $region19: #{cnn_forward.7} parent=0 // pred_check_branch
    %1275 = sbr.rel (0) target = $region21
  $region20: #{cnn_forward.7} parent=0 // pred_region
    _
  $region21: #{cnn_forward.7} parent=0 // pred_fallthru
    _

// kernel: cnn_forward.8
$region0: #{cnn_forward.8}
  #allocation0 [shape = 'u32[]', space=smem, size = 0x4, offset = 0x4, fixed_abs, tag = 'smem constant byte address 0x4 - core index']
  #allocation1 [shape = 'u32[144,128]{1,0:T(1,128)}', space=vmem, size = 0x12000, scoped, tag = 'internal scratch']
  %s0 = inlined_call_operand.vmem [shape: bf16[4,288,50], index: 0, kind: input, shape index: {}]
  %s1 = inlined_call_operand.vmem [shape: bf16[64,288], index: 1, kind: input, shape index: {}]
  %s2 = inlined_call_operand.vmem [shape: f32[64,1], index: 2, kind: input, shape index: {}]
  %s3 = inlined_call_operand.vmem [shape: f32[64,50], index: 3, kind: output, shape index: {}]
  %s4 = sld [smem:[#allocation0]]
  $region22: #{cnn_forward.8} parent=0
    _
  %s6 = ssub.s32 1, %s4
  %s7 = scalar_select 0, %s6, %s4
  // Predicated region
  $region2: #{cnn_forward.8} parent=0 // pred_check
    _
  $region3: #{cnn_forward.8} parent=0 // pred_check_branch
    %9 = sbr.rel (0) target = $region5
  $region4: #{cnn_forward.8} parent=0 // pred_region
    _
  $region5: #{cnn_forward.8} parent=0 // pred_fallthru
    _
  // Predicated region
  $region6: #{cnn_forward.8} parent=0 // pred_check
    _
  $region7: #{cnn_forward.8} parent=0 // pred_check_branch
    %11 = sbr.rel (0) target = $region9
  $region8: #{cnn_forward.8} parent=0 // pred_region
    _
  $region9: #{cnn_forward.8} parent=0 // pred_fallthru
    _
  // Predicated region
  $region10: #{cnn_forward.8} parent=0 // pred_check
    _
  $region11: #{cnn_forward.8} parent=0 // pred_check_branch
    %13 = sbr.rel (0) target = $region13
  $region12: #{cnn_forward.8} parent=0 // pred_region
    _
  $region13: #{cnn_forward.8} parent=0 // pred_fallthru
    _
  %v15 = vld [vmem:[%s1] sm:$0xff]
  %v16 = vld [vmem:[%s1 + $0x8] sm:$0xf]
  %v17 = vld [vmem:[%s1 + $0xc] sm:$0xff]
  %v18 = vld [vmem:[%s1 + $0x14] sm:$0xf]
  %v19 = vld [vmem:[%s1 + $0x18] sm:$0xff]
  %v20 = vld [vmem:[%s1 + $0x20] sm:$0xf]
  %v21 = vld [vmem:[%s1 + $0x24] sm:$0xff]
  %v22 = vld [vmem:[%s1 + $0x2c] sm:$0xf]
  %v23 = vld [vmem:[%s1 + $0x30] sm:$0xff]
  %v24 = vld [vmem:[%s1 + $0x38] sm:$0xf]
  %v25 = vld [vmem:[%s1 + $0x3c] sm:$0xff]
  %v26 = vld [vmem:[%s1 + $0x44] sm:$0xf]
  %v27 = vld [vmem:[%s1 + $0x48] sm:$0xff]
  %v28 = vld [vmem:[%s1 + $0x50] sm:$0xf]
  %v29 = vld [vmem:[%s1 + $0x54] sm:$0xff]
  %v30 = vld [vmem:[%s1 + $0x5c] sm:$0xf]
  %v31 = vld [vmem:[%s0] sm:$0xf]
  %v32 = vld [vmem:[%s0 + $0x4] sm:$0xf]
  %v33 = vld [vmem:[%s0 + $0x8] sm:$0xf]
  %v34 = vld [vmem:[%s0 + $0xc] sm:$0xf]
  %v35 = vld [vmem:[%s0 + $0x10] sm:$0xf]
  %v36 = vld [vmem:[%s0 + $0x14] sm:$0xf]
  %v37 = vld [vmem:[%s0 + $0x18] sm:$0xf]
  %v38 = vld [vmem:[%s0 + $0x1c] sm:$0xf]
  %v39 = vld [vmem:[%s0 + $0x20] sm:$0xf]
  %v40 = vld [vmem:[%s0 + $0x24] sm:$0xf]
  %v41 = vld [vmem:[%s0 + $0x28] sm:$0xf]
  %v42 = vld [vmem:[%s0 + $0x2c] sm:$0xf]
  %v43 = vld [vmem:[%s0 + $0x30] sm:$0xf]
  %v44 = vld [vmem:[%s0 + $0x34] sm:$0xf]
  %v45 = vld [vmem:[%s0 + $0x38] sm:$0xf]
  %v46 = vld [vmem:[%s0 + $0x3c] sm:$0xf]
  %v47 = vld [vmem:[%s0 + $0x40] sm:$0xf]
  %v48 = vld [vmem:[%s0 + $0x44] sm:$0xf]
  %v49 = vld [vmem:[%s0 + $0x48] sm:$0xf]
  %v50 = vld [vmem:[%s0 + $0x4c] sm:$0xf]
  %v51 = vld [vmem:[%s0 + $0x50] sm:$0xf]
  %v52 = vld [vmem:[%s0 + $0x54] sm:$0xf]
  %v53 = vld [vmem:[%s0 + $0x58] sm:$0xf]
  %v54 = vld [vmem:[%s0 + $0x5c] sm:$0xf]
  %v55 = vld [vmem:[%s0 + $0x60] sm:$0xf]
  %v56 = vld [vmem:[%s0 + $0x64] sm:$0xf]
  %v57 = vld [vmem:[%s0 + $0x68] sm:$0xf]
  %v58 = vld [vmem:[%s0 + $0x6c] sm:$0xf]
  %v59 = vld [vmem:[%s0 + $0x70] sm:$0xf]
  %v60 = vld [vmem:[%s0 + $0x74] sm:$0xf]
  %v61 = vld [vmem:[%s0 + $0x78] sm:$0xf]
  %v62 = vld [vmem:[%s0 + $0x7c] sm:$0xf]
  %v63 = vld [vmem:[%s0 + $0x80] sm:$0xf]
  %v64 = vld [vmem:[%s0 + $0x84] sm:$0xf]
  %v65 = vld [vmem:[%s0 + $0x88] sm:$0xf]
  %v66 = vld [vmem:[%s0 + $0x8c] sm:$0xf]
  %v83 = vunpack.c.l.b16 %v15
  %v84 = vunpack.c.h.b16 %v15
  %v85 = vunpack.c.l.b16 %v16
  %v86 = vunpack.c.l.b16 %v17
  %v87 = vunpack.c.h.b16 %v17
  %v88 = vunpack.c.l.b16 %v18
  %v89 = vunpack.c.l.b16 %v19
  %v90 = vunpack.c.h.b16 %v19
  %v91 = vunpack.c.l.b16 %v20
  %v92 = vunpack.c.l.b16 %v21
  %v93 = vunpack.c.h.b16 %v21
  %v94 = vunpack.c.l.b16 %v22
  %v95 = vunpack.c.l.b16 %v23
  %v96 = vunpack.c.h.b16 %v23
  %v97 = vunpack.c.l.b16 %v24
  %v98 = vunpack.c.l.b16 %v25
  %v99 = vunpack.c.h.b16 %v25
  %v100 = vunpack.c.l.b16 %v26
  %v101 = vunpack.c.l.b16 %v27
  %v102 = vunpack.c.h.b16 %v27
  %v103 = vunpack.c.l.b16 %v28
  %v104 = vunpack.c.l.b16 %v29
  %v105 = vunpack.c.h.b16 %v29
  %v106 = vunpack.c.l.b16 %v30
  %v107 = vpack.c.b16 %v86, %v83
  %v108 = vpack.c.b16 %v87, %v84
  %v109 = vpack.c.b16 %v88, %v85
  %v110 = vpack.c.b16 %v92, %v89
  %v111 = vpack.c.b16 %v93, %v90
  %v112 = vpack.c.b16 %v94, %v91
  %v113 = vpack.c.b16 %v98, %v95
  %v114 = vpack.c.b16 %v99, %v96
  %v115 = vpack.c.b16 %v100, %v97
  %v116 = vpack.c.b16 %v104, %v101
  %v117 = vpack.c.b16 %v105, %v102
  %v118 = vpack.c.b16 %v106, %v103
  %v163 = vunpack.c.l.b16 %v31
  %v164 = vunpack.c.l.b16 %v32
  %v165 = vunpack.c.l.b16 %v33
  %v166 = vunpack.c.l.b16 %v34
  %v167 = vunpack.c.l.b16 %v35
  %v168 = vunpack.c.l.b16 %v36
  %v169 = vunpack.c.l.b16 %v37
  %v170 = vunpack.c.l.b16 %v38
  %v171 = vunpack.c.l.b16 %v39
  %v172 = vunpack.c.l.b16 %v40
  %v173 = vunpack.c.l.b16 %v41
  %v174 = vunpack.c.l.b16 %v42
  %v175 = vunpack.c.l.b16 %v43
  %v176 = vunpack.c.l.b16 %v44
  %v177 = vunpack.c.l.b16 %v45
  %v178 = vunpack.c.l.b16 %v46
  %v179 = vunpack.c.l.b16 %v47
  %v180 = vunpack.c.l.b16 %v48
  %v181 = vunpack.c.l.b16 %v49
  %v182 = vunpack.c.l.b16 %v50
  %v183 = vunpack.c.l.b16 %v51
  %v184 = vunpack.c.l.b16 %v52
  %v185 = vunpack.c.l.b16 %v53
  %v186 = vunpack.c.l.b16 %v54
  %v187 = vunpack.c.l.b16 %v55
  %v188 = vunpack.c.l.b16 %v56
  %v189 = vunpack.c.l.b16 %v57
  %v190 = vunpack.c.l.b16 %v58
  %v191 = vunpack.c.l.b16 %v59
  %v192 = vunpack.c.l.b16 %v60
  %v193 = vunpack.c.l.b16 %v61
  %v194 = vunpack.c.l.b16 %v62
  %v195 = vunpack.c.l.b16 %v63
  %v196 = vunpack.c.l.b16 %v64
  %v197 = vunpack.c.l.b16 %v65
  %v198 = vunpack.c.l.b16 %v66
  %v199 = vpack.c.b16 %v164, %v163
  %v200 = vpack.c.b16 %v166, %v165
  %v201 = vpack.c.b16 %v168, %v167
  %v202 = vpack.c.b16 %v170, %v169
  %v203 = vpack.c.b16 %v172, %v171
  %v204 = vpack.c.b16 %v174, %v173
  %v205 = vpack.c.b16 %v176, %v175
  %v206 = vpack.c.b16 %v178, %v177
  %v207 = vpack.c.b16 %v180, %v179
  %v208 = vpack.c.b16 %v182, %v181
  %v209 = vpack.c.b16 %v184, %v183
  %v210 = vpack.c.b16 %v186, %v185
  %v211 = vpack.c.b16 %v188, %v187
  %v212 = vpack.c.b16 %v190, %v189
  %v213 = vpack.c.b16 %v192, %v191
  %v214 = vpack.c.b16 %v194, %v193
  %v215 = vpack.c.b16 %v196, %v195
  %v216 = vpack.c.b16 %v198, %v197
  %vm235 = vcmask 261120
  %v237 = vsel %vm235, %v109, 0
  %v240 = vsel %vm235, %v112, 0
  %v243 = vsel %vm235, %v115, 0
  %v246 = vsel %vm235, %v118, 0
  %248 = vmatprep.subr.bf16.mxu0 0
  %249 = vmatpush1.bf16.msra.mxu0 %v199
  %250 = vmatprep.subr.bf16.mxu0 0
  %251 = vmatpush1.bf16.msra.mxu0 %v200
  %252 = vmatprep.subr.bf16.mxu0 0
  %253 = vmatpush1.bf16.msra.mxu0 %v201
  %254 = vmatprep.subr.bf16.mxu0 0
  %255 = vmatpush1.bf16.msra.mxu0 %v202
  %256 = vmatprep.subr.bf16.mxu0 0
  %257 = vmatpush1.bf16.msra.mxu0 %v203
  %258 = vmatprep.subr.bf16.mxu0 0
  %259 = vmatpush1.bf16.msra.mxu0 %v204
  %260 = vmatprep.subr.bf16.mxu0 0
  %261 = vmatpush1.bf16.msra.mxu0 %v205
  %262 = vmatprep.subr.bf16.mxu0 0
  %263 = vmatpush1.bf16.msra.mxu0 %v206
  %264 = vmatprep.subr.bf16.mxu0 0
  %265 = vmatpush1.bf16.msra.mxu0 %v207
  %266 = vmatprep.subr.bf16.mxu0 0
  %267 = vmatpush1.bf16.msra.mxu0 %v208
  %268 = vmatprep.subr.bf16.mxu0 0
  %269 = vmatpush1.bf16.msra.mxu0 %v209
  %270 = vmatprep.subr.bf16.mxu0 0
  %271 = vmatpush1.bf16.msra.mxu0 %v210
  %272 = vmatprep.subr.bf16.mxu0 0
  %273 = vmatpush1.bf16.msra.mxu0 %v211
  %274 = vmatprep.subr.bf16.mxu0 0
  %275 = vmatpush1.bf16.msra.mxu0 %v212
  %276 = vmatprep.subr.bf16.mxu0 0
  %277 = vmatpush1.bf16.msra.mxu0 %v213
  %278 = vmatprep.subr.bf16.mxu0 0
  %279 = vmatpush1.bf16.msra.mxu0 %v214
  %280 = vmatprep.mubr.bf16.mxu0 %v108
  %281 = vmatmul.mubr.bf16.gmra.mrb[0].mxu0 %v107
  %v282 = vpop.f32.mrb[0].mxu0
  %v283 = vadd.f32 0.0, %v282
  %v284 = vpop.f32.mrb[0].mxu0
  %v285 = vpop.f32.mrb[0].mxu0
  %v286 = vadd.f32 0.0, %v285
  %v287 = vpop.f32.mrb[0].mxu0
  %288 = vmatprep.mubr.bf16.mxu0 %v111
  %289 = vmatmul.mubr.bf16.gmra.mrb[0].mxu0 %v110
  %v290 = vpop.f32.mrb[0].mxu0
  %v291 = vadd.f32 0.0, %v290
  %v292 = vpop.f32.mrb[0].mxu0
  %v293 = vpop.f32.mrb[0].mxu0
  %v294 = vadd.f32 0.0, %v293
  %v295 = vpop.f32.mrb[0].mxu0
  %296 = vmatprep.mubr.bf16.mxu0 %v114
  %297 = vmatmul.mubr.bf16.gmra.mrb[0].mxu0 %v113
  %v298 = vpop.f32.mrb[0].mxu0
  %v299 = vadd.f32 0.0, %v298
  %v300 = vpop.f32.mrb[0].mxu0
  %v301 = vpop.f32.mrb[0].mxu0
  %v302 = vadd.f32 0.0, %v301
  %v303 = vpop.f32.mrb[0].mxu0
  %304 = vmatprep.mubr.bf16.mxu0 %v117
  %305 = vmatmul.mubr.bf16.gmra.mrb[0].mxu0 %v116
  %v306 = vpop.f32.mrb[0].mxu0
  %v307 = vadd.f32 0.0, %v306
  %v308 = vpop.f32.mrb[0].mxu0
  %v309 = vpop.f32.mrb[0].mxu0
  %v310 = vadd.f32 0.0, %v309
  %v311 = vpop.f32.mrb[0].mxu0
  %312 = vdwg.mxu0
  %313 = vmatprep.subr.bf16.mxu0 0
  %314 = vmatpush1.bf16.msra.mxu0 %v215
  %315 = vmatprep.subr.bf16.mxu0 0
  %316 = vmatpush1.bf16.msra.mxu0 %v216
  %317 = vmatprep.subr.bf16.mxu0 0
  %318 = vmatpush1.bf16.msra.mxu0 0
  %319 = vmatprep.subr.bf16.mxu0 0
  %320 = vmatpush1.bf16.msra.mxu0 0
  %321 = vmatprep.subr.bf16.mxu0 0
  %322 = vmatpush1.bf16.msra.mxu0 0
  %323 = vmatprep.subr.bf16.mxu0 0
  %324 = vmatpush1.bf16.msra.mxu0 0
  %325 = vmatprep.subr.bf16.mxu0 0
  %326 = vmatpush1.bf16.msra.mxu0 0
  %327 = vmatprep.subr.bf16.mxu0 0
  %328 = vmatpush1.bf16.msra.mxu0 0
  %329 = vmatprep.subr.bf16.mxu0 0
  %330 = vmatpush1.bf16.msra.mxu0 0
  %331 = vmatprep.subr.bf16.mxu0 0
  %332 = vmatpush1.bf16.msra.mxu0 0
  %333 = vmatprep.subr.bf16.mxu0 0
  %334 = vmatpush1.bf16.msra.mxu0 0
  %335 = vmatprep.subr.bf16.mxu0 0
  %336 = vmatpush1.bf16.msra.mxu0 0
  %337 = vmatprep.subr.bf16.mxu0 0
  %338 = vmatpush1.bf16.msra.mxu0 0
  %339 = vmatprep.subr.bf16.mxu0 0
  %340 = vmatpush1.bf16.msra.mxu0 0
  %341 = vmatprep.subr.bf16.mxu0 0
  %342 = vmatpush1.bf16.msra.mxu0 0
  %343 = vmatprep.subr.bf16.mxu0 0
  %344 = vmatpush1.bf16.msra.mxu0 0
  %345 = vmatprep.mubr.bf16.mxu0 0
  %346 = vmatmul.mubr.bf16.gmra.mrb[0].mxu0 %v237
  %v347 = vpop.f32.mrb[0].mxu0
  %v348 = vadd.f32 %v283, %v347
  %v349 = vpop.f32.mrb[0].mxu0
  %v350 = vpop.f32.mrb[0].mxu0
  %v351 = vadd.f32 %v286, %v350
  %v352 = vpop.f32.mrb[0].mxu0
  %353 = vmatprep.mubr.bf16.mxu0 0
  %354 = vmatmul.mubr.bf16.gmra.mrb[0].mxu0 %v240
  %v355 = vpop.f32.mrb[0].mxu0
  %v356 = vadd.f32 %v291, %v355
  %v357 = vpop.f32.mrb[0].mxu0
  %v358 = vpop.f32.mrb[0].mxu0
  %v359 = vadd.f32 %v294, %v358
  %v360 = vpop.f32.mrb[0].mxu0
  %361 = vmatprep.mubr.bf16.mxu0 0
  %362 = vmatmul.mubr.bf16.gmra.mrb[0].mxu0 %v243
  %v363 = vpop.f32.mrb[0].mxu0
  %v364 = vadd.f32 %v299, %v363
  %v365 = vpop.f32.mrb[0].mxu0
  %v366 = vpop.f32.mrb[0].mxu0
  %v367 = vadd.f32 %v302, %v366
  %v368 = vpop.f32.mrb[0].mxu0
  %369 = vmatprep.mubr.bf16.mxu0 0
  %370 = vmatmul.mubr.bf16.gmra.mrb[0].mxu0 %v246
  %v371 = vpop.f32.mrb[0].mxu0
  %v372 = vadd.f32 %v307, %v371
  %v373 = vpop.f32.mrb[0].mxu0
  %v374 = vpop.f32.mrb[0].mxu0
  %v375 = vadd.f32 %v310, %v374
  %v376 = vpop.f32.mrb[0].mxu0
  %377 = vdwg.mxu0
  %s378 = scalar_lea.vmem %s0, 144
  %v379 = vld [vmem:[%s378] sm:$0xf]
  %v380 = vld [vmem:[%s378 + $0x4] sm:$0xf]
  %v381 = vld [vmem:[%s378 + $0x8] sm:$0xf]
  %v382 = vld [vmem:[%s378 + $0xc] sm:$0xf]
  %v383 = vld [vmem:[%s378 + $0x10] sm:$0xf]
  %v384 = vld [vmem:[%s378 + $0x14] sm:$0xf]
  %v385 = vld [vmem:[%s378 + $0x18] sm:$0xf]
  %v386 = vld [vmem:[%s378 + $0x1c] sm:$0xf]
  %v387 = vld [vmem:[%s378 + $0x20] sm:$0xf]
  %v388 = vld [vmem:[%s378 + $0x24] sm:$0xf]
  %v389 = vld [vmem:[%s378 + $0x28] sm:$0xf]
  %v390 = vld [vmem:[%s378 + $0x2c] sm:$0xf]
  %v391 = vld [vmem:[%s378 + $0x30] sm:$0xf]
  %v392 = vld [vmem:[%s378 + $0x34] sm:$0xf]
  %v393 = vld [vmem:[%s378 + $0x38] sm:$0xf]
  %v394 = vld [vmem:[%s378 + $0x3c] sm:$0xf]
  %v395 = vld [vmem:[%s378 + $0x40] sm:$0xf]
  %v396 = vld [vmem:[%s378 + $0x44] sm:$0xf]
  %v397 = vld [vmem:[%s378 + $0x48] sm:$0xf]
  %v398 = vld [vmem:[%s378 + $0x4c] sm:$0xf]
  %v399 = vld [vmem:[%s378 + $0x50] sm:$0xf]
  %v400 = vld [vmem:[%s378 + $0x54] sm:$0xf]
  %v401 = vld [vmem:[%s378 + $0x58] sm:$0xf]
  %v402 = vld [vmem:[%s378 + $0x5c] sm:$0xf]
  %v403 = vld [vmem:[%s378 + $0x60] sm:$0xf]
  %v404 = vld [vmem:[%s378 + $0x64] sm:$0xf]
  %v405 = vld [vmem:[%s378 + $0x68] sm:$0xf]
  %v406 = vld [vmem:[%s378 + $0x6c] sm:$0xf]
  %v407 = vld [vmem:[%s378 + $0x70] sm:$0xf]
  %v408 = vld [vmem:[%s378 + $0x74] sm:$0xf]
  %v409 = vld [vmem:[%s378 + $0x78] sm:$0xf]
  %v410 = vld [vmem:[%s378 + $0x7c] sm:$0xf]
  %v411 = vld [vmem:[%s378 + $0x80] sm:$0xf]
  %v412 = vld [vmem:[%s378 + $0x84] sm:$0xf]
  %v413 = vld [vmem:[%s378 + $0x88] sm:$0xf]
  %v414 = vld [vmem:[%s378 + $0x8c] sm:$0xf]
  %v451 = vunpack.c.l.b16 %v379
  %v452 = vunpack.c.l.b16 %v380
  %v453 = vunpack.c.l.b16 %v381
  %v454 = vunpack.c.l.b16 %v382
  %v455 = vunpack.c.l.b16 %v383
  %v456 = vunpack.c.l.b16 %v384
  %v457 = vunpack.c.l.b16 %v385
  %v458 = vunpack.c.l.b16 %v386
  %v459 = vunpack.c.l.b16 %v387
  %v460 = vunpack.c.l.b16 %v388
  %v461 = vunpack.c.l.b16 %v389
  %v462 = vunpack.c.l.b16 %v390
  %v463 = vunpack.c.l.b16 %v391
  %v464 = vunpack.c.l.b16 %v392
  %v465 = vunpack.c.l.b16 %v393
  %v466 = vunpack.c.l.b16 %v394
  %v467 = vunpack.c.l.b16 %v395
  %v468 = vunpack.c.l.b16 %v396
  %v469 = vunpack.c.l.b16 %v397
  %v470 = vunpack.c.l.b16 %v398
  %v471 = vunpack.c.l.b16 %v399
  %v472 = vunpack.c.l.b16 %v400
  %v473 = vunpack.c.l.b16 %v401
  %v474 = vunpack.c.l.b16 %v402
  %v475 = vunpack.c.l.b16 %v403
  %v476 = vunpack.c.l.b16 %v404
  %v477 = vunpack.c.l.b16 %v405
  %v478 = vunpack.c.l.b16 %v406
  %v479 = vunpack.c.l.b16 %v407
  %v480 = vunpack.c.l.b16 %v408
  %v481 = vunpack.c.l.b16 %v409
  %v482 = vunpack.c.l.b16 %v410
  %v483 = vunpack.c.l.b16 %v411
  %v484 = vunpack.c.l.b16 %v412
  %v485 = vunpack.c.l.b16 %v413
  %v486 = vunpack.c.l.b16 %v414
  %v487 = vpack.c.b16 %v452, %v451
  %v488 = vpack.c.b16 %v454, %v453
  %v489 = vpack.c.b16 %v456, %v455
  %v490 = vpack.c.b16 %v458, %v457
  %v491 = vpack.c.b16 %v460, %v459
  %v492 = vpack.c.b16 %v462, %v461
  %v493 = vpack.c.b16 %v464, %v463
  %v494 = vpack.c.b16 %v466, %v465
  %v495 = vpack.c.b16 %v468, %v467
  %v496 = vpack.c.b16 %v470, %v469
  %v497 = vpack.c.b16 %v472, %v471
  %v498 = vpack.c.b16 %v474, %v473
  %v499 = vpack.c.b16 %v476, %v475
  %v500 = vpack.c.b16 %v478, %v477
  %v501 = vpack.c.b16 %v480, %v479
  %v502 = vpack.c.b16 %v482, %v481
  %v503 = vpack.c.b16 %v484, %v483
  %v504 = vpack.c.b16 %v486, %v485
  %523 = vmatprep.subr.bf16.mxu0 0
  %524 = vmatpush1.bf16.msra.mxu0 %v487
  %525 = vmatprep.subr.bf16.mxu0 0
  %526 = vmatpush1.bf16.msra.mxu0 %v488
  %527 = vmatprep.subr.bf16.mxu0 0
  %528 = vmatpush1.bf16.msra.mxu0 %v489
  %529 = vmatprep.subr.bf16.mxu0 0
  %530 = vmatpush1.bf16.msra.mxu0 %v490
  %531 = vmatprep.subr.bf16.mxu0 0
  %532 = vmatpush1.bf16.msra.mxu0 %v491
  %533 = vmatprep.subr.bf16.mxu0 0
  %534 = vmatpush1.bf16.msra.mxu0 %v492
  %535 = vmatprep.subr.bf16.mxu0 0
  %536 = vmatpush1.bf16.msra.mxu0 %v493
  %537 = vmatprep.subr.bf16.mxu0 0
  %538 = vmatpush1.bf16.msra.mxu0 %v494
  %539 = vmatprep.subr.bf16.mxu0 0
  %540 = vmatpush1.bf16.msra.mxu0 %v495
  %541 = vmatprep.subr.bf16.mxu0 0
  %542 = vmatpush1.bf16.msra.mxu0 %v496
  %543 = vmatprep.subr.bf16.mxu0 0
  %544 = vmatpush1.bf16.msra.mxu0 %v497
  %545 = vmatprep.subr.bf16.mxu0 0
  %546 = vmatpush1.bf16.msra.mxu0 %v498
  %547 = vmatprep.subr.bf16.mxu0 0
  %548 = vmatpush1.bf16.msra.mxu0 %v499
  %549 = vmatprep.subr.bf16.mxu0 0
  %550 = vmatpush1.bf16.msra.mxu0 %v500
  %551 = vmatprep.subr.bf16.mxu0 0
  %552 = vmatpush1.bf16.msra.mxu0 %v501
  %553 = vmatprep.subr.bf16.mxu0 0
  %554 = vmatpush1.bf16.msra.mxu0 %v502
  %555 = vmatprep.mubr.bf16.mxu0 %v108
  %556 = vmatmul.mubr.bf16.gmra.mrb[0].mxu0 %v107
  %v557 = vpop.f32.mrb[0].mxu0
  %v558 = vadd.f32 0.0, %v557
  %v559 = vpop.f32.mrb[0].mxu0
  %v560 = vpop.f32.mrb[0].mxu0
  %v561 = vadd.f32 0.0, %v560
  %v562 = vpop.f32.mrb[0].mxu0
  %563 = vmatprep.mubr.bf16.mxu0 %v111
  %564 = vmatmul.mubr.bf16.gmra.mrb[0].mxu0 %v110
  %v565 = vpop.f32.mrb[0].mxu0
  %v566 = vadd.f32 0.0, %v565
  %v567 = vpop.f32.mrb[0].mxu0
  %v568 = vpop.f32.mrb[0].mxu0
  %v569 = vadd.f32 0.0, %v568
  %v570 = vpop.f32.mrb[0].mxu0
  %571 = vmatprep.mubr.bf16.mxu0 %v114
  %572 = vmatmul.mubr.bf16.gmra.mrb[0].mxu0 %v113
  %v573 = vpop.f32.mrb[0].mxu0
  %v574 = vadd.f32 0.0, %v573
  %v575 = vpop.f32.mrb[0].mxu0
  %v576 = vpop.f32.mrb[0].mxu0
  %v577 = vadd.f32 0.0, %v576
  %v578 = vpop.f32.mrb[0].mxu0
  %579 = vmatprep.mubr.bf16.mxu0 %v117
  %580 = vmatmul.mubr.bf16.gmra.mrb[0].mxu0 %v116
  %v581 = vpop.f32.mrb[0].mxu0
  %v582 = vadd.f32 0.0, %v581
  %v583 = vpop.f32.mrb[0].mxu0
  %v584 = vpop.f32.mrb[0].mxu0
  %v585 = vadd.f32 0.0, %v584
  %v586 = vpop.f32.mrb[0].mxu0
  %587 = vdwg.mxu0
  %588 = vmatprep.subr.bf16.mxu0 0
  %589 = vmatpush1.bf16.msra.mxu0 %v503
  %590 = vmatprep.subr.bf16.mxu0 0
  %591 = vmatpush1.bf16.msra.mxu0 %v504
  %592 = vmatprep.subr.bf16.mxu0 0
  %593 = vmatpush1.bf16.msra.mxu0 0
  %594 = vmatprep.subr.bf16.mxu0 0
  %595 = vmatpush1.bf16.msra.mxu0 0
  %596 = vmatprep.subr.bf16.mxu0 0
  %597 = vmatpush1.bf16.msra.mxu0 0
  %598 = vmatprep.subr.bf16.mxu0 0
  %599 = vmatpush1.bf16.msra.mxu0 0
  %600 = vmatprep.subr.bf16.mxu0 0
  %601 = vmatpush1.bf16.msra.mxu0 0
  %602 = vmatprep.subr.bf16.mxu0 0
  %603 = vmatpush1.bf16.msra.mxu0 0
  %604 = vmatprep.subr.bf16.mxu0 0
  %605 = vmatpush1.bf16.msra.mxu0 0
  %606 = vmatprep.subr.bf16.mxu0 0
  %607 = vmatpush1.bf16.msra.mxu0 0
  %608 = vmatprep.subr.bf16.mxu0 0
  %609 = vmatpush1.bf16.msra.mxu0 0
  %610 = vmatprep.subr.bf16.mxu0 0
  %611 = vmatpush1.bf16.msra.mxu0 0
  %612 = vmatprep.subr.bf16.mxu0 0
  %613 = vmatpush1.bf16.msra.mxu0 0
  %614 = vmatprep.subr.bf16.mxu0 0
  %615 = vmatpush1.bf16.msra.mxu0 0
  %616 = vmatprep.subr.bf16.mxu0 0
  %617 = vmatpush1.bf16.msra.mxu0 0
  %618 = vmatprep.subr.bf16.mxu0 0
  %619 = vmatpush1.bf16.msra.mxu0 0
  %620 = vmatprep.mubr.bf16.mxu0 0
  %621 = vmatmul.mubr.bf16.gmra.mrb[0].mxu0 %v237
  %v622 = vpop.f32.mrb[0].mxu0
  %v623 = vadd.f32 %v558, %v622
  %v624 = vpop.f32.mrb[0].mxu0
  %v625 = vpop.f32.mrb[0].mxu0
  %v626 = vadd.f32 %v561, %v625
  %v627 = vpop.f32.mrb[0].mxu0
  %628 = vmatprep.mubr.bf16.mxu0 0
  %629 = vmatmul.mubr.bf16.gmra.mrb[0].mxu0 %v240
  %v630 = vpop.f32.mrb[0].mxu0
  %v631 = vadd.f32 %v566, %v630
  %v632 = vpop.f32.mrb[0].mxu0
  %v633 = vpop.f32.mrb[0].mxu0
  %v634 = vadd.f32 %v569, %v633
  %v635 = vpop.f32.mrb[0].mxu0
  %636 = vmatprep.mubr.bf16.mxu0 0
  %637 = vmatmul.mubr.bf16.gmra.mrb[0].mxu0 %v243
  %v638 = vpop.f32.mrb[0].mxu0
  %v639 = vadd.f32 %v574, %v638
  %v640 = vpop.f32.mrb[0].mxu0
  %v641 = vpop.f32.mrb[0].mxu0
  %v642 = vadd.f32 %v577, %v641
  %v643 = vpop.f32.mrb[0].mxu0
  %644 = vmatprep.mubr.bf16.mxu0 0
  %645 = vmatmul.mubr.bf16.gmra.mrb[0].mxu0 %v246
  %v646 = vpop.f32.mrb[0].mxu0
  %v647 = vadd.f32 %v582, %v646
  %v648 = vpop.f32.mrb[0].mxu0
  %v649 = vpop.f32.mrb[0].mxu0
  %v650 = vadd.f32 %v585, %v649
  %v651 = vpop.f32.mrb[0].mxu0
  %652 = vdwg.mxu0
  %v653 = vmax.f32 %v348, %v623
  %v654 = vmax.f32 %v351, %v626
  %v655 = vmax.f32 %v356, %v631
  %v656 = vmax.f32 %v359, %v634
  %v657 = vmax.f32 %v364, %v639
  %v658 = vmax.f32 %v367, %v642
  %v659 = vmax.f32 %v372, %v647
  %v660 = vmax.f32 %v375, %v650
  %s661 = scalar_lea.vmem %s0, 288
  %v662 = vld [vmem:[%s661] sm:$0xf]
  %v663 = vld [vmem:[%s661 + $0x4] sm:$0xf]
  %v664 = vld [vmem:[%s661 + $0x8] sm:$0xf]
  %v665 = vld [vmem:[%s661 + $0xc] sm:$0xf]
  %v666 = vld [vmem:[%s661 + $0x10] sm:$0xf]
  %v667 = vld [vmem:[%s661 + $0x14] sm:$0xf]
  %v668 = vld [vmem:[%s661 + $0x18] sm:$0xf]
  %v669 = vld [vmem:[%s661 + $0x1c] sm:$0xf]
  %v670 = vld [vmem:[%s661 + $0x20] sm:$0xf]
  %v671 = vld [vmem:[%s661 + $0x24] sm:$0xf]
  %v672 = vld [vmem:[%s661 + $0x28] sm:$0xf]
  %v673 = vld [vmem:[%s661 + $0x2c] sm:$0xf]
  %v674 = vld [vmem:[%s661 + $0x30] sm:$0xf]
  %v675 = vld [vmem:[%s661 + $0x34] sm:$0xf]
  %v676 = vld [vmem:[%s661 + $0x38] sm:$0xf]
  %v677 = vld [vmem:[%s661 + $0x3c] sm:$0xf]
  %v678 = vld [vmem:[%s661 + $0x40] sm:$0xf]
  %v679 = vld [vmem:[%s661 + $0x44] sm:$0xf]
  %v680 = vld [vmem:[%s661 + $0x48] sm:$0xf]
  %v681 = vld [vmem:[%s661 + $0x4c] sm:$0xf]
  %v682 = vld [vmem:[%s661 + $0x50] sm:$0xf]
  %v683 = vld [vmem:[%s661 + $0x54] sm:$0xf]
  %v684 = vld [vmem:[%s661 + $0x58] sm:$0xf]
  %v685 = vld [vmem:[%s661 + $0x5c] sm:$0xf]
  %v686 = vld [vmem:[%s661 + $0x60] sm:$0xf]
  %v687 = vld [vmem:[%s661 + $0x64] sm:$0xf]
  %v688 = vld [vmem:[%s661 + $0x68] sm:$0xf]
  %v689 = vld [vmem:[%s661 + $0x6c] sm:$0xf]
  %v690 = vld [vmem:[%s661 + $0x70] sm:$0xf]
  %v691 = vld [vmem:[%s661 + $0x74] sm:$0xf]
  %v692 = vld [vmem:[%s661 + $0x78] sm:$0xf]
  %v693 = vld [vmem:[%s661 + $0x7c] sm:$0xf]
  %v694 = vld [vmem:[%s661 + $0x80] sm:$0xf]
  %v695 = vld [vmem:[%s661 + $0x84] sm:$0xf]
  %v696 = vld [vmem:[%s661 + $0x88] sm:$0xf]
  %v697 = vld [vmem:[%s661 + $0x8c] sm:$0xf]
  %v734 = vunpack.c.l.b16 %v662
  %v735 = vunpack.c.l.b16 %v663
  %v736 = vunpack.c.l.b16 %v664
  %v737 = vunpack.c.l.b16 %v665
  %v738 = vunpack.c.l.b16 %v666
  %v739 = vunpack.c.l.b16 %v667
  %v740 = vunpack.c.l.b16 %v668
  %v741 = vunpack.c.l.b16 %v669
  %v742 = vunpack.c.l.b16 %v670
  %v743 = vunpack.c.l.b16 %v671
  %v744 = vunpack.c.l.b16 %v672
  %v745 = vunpack.c.l.b16 %v673
  %v746 = vunpack.c.l.b16 %v674
  %v747 = vunpack.c.l.b16 %v675
  %v748 = vunpack.c.l.b16 %v676
  %v749 = vunpack.c.l.b16 %v677
  %v750 = vunpack.c.l.b16 %v678
  %v751 = vunpack.c.l.b16 %v679
  %v752 = vunpack.c.l.b16 %v680
  %v753 = vunpack.c.l.b16 %v681
  %v754 = vunpack.c.l.b16 %v682
  %v755 = vunpack.c.l.b16 %v683
  %v756 = vunpack.c.l.b16 %v684
  %v757 = vunpack.c.l.b16 %v685
  %v758 = vunpack.c.l.b16 %v686
  %v759 = vunpack.c.l.b16 %v687
  %v760 = vunpack.c.l.b16 %v688
  %v761 = vunpack.c.l.b16 %v689
  %v762 = vunpack.c.l.b16 %v690
  %v763 = vunpack.c.l.b16 %v691
  %v764 = vunpack.c.l.b16 %v692
  %v765 = vunpack.c.l.b16 %v693
  %v766 = vunpack.c.l.b16 %v694
  %v767 = vunpack.c.l.b16 %v695
  %v768 = vunpack.c.l.b16 %v696
  %v769 = vunpack.c.l.b16 %v697
  %v770 = vpack.c.b16 %v735, %v734
  %v771 = vpack.c.b16 %v737, %v736
  %v772 = vpack.c.b16 %v739, %v738
  %v773 = vpack.c.b16 %v741, %v740
  %v774 = vpack.c.b16 %v743, %v742
  %v775 = vpack.c.b16 %v745, %v744
  %v776 = vpack.c.b16 %v747, %v746
  %v777 = vpack.c.b16 %v749, %v748
  %v778 = vpack.c.b16 %v751, %v750
  %v779 = vpack.c.b16 %v753, %v752
  %v780 = vpack.c.b16 %v755, %v754
  %v781 = vpack.c.b16 %v757, %v756
  %v782 = vpack.c.b16 %v759, %v758
  %v783 = vpack.c.b16 %v761, %v760
  %v784 = vpack.c.b16 %v763, %v762
  %v785 = vpack.c.b16 %v765, %v764
  %v786 = vpack.c.b16 %v767, %v766
  %v787 = vpack.c.b16 %v769, %v768
  %806 = vmatprep.subr.bf16.mxu0 0
  %807 = vmatpush1.bf16.msra.mxu0 %v770
  %808 = vmatprep.subr.bf16.mxu0 0
  %809 = vmatpush1.bf16.msra.mxu0 %v771
  %810 = vmatprep.subr.bf16.mxu0 0
  %811 = vmatpush1.bf16.msra.mxu0 %v772
  %812 = vmatprep.subr.bf16.mxu0 0
  %813 = vmatpush1.bf16.msra.mxu0 %v773
  %814 = vmatprep.subr.bf16.mxu0 0
  %815 = vmatpush1.bf16.msra.mxu0 %v774
  %816 = vmatprep.subr.bf16.mxu0 0
  %817 = vmatpush1.bf16.msra.mxu0 %v775
  %818 = vmatprep.subr.bf16.mxu0 0
  %819 = vmatpush1.bf16.msra.mxu0 %v776
  %820 = vmatprep.subr.bf16.mxu0 0
  %821 = vmatpush1.bf16.msra.mxu0 %v777
  %822 = vmatprep.subr.bf16.mxu0 0
  %823 = vmatpush1.bf16.msra.mxu0 %v778
  %824 = vmatprep.subr.bf16.mxu0 0
  %825 = vmatpush1.bf16.msra.mxu0 %v779
  %826 = vmatprep.subr.bf16.mxu0 0
  %827 = vmatpush1.bf16.msra.mxu0 %v780
  %828 = vmatprep.subr.bf16.mxu0 0
  %829 = vmatpush1.bf16.msra.mxu0 %v781
  %830 = vmatprep.subr.bf16.mxu0 0
  %831 = vmatpush1.bf16.msra.mxu0 %v782
  %832 = vmatprep.subr.bf16.mxu0 0
  %833 = vmatpush1.bf16.msra.mxu0 %v783
  %834 = vmatprep.subr.bf16.mxu0 0
  %835 = vmatpush1.bf16.msra.mxu0 %v784
  %836 = vmatprep.subr.bf16.mxu0 0
  %837 = vmatpush1.bf16.msra.mxu0 %v785
  %838 = vmatprep.mubr.bf16.mxu0 %v108
  %839 = vmatmul.mubr.bf16.gmra.mrb[0].mxu0 %v107
  %v840 = vpop.f32.mrb[0].mxu0
  %v841 = vadd.f32 0.0, %v840
  %v842 = vpop.f32.mrb[0].mxu0
  %v843 = vpop.f32.mrb[0].mxu0
  %v844 = vadd.f32 0.0, %v843
  %v845 = vpop.f32.mrb[0].mxu0
  %846 = vmatprep.mubr.bf16.mxu0 %v111
  %847 = vmatmul.mubr.bf16.gmra.mrb[0].mxu0 %v110
  %v848 = vpop.f32.mrb[0].mxu0
  %v849 = vadd.f32 0.0, %v848
  %v850 = vpop.f32.mrb[0].mxu0
  %v851 = vpop.f32.mrb[0].mxu0
  %v852 = vadd.f32 0.0, %v851
  %v853 = vpop.f32.mrb[0].mxu0
  %854 = vmatprep.mubr.bf16.mxu0 %v114
  %855 = vmatmul.mubr.bf16.gmra.mrb[0].mxu0 %v113
  %v856 = vpop.f32.mrb[0].mxu0
  %v857 = vadd.f32 0.0, %v856
  %v858 = vpop.f32.mrb[0].mxu0
  %v859 = vpop.f32.mrb[0].mxu0
  %v860 = vadd.f32 0.0, %v859
  %v861 = vpop.f32.mrb[0].mxu0
  %862 = vmatprep.mubr.bf16.mxu0 %v117
  %863 = vmatmul.mubr.bf16.gmra.mrb[0].mxu0 %v116
  %v864 = vpop.f32.mrb[0].mxu0
  %v865 = vadd.f32 0.0, %v864
  %v866 = vpop.f32.mrb[0].mxu0
  %v867 = vpop.f32.mrb[0].mxu0
  %v868 = vadd.f32 0.0, %v867
  %v869 = vpop.f32.mrb[0].mxu0
  %870 = vdwg.mxu0
  %871 = vmatprep.subr.bf16.mxu0 0
  %872 = vmatpush1.bf16.msra.mxu0 %v786
  %873 = vmatprep.subr.bf16.mxu0 0
  %874 = vmatpush1.bf16.msra.mxu0 %v787
  %875 = vmatprep.subr.bf16.mxu0 0
  %876 = vmatpush1.bf16.msra.mxu0 0
  %877 = vmatprep.subr.bf16.mxu0 0
  %878 = vmatpush1.bf16.msra.mxu0 0
  %879 = vmatprep.subr.bf16.mxu0 0
  %880 = vmatpush1.bf16.msra.mxu0 0
  %881 = vmatprep.subr.bf16.mxu0 0
  %882 = vmatpush1.bf16.msra.mxu0 0
  %883 = vmatprep.subr.bf16.mxu0 0
  %884 = vmatpush1.bf16.msra.mxu0 0
  %885 = vmatprep.subr.bf16.mxu0 0
  %886 = vmatpush1.bf16.msra.mxu0 0
  %887 = vmatprep.subr.bf16.mxu0 0
  %888 = vmatpush1.bf16.msra.mxu0 0
  %889 = vmatprep.subr.bf16.mxu0 0
  %890 = vmatpush1.bf16.msra.mxu0 0
  %891 = vmatprep.subr.bf16.mxu0 0
  %892 = vmatpush1.bf16.msra.mxu0 0
  %893 = vmatprep.subr.bf16.mxu0 0
  %894 = vmatpush1.bf16.msra.mxu0 0
  %895 = vmatprep.subr.bf16.mxu0 0
  %896 = vmatpush1.bf16.msra.mxu0 0
  %897 = vmatprep.subr.bf16.mxu0 0
  %898 = vmatpush1.bf16.msra.mxu0 0
  %899 = vmatprep.subr.bf16.mxu0 0
  %900 = vmatpush1.bf16.msra.mxu0 0
  %901 = vmatprep.subr.bf16.mxu0 0
  %902 = vmatpush1.bf16.msra.mxu0 0
  %903 = vmatprep.mubr.bf16.mxu0 0
  %904 = vmatmul.mubr.bf16.gmra.mrb[0].mxu0 %v237
  %v905 = vpop.f32.mrb[0].mxu0
  %v906 = vadd.f32 %v841, %v905
  %v907 = vpop.f32.mrb[0].mxu0
  %v908 = vpop.f32.mrb[0].mxu0
  %v909 = vadd.f32 %v844, %v908
  %v910 = vpop.f32.mrb[0].mxu0
  %911 = vmatprep.mubr.bf16.mxu0 0
  %912 = vmatmul.mubr.bf16.gmra.mrb[0].mxu0 %v240
  %v913 = vpop.f32.mrb[0].mxu0
  %v914 = vadd.f32 %v849, %v913
  %v915 = vpop.f32.mrb[0].mxu0
  %v916 = vpop.f32.mrb[0].mxu0
  %v917 = vadd.f32 %v852, %v916
  %v918 = vpop.f32.mrb[0].mxu0
  %919 = vmatprep.mubr.bf16.mxu0 0
  %920 = vmatmul.mubr.bf16.gmra.mrb[0].mxu0 %v243
  %v921 = vpop.f32.mrb[0].mxu0
  %v922 = vadd.f32 %v857, %v921
  %v923 = vpop.f32.mrb[0].mxu0
  %v924 = vpop.f32.mrb[0].mxu0
  %v925 = vadd.f32 %v860, %v924
  %v926 = vpop.f32.mrb[0].mxu0
  %927 = vmatprep.mubr.bf16.mxu0 0
  %928 = vmatmul.mubr.bf16.gmra.mrb[0].mxu0 %v246
  %v929 = vpop.f32.mrb[0].mxu0
  %v930 = vadd.f32 %v865, %v929
  %v931 = vpop.f32.mrb[0].mxu0
  %v932 = vpop.f32.mrb[0].mxu0
  %v933 = vadd.f32 %v868, %v932
  %v934 = vpop.f32.mrb[0].mxu0
  %935 = vdwg.mxu0
  %v936 = vmax.f32 %v653, %v906
  %v937 = vmax.f32 %v654, %v909
  %v938 = vmax.f32 %v655, %v914
  %v939 = vmax.f32 %v656, %v917
  %v940 = vmax.f32 %v657, %v922
  %v941 = vmax.f32 %v658, %v925
  %v942 = vmax.f32 %v659, %v930
  %v943 = vmax.f32 %v660, %v933
  %s944 = scalar_lea.vmem %s0, 432
  %v945 = vld [vmem:[%s944] sm:$0xf]
  %v946 = vld [vmem:[%s944 + $0x4] sm:$0xf]
  %v947 = vld [vmem:[%s944 + $0x8] sm:$0xf]
  %v948 = vld [vmem:[%s944 + $0xc] sm:$0xf]
  %v949 = vld [vmem:[%s944 + $0x10] sm:$0xf]
  %v950 = vld [vmem:[%s944 + $0x14] sm:$0xf]
  %v951 = vld [vmem:[%s944 + $0x18] sm:$0xf]
  %v952 = vld [vmem:[%s944 + $0x1c] sm:$0xf]
  %v953 = vld [vmem:[%s944 + $0x20] sm:$0xf]
  %v954 = vld [vmem:[%s944 + $0x24] sm:$0xf]
  %v955 = vld [vmem:[%s944 + $0x28] sm:$0xf]
  %v956 = vld [vmem:[%s944 + $0x2c] sm:$0xf]
  %v957 = vld [vmem:[%s944 + $0x30] sm:$0xf]
  %v958 = vld [vmem:[%s944 + $0x34] sm:$0xf]
  %v959 = vld [vmem:[%s944 + $0x38] sm:$0xf]
  %v960 = vld [vmem:[%s944 + $0x3c] sm:$0xf]
  %v961 = vld [vmem:[%s944 + $0x40] sm:$0xf]
  %v962 = vld [vmem:[%s944 + $0x44] sm:$0xf]
  %v963 = vld [vmem:[%s944 + $0x48] sm:$0xf]
  %v964 = vld [vmem:[%s944 + $0x4c] sm:$0xf]
  %v965 = vld [vmem:[%s944 + $0x50] sm:$0xf]
  %v966 = vld [vmem:[%s944 + $0x54] sm:$0xf]
  %v967 = vld [vmem:[%s944 + $0x58] sm:$0xf]
  %v968 = vld [vmem:[%s944 + $0x5c] sm:$0xf]
  %v969 = vld [vmem:[%s944 + $0x60] sm:$0xf]
  %v970 = vld [vmem:[%s944 + $0x64] sm:$0xf]
  %v971 = vld [vmem:[%s944 + $0x68] sm:$0xf]
  %v972 = vld [vmem:[%s944 + $0x6c] sm:$0xf]
  %v973 = vld [vmem:[%s944 + $0x70] sm:$0xf]
  %v974 = vld [vmem:[%s944 + $0x74] sm:$0xf]
  %v975 = vld [vmem:[%s944 + $0x78] sm:$0xf]
  %v976 = vld [vmem:[%s944 + $0x7c] sm:$0xf]
  %v977 = vld [vmem:[%s944 + $0x80] sm:$0xf]
  %v978 = vld [vmem:[%s944 + $0x84] sm:$0xf]
  %v979 = vld [vmem:[%s944 + $0x88] sm:$0xf]
  %v980 = vld [vmem:[%s944 + $0x8c] sm:$0xf]
  %v1017 = vunpack.c.l.b16 %v945
  %v1018 = vunpack.c.l.b16 %v946
  %v1019 = vunpack.c.l.b16 %v947
  %v1020 = vunpack.c.l.b16 %v948
  %v1021 = vunpack.c.l.b16 %v949
  %v1022 = vunpack.c.l.b16 %v950
  %v1023 = vunpack.c.l.b16 %v951
  %v1024 = vunpack.c.l.b16 %v952
  %v1025 = vunpack.c.l.b16 %v953
  %v1026 = vunpack.c.l.b16 %v954
  %v1027 = vunpack.c.l.b16 %v955
  %v1028 = vunpack.c.l.b16 %v956
  %v1029 = vunpack.c.l.b16 %v957
  %v1030 = vunpack.c.l.b16 %v958
  %v1031 = vunpack.c.l.b16 %v959
  %v1032 = vunpack.c.l.b16 %v960
  %v1033 = vunpack.c.l.b16 %v961
  %v1034 = vunpack.c.l.b16 %v962
  %v1035 = vunpack.c.l.b16 %v963
  %v1036 = vunpack.c.l.b16 %v964
  %v1037 = vunpack.c.l.b16 %v965
  %v1038 = vunpack.c.l.b16 %v966
  %v1039 = vunpack.c.l.b16 %v967
  %v1040 = vunpack.c.l.b16 %v968
  %v1041 = vunpack.c.l.b16 %v969
  %v1042 = vunpack.c.l.b16 %v970
  %v1043 = vunpack.c.l.b16 %v971
  %v1044 = vunpack.c.l.b16 %v972
  %v1045 = vunpack.c.l.b16 %v973
  %v1046 = vunpack.c.l.b16 %v974
  %v1047 = vunpack.c.l.b16 %v975
  %v1048 = vunpack.c.l.b16 %v976
  %v1049 = vunpack.c.l.b16 %v977
  %v1050 = vunpack.c.l.b16 %v978
  %v1051 = vunpack.c.l.b16 %v979
  %v1052 = vunpack.c.l.b16 %v980
  %v1053 = vpack.c.b16 %v1018, %v1017
  %v1054 = vpack.c.b16 %v1020, %v1019
  %v1055 = vpack.c.b16 %v1022, %v1021
  %v1056 = vpack.c.b16 %v1024, %v1023
  %v1057 = vpack.c.b16 %v1026, %v1025
  %v1058 = vpack.c.b16 %v1028, %v1027
  %v1059 = vpack.c.b16 %v1030, %v1029
  %v1060 = vpack.c.b16 %v1032, %v1031
  %v1061 = vpack.c.b16 %v1034, %v1033
  %v1062 = vpack.c.b16 %v1036, %v1035
  %v1063 = vpack.c.b16 %v1038, %v1037
  %v1064 = vpack.c.b16 %v1040, %v1039
  %v1065 = vpack.c.b16 %v1042, %v1041
  %v1066 = vpack.c.b16 %v1044, %v1043
  %v1067 = vpack.c.b16 %v1046, %v1045
  %v1068 = vpack.c.b16 %v1048, %v1047
  %v1069 = vpack.c.b16 %v1050, %v1049
  %v1070 = vpack.c.b16 %v1052, %v1051
  %1089 = vmatprep.subr.bf16.mxu0 0
  %1090 = vmatpush1.bf16.msra.mxu0 %v1053
  %1091 = vmatprep.subr.bf16.mxu0 0
  %1092 = vmatpush1.bf16.msra.mxu0 %v1054
  %1093 = vmatprep.subr.bf16.mxu0 0
  %1094 = vmatpush1.bf16.msra.mxu0 %v1055
  %1095 = vmatprep.subr.bf16.mxu0 0
  %1096 = vmatpush1.bf16.msra.mxu0 %v1056
  %1097 = vmatprep.subr.bf16.mxu0 0
  %1098 = vmatpush1.bf16.msra.mxu0 %v1057
  %1099 = vmatprep.subr.bf16.mxu0 0
  %1100 = vmatpush1.bf16.msra.mxu0 %v1058
  %1101 = vmatprep.subr.bf16.mxu0 0
  %1102 = vmatpush1.bf16.msra.mxu0 %v1059
  %1103 = vmatprep.subr.bf16.mxu0 0
  %1104 = vmatpush1.bf16.msra.mxu0 %v1060
  %1105 = vmatprep.subr.bf16.mxu0 0
  %1106 = vmatpush1.bf16.msra.mxu0 %v1061
  %1107 = vmatprep.subr.bf16.mxu0 0
  %1108 = vmatpush1.bf16.msra.mxu0 %v1062
  %1109 = vmatprep.subr.bf16.mxu0 0
  %1110 = vmatpush1.bf16.msra.mxu0 %v1063
  %1111 = vmatprep.subr.bf16.mxu0 0
  %1112 = vmatpush1.bf16.msra.mxu0 %v1064
  %1113 = vmatprep.subr.bf16.mxu0 0
  %1114 = vmatpush1.bf16.msra.mxu0 %v1065
  %1115 = vmatprep.subr.bf16.mxu0 0
  %1116 = vmatpush1.bf16.msra.mxu0 %v1066
  %1117 = vmatprep.subr.bf16.mxu0 0
  %1118 = vmatpush1.bf16.msra.mxu0 %v1067
  %1119 = vmatprep.subr.bf16.mxu0 0
  %1120 = vmatpush1.bf16.msra.mxu0 %v1068
  %1121 = vmatprep.mubr.bf16.mxu0 %v108
  %1122 = vmatmul.mubr.bf16.gmra.mrb[0].mxu0 %v107
  %v1123 = vpop.f32.mrb[0].mxu0
  %v1124 = vadd.f32 0.0, %v1123
  %v1125 = vpop.f32.mrb[0].mxu0
  %v1126 = vpop.f32.mrb[0].mxu0
  %v1127 = vadd.f32 0.0, %v1126
  %v1128 = vpop.f32.mrb[0].mxu0
  %1129 = vmatprep.mubr.bf16.mxu0 %v111
  %1130 = vmatmul.mubr.bf16.gmra.mrb[0].mxu0 %v110
  %v1131 = vpop.f32.mrb[0].mxu0
  %v1132 = vadd.f32 0.0, %v1131
  %v1133 = vpop.f32.mrb[0].mxu0
  %v1134 = vpop.f32.mrb[0].mxu0
  %v1135 = vadd.f32 0.0, %v1134
  %v1136 = vpop.f32.mrb[0].mxu0
  %1137 = vmatprep.mubr.bf16.mxu0 %v114
  %1138 = vmatmul.mubr.bf16.gmra.mrb[0].mxu0 %v113
  %v1139 = vpop.f32.mrb[0].mxu0
  %v1140 = vadd.f32 0.0, %v1139
  %v1141 = vpop.f32.mrb[0].mxu0
  %v1142 = vpop.f32.mrb[0].mxu0
  %v1143 = vadd.f32 0.0, %v1142
  %v1144 = vpop.f32.mrb[0].mxu0
  %1145 = vmatprep.mubr.bf16.mxu0 %v117
  %1146 = vmatmul.mubr.bf16.gmra.mrb[0].mxu0 %v116
  %v1147 = vpop.f32.mrb[0].mxu0
  %v1148 = vadd.f32 0.0, %v1147
  %v1149 = vpop.f32.mrb[0].mxu0
  %v1150 = vpop.f32.mrb[0].mxu0
  %v1151 = vadd.f32 0.0, %v1150
  %v1152 = vpop.f32.mrb[0].mxu0
  %1153 = vdwg.mxu0
  %1154 = vmatprep.subr.bf16.mxu0 0
  %1155 = vmatpush1.bf16.msra.mxu0 %v1069
  %1156 = vmatprep.subr.bf16.mxu0 0
  %1157 = vmatpush1.bf16.msra.mxu0 %v1070
  %1158 = vmatprep.subr.bf16.mxu0 0
  %1159 = vmatpush1.bf16.msra.mxu0 0
  %1160 = vmatprep.subr.bf16.mxu0 0
  %1161 = vmatpush1.bf16.msra.mxu0 0
  %1162 = vmatprep.subr.bf16.mxu0 0
  %1163 = vmatpush1.bf16.msra.mxu0 0
  %1164 = vmatprep.subr.bf16.mxu0 0
  %1165 = vmatpush1.bf16.msra.mxu0 0
  %1166 = vmatprep.subr.bf16.mxu0 0
  %1167 = vmatpush1.bf16.msra.mxu0 0
  %1168 = vmatprep.subr.bf16.mxu0 0
  %1169 = vmatpush1.bf16.msra.mxu0 0
  %1170 = vmatprep.subr.bf16.mxu0 0
  %1171 = vmatpush1.bf16.msra.mxu0 0
  %1172 = vmatprep.subr.bf16.mxu0 0
  %1173 = vmatpush1.bf16.msra.mxu0 0
  %1174 = vmatprep.subr.bf16.mxu0 0
  %1175 = vmatpush1.bf16.msra.mxu0 0
  %1176 = vmatprep.subr.bf16.mxu0 0
  %1177 = vmatpush1.bf16.msra.mxu0 0
  %1178 = vmatprep.subr.bf16.mxu0 0
  %1179 = vmatpush1.bf16.msra.mxu0 0
  %1180 = vmatprep.subr.bf16.mxu0 0
  %1181 = vmatpush1.bf16.msra.mxu0 0
  %1182 = vmatprep.subr.bf16.mxu0 0
  %1183 = vmatpush1.bf16.msra.mxu0 0
  %1184 = vmatprep.subr.bf16.mxu0 0
  %1185 = vmatpush1.bf16.msra.mxu0 0
  %1186 = vmatprep.mubr.bf16.mxu0 0
  %1187 = vmatmul.mubr.bf16.gmra.mrb[0].mxu0 %v237
  %v1188 = vpop.f32.mrb[0].mxu0
  %v1189 = vadd.f32 %v1124, %v1188
  %v1190 = vpop.f32.mrb[0].mxu0
  %v1191 = vpop.f32.mrb[0].mxu0
  %v1192 = vadd.f32 %v1127, %v1191
  %v1193 = vpop.f32.mrb[0].mxu0
  %1194 = vmatprep.mubr.bf16.mxu0 0
  %1195 = vmatmul.mubr.bf16.gmra.mrb[0].mxu0 %v240
  %v1196 = vpop.f32.mrb[0].mxu0
  %v1197 = vadd.f32 %v1132, %v1196
  %v1198 = vpop.f32.mrb[0].mxu0
  %v1199 = vpop.f32.mrb[0].mxu0
  %v1200 = vadd.f32 %v1135, %v1199
  %v1201 = vpop.f32.mrb[0].mxu0
  %1202 = vmatprep.mubr.bf16.mxu0 0
  %1203 = vmatmul.mubr.bf16.gmra.mrb[0].mxu0 %v243
  %v1204 = vpop.f32.mrb[0].mxu0
  %v1205 = vadd.f32 %v1140, %v1204
  %v1206 = vpop.f32.mrb[0].mxu0
  %v1207 = vpop.f32.mrb[0].mxu0
  %v1208 = vadd.f32 %v1143, %v1207
  %v1209 = vpop.f32.mrb[0].mxu0
  %1210 = vmatprep.mubr.bf16.mxu0 0
  %1211 = vmatmul.mubr.bf16.gmra.mrb[0].mxu0 %v246
  %v1212 = vpop.f32.mrb[0].mxu0
  %v1213 = vadd.f32 %v1148, %v1212
  %v1214 = vpop.f32.mrb[0].mxu0
  %v1215 = vpop.f32.mrb[0].mxu0
  %v1216 = vadd.f32 %v1151, %v1215
  %v1217 = vpop.f32.mrb[0].mxu0
  %1218 = vdwg.mxu0
  %v1219 = vmax.f32 %v936, %v1189
  %v1220 = vmax.f32 %v937, %v1192
  %v1221 = vmax.f32 %v938, %v1197
  %v1222 = vmax.f32 %v939, %v1200
  %v1223 = vmax.f32 %v940, %v1205
  %v1224 = vmax.f32 %v941, %v1208
  %v1225 = vmax.f32 %v942, %v1213
  %v1226 = vmax.f32 %v943, %v1216
  %v1227 = vld [vmem:[%s2] sm:$0xff]
  %v1228 = vld [vmem:[%s2 + $0x8] sm:$0xff]
  %v1229 = vld [vmem:[%s2 + $0x10] sm:$0xff]
  %v1230 = vld [vmem:[%s2 + $0x18] sm:$0xff]
  %v1231 = vld [vmem:[%s2 + $0x20] sm:$0xff]
  %v1232 = vld [vmem:[%s2 + $0x28] sm:$0xff]
  %v1233 = vld [vmem:[%s2 + $0x30] sm:$0xff]
  %v1234 = vld [vmem:[%s2 + $0x38] sm:$0xff]
  %1236 = vset.pattern.permute.xlu0 0
  %1237 = vperm.xlu0 %1236, %v1227
  %v1238 = vpop.permute.xlu0 %1237
  %1241 = vset.pattern.permute.xlu0 0
  %1242 = vperm.xlu0 %1241, %v1228
  %v1243 = vpop.permute.xlu0 %1242
  %1246 = vset.pattern.permute.xlu0 0
  %1247 = vperm.xlu0 %1246, %v1229
  %v1248 = vpop.permute.xlu0 %1247
  %1251 = vset.pattern.permute.xlu0 0
  %1252 = vperm.xlu0 %1251, %v1230
  %v1253 = vpop.permute.xlu0 %1252
  %1256 = vset.pattern.permute.xlu0 0
  %1257 = vperm.xlu0 %1256, %v1231
  %v1258 = vpop.permute.xlu0 %1257
  %1261 = vset.pattern.permute.xlu0 0
  %1262 = vperm.xlu0 %1261, %v1232
  %v1263 = vpop.permute.xlu0 %1262
  %1266 = vset.pattern.permute.xlu0 0
  %1267 = vperm.xlu0 %1266, %v1233
  %v1268 = vpop.permute.xlu0 %1267
  %1271 = vset.pattern.permute.xlu0 0
  %1272 = vperm.xlu0 %1271, %v1234
  %v1273 = vpop.permute.xlu0 %1272
  %v1275 = vadd.f32 %v1219, %v1238
  %v1276 = vadd.f32 %v1220, %v1243
  %v1277 = vadd.f32 %v1221, %v1248
  %v1278 = vadd.f32 %v1222, %v1253
  %v1279 = vadd.f32 %v1223, %v1258
  %v1280 = vadd.f32 %v1224, %v1263
  %v1281 = vadd.f32 %v1225, %v1268
  %v1282 = vadd.f32 %v1226, %v1273
  %v1283 = vmax.f32 %v1275, 0.0
  %v1284 = vmax.f32 %v1276, 0.0
  %v1285 = vmax.f32 %v1277, 0.0
  %v1286 = vmax.f32 %v1278, 0.0
  %v1287 = vmax.f32 %v1279, 0.0
  %v1288 = vmax.f32 %v1280, 0.0
  %v1289 = vmax.f32 %v1281, 0.0
  %v1290 = vmax.f32 %v1282, 0.0
  %vm1291 = vcmask 408576
  %1292 = vst.msk [vmem:[%s3] sm:$0xff] %vm1291, %v1283
  %1293 = vst.msk [vmem:[%s3 + $0x8] sm:$0xff] %vm1291, %v1284
  %1294 = vst.msk [vmem:[%s3 + $0x10] sm:$0xff] %vm1291, %v1285
  %1295 = vst.msk [vmem:[%s3 + $0x18] sm:$0xff] %vm1291, %v1286
  %1296 = vst.msk [vmem:[%s3 + $0x20] sm:$0xff] %vm1291, %v1287
  %1297 = vst.msk [vmem:[%s3 + $0x28] sm:$0xff] %vm1291, %v1288
  %1298 = vst.msk [vmem:[%s3 + $0x30] sm:$0xff] %vm1291, %v1289
  %1299 = vst.msk [vmem:[%s3 + $0x38] sm:$0xff] %vm1291, %v1290
  // Predicated region
  $region14: #{cnn_forward.8} parent=0 // pred_check
    _
  $region15: #{cnn_forward.8} parent=0 // pred_check_branch
    %1301 = sbr.rel (0) target = $region17
  $region16: #{cnn_forward.8} parent=0 // pred_region
    _
  $region17: #{cnn_forward.8} parent=0 // pred_fallthru
    _
  // Predicated region
  $region18: #{cnn_forward.8} parent=0 // pred_check
    _
  $region19: #{cnn_forward.8} parent=0 // pred_check_branch
    %1303 = sbr.rel (0) target = $region21
  $region20: #{cnn_forward.8} parent=0 // pred_region
    _
  $region21: #{cnn_forward.8} parent=0 // pred_fallthru
    _

// kernel: cnn_forward.9
$region0: #{cnn_forward.9}
  #allocation0 [shape = 'u32[]', space=smem, size = 0x4, offset = 0x4, fixed_abs, tag = 'smem constant byte address 0x4 - core index']
  #allocation1 [shape = 'u32[144,128]{1,0:T(1,128)}', space=vmem, size = 0x12000, scoped, tag = 'internal scratch']
  %s0 = inlined_call_operand.vmem [shape: bf16[1600,2], index: 0, kind: input, shape index: {}]
  %s1 = inlined_call_operand.vmem [shape: bf16[64,1600], index: 1, kind: input, shape index: {}]
  %s2 = inlined_call_operand.vmem [shape: f32[64,1], index: 2, kind: input, shape index: {}]
  %s3 = inlined_call_operand.vmem [shape: f32[2,64], index: 3, kind: input, shape index: {}]
  %s4 = inlined_call_operand.vmem [shape: f32[2,1], index: 4, kind: input, shape index: {}]
  %s5 = inlined_call_operand.vmem [shape: f32[2,2], index: 5, kind: output, shape index: {}]
  %s6 = sld [smem:[#allocation0]]
  $region30: #{cnn_forward.9} parent=0
    _
  %s8 = ssub.s32 1, %s6
  %s9 = scalar_select 0, %s8, %s6
  // Predicated region
  $region2: #{cnn_forward.9} parent=0 // pred_check
    _
  $region3: #{cnn_forward.9} parent=0 // pred_check_branch
    %11 = sbr.rel (0) target = $region5
  $region4: #{cnn_forward.9} parent=0 // pred_region
    _
  $region5: #{cnn_forward.9} parent=0 // pred_fallthru
    _
  // Predicated region
  $region6: #{cnn_forward.9} parent=0 // pred_check
    _
  $region7: #{cnn_forward.9} parent=0 // pred_check_branch
    %13 = sbr.rel (0) target = $region9
  $region8: #{cnn_forward.9} parent=0 // pred_region
    _
  $region9: #{cnn_forward.9} parent=0 // pred_fallthru
    _
  // Predicated region
  $region10: #{cnn_forward.9} parent=0 // pred_check
    _
  $region11: #{cnn_forward.9} parent=0 // pred_check_branch
    %15 = sbr.rel (0) target = $region13
  $region12: #{cnn_forward.9} parent=0 // pred_region
    _
  $region13: #{cnn_forward.9} parent=0 // pred_fallthru
    _
  // Predicated region
  $region14: #{cnn_forward.9} parent=0 // pred_check
    _
  $region15: #{cnn_forward.9} parent=0 // pred_check_branch
    %17 = sbr.rel (0) target = $region17
  $region16: #{cnn_forward.9} parent=0 // pred_region
    _
  $region17: #{cnn_forward.9} parent=0 // pred_fallthru
    _
  // Predicated region
  $region18: #{cnn_forward.9} parent=0 // pred_check
    _
  $region19: #{cnn_forward.9} parent=0 // pred_check_branch
    %19 = sbr.rel (0) target = $region21
  $region20: #{cnn_forward.9} parent=0 // pred_region
    _
  $region21: #{cnn_forward.9} parent=0 // pred_fallthru
    _
  %v21 = vld [vmem:[%s1] sm:$0xff]
  %v22 = vld [vmem:[%s1 + $0x8] sm:$0xff]
  %v23 = vld [vmem:[%s1 + $0x10] sm:$0xff]
  %v24 = vld [vmem:[%s1 + $0x18] sm:$0xff]
  %v25 = vld [vmem:[%s1 + $0x20] sm:$0xff]
  %v26 = vld [vmem:[%s1 + $0x28] sm:$0xff]
  %v27 = vld [vmem:[%s1 + $0x30] sm:$0xf]
  %v28 = vld [vmem:[%s1 + $0x34] sm:$0xff]
  %v29 = vld [vmem:[%s1 + $0x3c] sm:$0xff]
  %v30 = vld [vmem:[%s1 + $0x44] sm:$0xff]
  %v31 = vld [vmem:[%s1 + $0x4c] sm:$0xff]
  %v32 = vld [vmem:[%s1 + $0x54] sm:$0xff]
  %v33 = vld [vmem:[%s1 + $0x5c] sm:$0xff]
  %v34 = vld [vmem:[%s1 + $0x64] sm:$0xf]
  %v35 = vld [vmem:[%s1 + $0x68] sm:$0xff]
  %v36 = vld [vmem:[%s1 + $0x70] sm:$0xff]
  %v37 = vld [vmem:[%s1 + $0x78] sm:$0xff]
  %v38 = vld [vmem:[%s1 + $0x80] sm:$0xff]
  %v39 = vld [vmem:[%s1 + $0x88] sm:$0xff]
  %v40 = vld [vmem:[%s1 + $0x90] sm:$0xff]
  %v41 = vld [vmem:[%s1 + $0x98] sm:$0xf]
  %v42 = vld [vmem:[%s1 + $0x9c] sm:$0xff]
  %v43 = vld [vmem:[%s1 + $0xa4] sm:$0xff]
  %v44 = vld [vmem:[%s1 + $0xac] sm:$0xff]
  %v45 = vld [vmem:[%s1 + $0xb4] sm:$0xff]
  %v46 = vld [vmem:[%s1 + $0xbc] sm:$0xff]
  %v47 = vld [vmem:[%s1 + $0xc4] sm:$0xff]
  %v48 = vld [vmem:[%s1 + $0xcc] sm:$0xf]
  %v49 = vld [vmem:[%s1 + $0xd0] sm:$0xff]
  %v50 = vld [vmem:[%s1 + $0xd8] sm:$0xff]
  %v51 = vld [vmem:[%s1 + $0xe0] sm:$0xff]
  %v52 = vld [vmem:[%s1 + $0xe8] sm:$0xff]
  %v53 = vld [vmem:[%s1 + $0xf0] sm:$0xff]
  %v54 = vld [vmem:[%s1 + $0xf8] sm:$0xff]
  %v55 = vld [vmem:[%s1 + $0x100] sm:$0xf]
  %v56 = vld [vmem:[%s1 + $0x104] sm:$0xff]
  %v57 = vld [vmem:[%s1 + $0x10c] sm:$0xff]
  %v58 = vld [vmem:[%s1 + $0x114] sm:$0xff]
  %v59 = vld [vmem:[%s1 + $0x11c] sm:$0xff]
  %v60 = vld [vmem:[%s1 + $0x124] sm:$0xff]
  %v61 = vld [vmem:[%s1 + $0x12c] sm:$0xff]
  %v62 = vld [vmem:[%s1 + $0x134] sm:$0xf]
  %v63 = vld [vmem:[%s1 + $0x138] sm:$0xff]
  %v64 = vld [vmem:[%s1 + $0x140] sm:$0xff]
  %v65 = vld [vmem:[%s1 + $0x148] sm:$0xff]
  %v66 = vld [vmem:[%s1 + $0x150] sm:$0xff]
  %v67 = vld [vmem:[%s1 + $0x158] sm:$0xff]
  %v68 = vld [vmem:[%s1 + $0x160] sm:$0xff]
  %v69 = vld [vmem:[%s1 + $0x168] sm:$0xf]
  %v70 = vld [vmem:[%s1 + $0x16c] sm:$0xff]
  %v71 = vld [vmem:[%s1 + $0x174] sm:$0xff]
  %v72 = vld [vmem:[%s1 + $0x17c] sm:$0xff]
  %v73 = vld [vmem:[%s1 + $0x184] sm:$0xff]
  %v74 = vld [vmem:[%s1 + $0x18c] sm:$0xff]
  %v75 = vld [vmem:[%s1 + $0x194] sm:$0xff]
  %v76 = vld [vmem:[%s1 + $0x19c] sm:$0xf]
  %v77 = vld [vmem:[%s0] sm:$0xf]
  %v78 = vld [vmem:[%s0 + $0x4] sm:$0xf]
  %v79 = vld [vmem:[%s0 + $0x8] sm:$0xf]
  %v80 = vld [vmem:[%s0 + $0xc] sm:$0xf]
  %v81 = vld [vmem:[%s0 + $0x10] sm:$0xf]
  %v82 = vld [vmem:[%s0 + $0x14] sm:$0xf]
  %v83 = vld [vmem:[%s0 + $0x18] sm:$0xf]
  %v84 = vld [vmem:[%s0 + $0x1c] sm:$0xf]
  %v85 = vld [vmem:[%s0 + $0x20] sm:$0xf]
  %v86 = vld [vmem:[%s0 + $0x24] sm:$0xf]
  %v87 = vld [vmem:[%s0 + $0x28] sm:$0xf]
  %v88 = vld [vmem:[%s0 + $0x2c] sm:$0xf]
  %v89 = vld [vmem:[%s0 + $0x30] sm:$0xf]
  %v90 = vld [vmem:[%s0 + $0x34] sm:$0xf]
  %v91 = vld [vmem:[%s0 + $0x38] sm:$0xf]
  %v92 = vld [vmem:[%s0 + $0x3c] sm:$0xf]
  %v93 = vld [vmem:[%s0 + $0x40] sm:$0xf]
  %v94 = vld [vmem:[%s0 + $0x44] sm:$0xf]
  %v95 = vld [vmem:[%s0 + $0x48] sm:$0xf]
  %v96 = vld [vmem:[%s0 + $0x4c] sm:$0xf]
  %v97 = vld [vmem:[%s0 + $0x50] sm:$0xf]
  %v98 = vld [vmem:[%s0 + $0x54] sm:$0xf]
  %v99 = vld [vmem:[%s0 + $0x58] sm:$0xf]
  %v100 = vld [vmem:[%s0 + $0x5c] sm:$0xf]
  %v101 = vld [vmem:[%s0 + $0x60] sm:$0xf]
  %v102 = vld [vmem:[%s0 + $0x64] sm:$0xf]
  %v103 = vld [vmem:[%s0 + $0x68] sm:$0xf]
  %v104 = vld [vmem:[%s0 + $0x6c] sm:$0xf]
  %v105 = vld [vmem:[%s0 + $0x70] sm:$0xf]
  %v106 = vld [vmem:[%s0 + $0x74] sm:$0xf]
  %v107 = vld [vmem:[%s0 + $0x78] sm:$0xf]
  %v108 = vld [vmem:[%s0 + $0x7c] sm:$0xf]
  %v109 = vld [vmem:[%s0 + $0x80] sm:$0xf]
  %v110 = vld [vmem:[%s0 + $0x84] sm:$0xf]
  %v111 = vld [vmem:[%s0 + $0x88] sm:$0xf]
  %v112 = vld [vmem:[%s0 + $0x8c] sm:$0xf]
  %v113 = vld [vmem:[%s0 + $0x90] sm:$0xf]
  %v114 = vld [vmem:[%s0 + $0x94] sm:$0xf]
  %v115 = vld [vmem:[%s0 + $0x98] sm:$0xf]
  %v116 = vld [vmem:[%s0 + $0x9c] sm:$0xf]
  %v117 = vld [vmem:[%s0 + $0xa0] sm:$0xf]
  %v118 = vld [vmem:[%s0 + $0xa4] sm:$0xf]
  %v119 = vld [vmem:[%s0 + $0xa8] sm:$0xf]
  %v120 = vld [vmem:[%s0 + $0xac] sm:$0xf]
  %v121 = vld [vmem:[%s0 + $0xb0] sm:$0xf]
  %v122 = vld [vmem:[%s0 + $0xb4] sm:$0xf]
  %v123 = vld [vmem:[%s0 + $0xb8] sm:$0xf]
  %v124 = vld [vmem:[%s0 + $0xbc] sm:$0xf]
  %v125 = vld [vmem:[%s0 + $0xc0] sm:$0xf]
  %v126 = vld [vmem:[%s0 + $0xc4] sm:$0xf]
  %v127 = vld [vmem:[%s0 + $0xc8] sm:$0xf]
  %v128 = vld [vmem:[%s0 + $0xcc] sm:$0xf]
  %v129 = vld [vmem:[%s0 + $0xd0] sm:$0xf]
  %v130 = vld [vmem:[%s0 + $0xd4] sm:$0xf]
  %v131 = vld [vmem:[%s0 + $0xd8] sm:$0xf]
  %v132 = vld [vmem:[%s0 + $0xdc] sm:$0xf]
  %v133 = vld [vmem:[%s0 + $0xe0] sm:$0xf]
  %v134 = vld [vmem:[%s0 + $0xe4] sm:$0xf]
  %v135 = vld [vmem:[%s0 + $0xe8] sm:$0xf]
  %v136 = vld [vmem:[%s0 + $0xec] sm:$0xf]
  %v137 = vld [vmem:[%s0 + $0xf0] sm:$0xf]
  %v138 = vld [vmem:[%s0 + $0xf4] sm:$0xf]
  %v139 = vld [vmem:[%s0 + $0xf8] sm:$0xf]
  %v140 = vld [vmem:[%s0 + $0xfc] sm:$0xf]
  %v141 = vld [vmem:[%s0 + $0x100] sm:$0xf]
  %v142 = vld [vmem:[%s0 + $0x104] sm:$0xf]
  %v143 = vld [vmem:[%s0 + $0x108] sm:$0xf]
  %v144 = vld [vmem:[%s0 + $0x10c] sm:$0xf]
  %v145 = vld [vmem:[%s0 + $0x110] sm:$0xf]
  %v146 = vld [vmem:[%s0 + $0x114] sm:$0xf]
  %v147 = vld [vmem:[%s0 + $0x118] sm:$0xf]
  %v148 = vld [vmem:[%s0 + $0x11c] sm:$0xf]
  %v149 = vld [vmem:[%s0 + $0x120] sm:$0xf]
  %v150 = vld [vmem:[%s0 + $0x124] sm:$0xf]
  %v151 = vld [vmem:[%s0 + $0x128] sm:$0xf]
  %v152 = vld [vmem:[%s0 + $0x12c] sm:$0xf]
  %v153 = vld [vmem:[%s0 + $0x130] sm:$0xf]
  %v154 = vld [vmem:[%s0 + $0x134] sm:$0xf]
  %v155 = vld [vmem:[%s0 + $0x138] sm:$0xf]
  %v156 = vld [vmem:[%s0 + $0x13c] sm:$0xf]
  %v157 = vld [vmem:[%s0 + $0x140] sm:$0xf]
  %v158 = vld [vmem:[%s0 + $0x144] sm:$0xf]
  %v159 = vld [vmem:[%s0 + $0x148] sm:$0xf]
  %v160 = vld [vmem:[%s0 + $0x14c] sm:$0xf]
  %v161 = vld [vmem:[%s0 + $0x150] sm:$0xf]
  %v162 = vld [vmem:[%s0 + $0x154] sm:$0xf]
  %v163 = vld [vmem:[%s0 + $0x158] sm:$0xf]
  %v164 = vld [vmem:[%s0 + $0x15c] sm:$0xf]
  %v165 = vld [vmem:[%s0 + $0x160] sm:$0xf]
  %v166 = vld [vmem:[%s0 + $0x164] sm:$0xf]
  %v167 = vld [vmem:[%s0 + $0x168] sm:$0xf]
  %v168 = vld [vmem:[%s0 + $0x16c] sm:$0xf]
  %v169 = vld [vmem:[%s0 + $0x170] sm:$0xf]
  %v170 = vld [vmem:[%s0 + $0x174] sm:$0xf]
  %v171 = vld [vmem:[%s0 + $0x178] sm:$0xf]
  %v172 = vld [vmem:[%s0 + $0x17c] sm:$0xf]
  %v173 = vld [vmem:[%s0 + $0x180] sm:$0xf]
  %v174 = vld [vmem:[%s0 + $0x184] sm:$0xf]
  %v175 = vld [vmem:[%s0 + $0x188] sm:$0xf]
  %v176 = vld [vmem:[%s0 + $0x18c] sm:$0xf]
  %v177 = vld [vmem:[%s0 + $0x190] sm:$0xf]
  %v178 = vld [vmem:[%s0 + $0x194] sm:$0xf]
  %v179 = vld [vmem:[%s0 + $0x198] sm:$0xf]
  %v180 = vld [vmem:[%s0 + $0x19c] sm:$0xf]
  %v181 = vld [vmem:[%s0 + $0x1a0] sm:$0xf]
  %v182 = vld [vmem:[%s0 + $0x1a4] sm:$0xf]
  %v183 = vld [vmem:[%s0 + $0x1a8] sm:$0xf]
  %v184 = vld [vmem:[%s0 + $0x1ac] sm:$0xf]
  %v185 = vld [vmem:[%s0 + $0x1b0] sm:$0xf]
  %v186 = vld [vmem:[%s0 + $0x1b4] sm:$0xf]
  %v187 = vld [vmem:[%s0 + $0x1b8] sm:$0xf]
  %v188 = vld [vmem:[%s0 + $0x1bc] sm:$0xf]
  %v189 = vld [vmem:[%s0 + $0x1c0] sm:$0xf]
  %v190 = vld [vmem:[%s0 + $0x1c4] sm:$0xf]
  %v191 = vld [vmem:[%s0 + $0x1c8] sm:$0xf]
  %v192 = vld [vmem:[%s0 + $0x1cc] sm:$0xf]
  %v193 = vld [vmem:[%s0 + $0x1d0] sm:$0xf]
  %v194 = vld [vmem:[%s0 + $0x1d4] sm:$0xf]
  %v195 = vld [vmem:[%s0 + $0x1d8] sm:$0xf]
  %v196 = vld [vmem:[%s0 + $0x1dc] sm:$0xf]
  %v197 = vld [vmem:[%s0 + $0x1e0] sm:$0xf]
  %v198 = vld [vmem:[%s0 + $0x1e4] sm:$0xf]
  %v199 = vld [vmem:[%s0 + $0x1e8] sm:$0xf]
  %v200 = vld [vmem:[%s0 + $0x1ec] sm:$0xf]
  %v201 = vld [vmem:[%s0 + $0x1f0] sm:$0xf]
  %v202 = vld [vmem:[%s0 + $0x1f4] sm:$0xf]
  %v203 = vld [vmem:[%s0 + $0x1f8] sm:$0xf]
  %v204 = vld [vmem:[%s0 + $0x1fc] sm:$0xf]
  %v205 = vld [vmem:[%s0 + $0x200] sm:$0xf]
  %v206 = vld [vmem:[%s0 + $0x204] sm:$0xf]
  %v207 = vld [vmem:[%s0 + $0x208] sm:$0xf]
  %v208 = vld [vmem:[%s0 + $0x20c] sm:$0xf]
  %v209 = vld [vmem:[%s0 + $0x210] sm:$0xf]
  %v210 = vld [vmem:[%s0 + $0x214] sm:$0xf]
  %v211 = vld [vmem:[%s0 + $0x218] sm:$0xf]
  %v212 = vld [vmem:[%s0 + $0x21c] sm:$0xf]
  %v213 = vld [vmem:[%s0 + $0x220] sm:$0xf]
  %v214 = vld [vmem:[%s0 + $0x224] sm:$0xf]
  %v215 = vld [vmem:[%s0 + $0x228] sm:$0xf]
  %v216 = vld [vmem:[%s0 + $0x22c] sm:$0xf]
  %v217 = vld [vmem:[%s0 + $0x230] sm:$0xf]
  %v218 = vld [vmem:[%s0 + $0x234] sm:$0xf]
  %v219 = vld [vmem:[%s0 + $0x238] sm:$0xf]
  %v220 = vld [vmem:[%s0 + $0x23c] sm:$0xf]
  %v221 = vld [vmem:[%s0 + $0x240] sm:$0xf]
  %v222 = vld [vmem:[%s0 + $0x244] sm:$0xf]
  %v223 = vld [vmem:[%s0 + $0x248] sm:$0xf]
  %v224 = vld [vmem:[%s0 + $0x24c] sm:$0xf]
  %v225 = vld [vmem:[%s0 + $0x250] sm:$0xf]
  %v226 = vld [vmem:[%s0 + $0x254] sm:$0xf]
  %v227 = vld [vmem:[%s0 + $0x258] sm:$0xf]
  %v228 = vld [vmem:[%s0 + $0x25c] sm:$0xf]
  %v229 = vld [vmem:[%s0 + $0x260] sm:$0xf]
  %v230 = vld [vmem:[%s0 + $0x264] sm:$0xf]
  %v231 = vld [vmem:[%s0 + $0x268] sm:$0xf]
  %v232 = vld [vmem:[%s0 + $0x26c] sm:$0xf]
  %v233 = vld [vmem:[%s0 + $0x270] sm:$0xf]
  %v234 = vld [vmem:[%s0 + $0x274] sm:$0xf]
  %v235 = vld [vmem:[%s0 + $0x278] sm:$0xf]
  %v236 = vld [vmem:[%s0 + $0x27c] sm:$0xf]
  %v237 = vld [vmem:[%s0 + $0x280] sm:$0xf]
  %v238 = vld [vmem:[%s0 + $0x284] sm:$0xf]
  %v239 = vld [vmem:[%s0 + $0x288] sm:$0xf]
  %v240 = vld [vmem:[%s0 + $0x28c] sm:$0xf]
  %v241 = vld [vmem:[%s0 + $0x290] sm:$0xf]
  %v242 = vld [vmem:[%s0 + $0x294] sm:$0xf]
  %v243 = vld [vmem:[%s0 + $0x298] sm:$0xf]
  %v244 = vld [vmem:[%s0 + $0x29c] sm:$0xf]
  %v245 = vld [vmem:[%s0 + $0x2a0] sm:$0xf]
  %v246 = vld [vmem:[%s0 + $0x2a4] sm:$0xf]
  %v247 = vld [vmem:[%s0 + $0x2a8] sm:$0xf]
  %v248 = vld [vmem:[%s0 + $0x2ac] sm:$0xf]
  %v249 = vld [vmem:[%s0 + $0x2b0] sm:$0xf]
  %v250 = vld [vmem:[%s0 + $0x2b4] sm:$0xf]
  %v251 = vld [vmem:[%s0 + $0x2b8] sm:$0xf]
  %v252 = vld [vmem:[%s0 + $0x2bc] sm:$0xf]
  %v253 = vld [vmem:[%s0 + $0x2c0] sm:$0xf]
  %v254 = vld [vmem:[%s0 + $0x2c4] sm:$0xf]
  %v255 = vld [vmem:[%s0 + $0x2c8] sm:$0xf]
  %v256 = vld [vmem:[%s0 + $0x2cc] sm:$0xf]
  %v257 = vld [vmem:[%s0 + $0x2d0] sm:$0xf]
  %v258 = vld [vmem:[%s0 + $0x2d4] sm:$0xf]
  %v259 = vld [vmem:[%s0 + $0x2d8] sm:$0xf]
  %v260 = vld [vmem:[%s0 + $0x2dc] sm:$0xf]
  %v261 = vld [vmem:[%s0 + $0x2e0] sm:$0xf]
  %v262 = vld [vmem:[%s0 + $0x2e4] sm:$0xf]
  %v263 = vld [vmem:[%s0 + $0x2e8] sm:$0xf]
  %v264 = vld [vmem:[%s0 + $0x2ec] sm:$0xf]
  %v265 = vld [vmem:[%s0 + $0x2f0] sm:$0xf]
  %v266 = vld [vmem:[%s0 + $0x2f4] sm:$0xf]
  %v267 = vld [vmem:[%s0 + $0x2f8] sm:$0xf]
  %v268 = vld [vmem:[%s0 + $0x2fc] sm:$0xf]
  %v269 = vld [vmem:[%s0 + $0x300] sm:$0xf]
  %v270 = vld [vmem:[%s0 + $0x304] sm:$0xf]
  %v271 = vld [vmem:[%s0 + $0x308] sm:$0xf]
  %v272 = vld [vmem:[%s0 + $0x30c] sm:$0xf]
  %v273 = vld [vmem:[%s0 + $0x310] sm:$0xf]
  %v274 = vld [vmem:[%s0 + $0x314] sm:$0xf]
  %v275 = vld [vmem:[%s0 + $0x318] sm:$0xf]
  %v276 = vld [vmem:[%s0 + $0x31c] sm:$0xf]
  %v277 = vld [vmem:[%s2] sm:$0xff]
  %v278 = vld [vmem:[%s2 + $0x8] sm:$0xff]
  %v279 = vld [vmem:[%s2 + $0x10] sm:$0xff]
  %v280 = vld [vmem:[%s2 + $0x18] sm:$0xff]
  %v281 = vld [vmem:[%s2 + $0x20] sm:$0xff]
  %v282 = vld [vmem:[%s2 + $0x28] sm:$0xff]
  %v283 = vld [vmem:[%s2 + $0x30] sm:$0xff]
  %v284 = vld [vmem:[%s2 + $0x38] sm:$0xff]
  %286 = vset.pattern.permute.xlu0 0
  %287 = vperm.xlu0 %286, %v277
  %v288 = vpop.permute.xlu0 %287
  %291 = vset.pattern.permute.xlu0 0
  %292 = vperm.xlu0 %291, %v278
  %v293 = vpop.permute.xlu0 %292
  %296 = vset.pattern.permute.xlu0 0
  %297 = vperm.xlu0 %296, %v279
  %v298 = vpop.permute.xlu0 %297
  %301 = vset.pattern.permute.xlu0 0
  %302 = vperm.xlu0 %301, %v280
  %v303 = vpop.permute.xlu0 %302
  %306 = vset.pattern.permute.xlu0 0
  %307 = vperm.xlu0 %306, %v281
  %v308 = vpop.permute.xlu0 %307
  %311 = vset.pattern.permute.xlu0 0
  %312 = vperm.xlu0 %311, %v282
  %v313 = vpop.permute.xlu0 %312
  %316 = vset.pattern.permute.xlu0 0
  %317 = vperm.xlu0 %316, %v283
  %v318 = vpop.permute.xlu0 %317
  %321 = vset.pattern.permute.xlu0 0
  %322 = vperm.xlu0 %321, %v284
  %v323 = vpop.permute.xlu0 %322
  %v381 = vunpack.c.l.b16 %v21
  %v382 = vunpack.c.h.b16 %v21
  %v383 = vunpack.c.l.b16 %v22
  %v384 = vunpack.c.h.b16 %v22
  %v385 = vunpack.c.l.b16 %v23
  %v386 = vunpack.c.h.b16 %v23
  %v387 = vunpack.c.l.b16 %v24
  %v388 = vunpack.c.h.b16 %v24
  %v389 = vunpack.c.l.b16 %v25
  %v390 = vunpack.c.h.b16 %v25
  %v391 = vunpack.c.l.b16 %v26
  %v392 = vunpack.c.h.b16 %v26
  %v393 = vunpack.c.l.b16 %v27
  %v394 = vunpack.c.l.b16 %v28
  %v395 = vunpack.c.h.b16 %v28
  %v396 = vunpack.c.l.b16 %v29
  %v397 = vunpack.c.h.b16 %v29
  %v398 = vunpack.c.l.b16 %v30
  %v399 = vunpack.c.h.b16 %v30
  %v400 = vunpack.c.l.b16 %v31
  %v401 = vunpack.c.h.b16 %v31
  %v402 = vunpack.c.l.b16 %v32
  %v403 = vunpack.c.h.b16 %v32
  %v404 = vunpack.c.l.b16 %v33
  %v405 = vunpack.c.h.b16 %v33
  %v406 = vunpack.c.l.b16 %v34
  %v407 = vunpack.c.l.b16 %v35
  %v408 = vunpack.c.h.b16 %v35
  %v409 = vunpack.c.l.b16 %v36
  %v410 = vunpack.c.h.b16 %v36
  %v411 = vunpack.c.l.b16 %v37
  %v412 = vunpack.c.h.b16 %v37
  %v413 = vunpack.c.l.b16 %v38
  %v414 = vunpack.c.h.b16 %v38
  %v415 = vunpack.c.l.b16 %v39
  %v416 = vunpack.c.h.b16 %v39
  %v417 = vunpack.c.l.b16 %v40
  %v418 = vunpack.c.h.b16 %v40
  %v419 = vunpack.c.l.b16 %v41
  %v420 = vunpack.c.l.b16 %v42
  %v421 = vunpack.c.h.b16 %v42
  %v422 = vunpack.c.l.b16 %v43
  %v423 = vunpack.c.h.b16 %v43
  %v424 = vunpack.c.l.b16 %v44
  %v425 = vunpack.c.h.b16 %v44
  %v426 = vunpack.c.l.b16 %v45
  %v427 = vunpack.c.h.b16 %v45
  %v428 = vunpack.c.l.b16 %v46
  %v429 = vunpack.c.h.b16 %v46
  %v430 = vunpack.c.l.b16 %v47
  %v431 = vunpack.c.h.b16 %v47
  %v432 = vunpack.c.l.b16 %v48
  %v433 = vunpack.c.l.b16 %v49
  %v434 = vunpack.c.h.b16 %v49
  %v435 = vunpack.c.l.b16 %v50
  %v436 = vunpack.c.h.b16 %v50
  %v437 = vunpack.c.l.b16 %v51
  %v438 = vunpack.c.h.b16 %v51
  %v439 = vunpack.c.l.b16 %v52
  %v440 = vunpack.c.h.b16 %v52
  %v441 = vunpack.c.l.b16 %v53
  %v442 = vunpack.c.h.b16 %v53
  %v443 = vunpack.c.l.b16 %v54
  %v444 = vunpack.c.h.b16 %v54
  %v445 = vunpack.c.l.b16 %v55
  %v446 = vunpack.c.l.b16 %v56
  %v447 = vunpack.c.h.b16 %v56
  %v448 = vunpack.c.l.b16 %v57
  %v449 = vunpack.c.h.b16 %v57
  %v450 = vunpack.c.l.b16 %v58
  %v451 = vunpack.c.h.b16 %v58
  %v452 = vunpack.c.l.b16 %v59
  %v453 = vunpack.c.h.b16 %v59
  %v454 = vunpack.c.l.b16 %v60
  %v455 = vunpack.c.h.b16 %v60
  %v456 = vunpack.c.l.b16 %v61
  %v457 = vunpack.c.h.b16 %v61
  %v458 = vunpack.c.l.b16 %v62
  %v459 = vunpack.c.l.b16 %v63
  %v460 = vunpack.c.h.b16 %v63
  %v461 = vunpack.c.l.b16 %v64
  %v462 = vunpack.c.h.b16 %v64
  %v463 = vunpack.c.l.b16 %v65
  %v464 = vunpack.c.h.b16 %v65
  %v465 = vunpack.c.l.b16 %v66
  %v466 = vunpack.c.h.b16 %v66
  %v467 = vunpack.c.l.b16 %v67
  %v468 = vunpack.c.h.b16 %v67
  %v469 = vunpack.c.l.b16 %v68
  %v470 = vunpack.c.h.b16 %v68
  %v471 = vunpack.c.l.b16 %v69
  %v472 = vunpack.c.l.b16 %v70
  %v473 = vunpack.c.h.b16 %v70
  %v474 = vunpack.c.l.b16 %v71
  %v475 = vunpack.c.h.b16 %v71
  %v476 = vunpack.c.l.b16 %v72
  %v477 = vunpack.c.h.b16 %v72
  %v478 = vunpack.c.l.b16 %v73
  %v479 = vunpack.c.h.b16 %v73
  %v480 = vunpack.c.l.b16 %v74
  %v481 = vunpack.c.h.b16 %v74
  %v482 = vunpack.c.l.b16 %v75
  %v483 = vunpack.c.h.b16 %v75
  %v484 = vunpack.c.l.b16 %v76
  %v485 = vpack.c.b16 %v394, %v381
  %v486 = vpack.c.b16 %v395, %v382
  %v487 = vpack.c.b16 %v396, %v383
  %v488 = vpack.c.b16 %v397, %v384
  %v489 = vpack.c.b16 %v398, %v385
  %v490 = vpack.c.b16 %v399, %v386
  %v491 = vpack.c.b16 %v400, %v387
  %v492 = vpack.c.b16 %v401, %v388
  %v493 = vpack.c.b16 %v402, %v389
  %v494 = vpack.c.b16 %v403, %v390
  %v495 = vpack.c.b16 %v404, %v391
  %v496 = vpack.c.b16 %v405, %v392
  %v497 = vpack.c.b16 %v406, %v393
  %v498 = vpack.c.b16 %v420, %v407
  %v499 = vpack.c.b16 %v421, %v408
  %v500 = vpack.c.b16 %v422, %v409
  %v501 = vpack.c.b16 %v423, %v410
  %v502 = vpack.c.b16 %v424, %v411
  %v503 = vpack.c.b16 %v425, %v412
  %v504 = vpack.c.b16 %v426, %v413
  %v505 = vpack.c.b16 %v427, %v414
  %v506 = vpack.c.b16 %v428, %v415
  %v507 = vpack.c.b16 %v429, %v416
  %v508 = vpack.c.b16 %v430, %v417
  %v509 = vpack.c.b16 %v431, %v418
  %v510 = vpack.c.b16 %v432, %v419
  %v511 = vpack.c.b16 %v446, %v433
  %v512 = vpack.c.b16 %v447, %v434
  %v513 = vpack.c.b16 %v448, %v435
  %v514 = vpack.c.b16 %v449, %v436
  %v515 = vpack.c.b16 %v450, %v437
  %v516 = vpack.c.b16 %v451, %v438
  %v517 = vpack.c.b16 %v452, %v439
  %v518 = vpack.c.b16 %v453, %v440
  %v519 = vpack.c.b16 %v454, %v441
  %v520 = vpack.c.b16 %v455, %v442
  %v521 = vpack.c.b16 %v456, %v443
  %v522 = vpack.c.b16 %v457, %v444
  %v523 = vpack.c.b16 %v458, %v445
  %v524 = vpack.c.b16 %v472, %v459
  %v525 = vpack.c.b16 %v473, %v460
  %v526 = vpack.c.b16 %v474, %v461
  %v527 = vpack.c.b16 %v475, %v462
  %v528 = vpack.c.b16 %v476, %v463
  %v529 = vpack.c.b16 %v477, %v464
  %v530 = vpack.c.b16 %v478, %v465
  %v531 = vpack.c.b16 %v479, %v466
  %v532 = vpack.c.b16 %v480, %v467
  %v533 = vpack.c.b16 %v481, %v468
  %v534 = vpack.c.b16 %v482, %v469
  %v535 = vpack.c.b16 %v483, %v470
  %v536 = vpack.c.b16 %v484, %v471
  %v785 = vunpack.c.l.b16 %v77
  %v786 = vunpack.c.l.b16 %v78
  %v787 = vunpack.c.l.b16 %v79
  %v788 = vunpack.c.l.b16 %v80
  %v789 = vunpack.c.l.b16 %v81
  %v790 = vunpack.c.l.b16 %v82
  %v791 = vunpack.c.l.b16 %v83
  %v792 = vunpack.c.l.b16 %v84
  %v793 = vunpack.c.l.b16 %v85
  %v794 = vunpack.c.l.b16 %v86
  %v795 = vunpack.c.l.b16 %v87
  %v796 = vunpack.c.l.b16 %v88
  %v797 = vunpack.c.l.b16 %v89
  %v798 = vunpack.c.l.b16 %v90
  %v799 = vunpack.c.l.b16 %v91
  %v800 = vunpack.c.l.b16 %v92
  %v801 = vunpack.c.l.b16 %v93
  %v802 = vunpack.c.l.b16 %v94
  %v803 = vunpack.c.l.b16 %v95
  %v804 = vunpack.c.l.b16 %v96
  %v805 = vunpack.c.l.b16 %v97
  %v806 = vunpack.c.l.b16 %v98
  %v807 = vunpack.c.l.b16 %v99
  %v808 = vunpack.c.l.b16 %v100
  %v809 = vunpack.c.l.b16 %v101
  %v810 = vunpack.c.l.b16 %v102
  %v811 = vunpack.c.l.b16 %v103
  %v812 = vunpack.c.l.b16 %v104
  %v813 = vunpack.c.l.b16 %v105
  %v814 = vunpack.c.l.b16 %v106
  %v815 = vunpack.c.l.b16 %v107
  %v816 = vunpack.c.l.b16 %v108
  %v817 = vunpack.c.l.b16 %v109
  %v818 = vunpack.c.l.b16 %v110
  %v819 = vunpack.c.l.b16 %v111
  %v820 = vunpack.c.l.b16 %v112
  %v821 = vunpack.c.l.b16 %v113
  %v822 = vunpack.c.l.b16 %v114
  %v823 = vunpack.c.l.b16 %v115
  %v824 = vunpack.c.l.b16 %v116
  %v825 = vunpack.c.l.b16 %v117
  %v826 = vunpack.c.l.b16 %v118
  %v827 = vunpack.c.l.b16 %v119
  %v828 = vunpack.c.l.b16 %v120
  %v829 = vunpack.c.l.b16 %v121
  %v830 = vunpack.c.l.b16 %v122
  %v831 = vunpack.c.l.b16 %v123
  %v832 = vunpack.c.l.b16 %v124
  %v833 = vunpack.c.l.b16 %v125
  %v834 = vunpack.c.l.b16 %v126
  %v835 = vunpack.c.l.b16 %v127
  %v836 = vunpack.c.l.b16 %v128
  %v837 = vunpack.c.l.b16 %v129
  %v838 = vunpack.c.l.b16 %v130
  %v839 = vunpack.c.l.b16 %v131
  %v840 = vunpack.c.l.b16 %v132
  %v841 = vunpack.c.l.b16 %v133
  %v842 = vunpack.c.l.b16 %v134
  %v843 = vunpack.c.l.b16 %v135
  %v844 = vunpack.c.l.b16 %v136
  %v845 = vunpack.c.l.b16 %v137
  %v846 = vunpack.c.l.b16 %v138
  %v847 = vunpack.c.l.b16 %v139
  %v848 = vunpack.c.l.b16 %v140
  %v849 = vunpack.c.l.b16 %v141
  %v850 = vunpack.c.l.b16 %v142
  %v851 = vunpack.c.l.b16 %v143
  %v852 = vunpack.c.l.b16 %v144
  %v853 = vunpack.c.l.b16 %v145
  %v854 = vunpack.c.l.b16 %v146
  %v855 = vunpack.c.l.b16 %v147
  %v856 = vunpack.c.l.b16 %v148
  %v857 = vunpack.c.l.b16 %v149
  %v858 = vunpack.c.l.b16 %v150
  %v859 = vunpack.c.l.b16 %v151
  %v860 = vunpack.c.l.b16 %v152
  %v861 = vunpack.c.l.b16 %v153
  %v862 = vunpack.c.l.b16 %v154
  %v863 = vunpack.c.l.b16 %v155
  %v864 = vunpack.c.l.b16 %v156
  %v865 = vunpack.c.l.b16 %v157
  %v866 = vunpack.c.l.b16 %v158
  %v867 = vunpack.c.l.b16 %v159
  %v868 = vunpack.c.l.b16 %v160
  %v869 = vunpack.c.l.b16 %v161
  %v870 = vunpack.c.l.b16 %v162
  %v871 = vunpack.c.l.b16 %v163
  %v872 = vunpack.c.l.b16 %v164
  %v873 = vunpack.c.l.b16 %v165
  %v874 = vunpack.c.l.b16 %v166
  %v875 = vunpack.c.l.b16 %v167
  %v876 = vunpack.c.l.b16 %v168
  %v877 = vunpack.c.l.b16 %v169
  %v878 = vunpack.c.l.b16 %v170
  %v879 = vunpack.c.l.b16 %v171
  %v880 = vunpack.c.l.b16 %v172
  %v881 = vunpack.c.l.b16 %v173
  %v882 = vunpack.c.l.b16 %v174
  %v883 = vunpack.c.l.b16 %v175
  %v884 = vunpack.c.l.b16 %v176
  %v885 = vunpack.c.l.b16 %v177
  %v886 = vunpack.c.l.b16 %v178
  %v887 = vunpack.c.l.b16 %v179
  %v888 = vunpack.c.l.b16 %v180
  %v889 = vunpack.c.l.b16 %v181
  %v890 = vunpack.c.l.b16 %v182
  %v891 = vunpack.c.l.b16 %v183
  %v892 = vunpack.c.l.b16 %v184
  %v893 = vunpack.c.l.b16 %v185
  %v894 = vunpack.c.l.b16 %v186
  %v895 = vunpack.c.l.b16 %v187
  %v896 = vunpack.c.l.b16 %v188
  %v897 = vunpack.c.l.b16 %v189
  %v898 = vunpack.c.l.b16 %v190
  %v899 = vunpack.c.l.b16 %v191
  %v900 = vunpack.c.l.b16 %v192
  %v901 = vunpack.c.l.b16 %v193
  %v902 = vunpack.c.l.b16 %v194
  %v903 = vunpack.c.l.b16 %v195
  %v904 = vunpack.c.l.b16 %v196
  %v905 = vunpack.c.l.b16 %v197
  %v906 = vunpack.c.l.b16 %v198
  %v907 = vunpack.c.l.b16 %v199
  %v908 = vunpack.c.l.b16 %v200
  %v909 = vunpack.c.l.b16 %v201
  %v910 = vunpack.c.l.b16 %v202
  %v911 = vunpack.c.l.b16 %v203
  %v912 = vunpack.c.l.b16 %v204
  %v913 = vunpack.c.l.b16 %v205
  %v914 = vunpack.c.l.b16 %v206
  %v915 = vunpack.c.l.b16 %v207
  %v916 = vunpack.c.l.b16 %v208
  %v917 = vunpack.c.l.b16 %v209
  %v918 = vunpack.c.l.b16 %v210
  %v919 = vunpack.c.l.b16 %v211
  %v920 = vunpack.c.l.b16 %v212
  %v921 = vunpack.c.l.b16 %v213
  %v922 = vunpack.c.l.b16 %v214
  %v923 = vunpack.c.l.b16 %v215
  %v924 = vunpack.c.l.b16 %v216
  %v925 = vunpack.c.l.b16 %v217
  %v926 = vunpack.c.l.b16 %v218
  %v927 = vunpack.c.l.b16 %v219
  %v928 = vunpack.c.l.b16 %v220
  %v929 = vunpack.c.l.b16 %v221
  %v930 = vunpack.c.l.b16 %v222
  %v931 = vunpack.c.l.b16 %v223
  %v932 = vunpack.c.l.b16 %v224
  %v933 = vunpack.c.l.b16 %v225
  %v934 = vunpack.c.l.b16 %v226
  %v935 = vunpack.c.l.b16 %v227
  %v936 = vunpack.c.l.b16 %v228
  %v937 = vunpack.c.l.b16 %v229
  %v938 = vunpack.c.l.b16 %v230
  %v939 = vunpack.c.l.b16 %v231
  %v940 = vunpack.c.l.b16 %v232
  %v941 = vunpack.c.l.b16 %v233
  %v942 = vunpack.c.l.b16 %v234
  %v943 = vunpack.c.l.b16 %v235
  %v944 = vunpack.c.l.b16 %v236
  %v945 = vunpack.c.l.b16 %v237
  %v946 = vunpack.c.l.b16 %v238
  %v947 = vunpack.c.l.b16 %v239
  %v948 = vunpack.c.l.b16 %v240
  %v949 = vunpack.c.l.b16 %v241
  %v950 = vunpack.c.l.b16 %v242
  %v951 = vunpack.c.l.b16 %v243
  %v952 = vunpack.c.l.b16 %v244
  %v953 = vunpack.c.l.b16 %v245
  %v954 = vunpack.c.l.b16 %v246
  %v955 = vunpack.c.l.b16 %v247
  %v956 = vunpack.c.l.b16 %v248
  %v957 = vunpack.c.l.b16 %v249
  %v958 = vunpack.c.l.b16 %v250
  %v959 = vunpack.c.l.b16 %v251
  %v960 = vunpack.c.l.b16 %v252
  %v961 = vunpack.c.l.b16 %v253
  %v962 = vunpack.c.l.b16 %v254
  %v963 = vunpack.c.l.b16 %v255
  %v964 = vunpack.c.l.b16 %v256
  %v965 = vunpack.c.l.b16 %v257
  %v966 = vunpack.c.l.b16 %v258
  %v967 = vunpack.c.l.b16 %v259
  %v968 = vunpack.c.l.b16 %v260
  %v969 = vunpack.c.l.b16 %v261
  %v970 = vunpack.c.l.b16 %v262
  %v971 = vunpack.c.l.b16 %v263
  %v972 = vunpack.c.l.b16 %v264
  %v973 = vunpack.c.l.b16 %v265
  %v974 = vunpack.c.l.b16 %v266
  %v975 = vunpack.c.l.b16 %v267
  %v976 = vunpack.c.l.b16 %v268
  %v977 = vunpack.c.l.b16 %v269
  %v978 = vunpack.c.l.b16 %v270
  %v979 = vunpack.c.l.b16 %v271
  %v980 = vunpack.c.l.b16 %v272
  %v981 = vunpack.c.l.b16 %v273
  %v982 = vunpack.c.l.b16 %v274
  %v983 = vunpack.c.l.b16 %v275
  %v984 = vunpack.c.l.b16 %v276
  %v985 = vpack.c.b16 %v786, %v785
  %v986 = vpack.c.b16 %v788, %v787
  %v987 = vpack.c.b16 %v790, %v789
  %v988 = vpack.c.b16 %v792, %v791
  %v989 = vpack.c.b16 %v794, %v793
  %v990 = vpack.c.b16 %v796, %v795
  %v991 = vpack.c.b16 %v798, %v797
  %v992 = vpack.c.b16 %v800, %v799
  %v993 = vpack.c.b16 %v802, %v801
  %v994 = vpack.c.b16 %v804, %v803
  %v995 = vpack.c.b16 %v806, %v805
  %v996 = vpack.c.b16 %v808, %v807
  %v997 = vpack.c.b16 %v810, %v809
  %v998 = vpack.c.b16 %v812, %v811
  %v999 = vpack.c.b16 %v814, %v813
  %v1000 = vpack.c.b16 %v816, %v815
  %v1001 = vpack.c.b16 %v818, %v817
  %v1002 = vpack.c.b16 %v820, %v819
  %v1003 = vpack.c.b16 %v822, %v821
  %v1004 = vpack.c.b16 %v824, %v823
  %v1005 = vpack.c.b16 %v826, %v825
  %v1006 = vpack.c.b16 %v828, %v827
  %v1007 = vpack.c.b16 %v830, %v829
  %v1008 = vpack.c.b16 %v832, %v831
  %v1009 = vpack.c.b16 %v834, %v833
  %v1010 = vpack.c.b16 %v836, %v835
  %v1011 = vpack.c.b16 %v838, %v837
  %v1012 = vpack.c.b16 %v840, %v839
  %v1013 = vpack.c.b16 %v842, %v841
  %v1014 = vpack.c.b16 %v844, %v843
  %v1015 = vpack.c.b16 %v846, %v845
  %v1016 = vpack.c.b16 %v848, %v847
  %v1017 = vpack.c.b16 %v850, %v849
  %v1018 = vpack.c.b16 %v852, %v851
  %v1019 = vpack.c.b16 %v854, %v853
  %v1020 = vpack.c.b16 %v856, %v855
  %v1021 = vpack.c.b16 %v858, %v857
  %v1022 = vpack.c.b16 %v860, %v859
  %v1023 = vpack.c.b16 %v862, %v861
  %v1024 = vpack.c.b16 %v864, %v863
  %v1025 = vpack.c.b16 %v866, %v865
  %v1026 = vpack.c.b16 %v868, %v867
  %v1027 = vpack.c.b16 %v870, %v869
  %v1028 = vpack.c.b16 %v872, %v871
  %v1029 = vpack.c.b16 %v874, %v873
  %v1030 = vpack.c.b16 %v876, %v875
  %v1031 = vpack.c.b16 %v878, %v877
  %v1032 = vpack.c.b16 %v880, %v879
  %v1033 = vpack.c.b16 %v882, %v881
  %v1034 = vpack.c.b16 %v884, %v883
  %v1035 = vpack.c.b16 %v886, %v885
  %v1036 = vpack.c.b16 %v888, %v887
  %v1037 = vpack.c.b16 %v890, %v889
  %v1038 = vpack.c.b16 %v892, %v891
  %v1039 = vpack.c.b16 %v894, %v893
  %v1040 = vpack.c.b16 %v896, %v895
  %v1041 = vpack.c.b16 %v898, %v897
  %v1042 = vpack.c.b16 %v900, %v899
  %v1043 = vpack.c.b16 %v902, %v901
  %v1044 = vpack.c.b16 %v904, %v903
  %v1045 = vpack.c.b16 %v906, %v905
  %v1046 = vpack.c.b16 %v908, %v907
  %v1047 = vpack.c.b16 %v910, %v909
  %v1048 = vpack.c.b16 %v912, %v911
  %v1049 = vpack.c.b16 %v914, %v913
  %v1050 = vpack.c.b16 %v916, %v915
  %v1051 = vpack.c.b16 %v918, %v917
  %v1052 = vpack.c.b16 %v920, %v919
  %v1053 = vpack.c.b16 %v922, %v921
  %v1054 = vpack.c.b16 %v924, %v923
  %v1055 = vpack.c.b16 %v926, %v925
  %v1056 = vpack.c.b16 %v928, %v927
  %v1057 = vpack.c.b16 %v930, %v929
  %v1058 = vpack.c.b16 %v932, %v931
  %v1059 = vpack.c.b16 %v934, %v933
  %v1060 = vpack.c.b16 %v936, %v935
  %v1061 = vpack.c.b16 %v938, %v937
  %v1062 = vpack.c.b16 %v940, %v939
  %v1063 = vpack.c.b16 %v942, %v941
  %v1064 = vpack.c.b16 %v944, %v943
  %v1065 = vpack.c.b16 %v946, %v945
  %v1066 = vpack.c.b16 %v948, %v947
  %v1067 = vpack.c.b16 %v950, %v949
  %v1068 = vpack.c.b16 %v952, %v951
  %v1069 = vpack.c.b16 %v954, %v953
  %v1070 = vpack.c.b16 %v956, %v955
  %v1071 = vpack.c.b16 %v958, %v957
  %v1072 = vpack.c.b16 %v960, %v959
  %v1073 = vpack.c.b16 %v962, %v961
  %v1074 = vpack.c.b16 %v964, %v963
  %v1075 = vpack.c.b16 %v966, %v965
  %v1076 = vpack.c.b16 %v968, %v967
  %v1077 = vpack.c.b16 %v970, %v969
  %v1078 = vpack.c.b16 %v972, %v971
  %v1079 = vpack.c.b16 %v974, %v973
  %v1080 = vpack.c.b16 %v976, %v975
  %v1081 = vpack.c.b16 %v978, %v977
  %v1082 = vpack.c.b16 %v980, %v979
  %v1083 = vpack.c.b16 %v982, %v981
  %v1084 = vpack.c.b16 %v984, %v983
  %vm1185 = vcmask 523264
  %v1187 = vsel %vm1185, %v497, 0
  %v1190 = vsel %vm1185, %v510, 0
  %v1193 = vsel %vm1185, %v523, 0
  %v1196 = vsel %vm1185, %v536, 0
  %1198 = vmatprep.subr.bf16.mxu0 0
  %1199 = vmatpush1.bf16.msra.mxu0 %v985
  %1200 = vmatprep.subr.bf16.mxu0 0
  %1201 = vmatpush1.bf16.msra.mxu0 %v986
  %1202 = vmatprep.subr.bf16.mxu0 0
  %1203 = vmatpush1.bf16.msra.mxu0 %v987
  %1204 = vmatprep.subr.bf16.mxu0 0
  %1205 = vmatpush1.bf16.msra.mxu0 %v988
  %1206 = vmatprep.subr.bf16.mxu0 0
  %1207 = vmatpush1.bf16.msra.mxu0 %v989
  %1208 = vmatprep.subr.bf16.mxu0 0
  %1209 = vmatpush1.bf16.msra.mxu0 %v990
  %1210 = vmatprep.subr.bf16.mxu0 0
  %1211 = vmatpush1.bf16.msra.mxu0 %v991
  %1212 = vmatprep.subr.bf16.mxu0 0
  %1213 = vmatpush1.bf16.msra.mxu0 %v992
  %1214 = vmatprep.subr.bf16.mxu0 0
  %1215 = vmatpush1.bf16.msra.mxu0 %v993
  %1216 = vmatprep.subr.bf16.mxu0 0
  %1217 = vmatpush1.bf16.msra.mxu0 %v994
  %1218 = vmatprep.subr.bf16.mxu0 0
  %1219 = vmatpush1.bf16.msra.mxu0 %v995
  %1220 = vmatprep.subr.bf16.mxu0 0
  %1221 = vmatpush1.bf16.msra.mxu0 %v996
  %1222 = vmatprep.subr.bf16.mxu0 0
  %1223 = vmatpush1.bf16.msra.mxu0 %v997
  %1224 = vmatprep.subr.bf16.mxu0 0
  %1225 = vmatpush1.bf16.msra.mxu0 %v998
  %1226 = vmatprep.subr.bf16.mxu0 0
  %1227 = vmatpush1.bf16.msra.mxu0 %v999
  %1228 = vmatprep.subr.bf16.mxu0 0
  %1229 = vmatpush1.bf16.msra.mxu0 %v1000
  %1230 = vmatprep.mubr.bf16.mxu0 %v486
  %1231 = vmatmul.mubr.bf16.gmra.mrb[0].mxu0 %v485
  %v1232 = vpop.f32.mrb[0].mxu0
  %v1233 = vadd.f32 %v288, %v1232
  %v1234 = vpop.f32.mrb[0].mxu0
  %v1235 = vpop.f32.mrb[0].mxu0
  %v1236 = vadd.f32 %v293, %v1235
  %v1237 = vpop.f32.mrb[0].mxu0
  %1238 = vmatprep.mubr.bf16.mxu0 %v499
  %1239 = vmatmul.mubr.bf16.gmra.mrb[0].mxu0 %v498
  %v1240 = vpop.f32.mrb[0].mxu0
  %v1241 = vadd.f32 %v298, %v1240
  %v1242 = vpop.f32.mrb[0].mxu0
  %v1243 = vpop.f32.mrb[0].mxu0
  %v1244 = vadd.f32 %v303, %v1243
  %v1245 = vpop.f32.mrb[0].mxu0
  %1246 = vmatprep.mubr.bf16.mxu0 %v512
  %1247 = vmatmul.mubr.bf16.gmra.mrb[0].mxu0 %v511
  %v1248 = vpop.f32.mrb[0].mxu0
  %v1249 = vadd.f32 %v308, %v1248
  %v1250 = vpop.f32.mrb[0].mxu0
  %v1251 = vpop.f32.mrb[0].mxu0
  %v1252 = vadd.f32 %v313, %v1251
  %v1253 = vpop.f32.mrb[0].mxu0
  %1254 = vmatprep.mubr.bf16.mxu0 %v525
  %1255 = vmatmul.mubr.bf16.gmra.mrb[0].mxu0 %v524
  %v1256 = vpop.f32.mrb[0].mxu0
  %v1257 = vadd.f32 %v318, %v1256
  %v1258 = vpop.f32.mrb[0].mxu0
  %v1259 = vpop.f32.mrb[0].mxu0
  %v1260 = vadd.f32 %v323, %v1259
  %v1261 = vpop.f32.mrb[0].mxu0
  %1262 = vdwg.mxu0
  %1263 = vmatprep.subr.bf16.mxu0 0
  %1264 = vmatpush1.bf16.msra.mxu0 %v1001
  %1265 = vmatprep.subr.bf16.mxu0 0
  %1266 = vmatpush1.bf16.msra.mxu0 %v1002
  %1267 = vmatprep.subr.bf16.mxu0 0
  %1268 = vmatpush1.bf16.msra.mxu0 %v1003
  %1269 = vmatprep.subr.bf16.mxu0 0
  %1270 = vmatpush1.bf16.msra.mxu0 %v1004
  %1271 = vmatprep.subr.bf16.mxu0 0
  %1272 = vmatpush1.bf16.msra.mxu0 %v1005
  %1273 = vmatprep.subr.bf16.mxu0 0
  %1274 = vmatpush1.bf16.msra.mxu0 %v1006
  %1275 = vmatprep.subr.bf16.mxu0 0
  %1276 = vmatpush1.bf16.msra.mxu0 %v1007
  %1277 = vmatprep.subr.bf16.mxu0 0
  %1278 = vmatpush1.bf16.msra.mxu0 %v1008
  %1279 = vmatprep.subr.bf16.mxu0 0
  %1280 = vmatpush1.bf16.msra.mxu0 %v1009
  %1281 = vmatprep.subr.bf16.mxu0 0
  %1282 = vmatpush1.bf16.msra.mxu0 %v1010
  %1283 = vmatprep.subr.bf16.mxu0 0
  %1284 = vmatpush1.bf16.msra.mxu0 %v1011
  %1285 = vmatprep.subr.bf16.mxu0 0
  %1286 = vmatpush1.bf16.msra.mxu0 %v1012
  %1287 = vmatprep.subr.bf16.mxu0 0
  %1288 = vmatpush1.bf16.msra.mxu0 %v1013
  %1289 = vmatprep.subr.bf16.mxu0 0
  %1290 = vmatpush1.bf16.msra.mxu0 %v1014
  %1291 = vmatprep.subr.bf16.mxu0 0
  %1292 = vmatpush1.bf16.msra.mxu0 %v1015
  %1293 = vmatprep.subr.bf16.mxu0 0
  %1294 = vmatpush1.bf16.msra.mxu0 %v1016
  %1295 = vmatprep.mubr.bf16.mxu0 %v488
  %1296 = vmatmul.mubr.bf16.gmra.mrb[0].mxu0 %v487
  %v1297 = vpop.f32.mrb[0].mxu0
  %v1298 = vadd.f32 %v1233, %v1297
  %v1299 = vpop.f32.mrb[0].mxu0
  %v1300 = vpop.f32.mrb[0].mxu0
  %v1301 = vadd.f32 %v1236, %v1300
  %v1302 = vpop.f32.mrb[0].mxu0
  %1303 = vmatprep.mubr.bf16.mxu0 %v501
  %1304 = vmatmul.mubr.bf16.gmra.mrb[0].mxu0 %v500
  %v1305 = vpop.f32.mrb[0].mxu0
  %v1306 = vadd.f32 %v1241, %v1305
  %v1307 = vpop.f32.mrb[0].mxu0
  %v1308 = vpop.f32.mrb[0].mxu0
  %v1309 = vadd.f32 %v1244, %v1308
  %v1310 = vpop.f32.mrb[0].mxu0
  %1311 = vmatprep.mubr.bf16.mxu0 %v514
  %1312 = vmatmul.mubr.bf16.gmra.mrb[0].mxu0 %v513
  %v1313 = vpop.f32.mrb[0].mxu0
  %v1314 = vadd.f32 %v1249, %v1313
  %v1315 = vpop.f32.mrb[0].mxu0
  %v1316 = vpop.f32.mrb[0].mxu0
  %v1317 = vadd.f32 %v1252, %v1316
  %v1318 = vpop.f32.mrb[0].mxu0
  %1319 = vmatprep.mubr.bf16.mxu0 %v527
  %1320 = vmatmul.mubr.bf16.gmra.mrb[0].mxu0 %v526
  %v1321 = vpop.f32.mrb[0].mxu0
  %v1322 = vadd.f32 %v1257, %v1321
  %v1323 = vpop.f32.mrb[0].mxu0
  %v1324 = vpop.f32.mrb[0].mxu0
  %v1325 = vadd.f32 %v1260, %v1324
  %v1326 = vpop.f32.mrb[0].mxu0
  %1327 = vdwg.mxu0
  %1328 = vmatprep.subr.bf16.mxu0 0
  %1329 = vmatpush1.bf16.msra.mxu0 %v1017
  %1330 = vmatprep.subr.bf16.mxu0 0
  %1331 = vmatpush1.bf16.msra.mxu0 %v1018
  %1332 = vmatprep.subr.bf16.mxu0 0
  %1333 = vmatpush1.bf16.msra.mxu0 %v1019
  %1334 = vmatprep.subr.bf16.mxu0 0
  %1335 = vmatpush1.bf16.msra.mxu0 %v1020
  %1336 = vmatprep.subr.bf16.mxu0 0
  %1337 = vmatpush1.bf16.msra.mxu0 %v1021
  %1338 = vmatprep.subr.bf16.mxu0 0
  %1339 = vmatpush1.bf16.msra.mxu0 %v1022
  %1340 = vmatprep.subr.bf16.mxu0 0
  %1341 = vmatpush1.bf16.msra.mxu0 %v1023
  %1342 = vmatprep.subr.bf16.mxu0 0
  %1343 = vmatpush1.bf16.msra.mxu0 %v1024
  %1344 = vmatprep.subr.bf16.mxu0 0
  %1345 = vmatpush1.bf16.msra.mxu0 %v1025
  %1346 = vmatprep.subr.bf16.mxu0 0
  %1347 = vmatpush1.bf16.msra.mxu0 %v1026
  %1348 = vmatprep.subr.bf16.mxu0 0
  %1349 = vmatpush1.bf16.msra.mxu0 %v1027
  %1350 = vmatprep.subr.bf16.mxu0 0
  %1351 = vmatpush1.bf16.msra.mxu0 %v1028
  %1352 = vmatprep.subr.bf16.mxu0 0
  %1353 = vmatpush1.bf16.msra.mxu0 %v1029
  %1354 = vmatprep.subr.bf16.mxu0 0
  %1355 = vmatpush1.bf16.msra.mxu0 %v1030
  %1356 = vmatprep.subr.bf16.mxu0 0
  %1357 = vmatpush1.bf16.msra.mxu0 %v1031
  %1358 = vmatprep.subr.bf16.mxu0 0
  %1359 = vmatpush1.bf16.msra.mxu0 %v1032
  %1360 = vmatprep.mubr.bf16.mxu0 %v490
  %1361 = vmatmul.mubr.bf16.gmra.mrb[0].mxu0 %v489
  %v1362 = vpop.f32.mrb[0].mxu0
  %v1363 = vadd.f32 %v1298, %v1362
  %v1364 = vpop.f32.mrb[0].mxu0
  %v1365 = vpop.f32.mrb[0].mxu0
  %v1366 = vadd.f32 %v1301, %v1365
  %v1367 = vpop.f32.mrb[0].mxu0
  %1368 = vmatprep.mubr.bf16.mxu0 %v503
  %1369 = vmatmul.mubr.bf16.gmra.mrb[0].mxu0 %v502
  %v1370 = vpop.f32.mrb[0].mxu0
  %v1371 = vadd.f32 %v1306, %v1370
  %v1372 = vpop.f32.mrb[0].mxu0
  %v1373 = vpop.f32.mrb[0].mxu0
  %v1374 = vadd.f32 %v1309, %v1373
  %v1375 = vpop.f32.mrb[0].mxu0
  %1376 = vmatprep.mubr.bf16.mxu0 %v516
  %1377 = vmatmul.mubr.bf16.gmra.mrb[0].mxu0 %v515
  %v1378 = vpop.f32.mrb[0].mxu0
  %v1379 = vadd.f32 %v1314, %v1378
  %v1380 = vpop.f32.mrb[0].mxu0
  %v1381 = vpop.f32.mrb[0].mxu0
  %v1382 = vadd.f32 %v1317, %v1381
  %v1383 = vpop.f32.mrb[0].mxu0
  %1384 = vmatprep.mubr.bf16.mxu0 %v529
  %1385 = vmatmul.mubr.bf16.gmra.mrb[0].mxu0 %v528
  %v1386 = vpop.f32.mrb[0].mxu0
  %v1387 = vadd.f32 %v1322, %v1386
  %v1388 = vpop.f32.mrb[0].mxu0
  %v1389 = vpop.f32.mrb[0].mxu0
  %v1390 = vadd.f32 %v1325, %v1389
  %v1391 = vpop.f32.mrb[0].mxu0
  %1392 = vdwg.mxu0
  %1393 = vmatprep.subr.bf16.mxu0 0
  %1394 = vmatpush1.bf16.msra.mxu0 %v1033
  %1395 = vmatprep.subr.bf16.mxu0 0
  %1396 = vmatpush1.bf16.msra.mxu0 %v1034
  %1397 = vmatprep.subr.bf16.mxu0 0
  %1398 = vmatpush1.bf16.msra.mxu0 %v1035
  %1399 = vmatprep.subr.bf16.mxu0 0
  %1400 = vmatpush1.bf16.msra.mxu0 %v1036
  %1401 = vmatprep.subr.bf16.mxu0 0
  %1402 = vmatpush1.bf16.msra.mxu0 %v1037
  %1403 = vmatprep.subr.bf16.mxu0 0
  %1404 = vmatpush1.bf16.msra.mxu0 %v1038
  %1405 = vmatprep.subr.bf16.mxu0 0
  %1406 = vmatpush1.bf16.msra.mxu0 %v1039
  %1407 = vmatprep.subr.bf16.mxu0 0
  %1408 = vmatpush1.bf16.msra.mxu0 %v1040
  %1409 = vmatprep.subr.bf16.mxu0 0
  %1410 = vmatpush1.bf16.msra.mxu0 %v1041
  %1411 = vmatprep.subr.bf16.mxu0 0
  %1412 = vmatpush1.bf16.msra.mxu0 %v1042
  %1413 = vmatprep.subr.bf16.mxu0 0
  %1414 = vmatpush1.bf16.msra.mxu0 %v1043
  %1415 = vmatprep.subr.bf16.mxu0 0
  %1416 = vmatpush1.bf16.msra.mxu0 %v1044
  %1417 = vmatprep.subr.bf16.mxu0 0
  %1418 = vmatpush1.bf16.msra.mxu0 %v1045
  %1419 = vmatprep.subr.bf16.mxu0 0
  %1420 = vmatpush1.bf16.msra.mxu0 %v1046
  %1421 = vmatprep.subr.bf16.mxu0 0
  %1422 = vmatpush1.bf16.msra.mxu0 %v1047
  %1423 = vmatprep.subr.bf16.mxu0 0
  %1424 = vmatpush1.bf16.msra.mxu0 %v1048
  %1425 = vmatprep.mubr.bf16.mxu0 %v492
  %1426 = vmatmul.mubr.bf16.gmra.mrb[0].mxu0 %v491
  %v1427 = vpop.f32.mrb[0].mxu0
  %v1428 = vadd.f32 %v1363, %v1427
  %v1429 = vpop.f32.mrb[0].mxu0
  %v1430 = vpop.f32.mrb[0].mxu0
  %v1431 = vadd.f32 %v1366, %v1430
  %v1432 = vpop.f32.mrb[0].mxu0
  %1433 = vmatprep.mubr.bf16.mxu0 %v505
  %1434 = vmatmul.mubr.bf16.gmra.mrb[0].mxu0 %v504
  %v1435 = vpop.f32.mrb[0].mxu0
  %v1436 = vadd.f32 %v1371, %v1435
  %v1437 = vpop.f32.mrb[0].mxu0
  %v1438 = vpop.f32.mrb[0].mxu0
  %v1439 = vadd.f32 %v1374, %v1438
  %v1440 = vpop.f32.mrb[0].mxu0
  %1441 = vmatprep.mubr.bf16.mxu0 %v518
  %1442 = vmatmul.mubr.bf16.gmra.mrb[0].mxu0 %v517
  %v1443 = vpop.f32.mrb[0].mxu0
  %v1444 = vadd.f32 %v1379, %v1443
  %v1445 = vpop.f32.mrb[0].mxu0
  %v1446 = vpop.f32.mrb[0].mxu0
  %v1447 = vadd.f32 %v1382, %v1446
  %v1448 = vpop.f32.mrb[0].mxu0
  %1449 = vmatprep.mubr.bf16.mxu0 %v531
  %1450 = vmatmul.mubr.bf16.gmra.mrb[0].mxu0 %v530
  %v1451 = vpop.f32.mrb[0].mxu0
  %v1452 = vadd.f32 %v1387, %v1451
  %v1453 = vpop.f32.mrb[0].mxu0
  %v1454 = vpop.f32.mrb[0].mxu0
  %v1455 = vadd.f32 %v1390, %v1454
  %v1456 = vpop.f32.mrb[0].mxu0
  %1457 = vdwg.mxu0
  %1458 = vmatprep.subr.bf16.mxu0 0
  %1459 = vmatpush1.bf16.msra.mxu0 %v1049
  %1460 = vmatprep.subr.bf16.mxu0 0
  %1461 = vmatpush1.bf16.msra.mxu0 %v1050
  %1462 = vmatprep.subr.bf16.mxu0 0
  %1463 = vmatpush1.bf16.msra.mxu0 %v1051
  %1464 = vmatprep.subr.bf16.mxu0 0
  %1465 = vmatpush1.bf16.msra.mxu0 %v1052
  %1466 = vmatprep.subr.bf16.mxu0 0
  %1467 = vmatpush1.bf16.msra.mxu0 %v1053
  %1468 = vmatprep.subr.bf16.mxu0 0
  %1469 = vmatpush1.bf16.msra.mxu0 %v1054
  %1470 = vmatprep.subr.bf16.mxu0 0
  %1471 = vmatpush1.bf16.msra.mxu0 %v1055
  %1472 = vmatprep.subr.bf16.mxu0 0
  %1473 = vmatpush1.bf16.msra.mxu0 %v1056
  %1474 = vmatprep.subr.bf16.mxu0 0
  %1475 = vmatpush1.bf16.msra.mxu0 %v1057
  %1476 = vmatprep.subr.bf16.mxu0 0
  %1477 = vmatpush1.bf16.msra.mxu0 %v1058
  %1478 = vmatprep.subr.bf16.mxu0 0
  %1479 = vmatpush1.bf16.msra.mxu0 %v1059
  %1480 = vmatprep.subr.bf16.mxu0 0
  %1481 = vmatpush1.bf16.msra.mxu0 %v1060
  %1482 = vmatprep.subr.bf16.mxu0 0
  %1483 = vmatpush1.bf16.msra.mxu0 %v1061
  %1484 = vmatprep.subr.bf16.mxu0 0
  %1485 = vmatpush1.bf16.msra.mxu0 %v1062
  %1486 = vmatprep.subr.bf16.mxu0 0
  %1487 = vmatpush1.bf16.msra.mxu0 %v1063
  %1488 = vmatprep.subr.bf16.mxu0 0
  %1489 = vmatpush1.bf16.msra.mxu0 %v1064
  %1490 = vmatprep.mubr.bf16.mxu0 %v494
  %1491 = vmatmul.mubr.bf16.gmra.mrb[0].mxu0 %v493
  %v1492 = vpop.f32.mrb[0].mxu0
  %v1493 = vadd.f32 %v1428, %v1492
  %v1494 = vpop.f32.mrb[0].mxu0
  %v1495 = vpop.f32.mrb[0].mxu0
  %v1496 = vadd.f32 %v1431, %v1495
  %v1497 = vpop.f32.mrb[0].mxu0
  %1498 = vmatprep.mubr.bf16.mxu0 %v507
  %1499 = vmatmul.mubr.bf16.gmra.mrb[0].mxu0 %v506
  %v1500 = vpop.f32.mrb[0].mxu0
  %v1501 = vadd.f32 %v1436, %v1500
  %v1502 = vpop.f32.mrb[0].mxu0
  %v1503 = vpop.f32.mrb[0].mxu0
  %v1504 = vadd.f32 %v1439, %v1503
  %v1505 = vpop.f32.mrb[0].mxu0
  %1506 = vmatprep.mubr.bf16.mxu0 %v520
  %1507 = vmatmul.mubr.bf16.gmra.mrb[0].mxu0 %v519
  %v1508 = vpop.f32.mrb[0].mxu0
  %v1509 = vadd.f32 %v1444, %v1508
  %v1510 = vpop.f32.mrb[0].mxu0
  %v1511 = vpop.f32.mrb[0].mxu0
  %v1512 = vadd.f32 %v1447, %v1511
  %v1513 = vpop.f32.mrb[0].mxu0
  %1514 = vmatprep.mubr.bf16.mxu0 %v533
  %1515 = vmatmul.mubr.bf16.gmra.mrb[0].mxu0 %v532
  %v1516 = vpop.f32.mrb[0].mxu0
  %v1517 = vadd.f32 %v1452, %v1516
  %v1518 = vpop.f32.mrb[0].mxu0
  %v1519 = vpop.f32.mrb[0].mxu0
  %v1520 = vadd.f32 %v1455, %v1519
  %v1521 = vpop.f32.mrb[0].mxu0
  %1522 = vdwg.mxu0
  %1523 = vmatprep.subr.bf16.mxu0 0
  %1524 = vmatpush1.bf16.msra.mxu0 %v1065
  %1525 = vmatprep.subr.bf16.mxu0 0
  %1526 = vmatpush1.bf16.msra.mxu0 %v1066
  %1527 = vmatprep.subr.bf16.mxu0 0
  %1528 = vmatpush1.bf16.msra.mxu0 %v1067
  %1529 = vmatprep.subr.bf16.mxu0 0
  %1530 = vmatpush1.bf16.msra.mxu0 %v1068
  %1531 = vmatprep.subr.bf16.mxu0 0
  %1532 = vmatpush1.bf16.msra.mxu0 %v1069
  %1533 = vmatprep.subr.bf16.mxu0 0
  %1534 = vmatpush1.bf16.msra.mxu0 %v1070
  %1535 = vmatprep.subr.bf16.mxu0 0
  %1536 = vmatpush1.bf16.msra.mxu0 %v1071
  %1537 = vmatprep.subr.bf16.mxu0 0
  %1538 = vmatpush1.bf16.msra.mxu0 %v1072
  %1539 = vmatprep.subr.bf16.mxu0 0
  %1540 = vmatpush1.bf16.msra.mxu0 %v1073
  %1541 = vmatprep.subr.bf16.mxu0 0
  %1542 = vmatpush1.bf16.msra.mxu0 %v1074
  %1543 = vmatprep.subr.bf16.mxu0 0
  %1544 = vmatpush1.bf16.msra.mxu0 %v1075
  %1545 = vmatprep.subr.bf16.mxu0 0
  %1546 = vmatpush1.bf16.msra.mxu0 %v1076
  %1547 = vmatprep.subr.bf16.mxu0 0
  %1548 = vmatpush1.bf16.msra.mxu0 %v1077
  %1549 = vmatprep.subr.bf16.mxu0 0
  %1550 = vmatpush1.bf16.msra.mxu0 %v1078
  %1551 = vmatprep.subr.bf16.mxu0 0
  %1552 = vmatpush1.bf16.msra.mxu0 %v1079
  %1553 = vmatprep.subr.bf16.mxu0 0
  %1554 = vmatpush1.bf16.msra.mxu0 %v1080
  %1555 = vmatprep.mubr.bf16.mxu0 %v496
  %1556 = vmatmul.mubr.bf16.gmra.mrb[0].mxu0 %v495
  %v1557 = vpop.f32.mrb[0].mxu0
  %v1558 = vadd.f32 %v1493, %v1557
  %v1559 = vpop.f32.mrb[0].mxu0
  %v1560 = vpop.f32.mrb[0].mxu0
  %v1561 = vadd.f32 %v1496, %v1560
  %v1562 = vpop.f32.mrb[0].mxu0
  %1563 = vmatprep.mubr.bf16.mxu0 %v509
  %1564 = vmatmul.mubr.bf16.gmra.mrb[0].mxu0 %v508
  %v1565 = vpop.f32.mrb[0].mxu0
  %v1566 = vadd.f32 %v1501, %v1565
  %v1567 = vpop.f32.mrb[0].mxu0
  %v1568 = vpop.f32.mrb[0].mxu0
  %v1569 = vadd.f32 %v1504, %v1568
  %v1570 = vpop.f32.mrb[0].mxu0
  %1571 = vmatprep.mubr.bf16.mxu0 %v522
  %1572 = vmatmul.mubr.bf16.gmra.mrb[0].mxu0 %v521
  %v1573 = vpop.f32.mrb[0].mxu0
  %v1574 = vadd.f32 %v1509, %v1573
  %v1575 = vpop.f32.mrb[0].mxu0
  %v1576 = vpop.f32.mrb[0].mxu0
  %v1577 = vadd.f32 %v1512, %v1576
  %v1578 = vpop.f32.mrb[0].mxu0
  %1579 = vmatprep.mubr.bf16.mxu0 %v535
  %1580 = vmatmul.mubr.bf16.gmra.mrb[0].mxu0 %v534
  %v1581 = vpop.f32.mrb[0].mxu0
  %v1582 = vadd.f32 %v1517, %v1581
  %v1583 = vpop.f32.mrb[0].mxu0
  %v1584 = vpop.f32.mrb[0].mxu0
  %v1585 = vadd.f32 %v1520, %v1584
  %v1586 = vpop.f32.mrb[0].mxu0
  %1587 = vdwg.mxu0
  %1588 = vmatprep.subr.bf16.mxu0 0
  %1589 = vmatpush1.bf16.msra.mxu0 %v1081
  %1590 = vmatprep.subr.bf16.mxu0 0
  %1591 = vmatpush1.bf16.msra.mxu0 %v1082
  %1592 = vmatprep.subr.bf16.mxu0 0
  %1593 = vmatpush1.bf16.msra.mxu0 %v1083
  %1594 = vmatprep.subr.bf16.mxu0 0
  %1595 = vmatpush1.bf16.msra.mxu0 %v1084
  %1596 = vmatprep.subr.bf16.mxu0 0
  %1597 = vmatpush1.bf16.msra.mxu0 0
  %1598 = vmatprep.subr.bf16.mxu0 0
  %1599 = vmatpush1.bf16.msra.mxu0 0
  %1600 = vmatprep.subr.bf16.mxu0 0
  %1601 = vmatpush1.bf16.msra.mxu0 0
  %1602 = vmatprep.subr.bf16.mxu0 0
  %1603 = vmatpush1.bf16.msra.mxu0 0
  %1604 = vmatprep.subr.bf16.mxu0 0
  %1605 = vmatpush1.bf16.msra.mxu0 0
  %1606 = vmatprep.subr.bf16.mxu0 0
  %1607 = vmatpush1.bf16.msra.mxu0 0
  %1608 = vmatprep.subr.bf16.mxu0 0
  %1609 = vmatpush1.bf16.msra.mxu0 0
  %1610 = vmatprep.subr.bf16.mxu0 0
  %1611 = vmatpush1.bf16.msra.mxu0 0
  %1612 = vmatprep.subr.bf16.mxu0 0
  %1613 = vmatpush1.bf16.msra.mxu0 0
  %1614 = vmatprep.subr.bf16.mxu0 0
  %1615 = vmatpush1.bf16.msra.mxu0 0
  %1616 = vmatprep.subr.bf16.mxu0 0
  %1617 = vmatpush1.bf16.msra.mxu0 0
  %1618 = vmatprep.subr.bf16.mxu0 0
  %1619 = vmatpush1.bf16.msra.mxu0 0
  %1620 = vmatprep.mubr.bf16.mxu0 0
  %1621 = vmatmul.mubr.bf16.gmra.mrb[0].mxu0 %v1187
  %v1622 = vpop.f32.mrb[0].mxu0
  %v1623 = vadd.f32 %v1558, %v1622
  %v1624 = vpop.f32.mrb[0].mxu0
  %v1625 = vpop.f32.mrb[0].mxu0
  %v1626 = vadd.f32 %v1561, %v1625
  %v1627 = vpop.f32.mrb[0].mxu0
  %1628 = vmatprep.mubr.bf16.mxu0 0
  %1629 = vmatmul.mubr.bf16.gmra.mrb[0].mxu0 %v1190
  %v1630 = vpop.f32.mrb[0].mxu0
  %v1631 = vadd.f32 %v1566, %v1630
  %v1632 = vpop.f32.mrb[0].mxu0
  %v1633 = vpop.f32.mrb[0].mxu0
  %v1634 = vadd.f32 %v1569, %v1633
  %v1635 = vpop.f32.mrb[0].mxu0
  %1636 = vmatprep.mubr.bf16.mxu0 0
  %1637 = vmatmul.mubr.bf16.gmra.mrb[0].mxu0 %v1193
  %v1638 = vpop.f32.mrb[0].mxu0
  %v1639 = vadd.f32 %v1574, %v1638
  %v1640 = vpop.f32.mrb[0].mxu0
  %v1641 = vpop.f32.mrb[0].mxu0
  %v1642 = vadd.f32 %v1577, %v1641
  %v1643 = vpop.f32.mrb[0].mxu0
  %1644 = vmatprep.mubr.bf16.mxu0 0
  %1645 = vmatmul.mubr.bf16.gmra.mrb[0].mxu0 %v1196
  %v1646 = vpop.f32.mrb[0].mxu0
  %v1647 = vadd.f32 %v1582, %v1646
  %v1648 = vpop.f32.mrb[0].mxu0
  %v1649 = vpop.f32.mrb[0].mxu0
  %v1650 = vadd.f32 %v1585, %v1649
  %v1651 = vpop.f32.mrb[0].mxu0
  %1652 = vdwg.mxu0
  %v1653 = vld [vmem:[%s3] sm:$0x3]
  %v1654 = vld [vmem:[%s4] sm:$0x3]
  %1656 = vset.pattern.permute.xlu0 0
  %1657 = vperm.xlu0 %1656, %v1654
  %v1658 = vpop.permute.xlu0 %1657
  %v1661 = vsel %vm1185, %v1653, 0
  %1663 = vmatprep.subr.mxu0 0.0
  %1664 = vmatpush1.msra.mxu0 %v1623
  %1665 = vmatprep.subr.mxu0 0.0
  %1666 = vmatpush1.msra.mxu0 %v1626
  %1667 = vmatprep.subr.mxu0 0.0
  %1668 = vmatpush1.msra.mxu0 %v1631
  %1669 = vmatprep.subr.mxu0 0.0
  %1670 = vmatpush1.msra.mxu0 %v1634
  %1671 = vmatprep.subr.mxu0 0.0
  %1672 = vmatpush1.msra.mxu0 %v1639
  %1673 = vmatprep.subr.mxu0 0.0
  %1674 = vmatpush1.msra.mxu0 %v1642
  %1675 = vmatprep.subr.mxu0 0.0
  %1676 = vmatpush1.msra.mxu0 %v1647
  %1677 = vmatprep.subr.mxu0 0.0
  %1678 = vmatpush1.msra.mxu0 %v1650
  %1679 = vmatprep.subr.mxu0 0.0
  %1680 = vmatpush1.msra.mxu0 0.0
  %1681 = vmatprep.subr.mxu0 0.0
  %1682 = vmatpush1.msra.mxu0 0.0
  %1683 = vmatprep.subr.mxu0 0.0
  %1684 = vmatpush1.msra.mxu0 0.0
  %1685 = vmatprep.subr.mxu0 0.0
  %1686 = vmatpush1.msra.mxu0 0.0
  %1687 = vmatprep.subr.mxu0 0.0
  %1688 = vmatpush1.msra.mxu0 0.0
  %1689 = vmatprep.subr.mxu0 0.0
  %1690 = vmatpush1.msra.mxu0 0.0
  %1691 = vmatprep.subr.mxu0 0.0
  %1692 = vmatpush1.msra.mxu0 0.0
  %1693 = vmatprep.subr.mxu0 0.0
  %1694 = vmatpush1.msra.mxu0 0.0
  %1695 = vmatprep.subr.mxu0 0.0
  %1696 = vmatpush1.msra.mxu0 0.0
  %1697 = vmatprep.subr.mxu0 0.0
  %1698 = vmatpush1.msra.mxu0 0.0
  %1699 = vmatprep.subr.mxu0 0.0
  %1700 = vmatpush1.msra.mxu0 0.0
  %1701 = vmatprep.subr.mxu0 0.0
  %1702 = vmatpush1.msra.mxu0 0.0
  %1703 = vmatprep.subr.mxu0 0.0
  %1704 = vmatpush1.msra.mxu0 0.0
  %1705 = vmatprep.subr.mxu0 0.0
  %1706 = vmatpush1.msra.mxu0 0.0
  %1707 = vmatprep.subr.mxu0 0.0
  %1708 = vmatpush1.msra.mxu0 0.0
  %1709 = vmatprep.subr.mxu0 0.0
  %1710 = vmatpush1.msra.mxu0 0.0
  %1711 = vmatprep.subr.mxu0 0.0
  %1712 = vmatpush1.msra.mxu0 0.0
  %1713 = vmatprep.subr.mxu0 0.0
  %1714 = vmatpush1.msra.mxu0 0.0
  %1715 = vmatprep.subr.mxu0 0.0
  %1716 = vmatpush1.msra.mxu0 0.0
  %1717 = vmatprep.subr.mxu0 0.0
  %1718 = vmatpush1.msra.mxu0 0.0
  %1719 = vmatprep.subr.mxu0 0.0
  %1720 = vmatpush1.msra.mxu0 0.0
  %1721 = vmatprep.subr.mxu0 0.0
  %1722 = vmatpush1.msra.mxu0 0.0
  %1723 = vmatprep.subr.mxu0 0.0
  %1724 = vmatpush1.msra.mxu0 0.0
  %1725 = vmatprep.subr.mxu0 0.0
  %1726 = vmatpush1.msra.mxu0 0.0
  %1727 = vmatprep.mubr.f32.mxu0 0.0
  %1728 = vmatmul.mubr.f32.gmra.mrb[0].mxu0 %v1661
  %v1729 = vpop.f32.mrb[0].mxu0
  %v1730 = vadd.f32 %v1658, %v1729
  %v1731 = vpop.f32.mrb[0].mxu0
  %1732 = vdwg.mxu0
  %vm1733 = vcmask 9216
  %1734 = vst.msk [vmem:[%s5] sm:$0x3] %vm1733, %v1730
  // Predicated region
  $region22: #{cnn_forward.9} parent=0 // pred_check
    _
  $region23: #{cnn_forward.9} parent=0 // pred_check_branch
    %1736 = sbr.rel (0) target = $region25
  $region24: #{cnn_forward.9} parent=0 // pred_region
    _
  $region25: #{cnn_forward.9} parent=0 // pred_fallthru
    _
  // Predicated region
  $region26: #{cnn_forward.9} parent=0 // pred_check
    _
  $region27: #{cnn_forward.9} parent=0 // pred_check_branch
    %1738 = sbr.rel (0) target = $region29
  $region28: #{cnn_forward.9} parent=0 // pred_region
    _
  $region29: #{cnn_forward.9} parent=0 // pred_fallthru
    _

</llo_original>
